<compile_context>
chip_gen: v5e
topology: v5e:2x2
jax: 0.10.0
libtpu: 0.0.40
codegen_flags: <defaults>
</compile_context>

<pallas_src>
import functools

import jax
import jax.numpy as jnp
from jax.experimental import pallas as pl
from jax.experimental.pallas import tpu as pltpu


# ----------------------------------------------------------------------------
# Fused kernel: (folded depthwise+pointwise) matmul + LeakyReLU(0.2) + PixelNormal
# ----------------------------------------------------------------------------
def _sepconv_kernel(cols_ref, w_ref, b_ref, out_ref, *, inv_cout):
    """cols_ref: (K, TN)    f32 im2col tile (K = 9*Cin, pixels on lanes)
       w_ref:    (Cout, K)  f32 folded depthwise*pointwise weights (grid-resident)
       b_ref:    (Cout, 1)  f32 folded bias (grid-resident)
       out_ref:  (Cout, TN) f32
    """
    # One MXU matmul replaces depthwise(3x3) + pointwise(1x1).
    z = jnp.dot(w_ref[...], cols_ref[...], preferred_element_type=jnp.float32)
    z = z + b_ref[...]
    # LeakyReLU(0.2)
    z = jnp.where(z >= 0.0, z, 0.2 * z)
    # PixelNormal: x / sqrt(mean_c(x^2) + 1e-8)   (rsqrt -> EUP slot)
    ms = jnp.sum(z * z, axis=0, keepdims=True) * inv_cout
    out_ref[...] = z * jax.lax.rsqrt(ms + 1e-8)


def _fold_weights(params):
    """Fold depthwise (3,3,Cin)+(Cin,) and pointwise (Cin,Cout)+(Cout,) into a
    single (Cout, 9*Cin) f32 matrix and a (Cout, 1) f32 bias."""
    dw, dwb, pw, pwb = params
    cin, cout = pw.shape
    wk = dw.reshape(9, cin)                                       # tap-major
    w_comb = (wk[:, :, None] * pw[None, :, :]).reshape(9 * cin, cout)
    w_comb = jnp.transpose(w_comb).astype(jnp.float32)            # (Cout, 9*Cin)
    b_comb = (dwb @ pw + pwb).astype(jnp.float32).reshape(cout, 1)
    return w_comb, b_comb


def _im2col(x, stride):
    """x: (Cin, B, H, W) f32 -> cols (9*Cin, N) f32 with N = B*Ho*Wo."""
    cin, b, h, w = x.shape
    ho = (h + 2 - 3) // stride + 1
    wo = (w + 2 - 3) // stride + 1
    xp = jnp.pad(x.astype(jnp.float32), ((0, 0), (0, 0), (1, 1), (1, 1)))
    taps = []
    for kh in range(3):
        for kw in range(3):
            t = xp[:, :, kh:kh + (ho - 1) * stride + 1:stride,
                         kw:kw + (wo - 1) * stride + 1:stride]
            taps.append(t.reshape(cin, b * ho * wo))
    # Row order k*Cin + c matches _fold_weights.
    return jnp.concatenate(taps, axis=0), ho, wo


def _pick_tile(n, cap=1024):
    """Largest multiple of 128 that divides n and is <= cap, else the full n."""
    best = None
    t = 128
    while t <= min(n, cap):
        if n % t == 0:
            best = t
        t += 128
    return best if best is not None else n


def sepconv_block(x, params, stride):
    """x: (Cin, B, H, W) f32 -> (Cout, B, Ho, Wo) f32 (channels-first layout)."""
    b = x.shape[1]
    cout = params[2].shape[1]
    cols, ho, wo = _im2col(x, stride)
    k, n = cols.shape
    w_comb, b_comb = _fold_weights(params)
    tn = _pick_tile(n)

    out = pl.pallas_call(
        functools.partial(_sepconv_kernel, inv_cout=1.0 / cout),
        out_shape=jax.ShapeDtypeStruct((cout, n), jnp.float32),
        grid=(n // tn,),
        in_specs=[
            pl.BlockSpec((k, tn), lambda i: (0, i)),       # im2col tile (pipelined)
            pl.BlockSpec((cout, k), lambda i: (0, 0)),     # weights, grid-resident
            pl.BlockSpec((cout, 1), lambda i: (0, 0)),     # bias, grid-resident
        ],
        out_specs=pl.BlockSpec((cout, tn), lambda i: (0, i)),
        compiler_params=pltpu.CompilerParams(
            dimension_semantics=("parallel",)),
    )(cols, w_comb, b_comb)
    return out.reshape(cout, b, ho, wo)


# ----------------------------------------------------------------------------
# UNetBlock forward (glue: upsample / pool / concat; compute: Pallas blocks)
# ----------------------------------------------------------------------------
def _upsample2(x):
    # nn.Upsample(scale_factor=2), nearest; x is (C, B, H, W)
    return jnp.repeat(jnp.repeat(x, 2, axis=2), 2, axis=3)


def unet_block_forward(x_nchw, params):
    x = jnp.transpose(x_nchw, (1, 0, 2, 3)).astype(jnp.float32)   # NCHW -> CNHW
    d1 = sepconv_block(x, params['dc1'], 2)
    d2 = sepconv_block(d1, params['dc2'], 2)
    d3 = sepconv_block(d2, params['dc3'], 2)
    d4 = sepconv_block(d3, params['dc4'], 2)
    u1 = sepconv_block(_upsample2(d4), params['uc1'], 1)
    # AdaptiveMaxPool2d((28, 1)): the skip concats force H == 28, so the pool
    # is identity over H and a max-reduction over W.
    assert u1.shape[2] == 28 and d3.shape[2] == 28
    u1 = jnp.max(u1, axis=3, keepdims=True)
    u2 = sepconv_block(_upsample2(jnp.concatenate([u1, d3], axis=0)), params['uc2'], 1)
    u3 = sepconv_block(_upsample2(jnp.concatenate([u2, d2], axis=0)), params['uc3'], 1)
    u4 = sepconv_block(_upsample2(jnp.concatenate([u3, d1], axis=0)), params['uc4'], 1)
    return jnp.transpose(u4, (1, 0, 2, 3))                        # CNHW -> NCHW


# ----------------------------------------------------------------------------
# Pure-JAX f32 reference (independent formulation, NHWC, high precision)
# ----------------------------------------------------------------------------
def _sepconv_block_ref(x_nhwc, params, stride):
    dw, dwb, pw, pwb = params
    cin = x_nhwc.shape[-1]
    y = jax.lax.conv_general_dilated(
        x_nhwc, dw.reshape(3, 3, 1, cin), window_strides=(stride, stride),
        padding=((1, 1), (1, 1)), dimension_numbers=('NHWC', 'HWIO', 'NHWC'),
        feature_group_count=cin, precision=jax.lax.Precision.HIGHEST) + dwb
    z = jnp.einsum('bhwc,cd->bhwd', y, pw,
                   precision=jax.lax.Precision.HIGHEST) + pwb
    z = jnp.where(z >= 0.0, z, 0.2 * z)
    return z / jnp.sqrt(jnp.mean(z * z, axis=-1, keepdims=True) + 1e-8)


def unet_block_forward_ref(x_nchw, params):
    x = jnp.transpose(x_nchw, (0, 2, 3, 1)).astype(jnp.float32)
    up = lambda t: jnp.repeat(jnp.repeat(t, 2, axis=1), 2, axis=2)
    d1 = _sepconv_block_ref(x, params['dc1'], 2)
    d2 = _sepconv_block_ref(d1, params['dc2'], 2)
    d3 = _sepconv_block_ref(d2, params['dc3'], 2)
    d4 = _sepconv_block_ref(d3, params['dc4'], 2)
    u1 = _sepconv_block_ref(up(d4), params['uc1'], 1)
    u1 = jnp.max(u1, axis=2, keepdims=True)
    u2 = _sepconv_block_ref(up(jnp.concatenate([u1, d3], axis=-1)), params['uc2'], 1)
    u3 = _sepconv_block_ref(up(jnp.concatenate([u2, d2], axis=-1)), params['uc3'], 1)
    u4 = _sepconv_block_ref(up(jnp.concatenate([u3, d1], axis=-1)), params['uc4'], 1)
    return jnp.transpose(u4, (0, 3, 1, 2))


# ----------------------------------------------------------------------------
# Deterministic synthetic parameters (same shapes as UNetBlock.__init__)
# ----------------------------------------------------------------------------
def make_params(key, in_channels, out_channels, channel_exp=5):
    c = 2 ** channel_exp
    dims = {
        'dc1': (in_channels, c), 'dc2': (c, 2 * c), 'dc3': (2 * c, 2 * c),
        'dc4': (2 * c, 4 * c), 'uc1': (4 * c, 2 * c), 'uc2': (4 * c, 2 * c),
        'uc3': (4 * c, c), 'uc4': (2 * c, out_channels),
    }
    params = {}
    for name, (ci, co) in dims.items():
        key, k1, k2, k3, k4 = jax.random.split(key, 5)
        params[name] = (
            0.2 * jax.random.normal(k1, (3, 3, ci), jnp.float32),         # depthwise w
            0.1 * jax.random.normal(k2, (ci,), jnp.float32),              # depthwise b
            (ci ** -0.5) * jax.random.normal(k3, (ci, co), jnp.float32),  # pointwise w
            0.1 * jax.random.normal(k4, (co,), jnp.float32),              # pointwise b
        )
    return params


if __name__ == "__main__":
    key = jax.random.PRNGKey(0)
    kx, kp = jax.random.split(key)
    B, CIN, COUT = 2, 4, 4
    # Spatial size (224, 8) is forced by AdaptiveMaxPool2d((28, 1)) + skip concats.
    x = jax.random.normal(kx, (B, CIN, 224, 8), jnp.float32)
    params = make_params(kp, CIN, COUT, channel_exp=5)

    out = jax.block_until_ready(jax.jit(unet_block_forward)(x, params))
    assert out.shape == (B, COUT, 224, 8), out.shape

    ref = jax.block_until_ready(jax.jit(unet_block_forward_ref)(x, params))
    max_err = float(jnp.max(jnp.abs(out - ref)))
    # f32 operands with f32 accumulation; PixelNormal keeps activations O(1),
    # so 5e-2 abs comfortably covers matmul-pass / ordering differences.
    assert max_err < 5e-2, max_err

    print("KERNEL_OK")
</pallas_src>

<mosaic_0001>
module attributes {stable_mosaic.version = 11 : i64} {
  func.func @_sepconv_kernel(%arg0: i32, %arg1: memref<36x896xf32, #tpu.memory_space<vmem>>, %arg2: memref<32x36xf32, #tpu.memory_space<vmem>>, %arg3: memref<32x1xf32, #tpu.memory_space<vmem>>, %arg4: memref<32x896xf32, #tpu.memory_space<vmem>>) attributes {dimension_semantics = [#tpu.dimension_semantics<parallel>], iteration_bounds = array<i64: 1>, scalar_prefetch = 0 : i64, scratch_operands = 0 : i64, tpu.core_type = #tpu.core_type<tc>, window_params = [{transform_indices = @transform_0, window_bounds = array<i64: 36, 896>}, {pipeline_mode = #tpu.pipeline_mode<synchronous>, transform_indices = @transform_1, window_bounds = array<i64: 32, 36>}, {pipeline_mode = #tpu.pipeline_mode<synchronous>, transform_indices = @transform_2, window_bounds = array<i64: 32, 1>}, {transform_indices = @transform_3, window_bounds = array<i64: 32, 896>}]} {
    %c0 = arith.constant 0 : index
    %c0_0 = arith.constant 0 : index
    %0 = vector.load %arg2[%c0, %c0_0] : memref<32x36xf32, #tpu.memory_space<vmem>>, vector<32x36xf32>
    %c0_1 = arith.constant 0 : index
    %c0_2 = arith.constant 0 : index
    %1 = vector.load %arg1[%c0_1, %c0_2] : memref<36x896xf32, #tpu.memory_space<vmem>>, vector<36x896xf32>
    %cst = arith.constant dense<0.000000e+00> : vector<32x896xf32>
    %2 = tpu.matmul %0, %1, %cst {dimension_numbers = #tpu.dot_dimension_numbers<[1], [0], [0], [1], [0, 0, 1, 1], [], []>} : vector<32x36xf32>, vector<36x896xf32>, vector<32x896xf32> -> vector<32x896xf32>
    %c0_3 = arith.constant 0 : index
    %c0_4 = arith.constant 0 : index
    %3 = vector.load %arg3[%c0_3, %c0_4] : memref<32x1xf32, #tpu.memory_space<vmem>>, vector<32x1xf32>
    %4 = vector.broadcast %3 : vector<32x1xf32> to vector<32x896xf32>
    %5 = arith.addf %2, %4 : vector<32x896xf32>
    %cst_5 = arith.constant 0.000000e+00 : f32
    %6 = vector.broadcast %cst_5 : f32 to vector<32x896xf32>
    %7 = arith.cmpf oge, %5, %6 : vector<32x896xf32>
    %cst_6 = arith.constant 2.000000e-01 : f32
    %8 = vector.broadcast %cst_6 : f32 to vector<32x896xf32>
    %9 = arith.mulf %8, %5 : vector<32x896xf32>
    %10 = arith.select %7, %5, %9 : vector<32x896xi1>, vector<32x896xf32>
    %11 = arith.mulf %10, %10 : vector<32x896xf32>
    %cst_7 = arith.constant dense<0.000000e+00> : vector<896xf32>
    %12 = vector.multi_reduction <add>, %11, %cst_7 [0] : vector<32x896xf32> to vector<896xf32>
    %13 = vector.shape_cast %12 : vector<896xf32> to vector<1x896xf32>
    %cst_8 = arith.constant 3.125000e-02 : f32
    %14 = vector.broadcast %cst_8 : f32 to vector<1x896xf32>
    %15 = arith.mulf %13, %14 : vector<1x896xf32>
    %cst_9 = arith.constant 9.99999993E-9 : f32
    %16 = vector.broadcast %cst_9 : f32 to vector<1x896xf32>
    %17 = arith.addf %15, %16 : vector<1x896xf32>
    %18 = math.rsqrt %17 : vector<1x896xf32>
    %19 = vector.broadcast %18 : vector<1x896xf32> to vector<32x896xf32>
    %20 = arith.mulf %10, %19 : vector<32x896xf32>
    %c0_10 = arith.constant 0 : index
    %c0_11 = arith.constant 0 : index
    %21 = vector.load %arg4[%c0_10, %c0_11] : memref<32x896xf32, #tpu.memory_space<vmem>>, vector<32x896xf32>
    tpu.vector_store %arg4[%c0_10, %c0_11], %20 {strides = array<i32>} : memref<32x896xf32, #tpu.memory_space<vmem>>, vector<32x896xf32>,
    return
  }
  func.func @transform_0(%arg0: i32) -> (i32, i32) {
    %c0_i32 = arith.constant 0 : i32
    %c0_i32_0 = arith.constant 0 : i32
    return %c0_i32, %arg0 : i32, i32
  }
  func.func @transform_1(%arg0: i32) -> (i32, i32) {
    %c0_i32 = arith.constant 0 : i32
    %c0_i32_0 = arith.constant 0 : i32
    %c0_i32_1 = arith.constant 0 : i32
    return %c0_i32, %c0_i32_0 : i32, i32
  }
  func.func @transform_2(%arg0: i32) -> (i32, i32) {
    %c0_i32 = arith.constant 0 : i32
    %c0_i32_0 = arith.constant 0 : i32
    %c0_i32_1 = arith.constant 0 : i32
    return %c0_i32, %c0_i32_0 : i32, i32
  }
  func.func @transform_3(%arg0: i32) -> (i32, i32) {
    %c0_i32 = arith.constant 0 : i32
    %c0_i32_0 = arith.constant 0 : i32
    return %c0_i32, %arg0 : i32, i32
  }
}

module attributes {stable_mosaic.version = 11 : i64} {
  func.func @_sepconv_kernel(%arg0: i32, %arg1: memref<288x224xf32, #tpu.memory_space<vmem>>, %arg2: memref<64x288xf32, #tpu.memory_space<vmem>>, %arg3: memref<64x1xf32, #tpu.memory_space<vmem>>, %arg4: memref<64x224xf32, #tpu.memory_space<vmem>>) attributes {dimension_semantics = [#tpu.dimension_semantics<parallel>], iteration_bounds = array<i64: 1>, scalar_prefetch = 0 : i64, scratch_operands = 0 : i64, tpu.core_type = #tpu.core_type<tc>, window_params = [{transform_indices = @transform_0, window_bounds = array<i64: 288, 224>}, {pipeline_mode = #tpu.pipeline_mode<synchronous>, transform_indices = @transform_1, window_bounds = array<i64: 64, 288>}, {pipeline_mode = #tpu.pipeline_mode<synchronous>, transform_indices = @transform_2, window_bounds = array<i64: 64, 1>}, {transform_indices = @transform_3, window_bounds = array<i64: 64, 224>}]} {
    %c0 = arith.constant 0 : index
    %c0_0 = arith.constant 0 : index
    %0 = vector.load %arg2[%c0, %c0_0] : memref<64x288xf32, #tpu.memory_space<vmem>>, vector<64x288xf32>
    %c0_1 = arith.constant 0 : index
    %c0_2 = arith.constant 0 : index
    %1 = vector.load %arg1[%c0_1, %c0_2] : memref<288x224xf32, #tpu.memory_space<vmem>>, vector<288x224xf32>
    %cst = arith.constant dense<0.000000e+00> : vector<64x224xf32>
    %2 = tpu.matmul %0, %1, %cst {dimension_numbers = #tpu.dot_dimension_numbers<[1], [0], [0], [1], [0, 0, 1, 1], [], []>} : vector<64x288xf32>, vector<288x224xf32>, vector<64x224xf32> -> vector<64x224xf32>
    %c0_3 = arith.constant 0 : index
    %c0_4 = arith.constant 0 : index
    %3 = vector.load %arg3[%c0_3, %c0_4] : memref<64x1xf32, #tpu.memory_space<vmem>>, vector<64x1xf32>
    %4 = vector.broadcast %3 : vector<64x1xf32> to vector<64x224xf32>
    %5 = arith.addf %2, %4 : vector<64x224xf32>
    %cst_5 = arith.constant 0.000000e+00 : f32
    %6 = vector.broadcast %cst_5 : f32 to vector<64x224xf32>
    %7 = arith.cmpf oge, %5, %6 : vector<64x224xf32>
    %cst_6 = arith.constant 2.000000e-01 : f32
    %8 = vector.broadcast %cst_6 : f32 to vector<64x224xf32>
    %9 = arith.mulf %8, %5 : vector<64x224xf32>
    %10 = arith.select %7, %5, %9 : vector<64x224xi1>, vector<64x224xf32>
    %11 = arith.mulf %10, %10 : vector<64x224xf32>
    %cst_7 = arith.constant dense<0.000000e+00> : vector<224xf32>
    %12 = vector.multi_reduction <add>, %11, %cst_7 [0] : vector<64x224xf32> to vector<224xf32>
    %13 = vector.shape_cast %12 : vector<224xf32> to vector<1x224xf32>
    %cst_8 = arith.constant 1.562500e-02 : f32
    %14 = vector.broadcast %cst_8 : f32 to vector<1x224xf32>
    %15 = arith.mulf %13, %14 : vector<1x224xf32>
    %cst_9 = arith.constant 9.99999993E-9 : f32
    %16 = vector.broadcast %cst_9 : f32 to vector<1x224xf32>
    %17 = arith.addf %15, %16 : vector<1x224xf32>
    %18 = math.rsqrt %17 : vector<1x224xf32>
    %19 = vector.broadcast %18 : vector<1x224xf32> to vector<64x224xf32>
    %20 = arith.mulf %10, %19 : vector<64x224xf32>
    %c0_10 = arith.constant 0 : index
    %c0_11 = arith.constant 0 : index
    %21 = vector.load %arg4[%c0_10, %c0_11] : memref<64x224xf32, #tpu.memory_space<vmem>>, vector<64x224xf32>
    tpu.vector_store %arg4[%c0_10, %c0_11], %20 {strides = array<i32>} : memref<64x224xf32, #tpu.memory_space<vmem>>, vector<64x224xf32>,
    return
  }
  func.func @transform_0(%arg0: i32) -> (i32, i32) {
    %c0_i32 = arith.constant 0 : i32
    %c0_i32_0 = arith.constant 0 : i32
    return %c0_i32, %arg0 : i32, i32
  }
  func.func @transform_1(%arg0: i32) -> (i32, i32) {
    %c0_i32 = arith.constant 0 : i32
    %c0_i32_0 = arith.constant 0 : i32
    %c0_i32_1 = arith.constant 0 : i32
    return %c0_i32, %c0_i32_0 : i32, i32
  }
  func.func @transform_2(%arg0: i32) -> (i32, i32) {
    %c0_i32 = arith.constant 0 : i32
    %c0_i32_0 = arith.constant 0 : i32
    %c0_i32_1 = arith.constant 0 : i32
    return %c0_i32, %c0_i32_0 : i32, i32
  }
  func.func @transform_3(%arg0: i32) -> (i32, i32) {
    %c0_i32 = arith.constant 0 : i32
    %c0_i32_0 = arith.constant 0 : i32
    return %c0_i32, %arg0 : i32, i32
  }
}

module attributes {stable_mosaic.version = 11 : i64} {
  func.func @_sepconv_kernel(%arg0: i32, %arg1: memref<576x56xf32, #tpu.memory_space<vmem>>, %arg2: memref<64x576xf32, #tpu.memory_space<vmem>>, %arg3: memref<64x1xf32, #tpu.memory_space<vmem>>, %arg4: memref<64x56xf32, #tpu.memory_space<vmem>>) attributes {dimension_semantics = [#tpu.dimension_semantics<parallel>], iteration_bounds = array<i64: 1>, scalar_prefetch = 0 : i64, scratch_operands = 0 : i64, tpu.core_type = #tpu.core_type<tc>, window_params = [{transform_indices = @transform_0, window_bounds = array<i64: 576, 56>}, {pipeline_mode = #tpu.pipeline_mode<synchronous>, transform_indices = @transform_1, window_bounds = array<i64: 64, 576>}, {pipeline_mode = #tpu.pipeline_mode<synchronous>, transform_indices = @transform_2, window_bounds = array<i64: 64, 1>}, {transform_indices = @transform_3, window_bounds = array<i64: 64, 56>}]} {
    %c0 = arith.constant 0 : index
    %c0_0 = arith.constant 0 : index
    %0 = vector.load %arg2[%c0, %c0_0] : memref<64x576xf32, #tpu.memory_space<vmem>>, vector<64x576xf32>
    %c0_1 = arith.constant 0 : index
    %c0_2 = arith.constant 0 : index
    %1 = vector.load %arg1[%c0_1, %c0_2] : memref<576x56xf32, #tpu.memory_space<vmem>>, vector<576x56xf32>
    %cst = arith.constant dense<0.000000e+00> : vector<64x56xf32>
    %2 = tpu.matmul %0, %1, %cst {dimension_numbers = #tpu.dot_dimension_numbers<[1], [0], [0], [1], [0, 0, 1, 1], [], []>} : vector<64x576xf32>, vector<576x56xf32>, vector<64x56xf32> -> vector<64x56xf32>
    %c0_3 = arith.constant 0 : index
    %c0_4 = arith.constant 0 : index
    %3 = vector.load %arg3[%c0_3, %c0_4] : memref<64x1xf32, #tpu.memory_space<vmem>>, vector<64x1xf32>
    %4 = vector.broadcast %3 : vector<64x1xf32> to vector<64x56xf32>
    %5 = arith.addf %2, %4 : vector<64x56xf32>
    %cst_5 = arith.constant 0.000000e+00 : f32
    %6 = vector.broadcast %cst_5 : f32 to vector<64x56xf32>
    %7 = arith.cmpf oge, %5, %6 : vector<64x56xf32>
    %cst_6 = arith.constant 2.000000e-01 : f32
    %8 = vector.broadcast %cst_6 : f32 to vector<64x56xf32>
    %9 = arith.mulf %8, %5 : vector<64x56xf32>
    %10 = arith.select %7, %5, %9 : vector<64x56xi1>, vector<64x56xf32>
    %11 = arith.mulf %10, %10 : vector<64x56xf32>
    %cst_7 = arith.constant dense<0.000000e+00> : vector<56xf32>
    %12 = vector.multi_reduction <add>, %11, %cst_7 [0] : vector<64x56xf32> to vector<56xf32>
    %13 = vector.shape_cast %12 : vector<56xf32> to vector<1x56xf32>
    %cst_8 = arith.constant 1.562500e-02 : f32
    %14 = vector.broadcast %cst_8 : f32 to vector<1x56xf32>
    %15 = arith.mulf %13, %14 : vector<1x56xf32>
    %cst_9 = arith.constant 9.99999993E-9 : f32
    %16 = vector.broadcast %cst_9 : f32 to vector<1x56xf32>
    %17 = arith.addf %15, %16 : vector<1x56xf32>
    %18 = math.rsqrt %17 : vector<1x56xf32>
    %19 = vector.broadcast %18 : vector<1x56xf32> to vector<64x56xf32>
    %20 = arith.mulf %10, %19 : vector<64x56xf32>
    %c0_10 = arith.constant 0 : index
    %c0_11 = arith.constant 0 : index
    %21 = vector.load %arg4[%c0_10, %c0_11] : memref<64x56xf32, #tpu.memory_space<vmem>>, vector<64x56xf32>
    tpu.vector_store %arg4[%c0_10, %c0_11], %20 {strides = array<i32>} : memref<64x56xf32, #tpu.memory_space<vmem>>, vector<64x56xf32>,
    return
  }
  func.func @transform_0(%arg0: i32) -> (i32, i32) {
    %c0_i32 = arith.constant 0 : i32
    %c0_i32_0 = arith.constant 0 : i32
    return %c0_i32, %arg0 : i32, i32
  }
  func.func @transform_1(%arg0: i32) -> (i32, i32) {
    %c0_i32 = arith.constant 0 : i32
    %c0_i32_0 = arith.constant 0 : i32
    %c0_i32_1 = arith.constant 0 : i32
    return %c0_i32, %c0_i32_0 : i32, i32
  }
  func.func @transform_2(%arg0: i32) -> (i32, i32) {
    %c0_i32 = arith.constant 0 : i32
    %c0_i32_0 = arith.constant 0 : i32
    %c0_i32_1 = arith.constant 0 : i32
    return %c0_i32, %c0_i32_0 : i32, i32
  }
  func.func @transform_3(%arg0: i32) -> (i32, i32) {
    %c0_i32 = arith.constant 0 : i32
    %c0_i32_0 = arith.constant 0 : i32
    return %c0_i32, %arg0 : i32, i32
  }
}

module attributes {stable_mosaic.version = 11 : i64} {
  func.func @_sepconv_kernel(%arg0: i32, %arg1: memref<576x28xf32, #tpu.memory_space<vmem>>, %arg2: memref<128x576xf32, #tpu.memory_space<vmem>>, %arg3: memref<128x1xf32, #tpu.memory_space<vmem>>, %arg4: memref<128x28xf32, #tpu.memory_space<vmem>>) attributes {dimension_semantics = [#tpu.dimension_semantics<parallel>], iteration_bounds = array<i64: 1>, scalar_prefetch = 0 : i64, scratch_operands = 0 : i64, tpu.core_type = #tpu.core_type<tc>, window_params = [{transform_indices = @transform_0, window_bounds = array<i64: 576, 28>}, {pipeline_mode = #tpu.pipeline_mode<synchronous>, transform_indices = @transform_1, window_bounds = array<i64: 128, 576>}, {pipeline_mode = #tpu.pipeline_mode<synchronous>, transform_indices = @transform_2, window_bounds = array<i64: 128, 1>}, {transform_indices = @transform_3, window_bounds = array<i64: 128, 28>}]} {
    %c0 = arith.constant 0 : index
    %c0_0 = arith.constant 0 : index
    %0 = vector.load %arg2[%c0, %c0_0] : memref<128x576xf32, #tpu.memory_space<vmem>>, vector<128x576xf32>
    %c0_1 = arith.constant 0 : index
    %c0_2 = arith.constant 0 : index
    %1 = vector.load %arg1[%c0_1, %c0_2] : memref<576x28xf32, #tpu.memory_space<vmem>>, vector<576x28xf32>
    %cst = arith.constant dense<0.000000e+00> : vector<128x28xf32>
    %2 = tpu.matmul %0, %1, %cst {dimension_numbers = #tpu.dot_dimension_numbers<[1], [0], [0], [1], [0, 0, 1, 1], [], []>} : vector<128x576xf32>, vector<576x28xf32>, vector<128x28xf32> -> vector<128x28xf32>
    %c0_3 = arith.constant 0 : index
    %c0_4 = arith.constant 0 : index
    %3 = vector.load %arg3[%c0_3, %c0_4] : memref<128x1xf32, #tpu.memory_space<vmem>>, vector<128x1xf32>
    %4 = vector.broadcast %3 : vector<128x1xf32> to vector<128x28xf32>
    %5 = arith.addf %2, %4 : vector<128x28xf32>
    %cst_5 = arith.constant 0.000000e+00 : f32
    %6 = vector.broadcast %cst_5 : f32 to vector<128x28xf32>
    %7 = arith.cmpf oge, %5, %6 : vector<128x28xf32>
    %cst_6 = arith.constant 2.000000e-01 : f32
    %8 = vector.broadcast %cst_6 : f32 to vector<128x28xf32>
    %9 = arith.mulf %8, %5 : vector<128x28xf32>
    %10 = arith.select %7, %5, %9 : vector<128x28xi1>, vector<128x28xf32>
    %11 = arith.mulf %10, %10 : vector<128x28xf32>
    %cst_7 = arith.constant dense<0.000000e+00> : vector<28xf32>
    %12 = vector.multi_reduction <add>, %11, %cst_7 [0] : vector<128x28xf32> to vector<28xf32>
    %13 = vector.shape_cast %12 : vector<28xf32> to vector<1x28xf32>
    %cst_8 = arith.constant 7.812500e-03 : f32
    %14 = vector.broadcast %cst_8 : f32 to vector<1x28xf32>
    %15 = arith.mulf %13, %14 : vector<1x28xf32>
    %cst_9 = arith.constant 9.99999993E-9 : f32
    %16 = vector.broadcast %cst_9 : f32 to vector<1x28xf32>
    %17 = arith.addf %15, %16 : vector<1x28xf32>
    %18 = math.rsqrt %17 : vector<1x28xf32>
    %19 = vector.broadcast %18 : vector<1x28xf32> to vector<128x28xf32>
    %20 = arith.mulf %10, %19 : vector<128x28xf32>
    %c0_10 = arith.constant 0 : index
    %c0_11 = arith.constant 0 : index
    %21 = vector.load %arg4[%c0_10, %c0_11] : memref<128x28xf32, #tpu.memory_space<vmem>>, vector<128x28xf32>
    tpu.vector_store %arg4[%c0_10, %c0_11], %20 {strides = array<i32>} : memref<128x28xf32, #tpu.memory_space<vmem>>, vector<128x28xf32>,
    return
  }
  func.func @transform_0(%arg0: i32) -> (i32, i32) {
    %c0_i32 = arith.constant 0 : i32
    %c0_i32_0 = arith.constant 0 : i32
    return %c0_i32, %arg0 : i32, i32
  }
  func.func @transform_1(%arg0: i32) -> (i32, i32) {
    %c0_i32 = arith.constant 0 : i32
    %c0_i32_0 = arith.constant 0 : i32
    %c0_i32_1 = arith.constant 0 : i32
    return %c0_i32, %c0_i32_0 : i32, i32
  }
  func.func @transform_2(%arg0: i32) -> (i32, i32) {
    %c0_i32 = arith.constant 0 : i32
    %c0_i32_0 = arith.constant 0 : i32
    %c0_i32_1 = arith.constant 0 : i32
    return %c0_i32, %c0_i32_0 : i32, i32
  }
  func.func @transform_3(%arg0: i32) -> (i32, i32) {
    %c0_i32 = arith.constant 0 : i32
    %c0_i32_0 = arith.constant 0 : i32
    return %c0_i32, %arg0 : i32, i32
  }
}

module attributes {stable_mosaic.version = 11 : i64} {
  func.func @_sepconv_kernel(%arg0: i32, %arg1: memref<1152x112xf32, #tpu.memory_space<vmem>>, %arg2: memref<64x1152xf32, #tpu.memory_space<vmem>>, %arg3: memref<64x1xf32, #tpu.memory_space<vmem>>, %arg4: memref<64x112xf32, #tpu.memory_space<vmem>>) attributes {dimension_semantics = [#tpu.dimension_semantics<parallel>], iteration_bounds = array<i64: 1>, scalar_prefetch = 0 : i64, scratch_operands = 0 : i64, tpu.core_type = #tpu.core_type<tc>, window_params = [{transform_indices = @transform_0, window_bounds = array<i64: 1152, 112>}, {pipeline_mode = #tpu.pipeline_mode<synchronous>, transform_indices = @transform_1, window_bounds = array<i64: 64, 1152>}, {pipeline_mode = #tpu.pipeline_mode<synchronous>, transform_indices = @transform_2, window_bounds = array<i64: 64, 1>}, {transform_indices = @transform_3, window_bounds = array<i64: 64, 112>}]} {
    %c0 = arith.constant 0 : index
    %c0_0 = arith.constant 0 : index
    %0 = vector.load %arg2[%c0, %c0_0] : memref<64x1152xf32, #tpu.memory_space<vmem>>, vector<64x1152xf32>
    %c0_1 = arith.constant 0 : index
    %c0_2 = arith.constant 0 : index
    %1 = vector.load %arg1[%c0_1, %c0_2] : memref<1152x112xf32, #tpu.memory_space<vmem>>, vector<1152x112xf32>
    %cst = arith.constant dense<0.000000e+00> : vector<64x112xf32>
    %2 = tpu.matmul %0, %1, %cst {dimension_numbers = #tpu.dot_dimension_numbers<[1], [0], [0], [1], [0, 0, 1, 1], [], []>} : vector<64x1152xf32>, vector<1152x112xf32>, vector<64x112xf32> -> vector<64x112xf32>
    %c0_3 = arith.constant 0 : index
    %c0_4 = arith.constant 0 : index
    %3 = vector.load %arg3[%c0_3, %c0_4] : memref<64x1xf32, #tpu.memory_space<vmem>>, vector<64x1xf32>
    %4 = vector.broadcast %3 : vector<64x1xf32> to vector<64x112xf32>
    %5 = arith.addf %2, %4 : vector<64x112xf32>
    %cst_5 = arith.constant 0.000000e+00 : f32
    %6 = vector.broadcast %cst_5 : f32 to vector<64x112xf32>
    %7 = arith.cmpf oge, %5, %6 : vector<64x112xf32>
    %cst_6 = arith.constant 2.000000e-01 : f32
    %8 = vector.broadcast %cst_6 : f32 to vector<64x112xf32>
    %9 = arith.mulf %8, %5 : vector<64x112xf32>
    %10 = arith.select %7, %5, %9 : vector<64x112xi1>, vector<64x112xf32>
    %11 = arith.mulf %10, %10 : vector<64x112xf32>
    %cst_7 = arith.constant dense<0.000000e+00> : vector<112xf32>
    %12 = vector.multi_reduction <add>, %11, %cst_7 [0] : vector<64x112xf32> to vector<112xf32>
    %13 = vector.shape_cast %12 : vector<112xf32> to vector<1x112xf32>
    %cst_8 = arith.constant 1.562500e-02 : f32
    %14 = vector.broadcast %cst_8 : f32 to vector<1x112xf32>
    %15 = arith.mulf %13, %14 : vector<1x112xf32>
    %cst_9 = arith.constant 9.99999993E-9 : f32
    %16 = vector.broadcast %cst_9 : f32 to vector<1x112xf32>
    %17 = arith.addf %15, %16 : vector<1x112xf32>
    %18 = math.rsqrt %17 : vector<1x112xf32>
    %19 = vector.broadcast %18 : vector<1x112xf32> to vector<64x112xf32>
    %20 = arith.mulf %10, %19 : vector<64x112xf32>
    %c0_10 = arith.constant 0 : index
    %c0_11 = arith.constant 0 : index
    %21 = vector.load %arg4[%c0_10, %c0_11] : memref<64x112xf32, #tpu.memory_space<vmem>>, vector<64x112xf32>
    tpu.vector_store %arg4[%c0_10, %c0_11], %20 {strides = array<i32>} : memref<64x112xf32, #tpu.memory_space<vmem>>, vector<64x112xf32>,
    return
  }
  func.func @transform_0(%arg0: i32) -> (i32, i32) {
    %c0_i32 = arith.constant 0 : i32
    %c0_i32_0 = arith.constant 0 : i32
    return %c0_i32, %arg0 : i32, i32
  }
  func.func @transform_1(%arg0: i32) -> (i32, i32) {
    %c0_i32 = arith.constant 0 : i32
    %c0_i32_0 = arith.constant 0 : i32
    %c0_i32_1 = arith.constant 0 : i32
    return %c0_i32, %c0_i32_0 : i32, i32
  }
  func.func @transform_2(%arg0: i32) -> (i32, i32) {
    %c0_i32 = arith.constant 0 : i32
    %c0_i32_0 = arith.constant 0 : i32
    %c0_i32_1 = arith.constant 0 : i32
    return %c0_i32, %c0_i32_0 : i32, i32
  }
  func.func @transform_3(%arg0: i32) -> (i32, i32) {
    %c0_i32 = arith.constant 0 : i32
    %c0_i32_0 = arith.constant 0 : i32
    return %c0_i32, %arg0 : i32, i32
  }
}

module attributes {stable_mosaic.version = 11 : i64} {
  func.func @_sepconv_kernel(%arg0: i32, %arg1: memref<1152x224xf32, #tpu.memory_space<vmem>>, %arg2: memref<64x1152xf32, #tpu.memory_space<vmem>>, %arg3: memref<64x1xf32, #tpu.memory_space<vmem>>, %arg4: memref<64x224xf32, #tpu.memory_space<vmem>>) attributes {dimension_semantics = [#tpu.dimension_semantics<parallel>], iteration_bounds = array<i64: 1>, scalar_prefetch = 0 : i64, scratch_operands = 0 : i64, tpu.core_type = #tpu.core_type<tc>, window_params = [{transform_indices = @transform_0, window_bounds = array<i64: 1152, 224>}, {pipeline_mode = #tpu.pipeline_mode<synchronous>, transform_indices = @transform_1, window_bounds = array<i64: 64, 1152>}, {pipeline_mode = #tpu.pipeline_mode<synchronous>, transform_indices = @transform_2, window_bounds = array<i64: 64, 1>}, {transform_indices = @transform_3, window_bounds = array<i64: 64, 224>}]} {
    %c0 = arith.constant 0 : index
    %c0_0 = arith.constant 0 : index
    %0 = vector.load %arg2[%c0, %c0_0] : memref<64x1152xf32, #tpu.memory_space<vmem>>, vector<64x1152xf32>
    %c0_1 = arith.constant 0 : index
    %c0_2 = arith.constant 0 : index
    %1 = vector.load %arg1[%c0_1, %c0_2] : memref<1152x224xf32, #tpu.memory_space<vmem>>, vector<1152x224xf32>
    %cst = arith.constant dense<0.000000e+00> : vector<64x224xf32>
    %2 = tpu.matmul %0, %1, %cst {dimension_numbers = #tpu.dot_dimension_numbers<[1], [0], [0], [1], [0, 0, 1, 1], [], []>} : vector<64x1152xf32>, vector<1152x224xf32>, vector<64x224xf32> -> vector<64x224xf32>
    %c0_3 = arith.constant 0 : index
    %c0_4 = arith.constant 0 : index
    %3 = vector.load %arg3[%c0_3, %c0_4] : memref<64x1xf32, #tpu.memory_space<vmem>>, vector<64x1xf32>
    %4 = vector.broadcast %3 : vector<64x1xf32> to vector<64x224xf32>
    %5 = arith.addf %2, %4 : vector<64x224xf32>
    %cst_5 = arith.constant 0.000000e+00 : f32
    %6 = vector.broadcast %cst_5 : f32 to vector<64x224xf32>
    %7 = arith.cmpf oge, %5, %6 : vector<64x224xf32>
    %cst_6 = arith.constant 2.000000e-01 : f32
    %8 = vector.broadcast %cst_6 : f32 to vector<64x224xf32>
    %9 = arith.mulf %8, %5 : vector<64x224xf32>
    %10 = arith.select %7, %5, %9 : vector<64x224xi1>, vector<64x224xf32>
    %11 = arith.mulf %10, %10 : vector<64x224xf32>
    %cst_7 = arith.constant dense<0.000000e+00> : vector<224xf32>
    %12 = vector.multi_reduction <add>, %11, %cst_7 [0] : vector<64x224xf32> to vector<224xf32>
    %13 = vector.shape_cast %12 : vector<224xf32> to vector<1x224xf32>
    %cst_8 = arith.constant 1.562500e-02 : f32
    %14 = vector.broadcast %cst_8 : f32 to vector<1x224xf32>
    %15 = arith.mulf %13, %14 : vector<1x224xf32>
    %cst_9 = arith.constant 9.99999993E-9 : f32
    %16 = vector.broadcast %cst_9 : f32 to vector<1x224xf32>
    %17 = arith.addf %15, %16 : vector<1x224xf32>
    %18 = math.rsqrt %17 : vector<1x224xf32>
    %19 = vector.broadcast %18 : vector<1x224xf32> to vector<64x224xf32>
    %20 = arith.mulf %10, %19 : vector<64x224xf32>
    %c0_10 = arith.constant 0 : index
    %c0_11 = arith.constant 0 : index
    %21 = vector.load %arg4[%c0_10, %c0_11] : memref<64x224xf32, #tpu.memory_space<vmem>>, vector<64x224xf32>
    tpu.vector_store %arg4[%c0_10, %c0_11], %20 {strides = array<i32>} : memref<64x224xf32, #tpu.memory_space<vmem>>, vector<64x224xf32>,
    return
  }
  func.func @transform_0(%arg0: i32) -> (i32, i32) {
    %c0_i32 = arith.constant 0 : i32
    %c0_i32_0 = arith.constant 0 : i32
    return %c0_i32, %arg0 : i32, i32
  }
  func.func @transform_1(%arg0: i32) -> (i32, i32) {
    %c0_i32 = arith.constant 0 : i32
    %c0_i32_0 = arith.constant 0 : i32
    %c0_i32_1 = arith.constant 0 : i32
    return %c0_i32, %c0_i32_0 : i32, i32
  }
  func.func @transform_2(%arg0: i32) -> (i32, i32) {
    %c0_i32 = arith.constant 0 : i32
    %c0_i32_0 = arith.constant 0 : i32
    %c0_i32_1 = arith.constant 0 : i32
    return %c0_i32, %c0_i32_0 : i32, i32
  }
  func.func @transform_3(%arg0: i32) -> (i32, i32) {
    %c0_i32 = arith.constant 0 : i32
    %c0_i32_0 = arith.constant 0 : i32
    return %c0_i32, %arg0 : i32, i32
  }
}

module attributes {stable_mosaic.version = 11 : i64} {
  func.func @_sepconv_kernel(%arg0: i32, %arg1: memref<1152x896xf32, #tpu.memory_space<vmem>>, %arg2: memref<32x1152xf32, #tpu.memory_space<vmem>>, %arg3: memref<32x1xf32, #tpu.memory_space<vmem>>, %arg4: memref<32x896xf32, #tpu.memory_space<vmem>>) attributes {dimension_semantics = [#tpu.dimension_semantics<parallel>], iteration_bounds = array<i64: 1>, scalar_prefetch = 0 : i64, scratch_operands = 0 : i64, tpu.core_type = #tpu.core_type<tc>, window_params = [{transform_indices = @transform_0, window_bounds = array<i64: 1152, 896>}, {pipeline_mode = #tpu.pipeline_mode<synchronous>, transform_indices = @transform_1, window_bounds = array<i64: 32, 1152>}, {pipeline_mode = #tpu.pipeline_mode<synchronous>, transform_indices = @transform_2, window_bounds = array<i64: 32, 1>}, {transform_indices = @transform_3, window_bounds = array<i64: 32, 896>}]} {
    %c0 = arith.constant 0 : index
    %c0_0 = arith.constant 0 : index
    %0 = vector.load %arg2[%c0, %c0_0] : memref<32x1152xf32, #tpu.memory_space<vmem>>, vector<32x1152xf32>
    %c0_1 = arith.constant 0 : index
    %c0_2 = arith.constant 0 : index
    %1 = vector.load %arg1[%c0_1, %c0_2] : memref<1152x896xf32, #tpu.memory_space<vmem>>, vector<1152x896xf32>
    %cst = arith.constant dense<0.000000e+00> : vector<32x896xf32>
    %2 = tpu.matmul %0, %1, %cst {dimension_numbers = #tpu.dot_dimension_numbers<[1], [0], [0], [1], [0, 0, 1, 1], [], []>} : vector<32x1152xf32>, vector<1152x896xf32>, vector<32x896xf32> -> vector<32x896xf32>
    %c0_3 = arith.constant 0 : index
    %c0_4 = arith.constant 0 : index
    %3 = vector.load %arg3[%c0_3, %c0_4] : memref<32x1xf32, #tpu.memory_space<vmem>>, vector<32x1xf32>
    %4 = vector.broadcast %3 : vector<32x1xf32> to vector<32x896xf32>
    %5 = arith.addf %2, %4 : vector<32x896xf32>
    %cst_5 = arith.constant 0.000000e+00 : f32
    %6 = vector.broadcast %cst_5 : f32 to vector<32x896xf32>
    %7 = arith.cmpf oge, %5, %6 : vector<32x896xf32>
    %cst_6 = arith.constant 2.000000e-01 : f32
    %8 = vector.broadcast %cst_6 : f32 to vector<32x896xf32>
    %9 = arith.mulf %8, %5 : vector<32x896xf32>
    %10 = arith.select %7, %5, %9 : vector<32x896xi1>, vector<32x896xf32>
    %11 = arith.mulf %10, %10 : vector<32x896xf32>
    %cst_7 = arith.constant dense<0.000000e+00> : vector<896xf32>
    %12 = vector.multi_reduction <add>, %11, %cst_7 [0] : vector<32x896xf32> to vector<896xf32>
    %13 = vector.shape_cast %12 : vector<896xf32> to vector<1x896xf32>
    %cst_8 = arith.constant 3.125000e-02 : f32
    %14 = vector.broadcast %cst_8 : f32 to vector<1x896xf32>
    %15 = arith.mulf %13, %14 : vector<1x896xf32>
    %cst_9 = arith.constant 9.99999993E-9 : f32
    %16 = vector.broadcast %cst_9 : f32 to vector<1x896xf32>
    %17 = arith.addf %15, %16 : vector<1x896xf32>
    %18 = math.rsqrt %17 : vector<1x896xf32>
    %19 = vector.broadcast %18 : vector<1x896xf32> to vector<32x896xf32>
    %20 = arith.mulf %10, %19 : vector<32x896xf32>
    %c0_10 = arith.constant 0 : index
    %c0_11 = arith.constant 0 : index
    %21 = vector.load %arg4[%c0_10, %c0_11] : memref<32x896xf32, #tpu.memory_space<vmem>>, vector<32x896xf32>
    tpu.vector_store %arg4[%c0_10, %c0_11], %20 {strides = array<i32>} : memref<32x896xf32, #tpu.memory_space<vmem>>, vector<32x896xf32>,
    return
  }
  func.func @transform_0(%arg0: i32) -> (i32, i32) {
    %c0_i32 = arith.constant 0 : i32
    %c0_i32_0 = arith.constant 0 : i32
    return %c0_i32, %arg0 : i32, i32
  }
  func.func @transform_1(%arg0: i32) -> (i32, i32) {
    %c0_i32 = arith.constant 0 : i32
    %c0_i32_0 = arith.constant 0 : i32
    %c0_i32_1 = arith.constant 0 : i32
    return %c0_i32, %c0_i32_0 : i32, i32
  }
  func.func @transform_2(%arg0: i32) -> (i32, i32) {
    %c0_i32 = arith.constant 0 : i32
    %c0_i32_0 = arith.constant 0 : i32
    %c0_i32_1 = arith.constant 0 : i32
    return %c0_i32, %c0_i32_0 : i32, i32
  }
  func.func @transform_3(%arg0: i32) -> (i32, i32) {
    %c0_i32 = arith.constant 0 : i32
    %c0_i32_0 = arith.constant 0 : i32
    return %c0_i32, %arg0 : i32, i32
  }
}

module attributes {stable_mosaic.version = 11 : i64} {
  func.func @_sepconv_kernel(%arg0: i32, %arg1: memref<576x896xf32, #tpu.memory_space<vmem>>, %arg2: memref<4x576xf32, #tpu.memory_space<vmem>>, %arg3: memref<4x1xf32, #tpu.memory_space<vmem>>, %arg4: memref<4x896xf32, #tpu.memory_space<vmem>>) attributes {dimension_semantics = [#tpu.dimension_semantics<parallel>], iteration_bounds = array<i64: 4>, scalar_prefetch = 0 : i64, scratch_operands = 0 : i64, tpu.core_type = #tpu.core_type<tc>, window_params = [{transform_indices = @transform_0, window_bounds = array<i64: 576, 896>}, {pipeline_mode = #tpu.pipeline_mode<synchronous>, transform_indices = @transform_1, window_bounds = array<i64: 4, 576>}, {pipeline_mode = #tpu.pipeline_mode<synchronous>, transform_indices = @transform_2, window_bounds = array<i64: 4, 1>}, {transform_indices = @transform_3, window_bounds = array<i64: 4, 896>}]} {
    %c0 = arith.constant 0 : index
    %c0_0 = arith.constant 0 : index
    %0 = vector.load %arg2[%c0, %c0_0] : memref<4x576xf32, #tpu.memory_space<vmem>>, vector<4x576xf32>
    %c0_1 = arith.constant 0 : index
    %c0_2 = arith.constant 0 : index
    %1 = vector.load %arg1[%c0_1, %c0_2] : memref<576x896xf32, #tpu.memory_space<vmem>>, vector<576x896xf32>
    %cst = arith.constant dense<0.000000e+00> : vector<4x896xf32>
    %2 = tpu.matmul %0, %1, %cst {dimension_numbers = #tpu.dot_dimension_numbers<[1], [0], [0], [1], [0, 0, 1, 1], [], []>} : vector<4x576xf32>, vector<576x896xf32>, vector<4x896xf32> -> vector<4x896xf32>
    %c0_3 = arith.constant 0 : index
    %c0_4 = arith.constant 0 : index
    %3 = vector.load %arg3[%c0_3, %c0_4] : memref<4x1xf32, #tpu.memory_space<vmem>>, vector<4x1xf32>
    %4 = vector.broadcast %3 : vector<4x1xf32> to vector<4x896xf32>
    %5 = arith.addf %2, %4 : vector<4x896xf32>
    %cst_5 = arith.constant 0.000000e+00 : f32
    %6 = vector.broadcast %cst_5 : f32 to vector<4x896xf32>
    %7 = arith.cmpf oge, %5, %6 : vector<4x896xf32>
    %cst_6 = arith.constant 2.000000e-01 : f32
    %8 = vector.broadcast %cst_6 : f32 to vector<4x896xf32>
    %9 = arith.mulf %8, %5 : vector<4x896xf32>
    %10 = arith.select %7, %5, %9 : vector<4x896xi1>, vector<4x896xf32>
    %11 = arith.mulf %10, %10 : vector<4x896xf32>
    %cst_7 = arith.constant dense<0.000000e+00> : vector<896xf32>
    %12 = vector.multi_reduction <add>, %11, %cst_7 [0] : vector<4x896xf32> to vector<896xf32>
    %13 = vector.shape_cast %12 : vector<896xf32> to vector<1x896xf32>
    %cst_8 = arith.constant 2.500000e-01 : f32
    %14 = vector.broadcast %cst_8 : f32 to vector<1x896xf32>
    %15 = arith.mulf %13, %14 : vector<1x896xf32>
    %cst_9 = arith.constant 9.99999993E-9 : f32
    %16 = vector.broadcast %cst_9 : f32 to vector<1x896xf32>
    %17 = arith.addf %15, %16 : vector<1x896xf32>
    %18 = math.rsqrt %17 : vector<1x896xf32>
    %19 = vector.broadcast %18 : vector<1x896xf32> to vector<4x896xf32>
    %20 = arith.mulf %10, %19 : vector<4x896xf32>
    %c0_10 = arith.constant 0 : index
    %c0_11 = arith.constant 0 : index
    %21 = vector.load %arg4[%c0_10, %c0_11] : memref<4x896xf32, #tpu.memory_space<vmem>>, vector<4x896xf32>
    tpu.vector_store %arg4[%c0_10, %c0_11], %20 {strides = array<i32>} : memref<4x896xf32, #tpu.memory_space<vmem>>, vector<4x896xf32>,
    return
  }
  func.func @transform_0(%arg0: i32) -> (i32, i32) {
    %c0_i32 = arith.constant 0 : i32
    %c0_i32_0 = arith.constant 0 : i32
    return %c0_i32, %arg0 : i32, i32
  }
  func.func @transform_1(%arg0: i32) -> (i32, i32) {
    %c0_i32 = arith.constant 0 : i32
    %c0_i32_0 = arith.constant 0 : i32
    %c0_i32_1 = arith.constant 0 : i32
    return %c0_i32, %c0_i32_0 : i32, i32
  }
  func.func @transform_2(%arg0: i32) -> (i32, i32) {
    %c0_i32 = arith.constant 0 : i32
    %c0_i32_0 = arith.constant 0 : i32
    %c0_i32_1 = arith.constant 0 : i32
    return %c0_i32, %c0_i32_0 : i32, i32
  }
  func.func @transform_3(%arg0: i32) -> (i32, i32) {
    %c0_i32 = arith.constant 0 : i32
    %c0_i32_0 = arith.constant 0 : i32
    return %c0_i32, %arg0 : i32, i32
  }
}

</mosaic_0001>

<llo_original>
// kernel: unet_block_forward.8
$region0: #{unet_block_forward.8}
  #allocation0 [shape = 'u32[]', space=smem, size = 0x4, offset = 0x4, fixed_abs, tag = 'smem constant byte address 0x4 - core index']
  #allocation1 [shape = 'u32[72,128]{1,0:T(1,128)}', space=vmem, size = 0x9000, scoped, tag = 'internal scratch']
  %s0 = inlined_call_operand.vmem [shape: f32[36,896], index: 0, kind: input, shape index: {}]
  %s1 = inlined_call_operand.vmem [shape: f32[32,36], index: 1, kind: input, shape index: {}]
  %s2 = inlined_call_operand.vmem [shape: f32[32,1], index: 2, kind: input, shape index: {}]
  %s3 = inlined_call_operand.vmem [shape: f32[32,896], index: 3, kind: output, shape index: {}]
  %s4 = sld [smem:[#allocation0]]
  $region22: #{unet_block_forward.8} parent=0
    _
  %s6 = ssub.s32 1, %s4
  %s7 = scalar_select 0, %s6, %s4
  // Predicated region
  $region2: #{unet_block_forward.8} parent=0 // pred_check
    _
  $region3: #{unet_block_forward.8} parent=0 // pred_check_branch
    %9 = sbr.rel (0) target = $region5
  $region4: #{unet_block_forward.8} parent=0 // pred_region
    _
  $region5: #{unet_block_forward.8} parent=0 // pred_fallthru
    _
  // Predicated region
  $region6: #{unet_block_forward.8} parent=0 // pred_check
    _
  $region7: #{unet_block_forward.8} parent=0 // pred_check_branch
    %11 = sbr.rel (0) target = $region9
  $region8: #{unet_block_forward.8} parent=0 // pred_region
    _
  $region9: #{unet_block_forward.8} parent=0 // pred_fallthru
    _
  // Predicated region
  $region10: #{unet_block_forward.8} parent=0 // pred_check
    _
  $region11: #{unet_block_forward.8} parent=0 // pred_check_branch
    %13 = sbr.rel (0) target = $region13
  $region12: #{unet_block_forward.8} parent=0 // pred_region
    _
  $region13: #{unet_block_forward.8} parent=0 // pred_fallthru
    _
  %v14 = vld [vmem:[%s1] sm:$0xff]
  %v15 = vld [vmem:[%s1 + $0x8] sm:$0xff]
  %v16 = vld [vmem:[%s1 + $0x10] sm:$0xff]
  %v17 = vld [vmem:[%s1 + $0x18] sm:$0xff]
  %v18 = vld [vmem:[%s0] sm:$0xff]
  %v19 = vld [vmem:[%s0 + $0x8] sm:$0xff]
  %v20 = vld [vmem:[%s0 + $0x10] sm:$0xff]
  %v21 = vld [vmem:[%s0 + $0x18] sm:$0xff]
  %v22 = vld [vmem:[%s0 + $0x20] sm:$0xff]
  %v23 = vld [vmem:[%s0 + $0x28] sm:$0xff]
  %v24 = vld [vmem:[%s0 + $0x30] sm:$0xff]
  %v25 = vld [vmem:[%s0 + $0x38] sm:$0xff]
  %v26 = vld [vmem:[%s0 + $0x40] sm:$0xff]
  %v27 = vld [vmem:[%s0 + $0x48] sm:$0xff]
  %v28 = vld [vmem:[%s0 + $0x50] sm:$0xff]
  %v29 = vld [vmem:[%s0 + $0x58] sm:$0xff]
  %v30 = vld [vmem:[%s0 + $0x60] sm:$0xff]
  %v31 = vld [vmem:[%s0 + $0x68] sm:$0xff]
  %v32 = vld [vmem:[%s0 + $0x70] sm:$0xff]
  %v33 = vld [vmem:[%s0 + $0x78] sm:$0xff]
  %v34 = vld [vmem:[%s0 + $0x80] sm:$0xff]
  %v35 = vld [vmem:[%s0 + $0x88] sm:$0xff]
  %v36 = vld [vmem:[%s0 + $0x90] sm:$0xff]
  %v37 = vld [vmem:[%s0 + $0x98] sm:$0xff]
  %v38 = vld [vmem:[%s0 + $0xa0] sm:$0xff]
  %v39 = vld [vmem:[%s0 + $0xa8] sm:$0xff]
  %v40 = vld [vmem:[%s0 + $0xb0] sm:$0xff]
  %v41 = vld [vmem:[%s0 + $0xb8] sm:$0xff]
  %v42 = vld [vmem:[%s0 + $0xc0] sm:$0xff]
  %v43 = vld [vmem:[%s0 + $0xc8] sm:$0xff]
  %v44 = vld [vmem:[%s0 + $0xd0] sm:$0xff]
  %v45 = vld [vmem:[%s0 + $0xd8] sm:$0xff]
  %v46 = vld [vmem:[%s0 + $0xe0] sm:$0xf]
  %v47 = vld [vmem:[%s0 + $0xe8] sm:$0xf]
  %v48 = vld [vmem:[%s0 + $0xf0] sm:$0xf]
  %v49 = vld [vmem:[%s0 + $0xf8] sm:$0xf]
  %v50 = vld [vmem:[%s0 + $0x100] sm:$0xf]
  %v51 = vld [vmem:[%s0 + $0x108] sm:$0xf]
  %v52 = vld [vmem:[%s0 + $0x110] sm:$0xf]
  %v53 = vld [vmem:[%s2] sm:$0xff]
  %v54 = vld [vmem:[%s2 + $0x8] sm:$0xff]
  %v55 = vld [vmem:[%s2 + $0x10] sm:$0xff]
  %v56 = vld [vmem:[%s2 + $0x18] sm:$0xff]
  %58 = vset.pattern.permute.xlu0 0
  %59 = vperm.xlu0 %58, %v53
  %v60 = vpop.permute.xlu0 %59
  %63 = vset.pattern.permute.xlu0 0
  %64 = vperm.xlu0 %63, %v54
  %v65 = vpop.permute.xlu0 %64
  %68 = vset.pattern.permute.xlu0 0
  %69 = vperm.xlu0 %68, %v55
  %v70 = vpop.permute.xlu0 %69
  %73 = vset.pattern.permute.xlu0 0
  %74 = vperm.xlu0 %73, %v56
  %v75 = vpop.permute.xlu0 %74
  %vm77 = vcmask 293888
  %v79 = vsel %vm77, %v14, 0
  %v82 = vsel %vm77, %v15, 0
  %v85 = vsel %vm77, %v16, 0
  %v88 = vsel %vm77, %v17, 0
  %vm90 = vcmask 1043456
  %v92 = vsel %vm90, %v46, 0
  %v95 = vsel %vm90, %v47, 0
  %v98 = vsel %vm90, %v48, 0
  %v101 = vsel %vm90, %v49, 0
  %v104 = vsel %vm90, %v50, 0
  %v107 = vsel %vm90, %v51, 0
  %v110 = vsel %vm90, %v52, 0
  %112 = vmatpush.msra.mxu0 0.0
  %113 = vmatpush.msra.mxu0 0.0
  %114 = vmatpush.msra.mxu0 0.0
  %115 = vmatpush.msra.mxu0 0.0
  %116 = vmatpush.msra.mxu0 0.0
  %117 = vmatpush.msra.mxu0 0.0
  %118 = vmatpush.msra.mxu0 0.0
  %119 = vmatpush.msra.mxu0 0.0
  %120 = vmatpush.msra.mxu0 0.0
  %121 = vmatpush.msra.mxu0 0.0
  %122 = vmatpush.msra.mxu0 0.0
  %123 = vmatpush.msra.mxu0 %v92
  %124 = vmatpush.msra.mxu0 %v39
  %125 = vmatpush.msra.mxu0 %v32
  %126 = vmatpush.msra.mxu0 %v25
  %127 = vmatpush.msra.mxu0 %v18
  %128 = vmatmul.f32.gmra.mxu0 %v79
  %v129 = vpop.f32.mrf.mxu0
  %v130 = vadd.f32 %v60, %v129
  %131 = vmatmul.f32.gmra.mxu0 %v82
  %v132 = vpop.f32.mrf.mxu0
  %v133 = vadd.f32 %v65, %v132
  %134 = vmatmul.f32.gmra.mxu0 %v85
  %v135 = vpop.f32.mrf.mxu0
  %v136 = vadd.f32 %v70, %v135
  %137 = vmatmul.f32.gmra.mxu0 %v88
  %v138 = vpop.f32.mrf.mxu0
  %v139 = vadd.f32 %v75, %v138
  %140 = vdwg.mxu0
  %141 = vmatpush.msra.mxu0 0.0
  %142 = vmatpush.msra.mxu0 0.0
  %143 = vmatpush.msra.mxu0 0.0
  %144 = vmatpush.msra.mxu0 0.0
  %145 = vmatpush.msra.mxu0 0.0
  %146 = vmatpush.msra.mxu0 0.0
  %147 = vmatpush.msra.mxu0 0.0
  %148 = vmatpush.msra.mxu0 0.0
  %149 = vmatpush.msra.mxu0 0.0
  %150 = vmatpush.msra.mxu0 0.0
  %151 = vmatpush.msra.mxu0 0.0
  %152 = vmatpush.msra.mxu0 %v95
  %153 = vmatpush.msra.mxu0 %v40
  %154 = vmatpush.msra.mxu0 %v33
  %155 = vmatpush.msra.mxu0 %v26
  %156 = vmatpush.msra.mxu0 %v19
  %157 = vmatmul.f32.gmra.mxu0 %v79
  %v158 = vpop.f32.mrf.mxu0
  %v159 = vadd.f32 %v60, %v158
  %160 = vmatmul.f32.gmra.mxu0 %v82
  %v161 = vpop.f32.mrf.mxu0
  %v162 = vadd.f32 %v65, %v161
  %163 = vmatmul.f32.gmra.mxu0 %v85
  %v164 = vpop.f32.mrf.mxu0
  %v165 = vadd.f32 %v70, %v164
  %166 = vmatmul.f32.gmra.mxu0 %v88
  %v167 = vpop.f32.mrf.mxu0
  %v168 = vadd.f32 %v75, %v167
  %169 = vdwg.mxu0
  %170 = vmatpush.msra.mxu0 0.0
  %171 = vmatpush.msra.mxu0 0.0
  %172 = vmatpush.msra.mxu0 0.0
  %173 = vmatpush.msra.mxu0 0.0
  %174 = vmatpush.msra.mxu0 0.0
  %175 = vmatpush.msra.mxu0 0.0
  %176 = vmatpush.msra.mxu0 0.0
  %177 = vmatpush.msra.mxu0 0.0
  %178 = vmatpush.msra.mxu0 0.0
  %179 = vmatpush.msra.mxu0 0.0
  %180 = vmatpush.msra.mxu0 0.0
  %181 = vmatpush.msra.mxu0 %v98
  %182 = vmatpush.msra.mxu0 %v41
  %183 = vmatpush.msra.mxu0 %v34
  %184 = vmatpush.msra.mxu0 %v27
  %185 = vmatpush.msra.mxu0 %v20
  %186 = vmatmul.f32.gmra.mxu0 %v79
  %v187 = vpop.f32.mrf.mxu0
  %v188 = vadd.f32 %v60, %v187
  %189 = vmatmul.f32.gmra.mxu0 %v82
  %v190 = vpop.f32.mrf.mxu0
  %v191 = vadd.f32 %v65, %v190
  %192 = vmatmul.f32.gmra.mxu0 %v85
  %v193 = vpop.f32.mrf.mxu0
  %v194 = vadd.f32 %v70, %v193
  %195 = vmatmul.f32.gmra.mxu0 %v88
  %v196 = vpop.f32.mrf.mxu0
  %v197 = vadd.f32 %v75, %v196
  %198 = vdwg.mxu0
  %199 = vmatpush.msra.mxu0 0.0
  %200 = vmatpush.msra.mxu0 0.0
  %201 = vmatpush.msra.mxu0 0.0
  %202 = vmatpush.msra.mxu0 0.0
  %203 = vmatpush.msra.mxu0 0.0
  %204 = vmatpush.msra.mxu0 0.0
  %205 = vmatpush.msra.mxu0 0.0
  %206 = vmatpush.msra.mxu0 0.0
  %207 = vmatpush.msra.mxu0 0.0
  %208 = vmatpush.msra.mxu0 0.0
  %209 = vmatpush.msra.mxu0 0.0
  %210 = vmatpush.msra.mxu0 %v101
  %211 = vmatpush.msra.mxu0 %v42
  %212 = vmatpush.msra.mxu0 %v35
  %213 = vmatpush.msra.mxu0 %v28
  %214 = vmatpush.msra.mxu0 %v21
  %215 = vmatmul.f32.gmra.mxu0 %v79
  %v216 = vpop.f32.mrf.mxu0
  %v217 = vadd.f32 %v60, %v216
  %218 = vmatmul.f32.gmra.mxu0 %v82
  %v219 = vpop.f32.mrf.mxu0
  %v220 = vadd.f32 %v65, %v219
  %221 = vmatmul.f32.gmra.mxu0 %v85
  %v222 = vpop.f32.mrf.mxu0
  %v223 = vadd.f32 %v70, %v222
  %224 = vmatmul.f32.gmra.mxu0 %v88
  %v225 = vpop.f32.mrf.mxu0
  %v226 = vadd.f32 %v75, %v225
  %227 = vdwg.mxu0
  %228 = vmatpush.msra.mxu0 0.0
  %229 = vmatpush.msra.mxu0 0.0
  %230 = vmatpush.msra.mxu0 0.0
  %231 = vmatpush.msra.mxu0 0.0
  %232 = vmatpush.msra.mxu0 0.0
  %233 = vmatpush.msra.mxu0 0.0
  %234 = vmatpush.msra.mxu0 0.0
  %235 = vmatpush.msra.mxu0 0.0
  %236 = vmatpush.msra.mxu0 0.0
  %237 = vmatpush.msra.mxu0 0.0
  %238 = vmatpush.msra.mxu0 0.0
  %239 = vmatpush.msra.mxu0 %v104
  %240 = vmatpush.msra.mxu0 %v43
  %241 = vmatpush.msra.mxu0 %v36
  %242 = vmatpush.msra.mxu0 %v29
  %243 = vmatpush.msra.mxu0 %v22
  %244 = vmatmul.f32.gmra.mxu0 %v79
  %v245 = vpop.f32.mrf.mxu0
  %v246 = vadd.f32 %v60, %v245
  %247 = vmatmul.f32.gmra.mxu0 %v82
  %v248 = vpop.f32.mrf.mxu0
  %v249 = vadd.f32 %v65, %v248
  %250 = vmatmul.f32.gmra.mxu0 %v85
  %v251 = vpop.f32.mrf.mxu0
  %v252 = vadd.f32 %v70, %v251
  %253 = vmatmul.f32.gmra.mxu0 %v88
  %v254 = vpop.f32.mrf.mxu0
  %v255 = vadd.f32 %v75, %v254
  %256 = vdwg.mxu0
  %257 = vmatpush.msra.mxu0 0.0
  %258 = vmatpush.msra.mxu0 0.0
  %259 = vmatpush.msra.mxu0 0.0
  %260 = vmatpush.msra.mxu0 0.0
  %261 = vmatpush.msra.mxu0 0.0
  %262 = vmatpush.msra.mxu0 0.0
  %263 = vmatpush.msra.mxu0 0.0
  %264 = vmatpush.msra.mxu0 0.0
  %265 = vmatpush.msra.mxu0 0.0
  %266 = vmatpush.msra.mxu0 0.0
  %267 = vmatpush.msra.mxu0 0.0
  %268 = vmatpush.msra.mxu0 %v107
  %269 = vmatpush.msra.mxu0 %v44
  %270 = vmatpush.msra.mxu0 %v37
  %271 = vmatpush.msra.mxu0 %v30
  %272 = vmatpush.msra.mxu0 %v23
  %273 = vmatmul.f32.gmra.mxu0 %v79
  %v274 = vpop.f32.mrf.mxu0
  %v275 = vadd.f32 %v60, %v274
  %276 = vmatmul.f32.gmra.mxu0 %v82
  %v277 = vpop.f32.mrf.mxu0
  %v278 = vadd.f32 %v65, %v277
  %279 = vmatmul.f32.gmra.mxu0 %v85
  %v280 = vpop.f32.mrf.mxu0
  %v281 = vadd.f32 %v70, %v280
  %282 = vmatmul.f32.gmra.mxu0 %v88
  %v283 = vpop.f32.mrf.mxu0
  %v284 = vadd.f32 %v75, %v283
  %285 = vdwg.mxu0
  %286 = vmatpush.msra.mxu0 0.0
  %287 = vmatpush.msra.mxu0 0.0
  %288 = vmatpush.msra.mxu0 0.0
  %289 = vmatpush.msra.mxu0 0.0
  %290 = vmatpush.msra.mxu0 0.0
  %291 = vmatpush.msra.mxu0 0.0
  %292 = vmatpush.msra.mxu0 0.0
  %293 = vmatpush.msra.mxu0 0.0
  %294 = vmatpush.msra.mxu0 0.0
  %295 = vmatpush.msra.mxu0 0.0
  %296 = vmatpush.msra.mxu0 0.0
  %297 = vmatpush.msra.mxu0 %v110
  %298 = vmatpush.msra.mxu0 %v45
  %299 = vmatpush.msra.mxu0 %v38
  %300 = vmatpush.msra.mxu0 %v31
  %301 = vmatpush.msra.mxu0 %v24
  %302 = vmatmul.f32.gmra.mxu0 %v79
  %v303 = vpop.f32.mrf.mxu0
  %v304 = vadd.f32 %v60, %v303
  %305 = vmatmul.f32.gmra.mxu0 %v82
  %v306 = vpop.f32.mrf.mxu0
  %v307 = vadd.f32 %v65, %v306
  %308 = vmatmul.f32.gmra.mxu0 %v85
  %v309 = vpop.f32.mrf.mxu0
  %v310 = vadd.f32 %v70, %v309
  %311 = vmatmul.f32.gmra.mxu0 %v88
  %v312 = vpop.f32.mrf.mxu0
  %v313 = vadd.f32 %v75, %v312
  %314 = vdwg.mxu0
  %vm315 = vcmp.ge.f32.partialorder %v130, 0.0
  %vm316 = vcmp.ge.f32.partialorder %v159, 0.0
  %vm317 = vcmp.ge.f32.partialorder %v188, 0.0
  %vm318 = vcmp.ge.f32.partialorder %v217, 0.0
  %vm319 = vcmp.ge.f32.partialorder %v246, 0.0
  %vm320 = vcmp.ge.f32.partialorder %v275, 0.0
  %vm321 = vcmp.ge.f32.partialorder %v304, 0.0
  %vm322 = vcmp.ge.f32.partialorder %v133, 0.0
  %vm323 = vcmp.ge.f32.partialorder %v162, 0.0
  %vm324 = vcmp.ge.f32.partialorder %v191, 0.0
  %vm325 = vcmp.ge.f32.partialorder %v220, 0.0
  %vm326 = vcmp.ge.f32.partialorder %v249, 0.0
  %vm327 = vcmp.ge.f32.partialorder %v278, 0.0
  %vm328 = vcmp.ge.f32.partialorder %v307, 0.0
  %vm329 = vcmp.ge.f32.partialorder %v136, 0.0
  %vm330 = vcmp.ge.f32.partialorder %v165, 0.0
  %vm331 = vcmp.ge.f32.partialorder %v194, 0.0
  %vm332 = vcmp.ge.f32.partialorder %v223, 0.0
  %vm333 = vcmp.ge.f32.partialorder %v252, 0.0
  %vm334 = vcmp.ge.f32.partialorder %v281, 0.0
  %vm335 = vcmp.ge.f32.partialorder %v310, 0.0
  %vm336 = vcmp.ge.f32.partialorder %v139, 0.0
  %vm337 = vcmp.ge.f32.partialorder %v168, 0.0
  %vm338 = vcmp.ge.f32.partialorder %v197, 0.0
  %vm339 = vcmp.ge.f32.partialorder %v226, 0.0
  %vm340 = vcmp.ge.f32.partialorder %v255, 0.0
  %vm341 = vcmp.ge.f32.partialorder %v284, 0.0
  %vm342 = vcmp.ge.f32.partialorder %v313, 0.0
  %v343 = vmul.f32 %v130, 0.2
  %v344 = vmul.f32 %v159, 0.2
  %v345 = vmul.f32 %v188, 0.2
  %v346 = vmul.f32 %v217, 0.2
  %v347 = vmul.f32 %v246, 0.2
  %v348 = vmul.f32 %v275, 0.2
  %v349 = vmul.f32 %v304, 0.2
  %v350 = vmul.f32 %v133, 0.2
  %v351 = vmul.f32 %v162, 0.2
  %v352 = vmul.f32 %v191, 0.2
  %v353 = vmul.f32 %v220, 0.2
  %v354 = vmul.f32 %v249, 0.2
  %v355 = vmul.f32 %v278, 0.2
  %v356 = vmul.f32 %v307, 0.2
  %v357 = vmul.f32 %v136, 0.2
  %v358 = vmul.f32 %v165, 0.2
  %v359 = vmul.f32 %v194, 0.2
  %v360 = vmul.f32 %v223, 0.2
  %v361 = vmul.f32 %v252, 0.2
  %v362 = vmul.f32 %v281, 0.2
  %v363 = vmul.f32 %v310, 0.2
  %v364 = vmul.f32 %v139, 0.2
  %v365 = vmul.f32 %v168, 0.2
  %v366 = vmul.f32 %v197, 0.2
  %v367 = vmul.f32 %v226, 0.2
  %v368 = vmul.f32 %v255, 0.2
  %v369 = vmul.f32 %v284, 0.2
  %v370 = vmul.f32 %v313, 0.2
  %v371 = vsel %vm315, %v130, %v343
  %v372 = vsel %vm316, %v159, %v344
  %v373 = vsel %vm317, %v188, %v345
  %v374 = vsel %vm318, %v217, %v346
  %v375 = vsel %vm319, %v246, %v347
  %v376 = vsel %vm320, %v275, %v348
  %v377 = vsel %vm321, %v304, %v349
  %v378 = vsel %vm322, %v133, %v350
  %v379 = vsel %vm323, %v162, %v351
  %v380 = vsel %vm324, %v191, %v352
  %v381 = vsel %vm325, %v220, %v353
  %v382 = vsel %vm326, %v249, %v354
  %v383 = vsel %vm327, %v278, %v355
  %v384 = vsel %vm328, %v307, %v356
  %v385 = vsel %vm329, %v136, %v357
  %v386 = vsel %vm330, %v165, %v358
  %v387 = vsel %vm331, %v194, %v359
  %v388 = vsel %vm332, %v223, %v360
  %v389 = vsel %vm333, %v252, %v361
  %v390 = vsel %vm334, %v281, %v362
  %v391 = vsel %vm335, %v310, %v363
  %v392 = vsel %vm336, %v139, %v364
  %v393 = vsel %vm337, %v168, %v365
  %v394 = vsel %vm338, %v197, %v366
  %v395 = vsel %vm339, %v226, %v367
  %v396 = vsel %vm340, %v255, %v368
  %v397 = vsel %vm341, %v284, %v369
  %v398 = vsel %vm342, %v313, %v370
  %v399 = vmul.f32 %v371, %v371
  %v400 = vmul.f32 %v372, %v372
  %v401 = vmul.f32 %v373, %v373
  %v402 = vmul.f32 %v374, %v374
  %v403 = vmul.f32 %v375, %v375
  %v404 = vmul.f32 %v376, %v376
  %v405 = vmul.f32 %v377, %v377
  %v406 = vmul.f32 %v378, %v378
  %v407 = vmul.f32 %v379, %v379
  %v408 = vmul.f32 %v380, %v380
  %v409 = vmul.f32 %v381, %v381
  %v410 = vmul.f32 %v382, %v382
  %v411 = vmul.f32 %v383, %v383
  %v412 = vmul.f32 %v384, %v384
  %v413 = vmul.f32 %v385, %v385
  %v414 = vmul.f32 %v386, %v386
  %v415 = vmul.f32 %v387, %v387
  %v416 = vmul.f32 %v388, %v388
  %v417 = vmul.f32 %v389, %v389
  %v418 = vmul.f32 %v390, %v390
  %v419 = vmul.f32 %v391, %v391
  %v420 = vmul.f32 %v392, %v392
  %v421 = vmul.f32 %v393, %v393
  %v422 = vmul.f32 %v394, %v394
  %v423 = vmul.f32 %v395, %v395
  %v424 = vmul.f32 %v396, %v396
  %v425 = vmul.f32 %v397, %v397
  %v426 = vmul.f32 %v398, %v398
  %v427 = vadd.f32 %v399, %v406
  %v428 = vadd.f32 %v427, %v413
  %v429 = vadd.f32 %v428, %v420
  %v430 = vrot.slane %v429, 4
  %v431 = vadd.f32 %v429, %v430
  %v432 = vrot.slane %v431, 2
  %v433 = vadd.f32 %v431, %v432
  %v434 = vrot.slane %v433, 1
  %v435 = vadd.f32 %v433, %v434
  %v436 = vadd.f32 %v400, %v407
  %v437 = vadd.f32 %v436, %v414
  %v438 = vadd.f32 %v437, %v421
  %v439 = vrot.slane %v438, 4
  %v440 = vadd.f32 %v438, %v439
  %v441 = vrot.slane %v440, 2
  %v442 = vadd.f32 %v440, %v441
  %v443 = vrot.slane %v442, 1
  %v444 = vadd.f32 %v442, %v443
  %v445 = vadd.f32 %v401, %v408
  %v446 = vadd.f32 %v445, %v415
  %v447 = vadd.f32 %v446, %v422
  %v448 = vrot.slane %v447, 4
  %v449 = vadd.f32 %v447, %v448
  %v450 = vrot.slane %v449, 2
  %v451 = vadd.f32 %v449, %v450
  %v452 = vrot.slane %v451, 1
  %v453 = vadd.f32 %v451, %v452
  %v454 = vadd.f32 %v402, %v409
  %v455 = vadd.f32 %v454, %v416
  %v456 = vadd.f32 %v455, %v423
  %v457 = vrot.slane %v456, 4
  %v458 = vadd.f32 %v456, %v457
  %v459 = vrot.slane %v458, 2
  %v460 = vadd.f32 %v458, %v459
  %v461 = vrot.slane %v460, 1
  %v462 = vadd.f32 %v460, %v461
  %v463 = vadd.f32 %v403, %v410
  %v464 = vadd.f32 %v463, %v417
  %v465 = vadd.f32 %v464, %v424
  %v466 = vrot.slane %v465, 4
  %v467 = vadd.f32 %v465, %v466
  %v468 = vrot.slane %v467, 2
  %v469 = vadd.f32 %v467, %v468
  %v470 = vrot.slane %v469, 1
  %v471 = vadd.f32 %v469, %v470
  %v472 = vadd.f32 %v404, %v411
  %v473 = vadd.f32 %v472, %v418
  %v474 = vadd.f32 %v473, %v425
  %v475 = vrot.slane %v474, 4
  %v476 = vadd.f32 %v474, %v475
  %v477 = vrot.slane %v476, 2
  %v478 = vadd.f32 %v476, %v477
  %v479 = vrot.slane %v478, 1
  %v480 = vadd.f32 %v478, %v479
  %v481 = vadd.f32 %v405, %v412
  %v482 = vadd.f32 %v481, %v419
  %v483 = vadd.f32 %v482, %v426
  %v484 = vrot.slane %v483, 4
  %v485 = vadd.f32 %v483, %v484
  %v486 = vrot.slane %v485, 2
  %v487 = vadd.f32 %v485, %v486
  %v488 = vrot.slane %v487, 1
  %v489 = vadd.f32 %v487, %v488
  %v490 = vmul.f32 %v435, 0.03125
  %v491 = vmul.f32 %v444, 0.03125
  %v492 = vmul.f32 %v453, 0.03125
  %v493 = vmul.f32 %v462, 0.03125
  %v494 = vmul.f32 %v471, 0.03125
  %v495 = vmul.f32 %v480, 0.03125
  %v496 = vmul.f32 %v489, 0.03125
  %v497 = vadd.f32 %v490, 1e-08
  %v498 = vadd.f32 %v491, 1e-08
  %v499 = vadd.f32 %v492, 1e-08
  %v500 = vadd.f32 %v493, 1e-08
  %v501 = vadd.f32 %v494, 1e-08
  %v502 = vadd.f32 %v495, 1e-08
  %v503 = vadd.f32 %v496, 1e-08
  %v504 = vrsqrt.pop %v497
  %v505 = vmul.f32 %v504, %v497
  %v506 = vmul.f32 %v505, %v504
  %v507 = vmul.f32 0.5, %v506
  %v508 = vsub.f32 1.5, %v507
  %v509 = vmul.f32 %v504, %v508
  %vm510 = vweird.f32 %v497
  %vm511 = vweird.f32 %v504
  %vm512 = vmor %vm510, %vm511
  %v513 = vsel %vm512, %v504, %v509
  %v514 = vrsqrt.pop %v498
  %v515 = vmul.f32 %v514, %v498
  %v516 = vmul.f32 %v515, %v514
  %v517 = vmul.f32 0.5, %v516
  %v518 = vsub.f32 1.5, %v517
  %v519 = vmul.f32 %v514, %v518
  %vm520 = vweird.f32 %v498
  %vm521 = vweird.f32 %v514
  %vm522 = vmor %vm520, %vm521
  %v523 = vsel %vm522, %v514, %v519
  %v524 = vrsqrt.pop %v499
  %v525 = vmul.f32 %v524, %v499
  %v526 = vmul.f32 %v525, %v524
  %v527 = vmul.f32 0.5, %v526
  %v528 = vsub.f32 1.5, %v527
  %v529 = vmul.f32 %v524, %v528
  %vm530 = vweird.f32 %v499
  %vm531 = vweird.f32 %v524
  %vm532 = vmor %vm530, %vm531
  %v533 = vsel %vm532, %v524, %v529
  %v534 = vrsqrt.pop %v500
  %v535 = vmul.f32 %v534, %v500
  %v536 = vmul.f32 %v535, %v534
  %v537 = vmul.f32 0.5, %v536
  %v538 = vsub.f32 1.5, %v537
  %v539 = vmul.f32 %v534, %v538
  %vm540 = vweird.f32 %v500
  %vm541 = vweird.f32 %v534
  %vm542 = vmor %vm540, %vm541
  %v543 = vsel %vm542, %v534, %v539
  %v544 = vrsqrt.pop %v501
  %v545 = vmul.f32 %v544, %v501
  %v546 = vmul.f32 %v545, %v544
  %v547 = vmul.f32 0.5, %v546
  %v548 = vsub.f32 1.5, %v547
  %v549 = vmul.f32 %v544, %v548
  %vm550 = vweird.f32 %v501
  %vm551 = vweird.f32 %v544
  %vm552 = vmor %vm550, %vm551
  %v553 = vsel %vm552, %v544, %v549
  %v554 = vrsqrt.pop %v502
  %v555 = vmul.f32 %v554, %v502
  %v556 = vmul.f32 %v555, %v554
  %v557 = vmul.f32 0.5, %v556
  %v558 = vsub.f32 1.5, %v557
  %v559 = vmul.f32 %v554, %v558
  %vm560 = vweird.f32 %v502
  %vm561 = vweird.f32 %v554
  %vm562 = vmor %vm560, %vm561
  %v563 = vsel %vm562, %v554, %v559
  %v564 = vrsqrt.pop %v503
  %v565 = vmul.f32 %v564, %v503
  %v566 = vmul.f32 %v565, %v564
  %v567 = vmul.f32 0.5, %v566
  %v568 = vsub.f32 1.5, %v567
  %v569 = vmul.f32 %v564, %v568
  %vm570 = vweird.f32 %v503
  %vm571 = vweird.f32 %v564
  %vm572 = vmor %vm570, %vm571
  %v573 = vsel %vm572, %v564, %v569
  %v574 = vmul.f32 %v371, %v513
  %v575 = vmul.f32 %v372, %v523
  %v576 = vmul.f32 %v373, %v533
  %v577 = vmul.f32 %v374, %v543
  %v578 = vmul.f32 %v375, %v553
  %v579 = vmul.f32 %v376, %v563
  %v580 = vmul.f32 %v377, %v573
  %v581 = vmul.f32 %v378, %v513
  %v582 = vmul.f32 %v379, %v523
  %v583 = vmul.f32 %v380, %v533
  %v584 = vmul.f32 %v381, %v543
  %v585 = vmul.f32 %v382, %v553
  %v586 = vmul.f32 %v383, %v563
  %v587 = vmul.f32 %v384, %v573
  %v588 = vmul.f32 %v385, %v513
  %v589 = vmul.f32 %v386, %v523
  %v590 = vmul.f32 %v387, %v533
  %v591 = vmul.f32 %v388, %v543
  %v592 = vmul.f32 %v389, %v553
  %v593 = vmul.f32 %v390, %v563
  %v594 = vmul.f32 %v391, %v573
  %v595 = vmul.f32 %v392, %v513
  %v596 = vmul.f32 %v393, %v523
  %v597 = vmul.f32 %v394, %v533
  %v598 = vmul.f32 %v395, %v543
  %v599 = vmul.f32 %v396, %v553
  %v600 = vmul.f32 %v397, %v563
  %v601 = vmul.f32 %v398, %v573
  %602 = vst [vmem:[%s3] sm:$0xff] %v574
  %603 = vst [vmem:[%s3 + $0x8] sm:$0xff] %v575
  %604 = vst [vmem:[%s3 + $0x10] sm:$0xff] %v576
  %605 = vst [vmem:[%s3 + $0x18] sm:$0xff] %v577
  %606 = vst [vmem:[%s3 + $0x20] sm:$0xff] %v578
  %607 = vst [vmem:[%s3 + $0x28] sm:$0xff] %v579
  %608 = vst [vmem:[%s3 + $0x30] sm:$0xff] %v580
  %609 = vst [vmem:[%s3 + $0x38] sm:$0xff] %v581
  %610 = vst [vmem:[%s3 + $0x40] sm:$0xff] %v582
  %611 = vst [vmem:[%s3 + $0x48] sm:$0xff] %v583
  %612 = vst [vmem:[%s3 + $0x50] sm:$0xff] %v584
  %613 = vst [vmem:[%s3 + $0x58] sm:$0xff] %v585
  %614 = vst [vmem:[%s3 + $0x60] sm:$0xff] %v586
  %615 = vst [vmem:[%s3 + $0x68] sm:$0xff] %v587
  %616 = vst [vmem:[%s3 + $0x70] sm:$0xff] %v588
  %617 = vst [vmem:[%s3 + $0x78] sm:$0xff] %v589
  %618 = vst [vmem:[%s3 + $0x80] sm:$0xff] %v590
  %619 = vst [vmem:[%s3 + $0x88] sm:$0xff] %v591
  %620 = vst [vmem:[%s3 + $0x90] sm:$0xff] %v592
  %621 = vst [vmem:[%s3 + $0x98] sm:$0xff] %v593
  %622 = vst [vmem:[%s3 + $0xa0] sm:$0xff] %v594
  %623 = vst [vmem:[%s3 + $0xa8] sm:$0xff] %v595
  %624 = vst [vmem:[%s3 + $0xb0] sm:$0xff] %v596
  %625 = vst [vmem:[%s3 + $0xb8] sm:$0xff] %v597
  %626 = vst [vmem:[%s3 + $0xc0] sm:$0xff] %v598
  %627 = vst [vmem:[%s3 + $0xc8] sm:$0xff] %v599
  %628 = vst [vmem:[%s3 + $0xd0] sm:$0xff] %v600
  %629 = vst [vmem:[%s3 + $0xd8] sm:$0xff] %v601
  // Predicated region
  $region14: #{unet_block_forward.8} parent=0 // pred_check
    _
  $region15: #{unet_block_forward.8} parent=0 // pred_check_branch
    %631 = sbr.rel (0) target = $region17
  $region16: #{unet_block_forward.8} parent=0 // pred_region
    _
  $region17: #{unet_block_forward.8} parent=0 // pred_fallthru
    _
  // Predicated region
  $region18: #{unet_block_forward.8} parent=0 // pred_check
    _
  $region19: #{unet_block_forward.8} parent=0 // pred_check_branch
    %633 = sbr.rel (0) target = $region21
  $region20: #{unet_block_forward.8} parent=0 // pred_region
    _
  $region21: #{unet_block_forward.8} parent=0 // pred_fallthru
    _

// kernel: unet_block_forward.9
$region0: #{unet_block_forward.9}
  #allocation0 [shape = 'u32[]', space=smem, size = 0x4, offset = 0x4, fixed_abs, tag = 'smem constant byte address 0x4 - core index']
  #allocation1 [shape = 'u32[72,128]{1,0:T(1,128)}', space=vmem, size = 0x9000, scoped, tag = 'internal scratch']
  %s0 = inlined_call_operand.vmem [shape: f32[288,224], index: 0, kind: input, shape index: {}]
  %s1 = inlined_call_operand.vmem [shape: f32[64,288], index: 1, kind: input, shape index: {}]
  %s2 = inlined_call_operand.vmem [shape: f32[64,1], index: 2, kind: input, shape index: {}]
  %s3 = inlined_call_operand.vmem [shape: f32[64,224], index: 3, kind: output, shape index: {}]
  %s4 = sld [smem:[#allocation0]]
  $region22: #{unet_block_forward.9} parent=0
    _
  %s6 = ssub.s32 1, %s4
  %s7 = scalar_select 0, %s6, %s4
  // Predicated region
  $region2: #{unet_block_forward.9} parent=0 // pred_check
    _
  $region3: #{unet_block_forward.9} parent=0 // pred_check_branch
    %9 = sbr.rel (0) target = $region5
  $region4: #{unet_block_forward.9} parent=0 // pred_region
    _
  $region5: #{unet_block_forward.9} parent=0 // pred_fallthru
    _
  // Predicated region
  $region6: #{unet_block_forward.9} parent=0 // pred_check
    _
  $region7: #{unet_block_forward.9} parent=0 // pred_check_branch
    %11 = sbr.rel (0) target = $region9
  $region8: #{unet_block_forward.9} parent=0 // pred_region
    _
  $region9: #{unet_block_forward.9} parent=0 // pred_fallthru
    _
  // Predicated region
  $region10: #{unet_block_forward.9} parent=0 // pred_check
    _
  $region11: #{unet_block_forward.9} parent=0 // pred_check_branch
    %13 = sbr.rel (0) target = $region13
  $region12: #{unet_block_forward.9} parent=0 // pred_region
    _
  $region13: #{unet_block_forward.9} parent=0 // pred_fallthru
    _
  %v14 = vld [vmem:[%s1] sm:$0xff]
  %v15 = vld [vmem:[%s1 + $0x8] sm:$0xff]
  %v16 = vld [vmem:[%s1 + $0x10] sm:$0xff]
  %v17 = vld [vmem:[%s1 + $0x18] sm:$0xff]
  %v18 = vld [vmem:[%s1 + $0x20] sm:$0xff]
  %v19 = vld [vmem:[%s1 + $0x28] sm:$0xff]
  %v20 = vld [vmem:[%s1 + $0x30] sm:$0xff]
  %v21 = vld [vmem:[%s1 + $0x38] sm:$0xff]
  %v22 = vld [vmem:[%s1 + $0x40] sm:$0xff]
  %v23 = vld [vmem:[%s1 + $0x48] sm:$0xff]
  %v24 = vld [vmem:[%s1 + $0x50] sm:$0xff]
  %v25 = vld [vmem:[%s1 + $0x58] sm:$0xff]
  %v26 = vld [vmem:[%s1 + $0x60] sm:$0xff]
  %v27 = vld [vmem:[%s1 + $0x68] sm:$0xff]
  %v28 = vld [vmem:[%s1 + $0x70] sm:$0xff]
  %v29 = vld [vmem:[%s1 + $0x78] sm:$0xff]
  %v30 = vld [vmem:[%s1 + $0x80] sm:$0xff]
  %v31 = vld [vmem:[%s1 + $0x88] sm:$0xff]
  %v32 = vld [vmem:[%s1 + $0x90] sm:$0xff]
  %v33 = vld [vmem:[%s1 + $0x98] sm:$0xff]
  %v34 = vld [vmem:[%s1 + $0xa0] sm:$0xff]
  %v35 = vld [vmem:[%s1 + $0xa8] sm:$0xff]
  %v36 = vld [vmem:[%s1 + $0xb0] sm:$0xff]
  %v37 = vld [vmem:[%s1 + $0xb8] sm:$0xff]
  %v38 = vld [vmem:[%s0] sm:$0xff]
  %v39 = vld [vmem:[%s0 + $0x8] sm:$0xff]
  %v40 = vld [vmem:[%s0 + $0x10] sm:$0xff]
  %v41 = vld [vmem:[%s0 + $0x18] sm:$0xff]
  %v42 = vld [vmem:[%s0 + $0x20] sm:$0xff]
  %v43 = vld [vmem:[%s0 + $0x28] sm:$0xff]
  %v44 = vld [vmem:[%s0 + $0x30] sm:$0xff]
  %v45 = vld [vmem:[%s0 + $0x38] sm:$0xff]
  %v46 = vld [vmem:[%s0 + $0x40] sm:$0xff]
  %v47 = vld [vmem:[%s0 + $0x48] sm:$0xff]
  %v48 = vld [vmem:[%s0 + $0x50] sm:$0xff]
  %v49 = vld [vmem:[%s0 + $0x58] sm:$0xff]
  %v50 = vld [vmem:[%s0 + $0x60] sm:$0xff]
  %v51 = vld [vmem:[%s0 + $0x68] sm:$0xff]
  %v52 = vld [vmem:[%s0 + $0x70] sm:$0xff]
  %v53 = vld [vmem:[%s0 + $0x78] sm:$0xff]
  %v54 = vld [vmem:[%s0 + $0x80] sm:$0xff]
  %v55 = vld [vmem:[%s0 + $0x88] sm:$0xff]
  %v56 = vld [vmem:[%s0 + $0x90] sm:$0xff]
  %v57 = vld [vmem:[%s0 + $0x98] sm:$0xff]
  %v58 = vld [vmem:[%s0 + $0xa0] sm:$0xff]
  %v59 = vld [vmem:[%s0 + $0xa8] sm:$0xff]
  %v60 = vld [vmem:[%s0 + $0xb0] sm:$0xff]
  %v61 = vld [vmem:[%s0 + $0xb8] sm:$0xff]
  %v62 = vld [vmem:[%s0 + $0xc0] sm:$0xff]
  %v63 = vld [vmem:[%s0 + $0xc8] sm:$0xff]
  %v64 = vld [vmem:[%s0 + $0xd0] sm:$0xff]
  %v65 = vld [vmem:[%s0 + $0xd8] sm:$0xff]
  %v66 = vld [vmem:[%s0 + $0xe0] sm:$0xff]
  %v67 = vld [vmem:[%s0 + $0xe8] sm:$0xff]
  %v68 = vld [vmem:[%s0 + $0xf0] sm:$0xff]
  %v69 = vld [vmem:[%s0 + $0xf8] sm:$0xff]
  %v70 = vld [vmem:[%s0 + $0x100] sm:$0xff]
  %v71 = vld [vmem:[%s0 + $0x108] sm:$0xff]
  %v72 = vld [vmem:[%s0 + $0x110] sm:$0xff]
  %v73 = vld [vmem:[%s0 + $0x118] sm:$0xff]
  %v74 = vld [vmem:[%s0 + $0x120] sm:$0xff]
  %v75 = vld [vmem:[%s0 + $0x128] sm:$0xff]
  %v76 = vld [vmem:[%s0 + $0x130] sm:$0xff]
  %v77 = vld [vmem:[%s0 + $0x138] sm:$0xff]
  %v78 = vld [vmem:[%s0 + $0x140] sm:$0xff]
  %v79 = vld [vmem:[%s0 + $0x148] sm:$0xff]
  %v80 = vld [vmem:[%s0 + $0x150] sm:$0xff]
  %v81 = vld [vmem:[%s0 + $0x158] sm:$0xff]
  %v82 = vld [vmem:[%s0 + $0x160] sm:$0xff]
  %v83 = vld [vmem:[%s0 + $0x168] sm:$0xff]
  %v84 = vld [vmem:[%s0 + $0x170] sm:$0xff]
  %v85 = vld [vmem:[%s0 + $0x178] sm:$0xff]
  %v86 = vld [vmem:[%s0 + $0x180] sm:$0xff]
  %v87 = vld [vmem:[%s0 + $0x188] sm:$0xff]
  %v88 = vld [vmem:[%s0 + $0x190] sm:$0xff]
  %v89 = vld [vmem:[%s0 + $0x198] sm:$0xff]
  %v90 = vld [vmem:[%s0 + $0x1a0] sm:$0xff]
  %v91 = vld [vmem:[%s0 + $0x1a8] sm:$0xff]
  %v92 = vld [vmem:[%s0 + $0x1b0] sm:$0xff]
  %v93 = vld [vmem:[%s0 + $0x1b8] sm:$0xff]
  %v94 = vld [vmem:[%s0 + $0x1c0] sm:$0xff]
  %v95 = vld [vmem:[%s0 + $0x1c8] sm:$0xff]
  %v96 = vld [vmem:[%s0 + $0x1d0] sm:$0xff]
  %v97 = vld [vmem:[%s0 + $0x1d8] sm:$0xff]
  %v98 = vld [vmem:[%s0 + $0x1e0] sm:$0xff]
  %v99 = vld [vmem:[%s0 + $0x1e8] sm:$0xff]
  %v100 = vld [vmem:[%s0 + $0x1f0] sm:$0xff]
  %v101 = vld [vmem:[%s0 + $0x1f8] sm:$0xff]
  %v102 = vld [vmem:[%s0 + $0x200] sm:$0xff]
  %v103 = vld [vmem:[%s0 + $0x208] sm:$0xff]
  %v104 = vld [vmem:[%s0 + $0x210] sm:$0xff]
  %v105 = vld [vmem:[%s0 + $0x218] sm:$0xff]
  %v106 = vld [vmem:[%s0 + $0x220] sm:$0xff]
  %v107 = vld [vmem:[%s0 + $0x228] sm:$0xff]
  %v108 = vld [vmem:[%s0 + $0x230] sm:$0xff]
  %v109 = vld [vmem:[%s0 + $0x238] sm:$0xff]
  %v110 = vld [vmem:[%s2] sm:$0xff]
  %v111 = vld [vmem:[%s2 + $0x8] sm:$0xff]
  %v112 = vld [vmem:[%s2 + $0x10] sm:$0xff]
  %v113 = vld [vmem:[%s2 + $0x18] sm:$0xff]
  %v114 = vld [vmem:[%s2 + $0x20] sm:$0xff]
  %v115 = vld [vmem:[%s2 + $0x28] sm:$0xff]
  %v116 = vld [vmem:[%s2 + $0x30] sm:$0xff]
  %v117 = vld [vmem:[%s2 + $0x38] sm:$0xff]
  %119 = vset.pattern.permute.xlu0 0
  %120 = vperm.xlu0 %119, %v110
  %v121 = vpop.permute.xlu0 %120
  %124 = vset.pattern.permute.xlu0 0
  %125 = vperm.xlu0 %124, %v111
  %v126 = vpop.permute.xlu0 %125
  %129 = vset.pattern.permute.xlu0 0
  %130 = vperm.xlu0 %129, %v112
  %v131 = vpop.permute.xlu0 %130
  %134 = vset.pattern.permute.xlu0 0
  %135 = vperm.xlu0 %134, %v113
  %v136 = vpop.permute.xlu0 %135
  %139 = vset.pattern.permute.xlu0 0
  %140 = vperm.xlu0 %139, %v114
  %v141 = vpop.permute.xlu0 %140
  %144 = vset.pattern.permute.xlu0 0
  %145 = vperm.xlu0 %144, %v115
  %v146 = vpop.permute.xlu0 %145
  %149 = vset.pattern.permute.xlu0 0
  %150 = vperm.xlu0 %149, %v116
  %v151 = vpop.permute.xlu0 %150
  %154 = vset.pattern.permute.xlu0 0
  %155 = vperm.xlu0 %154, %v117
  %v156 = vpop.permute.xlu0 %155
  %vm158 = vcmask 261120
  %v160 = vsel %vm158, %v16, 0
  %v163 = vsel %vm158, %v19, 0
  %v166 = vsel %vm158, %v22, 0
  %v169 = vsel %vm158, %v25, 0
  %v172 = vsel %vm158, %v28, 0
  %v175 = vsel %vm158, %v31, 0
  %v178 = vsel %vm158, %v34, 0
  %v181 = vsel %vm158, %v37, 0
  %183 = vmatpush.msra.mxu0 %v68
  %184 = vmatpush.msra.mxu0 %v66
  %185 = vmatpush.msra.mxu0 %v64
  %186 = vmatpush.msra.mxu0 %v62
  %187 = vmatpush.msra.mxu0 %v60
  %188 = vmatpush.msra.mxu0 %v58
  %189 = vmatpush.msra.mxu0 %v56
  %190 = vmatpush.msra.mxu0 %v54
  %191 = vmatpush.msra.mxu0 %v52
  %192 = vmatpush.msra.mxu0 %v50
  %193 = vmatpush.msra.mxu0 %v48
  %194 = vmatpush.msra.mxu0 %v46
  %195 = vmatpush.msra.mxu0 %v44
  %196 = vmatpush.msra.mxu0 %v42
  %197 = vmatpush.msra.mxu0 %v40
  %198 = vmatpush.msra.mxu0 %v38
  %199 = vmatmul.f32.gmra.mxu0 %v14
  %v200 = vpop.f32.mrf.mxu0
  %v201 = vadd.f32 %v121, %v200
  %202 = vmatmul.f32.gmra.mxu0 %v17
  %v203 = vpop.f32.mrf.mxu0
  %v204 = vadd.f32 %v126, %v203
  %205 = vmatmul.f32.gmra.mxu0 %v20
  %v206 = vpop.f32.mrf.mxu0
  %v207 = vadd.f32 %v131, %v206
  %208 = vmatmul.f32.gmra.mxu0 %v23
  %v209 = vpop.f32.mrf.mxu0
  %v210 = vadd.f32 %v136, %v209
  %211 = vmatmul.f32.gmra.mxu0 %v26
  %v212 = vpop.f32.mrf.mxu0
  %v213 = vadd.f32 %v141, %v212
  %214 = vmatmul.f32.gmra.mxu0 %v29
  %v215 = vpop.f32.mrf.mxu0
  %v216 = vadd.f32 %v146, %v215
  %217 = vmatmul.f32.gmra.mxu0 %v32
  %v218 = vpop.f32.mrf.mxu0
  %v219 = vadd.f32 %v151, %v218
  %220 = vmatmul.f32.gmra.mxu0 %v35
  %v221 = vpop.f32.mrf.mxu0
  %v222 = vadd.f32 %v156, %v221
  %223 = vdwg.mxu0
  %224 = vmatpush.msra.mxu0 %v100
  %225 = vmatpush.msra.mxu0 %v98
  %226 = vmatpush.msra.mxu0 %v96
  %227 = vmatpush.msra.mxu0 %v94
  %228 = vmatpush.msra.mxu0 %v92
  %229 = vmatpush.msra.mxu0 %v90
  %230 = vmatpush.msra.mxu0 %v88
  %231 = vmatpush.msra.mxu0 %v86
  %232 = vmatpush.msra.mxu0 %v84
  %233 = vmatpush.msra.mxu0 %v82
  %234 = vmatpush.msra.mxu0 %v80
  %235 = vmatpush.msra.mxu0 %v78
  %236 = vmatpush.msra.mxu0 %v76
  %237 = vmatpush.msra.mxu0 %v74
  %238 = vmatpush.msra.mxu0 %v72
  %239 = vmatpush.msra.mxu0 %v70
  %240 = vmatmul.f32.gmra.mxu0 %v15
  %v241 = vpop.f32.mrf.mxu0
  %v242 = vadd.f32 %v201, %v241
  %243 = vmatmul.f32.gmra.mxu0 %v18
  %v244 = vpop.f32.mrf.mxu0
  %v245 = vadd.f32 %v204, %v244
  %246 = vmatmul.f32.gmra.mxu0 %v21
  %v247 = vpop.f32.mrf.mxu0
  %v248 = vadd.f32 %v207, %v247
  %249 = vmatmul.f32.gmra.mxu0 %v24
  %v250 = vpop.f32.mrf.mxu0
  %v251 = vadd.f32 %v210, %v250
  %252 = vmatmul.f32.gmra.mxu0 %v27
  %v253 = vpop.f32.mrf.mxu0
  %v254 = vadd.f32 %v213, %v253
  %255 = vmatmul.f32.gmra.mxu0 %v30
  %v256 = vpop.f32.mrf.mxu0
  %v257 = vadd.f32 %v216, %v256
  %258 = vmatmul.f32.gmra.mxu0 %v33
  %v259 = vpop.f32.mrf.mxu0
  %v260 = vadd.f32 %v219, %v259
  %261 = vmatmul.f32.gmra.mxu0 %v36
  %v262 = vpop.f32.mrf.mxu0
  %v263 = vadd.f32 %v222, %v262
  %264 = vdwg.mxu0
  %265 = vmatpush.msra.mxu0 0.0
  %266 = vmatpush.msra.mxu0 0.0
  %267 = vmatpush.msra.mxu0 0.0
  %268 = vmatpush.msra.mxu0 0.0
  %269 = vmatpush.msra.mxu0 0.0
  %270 = vmatpush.msra.mxu0 0.0
  %271 = vmatpush.msra.mxu0 0.0
  %272 = vmatpush.msra.mxu0 0.0
  %273 = vmatpush.msra.mxu0 0.0
  %274 = vmatpush.msra.mxu0 0.0
  %275 = vmatpush.msra.mxu0 0.0
  %276 = vmatpush.msra.mxu0 0.0
  %277 = vmatpush.msra.mxu0 %v108
  %278 = vmatpush.msra.mxu0 %v106
  %279 = vmatpush.msra.mxu0 %v104
  %280 = vmatpush.msra.mxu0 %v102
  %281 = vmatmul.f32.gmra.mxu0 %v160
  %v282 = vpop.f32.mrf.mxu0
  %v283 = vadd.f32 %v242, %v282
  %284 = vmatmul.f32.gmra.mxu0 %v163
  %v285 = vpop.f32.mrf.mxu0
  %v286 = vadd.f32 %v245, %v285
  %287 = vmatmul.f32.gmra.mxu0 %v166
  %v288 = vpop.f32.mrf.mxu0
  %v289 = vadd.f32 %v248, %v288
  %290 = vmatmul.f32.gmra.mxu0 %v169
  %v291 = vpop.f32.mrf.mxu0
  %v292 = vadd.f32 %v251, %v291
  %293 = vmatmul.f32.gmra.mxu0 %v172
  %v294 = vpop.f32.mrf.mxu0
  %v295 = vadd.f32 %v254, %v294
  %296 = vmatmul.f32.gmra.mxu0 %v175
  %v297 = vpop.f32.mrf.mxu0
  %v298 = vadd.f32 %v257, %v297
  %299 = vmatmul.f32.gmra.mxu0 %v178
  %v300 = vpop.f32.mrf.mxu0
  %v301 = vadd.f32 %v260, %v300
  %302 = vmatmul.f32.gmra.mxu0 %v181
  %v303 = vpop.f32.mrf.mxu0
  %v304 = vadd.f32 %v263, %v303
  %305 = vdwg.mxu0
  %306 = vmatpush.msra.mxu0 %v69
  %307 = vmatpush.msra.mxu0 %v67
  %308 = vmatpush.msra.mxu0 %v65
  %309 = vmatpush.msra.mxu0 %v63
  %310 = vmatpush.msra.mxu0 %v61
  %311 = vmatpush.msra.mxu0 %v59
  %312 = vmatpush.msra.mxu0 %v57
  %313 = vmatpush.msra.mxu0 %v55
  %314 = vmatpush.msra.mxu0 %v53
  %315 = vmatpush.msra.mxu0 %v51
  %316 = vmatpush.msra.mxu0 %v49
  %317 = vmatpush.msra.mxu0 %v47
  %318 = vmatpush.msra.mxu0 %v45
  %319 = vmatpush.msra.mxu0 %v43
  %320 = vmatpush.msra.mxu0 %v41
  %321 = vmatpush.msra.mxu0 %v39
  %322 = vmatmul.f32.gmra.mxu0 %v14
  %v323 = vpop.f32.mrf.mxu0
  %v324 = vadd.f32 %v121, %v323
  %325 = vmatmul.f32.gmra.mxu0 %v17
  %v326 = vpop.f32.mrf.mxu0
  %v327 = vadd.f32 %v126, %v326
  %328 = vmatmul.f32.gmra.mxu0 %v20
  %v329 = vpop.f32.mrf.mxu0
  %v330 = vadd.f32 %v131, %v329
  %331 = vmatmul.f32.gmra.mxu0 %v23
  %v332 = vpop.f32.mrf.mxu0
  %v333 = vadd.f32 %v136, %v332
  %334 = vmatmul.f32.gmra.mxu0 %v26
  %v335 = vpop.f32.mrf.mxu0
  %v336 = vadd.f32 %v141, %v335
  %337 = vmatmul.f32.gmra.mxu0 %v29
  %v338 = vpop.f32.mrf.mxu0
  %v339 = vadd.f32 %v146, %v338
  %340 = vmatmul.f32.gmra.mxu0 %v32
  %v341 = vpop.f32.mrf.mxu0
  %v342 = vadd.f32 %v151, %v341
  %343 = vmatmul.f32.gmra.mxu0 %v35
  %v344 = vpop.f32.mrf.mxu0
  %v345 = vadd.f32 %v156, %v344
  %346 = vdwg.mxu0
  %347 = vmatpush.msra.mxu0 %v101
  %348 = vmatpush.msra.mxu0 %v99
  %349 = vmatpush.msra.mxu0 %v97
  %350 = vmatpush.msra.mxu0 %v95
  %351 = vmatpush.msra.mxu0 %v93
  %352 = vmatpush.msra.mxu0 %v91
  %353 = vmatpush.msra.mxu0 %v89
  %354 = vmatpush.msra.mxu0 %v87
  %355 = vmatpush.msra.mxu0 %v85
  %356 = vmatpush.msra.mxu0 %v83
  %357 = vmatpush.msra.mxu0 %v81
  %358 = vmatpush.msra.mxu0 %v79
  %359 = vmatpush.msra.mxu0 %v77
  %360 = vmatpush.msra.mxu0 %v75
  %361 = vmatpush.msra.mxu0 %v73
  %362 = vmatpush.msra.mxu0 %v71
  %363 = vmatmul.f32.gmra.mxu0 %v15
  %v364 = vpop.f32.mrf.mxu0
  %v365 = vadd.f32 %v324, %v364
  %366 = vmatmul.f32.gmra.mxu0 %v18
  %v367 = vpop.f32.mrf.mxu0
  %v368 = vadd.f32 %v327, %v367
  %369 = vmatmul.f32.gmra.mxu0 %v21
  %v370 = vpop.f32.mrf.mxu0
  %v371 = vadd.f32 %v330, %v370
  %372 = vmatmul.f32.gmra.mxu0 %v24
  %v373 = vpop.f32.mrf.mxu0
  %v374 = vadd.f32 %v333, %v373
  %375 = vmatmul.f32.gmra.mxu0 %v27
  %v376 = vpop.f32.mrf.mxu0
  %v377 = vadd.f32 %v336, %v376
  %378 = vmatmul.f32.gmra.mxu0 %v30
  %v379 = vpop.f32.mrf.mxu0
  %v380 = vadd.f32 %v339, %v379
  %381 = vmatmul.f32.gmra.mxu0 %v33
  %v382 = vpop.f32.mrf.mxu0
  %v383 = vadd.f32 %v342, %v382
  %384 = vmatmul.f32.gmra.mxu0 %v36
  %v385 = vpop.f32.mrf.mxu0
  %v386 = vadd.f32 %v345, %v385
  %387 = vdwg.mxu0
  %388 = vmatpush.msra.mxu0 0.0
  %389 = vmatpush.msra.mxu0 0.0
  %390 = vmatpush.msra.mxu0 0.0
  %391 = vmatpush.msra.mxu0 0.0
  %392 = vmatpush.msra.mxu0 0.0
  %393 = vmatpush.msra.mxu0 0.0
  %394 = vmatpush.msra.mxu0 0.0
  %395 = vmatpush.msra.mxu0 0.0
  %396 = vmatpush.msra.mxu0 0.0
  %397 = vmatpush.msra.mxu0 0.0
  %398 = vmatpush.msra.mxu0 0.0
  %399 = vmatpush.msra.mxu0 0.0
  %400 = vmatpush.msra.mxu0 %v109
  %401 = vmatpush.msra.mxu0 %v107
  %402 = vmatpush.msra.mxu0 %v105
  %403 = vmatpush.msra.mxu0 %v103
  %404 = vmatmul.f32.gmra.mxu0 %v160
  %v405 = vpop.f32.mrf.mxu0
  %v406 = vadd.f32 %v365, %v405
  %407 = vmatmul.f32.gmra.mxu0 %v163
  %v408 = vpop.f32.mrf.mxu0
  %v409 = vadd.f32 %v368, %v408
  %410 = vmatmul.f32.gmra.mxu0 %v166
  %v411 = vpop.f32.mrf.mxu0
  %v412 = vadd.f32 %v371, %v411
  %413 = vmatmul.f32.gmra.mxu0 %v169
  %v414 = vpop.f32.mrf.mxu0
  %v415 = vadd.f32 %v374, %v414
  %416 = vmatmul.f32.gmra.mxu0 %v172
  %v417 = vpop.f32.mrf.mxu0
  %v418 = vadd.f32 %v377, %v417
  %419 = vmatmul.f32.gmra.mxu0 %v175
  %v420 = vpop.f32.mrf.mxu0
  %v421 = vadd.f32 %v380, %v420
  %422 = vmatmul.f32.gmra.mxu0 %v178
  %v423 = vpop.f32.mrf.mxu0
  %v424 = vadd.f32 %v383, %v423
  %425 = vmatmul.f32.gmra.mxu0 %v181
  %v426 = vpop.f32.mrf.mxu0
  %v427 = vadd.f32 %v386, %v426
  %428 = vdwg.mxu0
  %vm429 = vcmp.ge.f32.partialorder %v283, 0.0
  %vm430 = vcmp.ge.f32.partialorder %v406, 0.0
  %vm431 = vcmp.ge.f32.partialorder %v286, 0.0
  %vm432 = vcmp.ge.f32.partialorder %v409, 0.0
  %vm433 = vcmp.ge.f32.partialorder %v289, 0.0
  %vm434 = vcmp.ge.f32.partialorder %v412, 0.0
  %vm435 = vcmp.ge.f32.partialorder %v292, 0.0
  %vm436 = vcmp.ge.f32.partialorder %v415, 0.0
  %vm437 = vcmp.ge.f32.partialorder %v295, 0.0
  %vm438 = vcmp.ge.f32.partialorder %v418, 0.0
  %vm439 = vcmp.ge.f32.partialorder %v298, 0.0
  %vm440 = vcmp.ge.f32.partialorder %v421, 0.0
  %vm441 = vcmp.ge.f32.partialorder %v301, 0.0
  %vm442 = vcmp.ge.f32.partialorder %v424, 0.0
  %vm443 = vcmp.ge.f32.partialorder %v304, 0.0
  %vm444 = vcmp.ge.f32.partialorder %v427, 0.0
  %v445 = vmul.f32 %v283, 0.2
  %v446 = vmul.f32 %v406, 0.2
  %v447 = vmul.f32 %v286, 0.2
  %v448 = vmul.f32 %v409, 0.2
  %v449 = vmul.f32 %v289, 0.2
  %v450 = vmul.f32 %v412, 0.2
  %v451 = vmul.f32 %v292, 0.2
  %v452 = vmul.f32 %v415, 0.2
  %v453 = vmul.f32 %v295, 0.2
  %v454 = vmul.f32 %v418, 0.2
  %v455 = vmul.f32 %v298, 0.2
  %v456 = vmul.f32 %v421, 0.2
  %v457 = vmul.f32 %v301, 0.2
  %v458 = vmul.f32 %v424, 0.2
  %v459 = vmul.f32 %v304, 0.2
  %v460 = vmul.f32 %v427, 0.2
  %v461 = vsel %vm429, %v283, %v445
  %v462 = vsel %vm430, %v406, %v446
  %v463 = vsel %vm431, %v286, %v447
  %v464 = vsel %vm432, %v409, %v448
  %v465 = vsel %vm433, %v289, %v449
  %v466 = vsel %vm434, %v412, %v450
  %v467 = vsel %vm435, %v292, %v451
  %v468 = vsel %vm436, %v415, %v452
  %v469 = vsel %vm437, %v295, %v453
  %v470 = vsel %vm438, %v418, %v454
  %v471 = vsel %vm439, %v298, %v455
  %v472 = vsel %vm440, %v421, %v456
  %v473 = vsel %vm441, %v301, %v457
  %v474 = vsel %vm442, %v424, %v458
  %v475 = vsel %vm443, %v304, %v459
  %v476 = vsel %vm444, %v427, %v460
  %v477 = vmul.f32 %v461, %v461
  %v478 = vmul.f32 %v462, %v462
  %v479 = vmul.f32 %v463, %v463
  %v480 = vmul.f32 %v464, %v464
  %v481 = vmul.f32 %v465, %v465
  %v482 = vmul.f32 %v466, %v466
  %v483 = vmul.f32 %v467, %v467
  %v484 = vmul.f32 %v468, %v468
  %v485 = vmul.f32 %v469, %v469
  %v486 = vmul.f32 %v470, %v470
  %v487 = vmul.f32 %v471, %v471
  %v488 = vmul.f32 %v472, %v472
  %v489 = vmul.f32 %v473, %v473
  %v490 = vmul.f32 %v474, %v474
  %v491 = vmul.f32 %v475, %v475
  %v492 = vmul.f32 %v476, %v476
  %v493 = vadd.f32 %v477, %v479
  %v494 = vadd.f32 %v493, %v481
  %v495 = vadd.f32 %v494, %v483
  %v496 = vadd.f32 %v495, %v485
  %v497 = vadd.f32 %v496, %v487
  %v498 = vadd.f32 %v497, %v489
  %v499 = vadd.f32 %v498, %v491
  %v500 = vrot.slane %v499, 4
  %v501 = vadd.f32 %v499, %v500
  %v502 = vrot.slane %v501, 2
  %v503 = vadd.f32 %v501, %v502
  %v504 = vrot.slane %v503, 1
  %v505 = vadd.f32 %v503, %v504
  %vm506 = vcmask 785408
  %v507 = vsel %vm506, %v478, 0.0
  %v508 = vsel %vm506, %v480, 0.0
  %v509 = vadd.f32 %v507, %v508
  %v510 = vsel %vm506, %v482, 0.0
  %v511 = vadd.f32 %v509, %v510
  %v512 = vsel %vm506, %v484, 0.0
  %v513 = vadd.f32 %v511, %v512
  %v514 = vsel %vm506, %v486, 0.0
  %v515 = vadd.f32 %v513, %v514
  %v516 = vsel %vm506, %v488, 0.0
  %v517 = vadd.f32 %v515, %v516
  %v518 = vsel %vm506, %v490, 0.0
  %v519 = vadd.f32 %v517, %v518
  %v520 = vsel %vm506, %v492, 0.0
  %v521 = vadd.f32 %v519, %v520
  %v522 = vrot.slane %v521, 4
  %v523 = vadd.f32 %v521, %v522
  %v524 = vrot.slane %v523, 2
  %v525 = vadd.f32 %v523, %v524
  %v526 = vrot.slane %v525, 1
  %v527 = vadd.f32 %v525, %v526
  %v528 = vmul.f32 %v505, 0.015625
  %v529 = vmul.f32 %v527, 0.015625
  %v530 = vadd.f32 %v528, 1e-08
  %v531 = vadd.f32 %v529, 1e-08
  %v532 = vrsqrt.pop %v530
  %v533 = vmul.f32 %v532, %v530
  %v534 = vmul.f32 %v533, %v532
  %v535 = vmul.f32 0.5, %v534
  %v536 = vsub.f32 1.5, %v535
  %v537 = vmul.f32 %v532, %v536
  %vm538 = vweird.f32 %v530
  %vm539 = vweird.f32 %v532
  %vm540 = vmor %vm538, %vm539
  %v541 = vsel %vm540, %v532, %v537
  %v542 = vrsqrt.pop %v531
  %v543 = vmul.f32 %v542, %v531
  %v544 = vmul.f32 %v543, %v542
  %v545 = vmul.f32 0.5, %v544
  %v546 = vsub.f32 1.5, %v545
  %v547 = vmul.f32 %v542, %v546
  %vm548 = vweird.f32 %v531
  %vm549 = vweird.f32 %v542
  %vm550 = vmor %vm548, %vm549
  %v551 = vsel %vm550, %v542, %v547
  %v552 = vmul.f32 %v461, %v541
  %v553 = vmul.f32 %v462, %v551
  %v554 = vmul.f32 %v463, %v541
  %v555 = vmul.f32 %v464, %v551
  %v556 = vmul.f32 %v465, %v541
  %v557 = vmul.f32 %v466, %v551
  %v558 = vmul.f32 %v467, %v541
  %v559 = vmul.f32 %v468, %v551
  %v560 = vmul.f32 %v469, %v541
  %v561 = vmul.f32 %v470, %v551
  %v562 = vmul.f32 %v471, %v541
  %v563 = vmul.f32 %v472, %v551
  %v564 = vmul.f32 %v473, %v541
  %v565 = vmul.f32 %v474, %v551
  %v566 = vmul.f32 %v475, %v541
  %v567 = vmul.f32 %v476, %v551
  %568 = vst [vmem:[%s3] sm:$0xff] %v552
  %569 = vst.msk [vmem:[%s3 + $0x8] sm:$0xff] %vm506, %v553
  %570 = vst [vmem:[%s3 + $0x10] sm:$0xff] %v554
  %571 = vst.msk [vmem:[%s3 + $0x18] sm:$0xff] %vm506, %v555
  %572 = vst [vmem:[%s3 + $0x20] sm:$0xff] %v556
  %573 = vst.msk [vmem:[%s3 + $0x28] sm:$0xff] %vm506, %v557
  %574 = vst [vmem:[%s3 + $0x30] sm:$0xff] %v558
  %575 = vst.msk [vmem:[%s3 + $0x38] sm:$0xff] %vm506, %v559
  %576 = vst [vmem:[%s3 + $0x40] sm:$0xff] %v560
  %577 = vst.msk [vmem:[%s3 + $0x48] sm:$0xff] %vm506, %v561
  %578 = vst [vmem:[%s3 + $0x50] sm:$0xff] %v562
  %579 = vst.msk [vmem:[%s3 + $0x58] sm:$0xff] %vm506, %v563
  %580 = vst [vmem:[%s3 + $0x60] sm:$0xff] %v564
  %581 = vst.msk [vmem:[%s3 + $0x68] sm:$0xff] %vm506, %v565
  %582 = vst [vmem:[%s3 + $0x70] sm:$0xff] %v566
  %583 = vst.msk [vmem:[%s3 + $0x78] sm:$0xff] %vm506, %v567
  // Predicated region
  $region14: #{unet_block_forward.9} parent=0 // pred_check
    _
  $region15: #{unet_block_forward.9} parent=0 // pred_check_branch
    %585 = sbr.rel (0) target = $region17
  $region16: #{unet_block_forward.9} parent=0 // pred_region
    _
  $region17: #{unet_block_forward.9} parent=0 // pred_fallthru
    _
  // Predicated region
  $region18: #{unet_block_forward.9} parent=0 // pred_check
    _
  $region19: #{unet_block_forward.9} parent=0 // pred_check_branch
    %587 = sbr.rel (0) target = $region21
  $region20: #{unet_block_forward.9} parent=0 // pred_region
    _
  $region21: #{unet_block_forward.9} parent=0 // pred_fallthru
    _

// kernel: unet_block_forward.10
$region0: #{unet_block_forward.10}
  #allocation0 [shape = 'u32[]', space=smem, size = 0x4, offset = 0x4, fixed_abs, tag = 'smem constant byte address 0x4 - core index']
  #allocation1 [shape = 'u32[72,128]{1,0:T(1,128)}', space=vmem, size = 0x9000, scoped, tag = 'internal scratch']
  %s0 = inlined_call_operand.vmem [shape: f32[576,56], index: 0, kind: input, shape index: {}]
  %s1 = inlined_call_operand.vmem [shape: f32[64,576], index: 1, kind: input, shape index: {}]
  %s2 = inlined_call_operand.vmem [shape: f32[64,1], index: 2, kind: input, shape index: {}]
  %s3 = inlined_call_operand.vmem [shape: f32[64,56], index: 3, kind: output, shape index: {}]
  %s4 = sld [smem:[#allocation0]]
  $region22: #{unet_block_forward.10} parent=0
    _
  %s6 = ssub.s32 1, %s4
  %s7 = scalar_select 0, %s6, %s4
  // Predicated region
  $region2: #{unet_block_forward.10} parent=0 // pred_check
    _
  $region3: #{unet_block_forward.10} parent=0 // pred_check_branch
    %9 = sbr.rel (0) target = $region5
  $region4: #{unet_block_forward.10} parent=0 // pred_region
    _
  $region5: #{unet_block_forward.10} parent=0 // pred_fallthru
    _
  // Predicated region
  $region6: #{unet_block_forward.10} parent=0 // pred_check
    _
  $region7: #{unet_block_forward.10} parent=0 // pred_check_branch
    %11 = sbr.rel (0) target = $region9
  $region8: #{unet_block_forward.10} parent=0 // pred_region
    _
  $region9: #{unet_block_forward.10} parent=0 // pred_fallthru
    _
  // Predicated region
  $region10: #{unet_block_forward.10} parent=0 // pred_check
    _
  $region11: #{unet_block_forward.10} parent=0 // pred_check_branch
    %13 = sbr.rel (0) target = $region13
  $region12: #{unet_block_forward.10} parent=0 // pred_region
    _
  $region13: #{unet_block_forward.10} parent=0 // pred_fallthru
    _
  %v14 = vld [vmem:[%s1] sm:$0xff]
  %v15 = vld [vmem:[%s1 + $0x8] sm:$0xff]
  %v16 = vld [vmem:[%s1 + $0x10] sm:$0xff]
  %v17 = vld [vmem:[%s1 + $0x18] sm:$0xff]
  %v18 = vld [vmem:[%s1 + $0x20] sm:$0xff]
  %v19 = vld [vmem:[%s1 + $0x28] sm:$0xff]
  %v20 = vld [vmem:[%s1 + $0x30] sm:$0xff]
  %v21 = vld [vmem:[%s1 + $0x38] sm:$0xff]
  %v22 = vld [vmem:[%s1 + $0x40] sm:$0xff]
  %v23 = vld [vmem:[%s1 + $0x48] sm:$0xff]
  %v24 = vld [vmem:[%s1 + $0x50] sm:$0xff]
  %v25 = vld [vmem:[%s1 + $0x58] sm:$0xff]
  %v26 = vld [vmem:[%s1 + $0x60] sm:$0xff]
  %v27 = vld [vmem:[%s1 + $0x68] sm:$0xff]
  %v28 = vld [vmem:[%s1 + $0x70] sm:$0xff]
  %v29 = vld [vmem:[%s1 + $0x78] sm:$0xff]
  %v30 = vld [vmem:[%s1 + $0x80] sm:$0xff]
  %v31 = vld [vmem:[%s1 + $0x88] sm:$0xff]
  %v32 = vld [vmem:[%s1 + $0x90] sm:$0xff]
  %v33 = vld [vmem:[%s1 + $0x98] sm:$0xff]
  %v34 = vld [vmem:[%s1 + $0xa0] sm:$0xff]
  %v35 = vld [vmem:[%s1 + $0xa8] sm:$0xff]
  %v36 = vld [vmem:[%s1 + $0xb0] sm:$0xff]
  %v37 = vld [vmem:[%s1 + $0xb8] sm:$0xff]
  %v38 = vld [vmem:[%s1 + $0xc0] sm:$0xff]
  %v39 = vld [vmem:[%s1 + $0xc8] sm:$0xff]
  %v40 = vld [vmem:[%s1 + $0xd0] sm:$0xff]
  %v41 = vld [vmem:[%s1 + $0xd8] sm:$0xff]
  %v42 = vld [vmem:[%s1 + $0xe0] sm:$0xff]
  %v43 = vld [vmem:[%s1 + $0xe8] sm:$0xff]
  %v44 = vld [vmem:[%s1 + $0xf0] sm:$0xff]
  %v45 = vld [vmem:[%s1 + $0xf8] sm:$0xff]
  %v46 = vld [vmem:[%s1 + $0x100] sm:$0xff]
  %v47 = vld [vmem:[%s1 + $0x108] sm:$0xff]
  %v48 = vld [vmem:[%s1 + $0x110] sm:$0xff]
  %v49 = vld [vmem:[%s1 + $0x118] sm:$0xff]
  %v50 = vld [vmem:[%s1 + $0x120] sm:$0xff]
  %v51 = vld [vmem:[%s1 + $0x128] sm:$0xff]
  %v52 = vld [vmem:[%s1 + $0x130] sm:$0xff]
  %v53 = vld [vmem:[%s1 + $0x138] sm:$0xff]
  %v54 = vld [vmem:[%s0] sm:$0xff]
  %v55 = vld [vmem:[%s0 + $0x8] sm:$0xff]
  %v56 = vld [vmem:[%s0 + $0x10] sm:$0xff]
  %v57 = vld [vmem:[%s0 + $0x18] sm:$0xff]
  %v58 = vld [vmem:[%s0 + $0x20] sm:$0xff]
  %v59 = vld [vmem:[%s0 + $0x28] sm:$0xff]
  %v60 = vld [vmem:[%s0 + $0x30] sm:$0xff]
  %v61 = vld [vmem:[%s0 + $0x38] sm:$0xff]
  %v62 = vld [vmem:[%s0 + $0x40] sm:$0xff]
  %v63 = vld [vmem:[%s0 + $0x48] sm:$0xff]
  %v64 = vld [vmem:[%s0 + $0x50] sm:$0xff]
  %v65 = vld [vmem:[%s0 + $0x58] sm:$0xff]
  %v66 = vld [vmem:[%s0 + $0x60] sm:$0xff]
  %v67 = vld [vmem:[%s0 + $0x68] sm:$0xff]
  %v68 = vld [vmem:[%s0 + $0x70] sm:$0xff]
  %v69 = vld [vmem:[%s0 + $0x78] sm:$0xff]
  %v70 = vld [vmem:[%s0 + $0x80] sm:$0xff]
  %v71 = vld [vmem:[%s0 + $0x88] sm:$0xff]
  %v72 = vld [vmem:[%s0 + $0x90] sm:$0xff]
  %v73 = vld [vmem:[%s0 + $0x98] sm:$0xff]
  %v74 = vld [vmem:[%s0 + $0xa0] sm:$0xff]
  %v75 = vld [vmem:[%s0 + $0xa8] sm:$0xff]
  %v76 = vld [vmem:[%s0 + $0xb0] sm:$0xff]
  %v77 = vld [vmem:[%s0 + $0xb8] sm:$0xff]
  %v78 = vld [vmem:[%s0 + $0xc0] sm:$0xff]
  %v79 = vld [vmem:[%s0 + $0xc8] sm:$0xff]
  %v80 = vld [vmem:[%s0 + $0xd0] sm:$0xff]
  %v81 = vld [vmem:[%s0 + $0xd8] sm:$0xff]
  %v82 = vld [vmem:[%s0 + $0xe0] sm:$0xff]
  %v83 = vld [vmem:[%s0 + $0xe8] sm:$0xff]
  %v84 = vld [vmem:[%s0 + $0xf0] sm:$0xff]
  %v85 = vld [vmem:[%s0 + $0xf8] sm:$0xff]
  %v86 = vld [vmem:[%s0 + $0x100] sm:$0xff]
  %v87 = vld [vmem:[%s0 + $0x108] sm:$0xff]
  %v88 = vld [vmem:[%s0 + $0x110] sm:$0xff]
  %v89 = vld [vmem:[%s0 + $0x118] sm:$0xff]
  %v90 = vld [vmem:[%s0 + $0x120] sm:$0xff]
  %v91 = vld [vmem:[%s0 + $0x128] sm:$0xff]
  %v92 = vld [vmem:[%s0 + $0x130] sm:$0xff]
  %v93 = vld [vmem:[%s0 + $0x138] sm:$0xff]
  %v94 = vld [vmem:[%s0 + $0x140] sm:$0xff]
  %v95 = vld [vmem:[%s0 + $0x148] sm:$0xff]
  %v96 = vld [vmem:[%s0 + $0x150] sm:$0xff]
  %v97 = vld [vmem:[%s0 + $0x158] sm:$0xff]
  %v98 = vld [vmem:[%s0 + $0x160] sm:$0xff]
  %v99 = vld [vmem:[%s0 + $0x168] sm:$0xff]
  %v100 = vld [vmem:[%s0 + $0x170] sm:$0xff]
  %v101 = vld [vmem:[%s0 + $0x178] sm:$0xff]
  %v102 = vld [vmem:[%s0 + $0x180] sm:$0xff]
  %v103 = vld [vmem:[%s0 + $0x188] sm:$0xff]
  %v104 = vld [vmem:[%s0 + $0x190] sm:$0xff]
  %v105 = vld [vmem:[%s0 + $0x198] sm:$0xff]
  %v106 = vld [vmem:[%s0 + $0x1a0] sm:$0xff]
  %v107 = vld [vmem:[%s0 + $0x1a8] sm:$0xff]
  %v108 = vld [vmem:[%s0 + $0x1b0] sm:$0xff]
  %v109 = vld [vmem:[%s0 + $0x1b8] sm:$0xff]
  %v110 = vld [vmem:[%s0 + $0x1c0] sm:$0xff]
  %v111 = vld [vmem:[%s0 + $0x1c8] sm:$0xff]
  %v112 = vld [vmem:[%s0 + $0x1d0] sm:$0xff]
  %v113 = vld [vmem:[%s0 + $0x1d8] sm:$0xff]
  %v114 = vld [vmem:[%s0 + $0x1e0] sm:$0xff]
  %v115 = vld [vmem:[%s0 + $0x1e8] sm:$0xff]
  %v116 = vld [vmem:[%s0 + $0x1f0] sm:$0xff]
  %v117 = vld [vmem:[%s0 + $0x1f8] sm:$0xff]
  %v118 = vld [vmem:[%s0 + $0x200] sm:$0xff]
  %v119 = vld [vmem:[%s0 + $0x208] sm:$0xff]
  %v120 = vld [vmem:[%s0 + $0x210] sm:$0xff]
  %v121 = vld [vmem:[%s0 + $0x218] sm:$0xff]
  %v122 = vld [vmem:[%s0 + $0x220] sm:$0xff]
  %v123 = vld [vmem:[%s0 + $0x228] sm:$0xff]
  %v124 = vld [vmem:[%s0 + $0x230] sm:$0xff]
  %v125 = vld [vmem:[%s0 + $0x238] sm:$0xff]
  %v126 = vld [vmem:[%s2] sm:$0xff]
  %v127 = vld [vmem:[%s2 + $0x8] sm:$0xff]
  %v128 = vld [vmem:[%s2 + $0x10] sm:$0xff]
  %v129 = vld [vmem:[%s2 + $0x18] sm:$0xff]
  %v130 = vld [vmem:[%s2 + $0x20] sm:$0xff]
  %v131 = vld [vmem:[%s2 + $0x28] sm:$0xff]
  %v132 = vld [vmem:[%s2 + $0x30] sm:$0xff]
  %v133 = vld [vmem:[%s2 + $0x38] sm:$0xff]
  %135 = vset.pattern.permute.xlu0 0
  %136 = vperm.xlu0 %135, %v126
  %v137 = vpop.permute.xlu0 %136
  %140 = vset.pattern.permute.xlu0 0
  %141 = vperm.xlu0 %140, %v127
  %v142 = vpop.permute.xlu0 %141
  %145 = vset.pattern.permute.xlu0 0
  %146 = vperm.xlu0 %145, %v128
  %v147 = vpop.permute.xlu0 %146
  %150 = vset.pattern.permute.xlu0 0
  %151 = vperm.xlu0 %150, %v129
  %v152 = vpop.permute.xlu0 %151
  %155 = vset.pattern.permute.xlu0 0
  %156 = vperm.xlu0 %155, %v130
  %v157 = vpop.permute.xlu0 %156
  %160 = vset.pattern.permute.xlu0 0
  %161 = vperm.xlu0 %160, %v131
  %v162 = vpop.permute.xlu0 %161
  %165 = vset.pattern.permute.xlu0 0
  %166 = vperm.xlu0 %165, %v132
  %v167 = vpop.permute.xlu0 %166
  %170 = vset.pattern.permute.xlu0 0
  %171 = vperm.xlu0 %170, %v133
  %v172 = vpop.permute.xlu0 %171
  %vm174 = vcmask 523264
  %v176 = vsel %vm174, %v18, 0
  %v179 = vsel %vm174, %v23, 0
  %v182 = vsel %vm174, %v28, 0
  %v185 = vsel %vm174, %v33, 0
  %v188 = vsel %vm174, %v38, 0
  %v191 = vsel %vm174, %v43, 0
  %v194 = vsel %vm174, %v48, 0
  %v197 = vsel %vm174, %v53, 0
  %199 = vmatpush.msra.mxu0 %v69
  %200 = vmatpush.msra.mxu0 %v68
  %201 = vmatpush.msra.mxu0 %v67
  %202 = vmatpush.msra.mxu0 %v66
  %203 = vmatpush.msra.mxu0 %v65
  %204 = vmatpush.msra.mxu0 %v64
  %205 = vmatpush.msra.mxu0 %v63
  %206 = vmatpush.msra.mxu0 %v62
  %207 = vmatpush.msra.mxu0 %v61
  %208 = vmatpush.msra.mxu0 %v60
  %209 = vmatpush.msra.mxu0 %v59
  %210 = vmatpush.msra.mxu0 %v58
  %211 = vmatpush.msra.mxu0 %v57
  %212 = vmatpush.msra.mxu0 %v56
  %213 = vmatpush.msra.mxu0 %v55
  %214 = vmatpush.msra.mxu0 %v54
  %215 = vmatmul.f32.gmra.mxu0 %v14
  %v216 = vpop.f32.mrf.mxu0
  %v217 = vadd.f32 %v137, %v216
  %218 = vmatmul.f32.gmra.mxu0 %v19
  %v219 = vpop.f32.mrf.mxu0
  %v220 = vadd.f32 %v142, %v219
  %221 = vmatmul.f32.gmra.mxu0 %v24
  %v222 = vpop.f32.mrf.mxu0
  %v223 = vadd.f32 %v147, %v222
  %224 = vmatmul.f32.gmra.mxu0 %v29
  %v225 = vpop.f32.mrf.mxu0
  %v226 = vadd.f32 %v152, %v225
  %227 = vmatmul.f32.gmra.mxu0 %v34
  %v228 = vpop.f32.mrf.mxu0
  %v229 = vadd.f32 %v157, %v228
  %230 = vmatmul.f32.gmra.mxu0 %v39
  %v231 = vpop.f32.mrf.mxu0
  %v232 = vadd.f32 %v162, %v231
  %233 = vmatmul.f32.gmra.mxu0 %v44
  %v234 = vpop.f32.mrf.mxu0
  %v235 = vadd.f32 %v167, %v234
  %236 = vmatmul.f32.gmra.mxu0 %v49
  %v237 = vpop.f32.mrf.mxu0
  %v238 = vadd.f32 %v172, %v237
  %239 = vdwg.mxu0
  %240 = vmatpush.msra.mxu0 %v85
  %241 = vmatpush.msra.mxu0 %v84
  %242 = vmatpush.msra.mxu0 %v83
  %243 = vmatpush.msra.mxu0 %v82
  %244 = vmatpush.msra.mxu0 %v81
  %245 = vmatpush.msra.mxu0 %v80
  %246 = vmatpush.msra.mxu0 %v79
  %247 = vmatpush.msra.mxu0 %v78
  %248 = vmatpush.msra.mxu0 %v77
  %249 = vmatpush.msra.mxu0 %v76
  %250 = vmatpush.msra.mxu0 %v75
  %251 = vmatpush.msra.mxu0 %v74
  %252 = vmatpush.msra.mxu0 %v73
  %253 = vmatpush.msra.mxu0 %v72
  %254 = vmatpush.msra.mxu0 %v71
  %255 = vmatpush.msra.mxu0 %v70
  %256 = vmatmul.f32.gmra.mxu0 %v15
  %v257 = vpop.f32.mrf.mxu0
  %v258 = vadd.f32 %v217, %v257
  %259 = vmatmul.f32.gmra.mxu0 %v20
  %v260 = vpop.f32.mrf.mxu0
  %v261 = vadd.f32 %v220, %v260
  %262 = vmatmul.f32.gmra.mxu0 %v25
  %v263 = vpop.f32.mrf.mxu0
  %v264 = vadd.f32 %v223, %v263
  %265 = vmatmul.f32.gmra.mxu0 %v30
  %v266 = vpop.f32.mrf.mxu0
  %v267 = vadd.f32 %v226, %v266
  %268 = vmatmul.f32.gmra.mxu0 %v35
  %v269 = vpop.f32.mrf.mxu0
  %v270 = vadd.f32 %v229, %v269
  %271 = vmatmul.f32.gmra.mxu0 %v40
  %v272 = vpop.f32.mrf.mxu0
  %v273 = vadd.f32 %v232, %v272
  %274 = vmatmul.f32.gmra.mxu0 %v45
  %v275 = vpop.f32.mrf.mxu0
  %v276 = vadd.f32 %v235, %v275
  %277 = vmatmul.f32.gmra.mxu0 %v50
  %v278 = vpop.f32.mrf.mxu0
  %v279 = vadd.f32 %v238, %v278
  %280 = vdwg.mxu0
  %281 = vmatpush.msra.mxu0 %v101
  %282 = vmatpush.msra.mxu0 %v100
  %283 = vmatpush.msra.mxu0 %v99
  %284 = vmatpush.msra.mxu0 %v98
  %285 = vmatpush.msra.mxu0 %v97
  %286 = vmatpush.msra.mxu0 %v96
  %287 = vmatpush.msra.mxu0 %v95
  %288 = vmatpush.msra.mxu0 %v94
  %289 = vmatpush.msra.mxu0 %v93
  %290 = vmatpush.msra.mxu0 %v92
  %291 = vmatpush.msra.mxu0 %v91
  %292 = vmatpush.msra.mxu0 %v90
  %293 = vmatpush.msra.mxu0 %v89
  %294 = vmatpush.msra.mxu0 %v88
  %295 = vmatpush.msra.mxu0 %v87
  %296 = vmatpush.msra.mxu0 %v86
  %297 = vmatmul.f32.gmra.mxu0 %v16
  %v298 = vpop.f32.mrf.mxu0
  %v299 = vadd.f32 %v258, %v298
  %300 = vmatmul.f32.gmra.mxu0 %v21
  %v301 = vpop.f32.mrf.mxu0
  %v302 = vadd.f32 %v261, %v301
  %303 = vmatmul.f32.gmra.mxu0 %v26
  %v304 = vpop.f32.mrf.mxu0
  %v305 = vadd.f32 %v264, %v304
  %306 = vmatmul.f32.gmra.mxu0 %v31
  %v307 = vpop.f32.mrf.mxu0
  %v308 = vadd.f32 %v267, %v307
  %309 = vmatmul.f32.gmra.mxu0 %v36
  %v310 = vpop.f32.mrf.mxu0
  %v311 = vadd.f32 %v270, %v310
  %312 = vmatmul.f32.gmra.mxu0 %v41
  %v313 = vpop.f32.mrf.mxu0
  %v314 = vadd.f32 %v273, %v313
  %315 = vmatmul.f32.gmra.mxu0 %v46
  %v316 = vpop.f32.mrf.mxu0
  %v317 = vadd.f32 %v276, %v316
  %318 = vmatmul.f32.gmra.mxu0 %v51
  %v319 = vpop.f32.mrf.mxu0
  %v320 = vadd.f32 %v279, %v319
  %321 = vdwg.mxu0
  %322 = vmatpush.msra.mxu0 %v117
  %323 = vmatpush.msra.mxu0 %v116
  %324 = vmatpush.msra.mxu0 %v115
  %325 = vmatpush.msra.mxu0 %v114
  %326 = vmatpush.msra.mxu0 %v113
  %327 = vmatpush.msra.mxu0 %v112
  %328 = vmatpush.msra.mxu0 %v111
  %329 = vmatpush.msra.mxu0 %v110
  %330 = vmatpush.msra.mxu0 %v109
  %331 = vmatpush.msra.mxu0 %v108
  %332 = vmatpush.msra.mxu0 %v107
  %333 = vmatpush.msra.mxu0 %v106
  %334 = vmatpush.msra.mxu0 %v105
  %335 = vmatpush.msra.mxu0 %v104
  %336 = vmatpush.msra.mxu0 %v103
  %337 = vmatpush.msra.mxu0 %v102
  %338 = vmatmul.f32.gmra.mxu0 %v17
  %v339 = vpop.f32.mrf.mxu0
  %v340 = vadd.f32 %v299, %v339
  %341 = vmatmul.f32.gmra.mxu0 %v22
  %v342 = vpop.f32.mrf.mxu0
  %v343 = vadd.f32 %v302, %v342
  %344 = vmatmul.f32.gmra.mxu0 %v27
  %v345 = vpop.f32.mrf.mxu0
  %v346 = vadd.f32 %v305, %v345
  %347 = vmatmul.f32.gmra.mxu0 %v32
  %v348 = vpop.f32.mrf.mxu0
  %v349 = vadd.f32 %v308, %v348
  %350 = vmatmul.f32.gmra.mxu0 %v37
  %v351 = vpop.f32.mrf.mxu0
  %v352 = vadd.f32 %v311, %v351
  %353 = vmatmul.f32.gmra.mxu0 %v42
  %v354 = vpop.f32.mrf.mxu0
  %v355 = vadd.f32 %v314, %v354
  %356 = vmatmul.f32.gmra.mxu0 %v47
  %v357 = vpop.f32.mrf.mxu0
  %v358 = vadd.f32 %v317, %v357
  %359 = vmatmul.f32.gmra.mxu0 %v52
  %v360 = vpop.f32.mrf.mxu0
  %v361 = vadd.f32 %v320, %v360
  %362 = vdwg.mxu0
  %363 = vmatpush.msra.mxu0 0.0
  %364 = vmatpush.msra.mxu0 0.0
  %365 = vmatpush.msra.mxu0 0.0
  %366 = vmatpush.msra.mxu0 0.0
  %367 = vmatpush.msra.mxu0 0.0
  %368 = vmatpush.msra.mxu0 0.0
  %369 = vmatpush.msra.mxu0 0.0
  %370 = vmatpush.msra.mxu0 0.0
  %371 = vmatpush.msra.mxu0 %v125
  %372 = vmatpush.msra.mxu0 %v124
  %373 = vmatpush.msra.mxu0 %v123
  %374 = vmatpush.msra.mxu0 %v122
  %375 = vmatpush.msra.mxu0 %v121
  %376 = vmatpush.msra.mxu0 %v120
  %377 = vmatpush.msra.mxu0 %v119
  %378 = vmatpush.msra.mxu0 %v118
  %379 = vmatmul.f32.gmra.mxu0 %v176
  %v380 = vpop.f32.mrf.mxu0
  %v381 = vadd.f32 %v340, %v380
  %382 = vmatmul.f32.gmra.mxu0 %v179
  %v383 = vpop.f32.mrf.mxu0
  %v384 = vadd.f32 %v343, %v383
  %385 = vmatmul.f32.gmra.mxu0 %v182
  %v386 = vpop.f32.mrf.mxu0
  %v387 = vadd.f32 %v346, %v386
  %388 = vmatmul.f32.gmra.mxu0 %v185
  %v389 = vpop.f32.mrf.mxu0
  %v390 = vadd.f32 %v349, %v389
  %391 = vmatmul.f32.gmra.mxu0 %v188
  %v392 = vpop.f32.mrf.mxu0
  %v393 = vadd.f32 %v352, %v392
  %394 = vmatmul.f32.gmra.mxu0 %v191
  %v395 = vpop.f32.mrf.mxu0
  %v396 = vadd.f32 %v355, %v395
  %397 = vmatmul.f32.gmra.mxu0 %v194
  %v398 = vpop.f32.mrf.mxu0
  %v399 = vadd.f32 %v358, %v398
  %400 = vmatmul.f32.gmra.mxu0 %v197
  %v401 = vpop.f32.mrf.mxu0
  %v402 = vadd.f32 %v361, %v401
  %403 = vdwg.mxu0
  %vm404 = vcmp.ge.f32.partialorder %v381, 0.0
  %vm405 = vcmp.ge.f32.partialorder %v384, 0.0
  %vm406 = vcmp.ge.f32.partialorder %v387, 0.0
  %vm407 = vcmp.ge.f32.partialorder %v390, 0.0
  %vm408 = vcmp.ge.f32.partialorder %v393, 0.0
  %vm409 = vcmp.ge.f32.partialorder %v396, 0.0
  %vm410 = vcmp.ge.f32.partialorder %v399, 0.0
  %vm411 = vcmp.ge.f32.partialorder %v402, 0.0
  %v412 = vmul.f32 %v381, 0.2
  %v413 = vmul.f32 %v384, 0.2
  %v414 = vmul.f32 %v387, 0.2
  %v415 = vmul.f32 %v390, 0.2
  %v416 = vmul.f32 %v393, 0.2
  %v417 = vmul.f32 %v396, 0.2
  %v418 = vmul.f32 %v399, 0.2
  %v419 = vmul.f32 %v402, 0.2
  %v420 = vsel %vm404, %v381, %v412
  %v421 = vsel %vm405, %v384, %v413
  %v422 = vsel %vm406, %v387, %v414
  %v423 = vsel %vm407, %v390, %v415
  %v424 = vsel %vm408, %v393, %v416
  %v425 = vsel %vm409, %v396, %v417
  %v426 = vsel %vm410, %v399, %v418
  %v427 = vsel %vm411, %v402, %v419
  %v428 = vmul.f32 %v420, %v420
  %v429 = vmul.f32 %v421, %v421
  %v430 = vmul.f32 %v422, %v422
  %v431 = vmul.f32 %v423, %v423
  %v432 = vmul.f32 %v424, %v424
  %v433 = vmul.f32 %v425, %v425
  %v434 = vmul.f32 %v426, %v426
  %v435 = vmul.f32 %v427, %v427
  %vm436 = vcmask 457728
  %v437 = vsel %vm436, %v428, 0.0
  %v438 = vsel %vm436, %v429, 0.0
  %v439 = vadd.f32 %v437, %v438
  %v440 = vsel %vm436, %v430, 0.0
  %v441 = vadd.f32 %v439, %v440
  %v442 = vsel %vm436, %v431, 0.0
  %v443 = vadd.f32 %v441, %v442
  %v444 = vsel %vm436, %v432, 0.0
  %v445 = vadd.f32 %v443, %v444
  %v446 = vsel %vm436, %v433, 0.0
  %v447 = vadd.f32 %v445, %v446
  %v448 = vsel %vm436, %v434, 0.0
  %v449 = vadd.f32 %v447, %v448
  %v450 = vsel %vm436, %v435, 0.0
  %v451 = vadd.f32 %v449, %v450
  %v452 = vrot.slane %v451, 4
  %v453 = vadd.f32 %v451, %v452
  %v454 = vrot.slane %v453, 2
  %v455 = vadd.f32 %v453, %v454
  %v456 = vrot.slane %v455, 1
  %v457 = vadd.f32 %v455, %v456
  %v458 = vmul.f32 %v457, 0.015625
  %v459 = vadd.f32 %v458, 1e-08
  %v460 = vrsqrt.pop %v459
  %v461 = vmul.f32 %v460, %v459
  %v462 = vmul.f32 %v461, %v460
  %v463 = vmul.f32 0.5, %v462
  %v464 = vsub.f32 1.5, %v463
  %v465 = vmul.f32 %v460, %v464
  %vm466 = vweird.f32 %v459
  %vm467 = vweird.f32 %v460
  %vm468 = vmor %vm466, %vm467
  %v469 = vsel %vm468, %v460, %v465
  %v470 = vmul.f32 %v420, %v469
  %v471 = vmul.f32 %v421, %v469
  %v472 = vmul.f32 %v422, %v469
  %v473 = vmul.f32 %v423, %v469
  %v474 = vmul.f32 %v424, %v469
  %v475 = vmul.f32 %v425, %v469
  %v476 = vmul.f32 %v426, %v469
  %v477 = vmul.f32 %v427, %v469
  %478 = vst.msk [vmem:[%s3] sm:$0xff] %vm436, %v470
  %479 = vst.msk [vmem:[%s3 + $0x8] sm:$0xff] %vm436, %v471
  %480 = vst.msk [vmem:[%s3 + $0x10] sm:$0xff] %vm436, %v472
  %481 = vst.msk [vmem:[%s3 + $0x18] sm:$0xff] %vm436, %v473
  %482 = vst.msk [vmem:[%s3 + $0x20] sm:$0xff] %vm436, %v474
  %483 = vst.msk [vmem:[%s3 + $0x28] sm:$0xff] %vm436, %v475
  %484 = vst.msk [vmem:[%s3 + $0x30] sm:$0xff] %vm436, %v476
  %485 = vst.msk [vmem:[%s3 + $0x38] sm:$0xff] %vm436, %v477
  // Predicated region
  $region14: #{unet_block_forward.10} parent=0 // pred_check
    _
  $region15: #{unet_block_forward.10} parent=0 // pred_check_branch
    %487 = sbr.rel (0) target = $region17
  $region16: #{unet_block_forward.10} parent=0 // pred_region
    _
  $region17: #{unet_block_forward.10} parent=0 // pred_fallthru
    _
  // Predicated region
  $region18: #{unet_block_forward.10} parent=0 // pred_check
    _
  $region19: #{unet_block_forward.10} parent=0 // pred_check_branch
    %489 = sbr.rel (0) target = $region21
  $region20: #{unet_block_forward.10} parent=0 // pred_region
    _
  $region21: #{unet_block_forward.10} parent=0 // pred_fallthru
    _

// kernel: unet_block_forward.11
$region0: #{unet_block_forward.11}
  #allocation0 [shape = 'u32[]', space=smem, size = 0x4, offset = 0x4, fixed_abs, tag = 'smem constant byte address 0x4 - core index']
  #allocation1 [shape = 'u32[72,128]{1,0:T(1,128)}', space=vmem, size = 0x9000, scoped, tag = 'internal scratch']
  %s0 = inlined_call_operand.vmem [shape: f32[576,28], index: 0, kind: input, shape index: {}]
  %s1 = inlined_call_operand.vmem [shape: f32[128,576], index: 1, kind: input, shape index: {}]
  %s2 = inlined_call_operand.vmem [shape: f32[128,1], index: 2, kind: input, shape index: {}]
  %s3 = inlined_call_operand.vmem [shape: f32[128,28], index: 3, kind: output, shape index: {}]
  %s4 = sld [smem:[#allocation0]]
  $region22: #{unet_block_forward.11} parent=0
    _
  %s6 = ssub.s32 1, %s4
  %s7 = scalar_select 0, %s6, %s4
  // Predicated region
  $region2: #{unet_block_forward.11} parent=0 // pred_check
    _
  $region3: #{unet_block_forward.11} parent=0 // pred_check_branch
    %9 = sbr.rel (0) target = $region5
  $region4: #{unet_block_forward.11} parent=0 // pred_region
    _
  $region5: #{unet_block_forward.11} parent=0 // pred_fallthru
    _
  // Predicated region
  $region6: #{unet_block_forward.11} parent=0 // pred_check
    _
  $region7: #{unet_block_forward.11} parent=0 // pred_check_branch
    %11 = sbr.rel (0) target = $region9
  $region8: #{unet_block_forward.11} parent=0 // pred_region
    _
  $region9: #{unet_block_forward.11} parent=0 // pred_fallthru
    _
  // Predicated region
  $region10: #{unet_block_forward.11} parent=0 // pred_check
    _
  $region11: #{unet_block_forward.11} parent=0 // pred_check_branch
    %13 = sbr.rel (0) target = $region13
  $region12: #{unet_block_forward.11} parent=0 // pred_region
    _
  $region13: #{unet_block_forward.11} parent=0 // pred_fallthru
    _
  %v14 = vld [vmem:[%s1] sm:$0xff]
  %v15 = vld [vmem:[%s1 + $0x8] sm:$0xff]
  %v16 = vld [vmem:[%s1 + $0x10] sm:$0xff]
  %v17 = vld [vmem:[%s1 + $0x18] sm:$0xff]
  %v18 = vld [vmem:[%s1 + $0x20] sm:$0xff]
  %v19 = vld [vmem:[%s1 + $0x28] sm:$0xff]
  %v20 = vld [vmem:[%s1 + $0x30] sm:$0xff]
  %v21 = vld [vmem:[%s1 + $0x38] sm:$0xff]
  %v22 = vld [vmem:[%s1 + $0x40] sm:$0xff]
  %v23 = vld [vmem:[%s1 + $0x48] sm:$0xff]
  %v24 = vld [vmem:[%s1 + $0x50] sm:$0xff]
  %v25 = vld [vmem:[%s1 + $0x58] sm:$0xff]
  %v26 = vld [vmem:[%s1 + $0x60] sm:$0xff]
  %v27 = vld [vmem:[%s1 + $0x68] sm:$0xff]
  %v28 = vld [vmem:[%s1 + $0x70] sm:$0xff]
  %v29 = vld [vmem:[%s1 + $0x78] sm:$0xff]
  %v30 = vld [vmem:[%s1 + $0x80] sm:$0xff]
  %v31 = vld [vmem:[%s1 + $0x88] sm:$0xff]
  %v32 = vld [vmem:[%s1 + $0x90] sm:$0xff]
  %v33 = vld [vmem:[%s1 + $0x98] sm:$0xff]
  %v34 = vld [vmem:[%s1 + $0xa0] sm:$0xff]
  %v35 = vld [vmem:[%s1 + $0xa8] sm:$0xff]
  %v36 = vld [vmem:[%s1 + $0xb0] sm:$0xff]
  %v37 = vld [vmem:[%s1 + $0xb8] sm:$0xff]
  %v38 = vld [vmem:[%s1 + $0xc0] sm:$0xff]
  %v39 = vld [vmem:[%s1 + $0xc8] sm:$0xff]
  %v40 = vld [vmem:[%s1 + $0xd0] sm:$0xff]
  %v41 = vld [vmem:[%s1 + $0xd8] sm:$0xff]
  %v42 = vld [vmem:[%s1 + $0xe0] sm:$0xff]
  %v43 = vld [vmem:[%s1 + $0xe8] sm:$0xff]
  %v44 = vld [vmem:[%s1 + $0xf0] sm:$0xff]
  %v45 = vld [vmem:[%s1 + $0xf8] sm:$0xff]
  %v46 = vld [vmem:[%s1 + $0x100] sm:$0xff]
  %v47 = vld [vmem:[%s1 + $0x108] sm:$0xff]
  %v48 = vld [vmem:[%s1 + $0x110] sm:$0xff]
  %v49 = vld [vmem:[%s1 + $0x118] sm:$0xff]
  %v50 = vld [vmem:[%s1 + $0x120] sm:$0xff]
  %v51 = vld [vmem:[%s1 + $0x128] sm:$0xff]
  %v52 = vld [vmem:[%s1 + $0x130] sm:$0xff]
  %v53 = vld [vmem:[%s1 + $0x138] sm:$0xff]
  %v54 = vld [vmem:[%s1 + $0x140] sm:$0xff]
  %v55 = vld [vmem:[%s1 + $0x148] sm:$0xff]
  %v56 = vld [vmem:[%s1 + $0x150] sm:$0xff]
  %v57 = vld [vmem:[%s1 + $0x158] sm:$0xff]
  %v58 = vld [vmem:[%s1 + $0x160] sm:$0xff]
  %v59 = vld [vmem:[%s1 + $0x168] sm:$0xff]
  %v60 = vld [vmem:[%s1 + $0x170] sm:$0xff]
  %v61 = vld [vmem:[%s1 + $0x178] sm:$0xff]
  %v62 = vld [vmem:[%s1 + $0x180] sm:$0xff]
  %v63 = vld [vmem:[%s1 + $0x188] sm:$0xff]
  %v64 = vld [vmem:[%s1 + $0x190] sm:$0xff]
  %v65 = vld [vmem:[%s1 + $0x198] sm:$0xff]
  %v66 = vld [vmem:[%s1 + $0x1a0] sm:$0xff]
  %v67 = vld [vmem:[%s1 + $0x1a8] sm:$0xff]
  %v68 = vld [vmem:[%s1 + $0x1b0] sm:$0xff]
  %v69 = vld [vmem:[%s1 + $0x1b8] sm:$0xff]
  %v70 = vld [vmem:[%s1 + $0x1c0] sm:$0xff]
  %v71 = vld [vmem:[%s1 + $0x1c8] sm:$0xff]
  %v72 = vld [vmem:[%s1 + $0x1d0] sm:$0xff]
  %v73 = vld [vmem:[%s1 + $0x1d8] sm:$0xff]
  %v74 = vld [vmem:[%s1 + $0x1e0] sm:$0xff]
  %v75 = vld [vmem:[%s1 + $0x1e8] sm:$0xff]
  %v76 = vld [vmem:[%s1 + $0x1f0] sm:$0xff]
  %v77 = vld [vmem:[%s1 + $0x1f8] sm:$0xff]
  %v78 = vld [vmem:[%s1 + $0x200] sm:$0xff]
  %v79 = vld [vmem:[%s1 + $0x208] sm:$0xff]
  %v80 = vld [vmem:[%s1 + $0x210] sm:$0xff]
  %v81 = vld [vmem:[%s1 + $0x218] sm:$0xff]
  %v82 = vld [vmem:[%s1 + $0x220] sm:$0xff]
  %v83 = vld [vmem:[%s1 + $0x228] sm:$0xff]
  %v84 = vld [vmem:[%s1 + $0x230] sm:$0xff]
  %v85 = vld [vmem:[%s1 + $0x238] sm:$0xff]
  %v86 = vld [vmem:[%s1 + $0x240] sm:$0xff]
  %v87 = vld [vmem:[%s1 + $0x248] sm:$0xff]
  %v88 = vld [vmem:[%s1 + $0x250] sm:$0xff]
  %v89 = vld [vmem:[%s1 + $0x258] sm:$0xff]
  %v90 = vld [vmem:[%s1 + $0x260] sm:$0xff]
  %v91 = vld [vmem:[%s1 + $0x268] sm:$0xff]
  %v92 = vld [vmem:[%s1 + $0x270] sm:$0xff]
  %v93 = vld [vmem:[%s1 + $0x278] sm:$0xff]
  %v94 = vld [vmem:[%s0] sm:$0xff]
  %v95 = vld [vmem:[%s0 + $0x8] sm:$0xff]
  %v96 = vld [vmem:[%s0 + $0x10] sm:$0xff]
  %v97 = vld [vmem:[%s0 + $0x18] sm:$0xff]
  %v98 = vld [vmem:[%s0 + $0x20] sm:$0xff]
  %v99 = vld [vmem:[%s0 + $0x28] sm:$0xff]
  %v100 = vld [vmem:[%s0 + $0x30] sm:$0xff]
  %v101 = vld [vmem:[%s0 + $0x38] sm:$0xff]
  %v102 = vld [vmem:[%s0 + $0x40] sm:$0xff]
  %v103 = vld [vmem:[%s0 + $0x48] sm:$0xff]
  %v104 = vld [vmem:[%s0 + $0x50] sm:$0xff]
  %v105 = vld [vmem:[%s0 + $0x58] sm:$0xff]
  %v106 = vld [vmem:[%s0 + $0x60] sm:$0xff]
  %v107 = vld [vmem:[%s0 + $0x68] sm:$0xff]
  %v108 = vld [vmem:[%s0 + $0x70] sm:$0xff]
  %v109 = vld [vmem:[%s0 + $0x78] sm:$0xff]
  %v110 = vld [vmem:[%s0 + $0x80] sm:$0xff]
  %v111 = vld [vmem:[%s0 + $0x88] sm:$0xff]
  %v112 = vld [vmem:[%s0 + $0x90] sm:$0xff]
  %v113 = vld [vmem:[%s0 + $0x98] sm:$0xff]
  %v114 = vld [vmem:[%s0 + $0xa0] sm:$0xff]
  %v115 = vld [vmem:[%s0 + $0xa8] sm:$0xff]
  %v116 = vld [vmem:[%s0 + $0xb0] sm:$0xff]
  %v117 = vld [vmem:[%s0 + $0xb8] sm:$0xff]
  %v118 = vld [vmem:[%s0 + $0xc0] sm:$0xff]
  %v119 = vld [vmem:[%s0 + $0xc8] sm:$0xff]
  %v120 = vld [vmem:[%s0 + $0xd0] sm:$0xff]
  %v121 = vld [vmem:[%s0 + $0xd8] sm:$0xff]
  %v122 = vld [vmem:[%s0 + $0xe0] sm:$0xff]
  %v123 = vld [vmem:[%s0 + $0xe8] sm:$0xff]
  %v124 = vld [vmem:[%s0 + $0xf0] sm:$0xff]
  %v125 = vld [vmem:[%s0 + $0xf8] sm:$0xff]
  %v126 = vld [vmem:[%s0 + $0x100] sm:$0xff]
  %v127 = vld [vmem:[%s0 + $0x108] sm:$0xff]
  %v128 = vld [vmem:[%s0 + $0x110] sm:$0xff]
  %v129 = vld [vmem:[%s0 + $0x118] sm:$0xff]
  %v130 = vld [vmem:[%s0 + $0x120] sm:$0xff]
  %v131 = vld [vmem:[%s0 + $0x128] sm:$0xff]
  %v132 = vld [vmem:[%s0 + $0x130] sm:$0xff]
  %v133 = vld [vmem:[%s0 + $0x138] sm:$0xff]
  %v134 = vld [vmem:[%s0 + $0x140] sm:$0xff]
  %v135 = vld [vmem:[%s0 + $0x148] sm:$0xff]
  %v136 = vld [vmem:[%s0 + $0x150] sm:$0xff]
  %v137 = vld [vmem:[%s0 + $0x158] sm:$0xff]
  %v138 = vld [vmem:[%s0 + $0x160] sm:$0xff]
  %v139 = vld [vmem:[%s0 + $0x168] sm:$0xff]
  %v140 = vld [vmem:[%s0 + $0x170] sm:$0xff]
  %v141 = vld [vmem:[%s0 + $0x178] sm:$0xff]
  %v142 = vld [vmem:[%s0 + $0x180] sm:$0xff]
  %v143 = vld [vmem:[%s0 + $0x188] sm:$0xff]
  %v144 = vld [vmem:[%s0 + $0x190] sm:$0xff]
  %v145 = vld [vmem:[%s0 + $0x198] sm:$0xff]
  %v146 = vld [vmem:[%s0 + $0x1a0] sm:$0xff]
  %v147 = vld [vmem:[%s0 + $0x1a8] sm:$0xff]
  %v148 = vld [vmem:[%s0 + $0x1b0] sm:$0xff]
  %v149 = vld [vmem:[%s0 + $0x1b8] sm:$0xff]
  %v150 = vld [vmem:[%s0 + $0x1c0] sm:$0xff]
  %v151 = vld [vmem:[%s0 + $0x1c8] sm:$0xff]
  %v152 = vld [vmem:[%s0 + $0x1d0] sm:$0xff]
  %v153 = vld [vmem:[%s0 + $0x1d8] sm:$0xff]
  %v154 = vld [vmem:[%s0 + $0x1e0] sm:$0xff]
  %v155 = vld [vmem:[%s0 + $0x1e8] sm:$0xff]
  %v156 = vld [vmem:[%s0 + $0x1f0] sm:$0xff]
  %v157 = vld [vmem:[%s0 + $0x1f8] sm:$0xff]
  %v158 = vld [vmem:[%s0 + $0x200] sm:$0xff]
  %v159 = vld [vmem:[%s0 + $0x208] sm:$0xff]
  %v160 = vld [vmem:[%s0 + $0x210] sm:$0xff]
  %v161 = vld [vmem:[%s0 + $0x218] sm:$0xff]
  %v162 = vld [vmem:[%s0 + $0x220] sm:$0xff]
  %v163 = vld [vmem:[%s0 + $0x228] sm:$0xff]
  %v164 = vld [vmem:[%s0 + $0x230] sm:$0xff]
  %v165 = vld [vmem:[%s0 + $0x238] sm:$0xff]
  %v166 = vld [vmem:[%s2] sm:$0xff]
  %v167 = vld [vmem:[%s2 + $0x8] sm:$0xff]
  %v168 = vld [vmem:[%s2 + $0x10] sm:$0xff]
  %v169 = vld [vmem:[%s2 + $0x18] sm:$0xff]
  %v170 = vld [vmem:[%s2 + $0x20] sm:$0xff]
  %v171 = vld [vmem:[%s2 + $0x28] sm:$0xff]
  %v172 = vld [vmem:[%s2 + $0x30] sm:$0xff]
  %v173 = vld [vmem:[%s2 + $0x38] sm:$0xff]
  %v174 = vld [vmem:[%s2 + $0x40] sm:$0xff]
  %v175 = vld [vmem:[%s2 + $0x48] sm:$0xff]
  %v176 = vld [vmem:[%s2 + $0x50] sm:$0xff]
  %v177 = vld [vmem:[%s2 + $0x58] sm:$0xff]
  %v178 = vld [vmem:[%s2 + $0x60] sm:$0xff]
  %v179 = vld [vmem:[%s2 + $0x68] sm:$0xff]
  %v180 = vld [vmem:[%s2 + $0x70] sm:$0xff]
  %v181 = vld [vmem:[%s2 + $0x78] sm:$0xff]
  %183 = vset.pattern.permute.xlu0 0
  %184 = vperm.xlu0 %183, %v166
  %v185 = vpop.permute.xlu0 %184
  %188 = vset.pattern.permute.xlu0 0
  %189 = vperm.xlu0 %188, %v167
  %v190 = vpop.permute.xlu0 %189
  %193 = vset.pattern.permute.xlu0 0
  %194 = vperm.xlu0 %193, %v168
  %v195 = vpop.permute.xlu0 %194
  %198 = vset.pattern.permute.xlu0 0
  %199 = vperm.xlu0 %198, %v169
  %v200 = vpop.permute.xlu0 %199
  %203 = vset.pattern.permute.xlu0 0
  %204 = vperm.xlu0 %203, %v170
  %v205 = vpop.permute.xlu0 %204
  %208 = vset.pattern.permute.xlu0 0
  %209 = vperm.xlu0 %208, %v171
  %v210 = vpop.permute.xlu0 %209
  %213 = vset.pattern.permute.xlu0 0
  %214 = vperm.xlu0 %213, %v172
  %v215 = vpop.permute.xlu0 %214
  %218 = vset.pattern.permute.xlu0 0
  %219 = vperm.xlu0 %218, %v173
  %v220 = vpop.permute.xlu0 %219
  %223 = vset.pattern.permute.xlu0 0
  %224 = vperm.xlu0 %223, %v174
  %v225 = vpop.permute.xlu0 %224
  %228 = vset.pattern.permute.xlu0 0
  %229 = vperm.xlu0 %228, %v175
  %v230 = vpop.permute.xlu0 %229
  %233 = vset.pattern.permute.xlu0 0
  %234 = vperm.xlu0 %233, %v176
  %v235 = vpop.permute.xlu0 %234
  %238 = vset.pattern.permute.xlu0 0
  %239 = vperm.xlu0 %238, %v177
  %v240 = vpop.permute.xlu0 %239
  %243 = vset.pattern.permute.xlu0 0
  %244 = vperm.xlu0 %243, %v178
  %v245 = vpop.permute.xlu0 %244
  %248 = vset.pattern.permute.xlu0 0
  %249 = vperm.xlu0 %248, %v179
  %v250 = vpop.permute.xlu0 %249
  %253 = vset.pattern.permute.xlu0 0
  %254 = vperm.xlu0 %253, %v180
  %v255 = vpop.permute.xlu0 %254
  %258 = vset.pattern.permute.xlu0 0
  %259 = vperm.xlu0 %258, %v181
  %v260 = vpop.permute.xlu0 %259
  %vm262 = vcmask 523264
  %v264 = vsel %vm262, %v18, 0
  %v267 = vsel %vm262, %v23, 0
  %v270 = vsel %vm262, %v28, 0
  %v273 = vsel %vm262, %v33, 0
  %v276 = vsel %vm262, %v38, 0
  %v279 = vsel %vm262, %v43, 0
  %v282 = vsel %vm262, %v48, 0
  %v285 = vsel %vm262, %v53, 0
  %v288 = vsel %vm262, %v58, 0
  %v291 = vsel %vm262, %v63, 0
  %v294 = vsel %vm262, %v68, 0
  %v297 = vsel %vm262, %v73, 0
  %v300 = vsel %vm262, %v78, 0
  %v303 = vsel %vm262, %v83, 0
  %v306 = vsel %vm262, %v88, 0
  %v309 = vsel %vm262, %v93, 0
  %311 = vmatpush.msra.mxu0 %v109
  %312 = vmatpush.msra.mxu0 %v108
  %313 = vmatpush.msra.mxu0 %v107
  %314 = vmatpush.msra.mxu0 %v106
  %315 = vmatpush.msra.mxu0 %v105
  %316 = vmatpush.msra.mxu0 %v104
  %317 = vmatpush.msra.mxu0 %v103
  %318 = vmatpush.msra.mxu0 %v102
  %319 = vmatpush.msra.mxu0 %v101
  %320 = vmatpush.msra.mxu0 %v100
  %321 = vmatpush.msra.mxu0 %v99
  %322 = vmatpush.msra.mxu0 %v98
  %323 = vmatpush.msra.mxu0 %v97
  %324 = vmatpush.msra.mxu0 %v96
  %325 = vmatpush.msra.mxu0 %v95
  %326 = vmatpush.msra.mxu0 %v94
  %327 = vmatmul.f32.gmra.mxu0 %v14
  %v328 = vpop.f32.mrf.mxu0
  %v329 = vadd.f32 %v185, %v328
  %330 = vmatmul.f32.gmra.mxu0 %v19
  %v331 = vpop.f32.mrf.mxu0
  %v332 = vadd.f32 %v190, %v331
  %333 = vmatmul.f32.gmra.mxu0 %v24
  %v334 = vpop.f32.mrf.mxu0
  %v335 = vadd.f32 %v195, %v334
  %336 = vmatmul.f32.gmra.mxu0 %v29
  %v337 = vpop.f32.mrf.mxu0
  %v338 = vadd.f32 %v200, %v337
  %339 = vmatmul.f32.gmra.mxu0 %v34
  %v340 = vpop.f32.mrf.mxu0
  %v341 = vadd.f32 %v205, %v340
  %342 = vmatmul.f32.gmra.mxu0 %v39
  %v343 = vpop.f32.mrf.mxu0
  %v344 = vadd.f32 %v210, %v343
  %345 = vmatmul.f32.gmra.mxu0 %v44
  %v346 = vpop.f32.mrf.mxu0
  %v347 = vadd.f32 %v215, %v346
  %348 = vmatmul.f32.gmra.mxu0 %v49
  %v349 = vpop.f32.mrf.mxu0
  %v350 = vadd.f32 %v220, %v349
  %351 = vmatmul.f32.gmra.mxu0 %v54
  %v352 = vpop.f32.mrf.mxu0
  %v353 = vadd.f32 %v225, %v352
  %354 = vmatmul.f32.gmra.mxu0 %v59
  %v355 = vpop.f32.mrf.mxu0
  %v356 = vadd.f32 %v230, %v355
  %357 = vmatmul.f32.gmra.mxu0 %v64
  %v358 = vpop.f32.mrf.mxu0
  %v359 = vadd.f32 %v235, %v358
  %360 = vmatmul.f32.gmra.mxu0 %v69
  %v361 = vpop.f32.mrf.mxu0
  %v362 = vadd.f32 %v240, %v361
  %363 = vmatmul.f32.gmra.mxu0 %v74
  %v364 = vpop.f32.mrf.mxu0
  %v365 = vadd.f32 %v245, %v364
  %366 = vmatmul.f32.gmra.mxu0 %v79
  %v367 = vpop.f32.mrf.mxu0
  %v368 = vadd.f32 %v250, %v367
  %369 = vmatmul.f32.gmra.mxu0 %v84
  %v370 = vpop.f32.mrf.mxu0
  %v371 = vadd.f32 %v255, %v370
  %372 = vmatmul.f32.gmra.mxu0 %v89
  %v373 = vpop.f32.mrf.mxu0
  %v374 = vadd.f32 %v260, %v373
  %375 = vdwg.mxu0
  %376 = vmatpush.msra.mxu0 %v125
  %377 = vmatpush.msra.mxu0 %v124
  %378 = vmatpush.msra.mxu0 %v123
  %379 = vmatpush.msra.mxu0 %v122
  %380 = vmatpush.msra.mxu0 %v121
  %381 = vmatpush.msra.mxu0 %v120
  %382 = vmatpush.msra.mxu0 %v119
  %383 = vmatpush.msra.mxu0 %v118
  %384 = vmatpush.msra.mxu0 %v117
  %385 = vmatpush.msra.mxu0 %v116
  %386 = vmatpush.msra.mxu0 %v115
  %387 = vmatpush.msra.mxu0 %v114
  %388 = vmatpush.msra.mxu0 %v113
  %389 = vmatpush.msra.mxu0 %v112
  %390 = vmatpush.msra.mxu0 %v111
  %391 = vmatpush.msra.mxu0 %v110
  %392 = vmatmul.f32.gmra.mxu0 %v15
  %v393 = vpop.f32.mrf.mxu0
  %v394 = vadd.f32 %v329, %v393
  %395 = vmatmul.f32.gmra.mxu0 %v20
  %v396 = vpop.f32.mrf.mxu0
  %v397 = vadd.f32 %v332, %v396
  %398 = vmatmul.f32.gmra.mxu0 %v25
  %v399 = vpop.f32.mrf.mxu0
  %v400 = vadd.f32 %v335, %v399
  %401 = vmatmul.f32.gmra.mxu0 %v30
  %v402 = vpop.f32.mrf.mxu0
  %v403 = vadd.f32 %v338, %v402
  %404 = vmatmul.f32.gmra.mxu0 %v35
  %v405 = vpop.f32.mrf.mxu0
  %v406 = vadd.f32 %v341, %v405
  %407 = vmatmul.f32.gmra.mxu0 %v40
  %v408 = vpop.f32.mrf.mxu0
  %v409 = vadd.f32 %v344, %v408
  %410 = vmatmul.f32.gmra.mxu0 %v45
  %v411 = vpop.f32.mrf.mxu0
  %v412 = vadd.f32 %v347, %v411
  %413 = vmatmul.f32.gmra.mxu0 %v50
  %v414 = vpop.f32.mrf.mxu0
  %v415 = vadd.f32 %v350, %v414
  %416 = vmatmul.f32.gmra.mxu0 %v55
  %v417 = vpop.f32.mrf.mxu0
  %v418 = vadd.f32 %v353, %v417
  %419 = vmatmul.f32.gmra.mxu0 %v60
  %v420 = vpop.f32.mrf.mxu0
  %v421 = vadd.f32 %v356, %v420
  %422 = vmatmul.f32.gmra.mxu0 %v65
  %v423 = vpop.f32.mrf.mxu0
  %v424 = vadd.f32 %v359, %v423
  %425 = vmatmul.f32.gmra.mxu0 %v70
  %v426 = vpop.f32.mrf.mxu0
  %v427 = vadd.f32 %v362, %v426
  %428 = vmatmul.f32.gmra.mxu0 %v75
  %v429 = vpop.f32.mrf.mxu0
  %v430 = vadd.f32 %v365, %v429
  %431 = vmatmul.f32.gmra.mxu0 %v80
  %v432 = vpop.f32.mrf.mxu0
  %v433 = vadd.f32 %v368, %v432
  %434 = vmatmul.f32.gmra.mxu0 %v85
  %v435 = vpop.f32.mrf.mxu0
  %v436 = vadd.f32 %v371, %v435
  %437 = vmatmul.f32.gmra.mxu0 %v90
  %v438 = vpop.f32.mrf.mxu0
  %v439 = vadd.f32 %v374, %v438
  %440 = vdwg.mxu0
  %441 = vmatpush.msra.mxu0 %v141
  %442 = vmatpush.msra.mxu0 %v140
  %443 = vmatpush.msra.mxu0 %v139
  %444 = vmatpush.msra.mxu0 %v138
  %445 = vmatpush.msra.mxu0 %v137
  %446 = vmatpush.msra.mxu0 %v136
  %447 = vmatpush.msra.mxu0 %v135
  %448 = vmatpush.msra.mxu0 %v134
  %449 = vmatpush.msra.mxu0 %v133
  %450 = vmatpush.msra.mxu0 %v132
  %451 = vmatpush.msra.mxu0 %v131
  %452 = vmatpush.msra.mxu0 %v130
  %453 = vmatpush.msra.mxu0 %v129
  %454 = vmatpush.msra.mxu0 %v128
  %455 = vmatpush.msra.mxu0 %v127
  %456 = vmatpush.msra.mxu0 %v126
  %457 = vmatmul.f32.gmra.mxu0 %v16
  %v458 = vpop.f32.mrf.mxu0
  %v459 = vadd.f32 %v394, %v458
  %460 = vmatmul.f32.gmra.mxu0 %v21
  %v461 = vpop.f32.mrf.mxu0
  %v462 = vadd.f32 %v397, %v461
  %463 = vmatmul.f32.gmra.mxu0 %v26
  %v464 = vpop.f32.mrf.mxu0
  %v465 = vadd.f32 %v400, %v464
  %466 = vmatmul.f32.gmra.mxu0 %v31
  %v467 = vpop.f32.mrf.mxu0
  %v468 = vadd.f32 %v403, %v467
  %469 = vmatmul.f32.gmra.mxu0 %v36
  %v470 = vpop.f32.mrf.mxu0
  %v471 = vadd.f32 %v406, %v470
  %472 = vmatmul.f32.gmra.mxu0 %v41
  %v473 = vpop.f32.mrf.mxu0
  %v474 = vadd.f32 %v409, %v473
  %475 = vmatmul.f32.gmra.mxu0 %v46
  %v476 = vpop.f32.mrf.mxu0
  %v477 = vadd.f32 %v412, %v476
  %478 = vmatmul.f32.gmra.mxu0 %v51
  %v479 = vpop.f32.mrf.mxu0
  %v480 = vadd.f32 %v415, %v479
  %481 = vmatmul.f32.gmra.mxu0 %v56
  %v482 = vpop.f32.mrf.mxu0
  %v483 = vadd.f32 %v418, %v482
  %484 = vmatmul.f32.gmra.mxu0 %v61
  %v485 = vpop.f32.mrf.mxu0
  %v486 = vadd.f32 %v421, %v485
  %487 = vmatmul.f32.gmra.mxu0 %v66
  %v488 = vpop.f32.mrf.mxu0
  %v489 = vadd.f32 %v424, %v488
  %490 = vmatmul.f32.gmra.mxu0 %v71
  %v491 = vpop.f32.mrf.mxu0
  %v492 = vadd.f32 %v427, %v491
  %493 = vmatmul.f32.gmra.mxu0 %v76
  %v494 = vpop.f32.mrf.mxu0
  %v495 = vadd.f32 %v430, %v494
  %496 = vmatmul.f32.gmra.mxu0 %v81
  %v497 = vpop.f32.mrf.mxu0
  %v498 = vadd.f32 %v433, %v497
  %499 = vmatmul.f32.gmra.mxu0 %v86
  %v500 = vpop.f32.mrf.mxu0
  %v501 = vadd.f32 %v436, %v500
  %502 = vmatmul.f32.gmra.mxu0 %v91
  %v503 = vpop.f32.mrf.mxu0
  %v504 = vadd.f32 %v439, %v503
  %505 = vdwg.mxu0
  %506 = vmatpush.msra.mxu0 %v157
  %507 = vmatpush.msra.mxu0 %v156
  %508 = vmatpush.msra.mxu0 %v155
  %509 = vmatpush.msra.mxu0 %v154
  %510 = vmatpush.msra.mxu0 %v153
  %511 = vmatpush.msra.mxu0 %v152
  %512 = vmatpush.msra.mxu0 %v151
  %513 = vmatpush.msra.mxu0 %v150
  %514 = vmatpush.msra.mxu0 %v149
  %515 = vmatpush.msra.mxu0 %v148
  %516 = vmatpush.msra.mxu0 %v147
  %517 = vmatpush.msra.mxu0 %v146
  %518 = vmatpush.msra.mxu0 %v145
  %519 = vmatpush.msra.mxu0 %v144
  %520 = vmatpush.msra.mxu0 %v143
  %521 = vmatpush.msra.mxu0 %v142
  %522 = vmatmul.f32.gmra.mxu0 %v17
  %v523 = vpop.f32.mrf.mxu0
  %v524 = vadd.f32 %v459, %v523
  %525 = vmatmul.f32.gmra.mxu0 %v22
  %v526 = vpop.f32.mrf.mxu0
  %v527 = vadd.f32 %v462, %v526
  %528 = vmatmul.f32.gmra.mxu0 %v27
  %v529 = vpop.f32.mrf.mxu0
  %v530 = vadd.f32 %v465, %v529
  %531 = vmatmul.f32.gmra.mxu0 %v32
  %v532 = vpop.f32.mrf.mxu0
  %v533 = vadd.f32 %v468, %v532
  %534 = vmatmul.f32.gmra.mxu0 %v37
  %v535 = vpop.f32.mrf.mxu0
  %v536 = vadd.f32 %v471, %v535
  %537 = vmatmul.f32.gmra.mxu0 %v42
  %v538 = vpop.f32.mrf.mxu0
  %v539 = vadd.f32 %v474, %v538
  %540 = vmatmul.f32.gmra.mxu0 %v47
  %v541 = vpop.f32.mrf.mxu0
  %v542 = vadd.f32 %v477, %v541
  %543 = vmatmul.f32.gmra.mxu0 %v52
  %v544 = vpop.f32.mrf.mxu0
  %v545 = vadd.f32 %v480, %v544
  %546 = vmatmul.f32.gmra.mxu0 %v57
  %v547 = vpop.f32.mrf.mxu0
  %v548 = vadd.f32 %v483, %v547
  %549 = vmatmul.f32.gmra.mxu0 %v62
  %v550 = vpop.f32.mrf.mxu0
  %v551 = vadd.f32 %v486, %v550
  %552 = vmatmul.f32.gmra.mxu0 %v67
  %v553 = vpop.f32.mrf.mxu0
  %v554 = vadd.f32 %v489, %v553
  %555 = vmatmul.f32.gmra.mxu0 %v72
  %v556 = vpop.f32.mrf.mxu0
  %v557 = vadd.f32 %v492, %v556
  %558 = vmatmul.f32.gmra.mxu0 %v77
  %v559 = vpop.f32.mrf.mxu0
  %v560 = vadd.f32 %v495, %v559
  %561 = vmatmul.f32.gmra.mxu0 %v82
  %v562 = vpop.f32.mrf.mxu0
  %v563 = vadd.f32 %v498, %v562
  %564 = vmatmul.f32.gmra.mxu0 %v87
  %v565 = vpop.f32.mrf.mxu0
  %v566 = vadd.f32 %v501, %v565
  %567 = vmatmul.f32.gmra.mxu0 %v92
  %v568 = vpop.f32.mrf.mxu0
  %v569 = vadd.f32 %v504, %v568
  %570 = vdwg.mxu0
  %571 = vmatpush.msra.mxu0 0.0
  %572 = vmatpush.msra.mxu0 0.0
  %573 = vmatpush.msra.mxu0 0.0
  %574 = vmatpush.msra.mxu0 0.0
  %575 = vmatpush.msra.mxu0 0.0
  %576 = vmatpush.msra.mxu0 0.0
  %577 = vmatpush.msra.mxu0 0.0
  %578 = vmatpush.msra.mxu0 0.0
  %579 = vmatpush.msra.mxu0 %v165
  %580 = vmatpush.msra.mxu0 %v164
  %581 = vmatpush.msra.mxu0 %v163
  %582 = vmatpush.msra.mxu0 %v162
  %583 = vmatpush.msra.mxu0 %v161
  %584 = vmatpush.msra.mxu0 %v160
  %585 = vmatpush.msra.mxu0 %v159
  %586 = vmatpush.msra.mxu0 %v158
  %587 = vmatmul.f32.gmra.mxu0 %v264
  %v588 = vpop.f32.mrf.mxu0
  %v589 = vadd.f32 %v524, %v588
  %590 = vmatmul.f32.gmra.mxu0 %v267
  %v591 = vpop.f32.mrf.mxu0
  %v592 = vadd.f32 %v527, %v591
  %593 = vmatmul.f32.gmra.mxu0 %v270
  %v594 = vpop.f32.mrf.mxu0
  %v595 = vadd.f32 %v530, %v594
  %596 = vmatmul.f32.gmra.mxu0 %v273
  %v597 = vpop.f32.mrf.mxu0
  %v598 = vadd.f32 %v533, %v597
  %599 = vmatmul.f32.gmra.mxu0 %v276
  %v600 = vpop.f32.mrf.mxu0
  %v601 = vadd.f32 %v536, %v600
  %602 = vmatmul.f32.gmra.mxu0 %v279
  %v603 = vpop.f32.mrf.mxu0
  %v604 = vadd.f32 %v539, %v603
  %605 = vmatmul.f32.gmra.mxu0 %v282
  %v606 = vpop.f32.mrf.mxu0
  %v607 = vadd.f32 %v542, %v606
  %608 = vmatmul.f32.gmra.mxu0 %v285
  %v609 = vpop.f32.mrf.mxu0
  %v610 = vadd.f32 %v545, %v609
  %611 = vmatmul.f32.gmra.mxu0 %v288
  %v612 = vpop.f32.mrf.mxu0
  %v613 = vadd.f32 %v548, %v612
  %614 = vmatmul.f32.gmra.mxu0 %v291
  %v615 = vpop.f32.mrf.mxu0
  %v616 = vadd.f32 %v551, %v615
  %617 = vmatmul.f32.gmra.mxu0 %v294
  %v618 = vpop.f32.mrf.mxu0
  %v619 = vadd.f32 %v554, %v618
  %620 = vmatmul.f32.gmra.mxu0 %v297
  %v621 = vpop.f32.mrf.mxu0
  %v622 = vadd.f32 %v557, %v621
  %623 = vmatmul.f32.gmra.mxu0 %v300
  %v624 = vpop.f32.mrf.mxu0
  %v625 = vadd.f32 %v560, %v624
  %626 = vmatmul.f32.gmra.mxu0 %v303
  %v627 = vpop.f32.mrf.mxu0
  %v628 = vadd.f32 %v563, %v627
  %629 = vmatmul.f32.gmra.mxu0 %v306
  %v630 = vpop.f32.mrf.mxu0
  %v631 = vadd.f32 %v566, %v630
  %632 = vmatmul.f32.gmra.mxu0 %v309
  %v633 = vpop.f32.mrf.mxu0
  %v634 = vadd.f32 %v569, %v633
  %635 = vdwg.mxu0
  %vm636 = vcmp.ge.f32.partialorder %v589, 0.0
  %vm637 = vcmp.ge.f32.partialorder %v592, 0.0
  %vm638 = vcmp.ge.f32.partialorder %v595, 0.0
  %vm639 = vcmp.ge.f32.partialorder %v598, 0.0
  %vm640 = vcmp.ge.f32.partialorder %v601, 0.0
  %vm641 = vcmp.ge.f32.partialorder %v604, 0.0
  %vm642 = vcmp.ge.f32.partialorder %v607, 0.0
  %vm643 = vcmp.ge.f32.partialorder %v610, 0.0
  %vm644 = vcmp.ge.f32.partialorder %v613, 0.0
  %vm645 = vcmp.ge.f32.partialorder %v616, 0.0
  %vm646 = vcmp.ge.f32.partialorder %v619, 0.0
  %vm647 = vcmp.ge.f32.partialorder %v622, 0.0
  %vm648 = vcmp.ge.f32.partialorder %v625, 0.0
  %vm649 = vcmp.ge.f32.partialorder %v628, 0.0
  %vm650 = vcmp.ge.f32.partialorder %v631, 0.0
  %vm651 = vcmp.ge.f32.partialorder %v634, 0.0
  %v652 = vmul.f32 %v589, 0.2
  %v653 = vmul.f32 %v592, 0.2
  %v654 = vmul.f32 %v595, 0.2
  %v655 = vmul.f32 %v598, 0.2
  %v656 = vmul.f32 %v601, 0.2
  %v657 = vmul.f32 %v604, 0.2
  %v658 = vmul.f32 %v607, 0.2
  %v659 = vmul.f32 %v610, 0.2
  %v660 = vmul.f32 %v613, 0.2
  %v661 = vmul.f32 %v616, 0.2
  %v662 = vmul.f32 %v619, 0.2
  %v663 = vmul.f32 %v622, 0.2
  %v664 = vmul.f32 %v625, 0.2
  %v665 = vmul.f32 %v628, 0.2
  %v666 = vmul.f32 %v631, 0.2
  %v667 = vmul.f32 %v634, 0.2
  %v668 = vsel %vm636, %v589, %v652
  %v669 = vsel %vm637, %v592, %v653
  %v670 = vsel %vm638, %v595, %v654
  %v671 = vsel %vm639, %v598, %v655
  %v672 = vsel %vm640, %v601, %v656
  %v673 = vsel %vm641, %v604, %v657
  %v674 = vsel %vm642, %v607, %v658
  %v675 = vsel %vm643, %v610, %v659
  %v676 = vsel %vm644, %v613, %v660
  %v677 = vsel %vm645, %v616, %v661
  %v678 = vsel %vm646, %v619, %v662
  %v679 = vsel %vm647, %v622, %v663
  %v680 = vsel %vm648, %v625, %v664
  %v681 = vsel %vm649, %v628, %v665
  %v682 = vsel %vm650, %v631, %v666
  %v683 = vsel %vm651, %v634, %v667
  %v684 = vmul.f32 %v668, %v668
  %v685 = vmul.f32 %v669, %v669
  %v686 = vmul.f32 %v670, %v670
  %v687 = vmul.f32 %v671, %v671
  %v688 = vmul.f32 %v672, %v672
  %v689 = vmul.f32 %v673, %v673
  %v690 = vmul.f32 %v674, %v674
  %v691 = vmul.f32 %v675, %v675
  %v692 = vmul.f32 %v676, %v676
  %v693 = vmul.f32 %v677, %v677
  %v694 = vmul.f32 %v678, %v678
  %v695 = vmul.f32 %v679, %v679
  %v696 = vmul.f32 %v680, %v680
  %v697 = vmul.f32 %v681, %v681
  %v698 = vmul.f32 %v682, %v682
  %v699 = vmul.f32 %v683, %v683
  %vm700 = vcmask 228352
  %v701 = vsel %vm700, %v684, 0.0
  %v702 = vsel %vm700, %v685, 0.0
  %v703 = vadd.f32 %v701, %v702
  %v704 = vsel %vm700, %v686, 0.0
  %v705 = vadd.f32 %v703, %v704
  %v706 = vsel %vm700, %v687, 0.0
  %v707 = vadd.f32 %v705, %v706
  %v708 = vsel %vm700, %v688, 0.0
  %v709 = vadd.f32 %v707, %v708
  %v710 = vsel %vm700, %v689, 0.0
  %v711 = vadd.f32 %v709, %v710
  %v712 = vsel %vm700, %v690, 0.0
  %v713 = vadd.f32 %v711, %v712
  %v714 = vsel %vm700, %v691, 0.0
  %v715 = vadd.f32 %v713, %v714
  %v716 = vsel %vm700, %v692, 0.0
  %v717 = vadd.f32 %v715, %v716
  %v718 = vsel %vm700, %v693, 0.0
  %v719 = vadd.f32 %v717, %v718
  %v720 = vsel %vm700, %v694, 0.0
  %v721 = vadd.f32 %v719, %v720
  %v722 = vsel %vm700, %v695, 0.0
  %v723 = vadd.f32 %v721, %v722
  %v724 = vsel %vm700, %v696, 0.0
  %v725 = vadd.f32 %v723, %v724
  %v726 = vsel %vm700, %v697, 0.0
  %v727 = vadd.f32 %v725, %v726
  %v728 = vsel %vm700, %v698, 0.0
  %v729 = vadd.f32 %v727, %v728
  %v730 = vsel %vm700, %v699, 0.0
  %v731 = vadd.f32 %v729, %v730
  %v732 = vrot.slane %v731, 4
  %v733 = vadd.f32 %v731, %v732
  %v734 = vrot.slane %v733, 2
  %v735 = vadd.f32 %v733, %v734
  %v736 = vrot.slane %v735, 1
  %v737 = vadd.f32 %v735, %v736
  %v738 = vmul.f32 %v737, 0.0078125
  %v739 = vadd.f32 %v738, 1e-08
  %v740 = vrsqrt.pop %v739
  %v741 = vmul.f32 %v740, %v739
  %v742 = vmul.f32 %v741, %v740
  %v743 = vmul.f32 0.5, %v742
  %v744 = vsub.f32 1.5, %v743
  %v745 = vmul.f32 %v740, %v744
  %vm746 = vweird.f32 %v739
  %vm747 = vweird.f32 %v740
  %vm748 = vmor %vm746, %vm747
  %v749 = vsel %vm748, %v740, %v745
  %v750 = vmul.f32 %v668, %v749
  %v751 = vmul.f32 %v669, %v749
  %v752 = vmul.f32 %v670, %v749
  %v753 = vmul.f32 %v671, %v749
  %v754 = vmul.f32 %v672, %v749
  %v755 = vmul.f32 %v673, %v749
  %v756 = vmul.f32 %v674, %v749
  %v757 = vmul.f32 %v675, %v749
  %v758 = vmul.f32 %v676, %v749
  %v759 = vmul.f32 %v677, %v749
  %v760 = vmul.f32 %v678, %v749
  %v761 = vmul.f32 %v679, %v749
  %v762 = vmul.f32 %v680, %v749
  %v763 = vmul.f32 %v681, %v749
  %v764 = vmul.f32 %v682, %v749
  %v765 = vmul.f32 %v683, %v749
  %766 = vst.msk [vmem:[%s3] sm:$0xff] %vm700, %v750
  %767 = vst.msk [vmem:[%s3 + $0x8] sm:$0xff] %vm700, %v751
  %768 = vst.msk [vmem:[%s3 + $0x10] sm:$0xff] %vm700, %v752
  %769 = vst.msk [vmem:[%s3 + $0x18] sm:$0xff] %vm700, %v753
  %770 = vst.msk [vmem:[%s3 + $0x20] sm:$0xff] %vm700, %v754
  %771 = vst.msk [vmem:[%s3 + $0x28] sm:$0xff] %vm700, %v755
  %772 = vst.msk [vmem:[%s3 + $0x30] sm:$0xff] %vm700, %v756
  %773 = vst.msk [vmem:[%s3 + $0x38] sm:$0xff] %vm700, %v757
  %774 = vst.msk [vmem:[%s3 + $0x40] sm:$0xff] %vm700, %v758
  %775 = vst.msk [vmem:[%s3 + $0x48] sm:$0xff] %vm700, %v759
  %776 = vst.msk [vmem:[%s3 + $0x50] sm:$0xff] %vm700, %v760
  %777 = vst.msk [vmem:[%s3 + $0x58] sm:$0xff] %vm700, %v761
  %778 = vst.msk [vmem:[%s3 + $0x60] sm:$0xff] %vm700, %v762
  %779 = vst.msk [vmem:[%s3 + $0x68] sm:$0xff] %vm700, %v763
  %780 = vst.msk [vmem:[%s3 + $0x70] sm:$0xff] %vm700, %v764
  %781 = vst.msk [vmem:[%s3 + $0x78] sm:$0xff] %vm700, %v765
  // Predicated region
  $region14: #{unet_block_forward.11} parent=0 // pred_check
    _
  $region15: #{unet_block_forward.11} parent=0 // pred_check_branch
    %783 = sbr.rel (0) target = $region17
  $region16: #{unet_block_forward.11} parent=0 // pred_region
    _
  $region17: #{unet_block_forward.11} parent=0 // pred_fallthru
    _
  // Predicated region
  $region18: #{unet_block_forward.11} parent=0 // pred_check
    _
  $region19: #{unet_block_forward.11} parent=0 // pred_check_branch
    %785 = sbr.rel (0) target = $region21
  $region20: #{unet_block_forward.11} parent=0 // pred_region
    _
  $region21: #{unet_block_forward.11} parent=0 // pred_fallthru
    _

// kernel: unet_block_forward.12
$region0: #{unet_block_forward.12}
  #allocation0 [shape = 'u32[]', space=smem, size = 0x4, offset = 0x4, fixed_abs, tag = 'smem constant byte address 0x4 - core index']
  #allocation1 [shape = 'u32[72,128]{1,0:T(1,128)}', space=vmem, size = 0x9000, scoped, tag = 'internal scratch']
  %s0 = inlined_call_operand.vmem [shape: f32[1152,112], index: 0, kind: input, shape index: {}]
  %s1 = inlined_call_operand.vmem [shape: f32[64,1152], index: 1, kind: input, shape index: {}]
  %s2 = inlined_call_operand.vmem [shape: f32[64,1], index: 2, kind: input, shape index: {}]
  %s3 = inlined_call_operand.vmem [shape: f32[64,112], index: 3, kind: output, shape index: {}]
  %s4 = sld [smem:[#allocation0]]
  $region22: #{unet_block_forward.12} parent=0
    _
  %s6 = ssub.s32 1, %s4
  %s7 = scalar_select 0, %s6, %s4
  // Predicated region
  $region2: #{unet_block_forward.12} parent=0 // pred_check
    _
  $region3: #{unet_block_forward.12} parent=0 // pred_check_branch
    %9 = sbr.rel (0) target = $region5
  $region4: #{unet_block_forward.12} parent=0 // pred_region
    _
  $region5: #{unet_block_forward.12} parent=0 // pred_fallthru
    _
  // Predicated region
  $region6: #{unet_block_forward.12} parent=0 // pred_check
    _
  $region7: #{unet_block_forward.12} parent=0 // pred_check_branch
    %11 = sbr.rel (0) target = $region9
  $region8: #{unet_block_forward.12} parent=0 // pred_region
    _
  $region9: #{unet_block_forward.12} parent=0 // pred_fallthru
    _
  // Predicated region
  $region10: #{unet_block_forward.12} parent=0 // pred_check
    _
  $region11: #{unet_block_forward.12} parent=0 // pred_check_branch
    %13 = sbr.rel (0) target = $region13
  $region12: #{unet_block_forward.12} parent=0 // pred_region
    _
  $region13: #{unet_block_forward.12} parent=0 // pred_fallthru
    _
  %v14 = vld [vmem:[%s1] sm:$0xff]
  %v15 = vld [vmem:[%s1 + $0x8] sm:$0xff]
  %v16 = vld [vmem:[%s1 + $0x10] sm:$0xff]
  %v17 = vld [vmem:[%s1 + $0x18] sm:$0xff]
  %v18 = vld [vmem:[%s1 + $0x20] sm:$0xff]
  %v19 = vld [vmem:[%s1 + $0x28] sm:$0xff]
  %v20 = vld [vmem:[%s1 + $0x30] sm:$0xff]
  %v21 = vld [vmem:[%s1 + $0x38] sm:$0xff]
  %v22 = vld [vmem:[%s1 + $0x40] sm:$0xff]
  %v23 = vld [vmem:[%s1 + $0x48] sm:$0xff]
  %v24 = vld [vmem:[%s1 + $0x50] sm:$0xff]
  %v25 = vld [vmem:[%s1 + $0x58] sm:$0xff]
  %v26 = vld [vmem:[%s1 + $0x60] sm:$0xff]
  %v27 = vld [vmem:[%s1 + $0x68] sm:$0xff]
  %v28 = vld [vmem:[%s1 + $0x70] sm:$0xff]
  %v29 = vld [vmem:[%s1 + $0x78] sm:$0xff]
  %v30 = vld [vmem:[%s1 + $0x80] sm:$0xff]
  %v31 = vld [vmem:[%s1 + $0x88] sm:$0xff]
  %v32 = vld [vmem:[%s1 + $0x90] sm:$0xff]
  %v33 = vld [vmem:[%s1 + $0x98] sm:$0xff]
  %v34 = vld [vmem:[%s1 + $0xa0] sm:$0xff]
  %v35 = vld [vmem:[%s1 + $0xa8] sm:$0xff]
  %v36 = vld [vmem:[%s1 + $0xb0] sm:$0xff]
  %v37 = vld [vmem:[%s1 + $0xb8] sm:$0xff]
  %v38 = vld [vmem:[%s1 + $0xc0] sm:$0xff]
  %v39 = vld [vmem:[%s1 + $0xc8] sm:$0xff]
  %v40 = vld [vmem:[%s1 + $0xd0] sm:$0xff]
  %v41 = vld [vmem:[%s1 + $0xd8] sm:$0xff]
  %v42 = vld [vmem:[%s1 + $0xe0] sm:$0xff]
  %v43 = vld [vmem:[%s1 + $0xe8] sm:$0xff]
  %v44 = vld [vmem:[%s1 + $0xf0] sm:$0xff]
  %v45 = vld [vmem:[%s1 + $0xf8] sm:$0xff]
  %v46 = vld [vmem:[%s1 + $0x100] sm:$0xff]
  %v47 = vld [vmem:[%s1 + $0x108] sm:$0xff]
  %v48 = vld [vmem:[%s1 + $0x110] sm:$0xff]
  %v49 = vld [vmem:[%s1 + $0x118] sm:$0xff]
  %v50 = vld [vmem:[%s1 + $0x120] sm:$0xff]
  %v51 = vld [vmem:[%s1 + $0x128] sm:$0xff]
  %v52 = vld [vmem:[%s1 + $0x130] sm:$0xff]
  %v53 = vld [vmem:[%s1 + $0x138] sm:$0xff]
  %v54 = vld [vmem:[%s1 + $0x140] sm:$0xff]
  %v55 = vld [vmem:[%s1 + $0x148] sm:$0xff]
  %v56 = vld [vmem:[%s1 + $0x150] sm:$0xff]
  %v57 = vld [vmem:[%s1 + $0x158] sm:$0xff]
  %v58 = vld [vmem:[%s1 + $0x160] sm:$0xff]
  %v59 = vld [vmem:[%s1 + $0x168] sm:$0xff]
  %v60 = vld [vmem:[%s1 + $0x170] sm:$0xff]
  %v61 = vld [vmem:[%s1 + $0x178] sm:$0xff]
  %v62 = vld [vmem:[%s1 + $0x180] sm:$0xff]
  %v63 = vld [vmem:[%s1 + $0x188] sm:$0xff]
  %v64 = vld [vmem:[%s1 + $0x190] sm:$0xff]
  %v65 = vld [vmem:[%s1 + $0x198] sm:$0xff]
  %v66 = vld [vmem:[%s1 + $0x1a0] sm:$0xff]
  %v67 = vld [vmem:[%s1 + $0x1a8] sm:$0xff]
  %v68 = vld [vmem:[%s1 + $0x1b0] sm:$0xff]
  %v69 = vld [vmem:[%s1 + $0x1b8] sm:$0xff]
  %v70 = vld [vmem:[%s1 + $0x1c0] sm:$0xff]
  %v71 = vld [vmem:[%s1 + $0x1c8] sm:$0xff]
  %v72 = vld [vmem:[%s1 + $0x1d0] sm:$0xff]
  %v73 = vld [vmem:[%s1 + $0x1d8] sm:$0xff]
  %v74 = vld [vmem:[%s1 + $0x1e0] sm:$0xff]
  %v75 = vld [vmem:[%s1 + $0x1e8] sm:$0xff]
  %v76 = vld [vmem:[%s1 + $0x1f0] sm:$0xff]
  %v77 = vld [vmem:[%s1 + $0x1f8] sm:$0xff]
  %v78 = vld [vmem:[%s1 + $0x200] sm:$0xff]
  %v79 = vld [vmem:[%s1 + $0x208] sm:$0xff]
  %v80 = vld [vmem:[%s1 + $0x210] sm:$0xff]
  %v81 = vld [vmem:[%s1 + $0x218] sm:$0xff]
  %v82 = vld [vmem:[%s1 + $0x220] sm:$0xff]
  %v83 = vld [vmem:[%s1 + $0x228] sm:$0xff]
  %v84 = vld [vmem:[%s1 + $0x230] sm:$0xff]
  %v85 = vld [vmem:[%s1 + $0x238] sm:$0xff]
  %v86 = vld [vmem:[%s0] sm:$0xff]
  %v87 = vld [vmem:[%s0 + $0x8] sm:$0xff]
  %v88 = vld [vmem:[%s0 + $0x10] sm:$0xff]
  %v89 = vld [vmem:[%s0 + $0x18] sm:$0xff]
  %v90 = vld [vmem:[%s0 + $0x20] sm:$0xff]
  %v91 = vld [vmem:[%s0 + $0x28] sm:$0xff]
  %v92 = vld [vmem:[%s0 + $0x30] sm:$0xff]
  %v93 = vld [vmem:[%s0 + $0x38] sm:$0xff]
  %v94 = vld [vmem:[%s0 + $0x40] sm:$0xff]
  %v95 = vld [vmem:[%s0 + $0x48] sm:$0xff]
  %v96 = vld [vmem:[%s0 + $0x50] sm:$0xff]
  %v97 = vld [vmem:[%s0 + $0x58] sm:$0xff]
  %v98 = vld [vmem:[%s0 + $0x60] sm:$0xff]
  %v99 = vld [vmem:[%s0 + $0x68] sm:$0xff]
  %v100 = vld [vmem:[%s0 + $0x70] sm:$0xff]
  %v101 = vld [vmem:[%s0 + $0x78] sm:$0xff]
  %v102 = vld [vmem:[%s0 + $0x80] sm:$0xff]
  %v103 = vld [vmem:[%s0 + $0x88] sm:$0xff]
  %v104 = vld [vmem:[%s0 + $0x90] sm:$0xff]
  %v105 = vld [vmem:[%s0 + $0x98] sm:$0xff]
  %v106 = vld [vmem:[%s0 + $0xa0] sm:$0xff]
  %v107 = vld [vmem:[%s0 + $0xa8] sm:$0xff]
  %v108 = vld [vmem:[%s0 + $0xb0] sm:$0xff]
  %v109 = vld [vmem:[%s0 + $0xb8] sm:$0xff]
  %v110 = vld [vmem:[%s0 + $0xc0] sm:$0xff]
  %v111 = vld [vmem:[%s0 + $0xc8] sm:$0xff]
  %v112 = vld [vmem:[%s0 + $0xd0] sm:$0xff]
  %v113 = vld [vmem:[%s0 + $0xd8] sm:$0xff]
  %v114 = vld [vmem:[%s0 + $0xe0] sm:$0xff]
  %v115 = vld [vmem:[%s0 + $0xe8] sm:$0xff]
  %v116 = vld [vmem:[%s0 + $0xf0] sm:$0xff]
  %v117 = vld [vmem:[%s0 + $0xf8] sm:$0xff]
  %v118 = vld [vmem:[%s0 + $0x100] sm:$0xff]
  %v119 = vld [vmem:[%s0 + $0x108] sm:$0xff]
  %v120 = vld [vmem:[%s0 + $0x110] sm:$0xff]
  %v121 = vld [vmem:[%s0 + $0x118] sm:$0xff]
  %v122 = vld [vmem:[%s0 + $0x120] sm:$0xff]
  %v123 = vld [vmem:[%s0 + $0x128] sm:$0xff]
  %v124 = vld [vmem:[%s0 + $0x130] sm:$0xff]
  %v125 = vld [vmem:[%s0 + $0x138] sm:$0xff]
  %v126 = vld [vmem:[%s0 + $0x140] sm:$0xff]
  %v127 = vld [vmem:[%s0 + $0x148] sm:$0xff]
  %v128 = vld [vmem:[%s0 + $0x150] sm:$0xff]
  %v129 = vld [vmem:[%s0 + $0x158] sm:$0xff]
  %v130 = vld [vmem:[%s0 + $0x160] sm:$0xff]
  %v131 = vld [vmem:[%s0 + $0x168] sm:$0xff]
  %v132 = vld [vmem:[%s0 + $0x170] sm:$0xff]
  %v133 = vld [vmem:[%s0 + $0x178] sm:$0xff]
  %v134 = vld [vmem:[%s0 + $0x180] sm:$0xff]
  %v135 = vld [vmem:[%s0 + $0x188] sm:$0xff]
  %v136 = vld [vmem:[%s0 + $0x190] sm:$0xff]
  %v137 = vld [vmem:[%s0 + $0x198] sm:$0xff]
  %v138 = vld [vmem:[%s0 + $0x1a0] sm:$0xff]
  %v139 = vld [vmem:[%s0 + $0x1a8] sm:$0xff]
  %v140 = vld [vmem:[%s0 + $0x1b0] sm:$0xff]
  %v141 = vld [vmem:[%s0 + $0x1b8] sm:$0xff]
  %v142 = vld [vmem:[%s0 + $0x1c0] sm:$0xff]
  %v143 = vld [vmem:[%s0 + $0x1c8] sm:$0xff]
  %v144 = vld [vmem:[%s0 + $0x1d0] sm:$0xff]
  %v145 = vld [vmem:[%s0 + $0x1d8] sm:$0xff]
  %v146 = vld [vmem:[%s0 + $0x1e0] sm:$0xff]
  %v147 = vld [vmem:[%s0 + $0x1e8] sm:$0xff]
  %v148 = vld [vmem:[%s0 + $0x1f0] sm:$0xff]
  %v149 = vld [vmem:[%s0 + $0x1f8] sm:$0xff]
  %v150 = vld [vmem:[%s0 + $0x200] sm:$0xff]
  %v151 = vld [vmem:[%s0 + $0x208] sm:$0xff]
  %v152 = vld [vmem:[%s0 + $0x210] sm:$0xff]
  %v153 = vld [vmem:[%s0 + $0x218] sm:$0xff]
  %v154 = vld [vmem:[%s0 + $0x220] sm:$0xff]
  %v155 = vld [vmem:[%s0 + $0x228] sm:$0xff]
  %v156 = vld [vmem:[%s0 + $0x230] sm:$0xff]
  %v157 = vld [vmem:[%s0 + $0x238] sm:$0xff]
  %v158 = vld [vmem:[%s0 + $0x240] sm:$0xff]
  %v159 = vld [vmem:[%s0 + $0x248] sm:$0xff]
  %v160 = vld [vmem:[%s0 + $0x250] sm:$0xff]
  %v161 = vld [vmem:[%s0 + $0x258] sm:$0xff]
  %v162 = vld [vmem:[%s0 + $0x260] sm:$0xff]
  %v163 = vld [vmem:[%s0 + $0x268] sm:$0xff]
  %v164 = vld [vmem:[%s0 + $0x270] sm:$0xff]
  %v165 = vld [vmem:[%s0 + $0x278] sm:$0xff]
  %v166 = vld [vmem:[%s0 + $0x280] sm:$0xff]
  %v167 = vld [vmem:[%s0 + $0x288] sm:$0xff]
  %v168 = vld [vmem:[%s0 + $0x290] sm:$0xff]
  %v169 = vld [vmem:[%s0 + $0x298] sm:$0xff]
  %v170 = vld [vmem:[%s0 + $0x2a0] sm:$0xff]
  %v171 = vld [vmem:[%s0 + $0x2a8] sm:$0xff]
  %v172 = vld [vmem:[%s0 + $0x2b0] sm:$0xff]
  %v173 = vld [vmem:[%s0 + $0x2b8] sm:$0xff]
  %v174 = vld [vmem:[%s0 + $0x2c0] sm:$0xff]
  %v175 = vld [vmem:[%s0 + $0x2c8] sm:$0xff]
  %v176 = vld [vmem:[%s0 + $0x2d0] sm:$0xff]
  %v177 = vld [vmem:[%s0 + $0x2d8] sm:$0xff]
  %v178 = vld [vmem:[%s0 + $0x2e0] sm:$0xff]
  %v179 = vld [vmem:[%s0 + $0x2e8] sm:$0xff]
  %v180 = vld [vmem:[%s0 + $0x2f0] sm:$0xff]
  %v181 = vld [vmem:[%s0 + $0x2f8] sm:$0xff]
  %v182 = vld [vmem:[%s0 + $0x300] sm:$0xff]
  %v183 = vld [vmem:[%s0 + $0x308] sm:$0xff]
  %v184 = vld [vmem:[%s0 + $0x310] sm:$0xff]
  %v185 = vld [vmem:[%s0 + $0x318] sm:$0xff]
  %v186 = vld [vmem:[%s0 + $0x320] sm:$0xff]
  %v187 = vld [vmem:[%s0 + $0x328] sm:$0xff]
  %v188 = vld [vmem:[%s0 + $0x330] sm:$0xff]
  %v189 = vld [vmem:[%s0 + $0x338] sm:$0xff]
  %v190 = vld [vmem:[%s0 + $0x340] sm:$0xff]
  %v191 = vld [vmem:[%s0 + $0x348] sm:$0xff]
  %v192 = vld [vmem:[%s0 + $0x350] sm:$0xff]
  %v193 = vld [vmem:[%s0 + $0x358] sm:$0xff]
  %v194 = vld [vmem:[%s0 + $0x360] sm:$0xff]
  %v195 = vld [vmem:[%s0 + $0x368] sm:$0xff]
  %v196 = vld [vmem:[%s0 + $0x370] sm:$0xff]
  %v197 = vld [vmem:[%s0 + $0x378] sm:$0xff]
  %v198 = vld [vmem:[%s0 + $0x380] sm:$0xff]
  %v199 = vld [vmem:[%s0 + $0x388] sm:$0xff]
  %v200 = vld [vmem:[%s0 + $0x390] sm:$0xff]
  %v201 = vld [vmem:[%s0 + $0x398] sm:$0xff]
  %v202 = vld [vmem:[%s0 + $0x3a0] sm:$0xff]
  %v203 = vld [vmem:[%s0 + $0x3a8] sm:$0xff]
  %v204 = vld [vmem:[%s0 + $0x3b0] sm:$0xff]
  %v205 = vld [vmem:[%s0 + $0x3b8] sm:$0xff]
  %v206 = vld [vmem:[%s0 + $0x3c0] sm:$0xff]
  %v207 = vld [vmem:[%s0 + $0x3c8] sm:$0xff]
  %v208 = vld [vmem:[%s0 + $0x3d0] sm:$0xff]
  %v209 = vld [vmem:[%s0 + $0x3d8] sm:$0xff]
  %v210 = vld [vmem:[%s0 + $0x3e0] sm:$0xff]
  %v211 = vld [vmem:[%s0 + $0x3e8] sm:$0xff]
  %v212 = vld [vmem:[%s0 + $0x3f0] sm:$0xff]
  %v213 = vld [vmem:[%s0 + $0x3f8] sm:$0xff]
  %v214 = vld [vmem:[%s0 + $0x400] sm:$0xff]
  %v215 = vld [vmem:[%s0 + $0x408] sm:$0xff]
  %v216 = vld [vmem:[%s0 + $0x410] sm:$0xff]
  %v217 = vld [vmem:[%s0 + $0x418] sm:$0xff]
  %v218 = vld [vmem:[%s0 + $0x420] sm:$0xff]
  %v219 = vld [vmem:[%s0 + $0x428] sm:$0xff]
  %v220 = vld [vmem:[%s0 + $0x430] sm:$0xff]
  %v221 = vld [vmem:[%s0 + $0x438] sm:$0xff]
  %v222 = vld [vmem:[%s0 + $0x440] sm:$0xff]
  %v223 = vld [vmem:[%s0 + $0x448] sm:$0xff]
  %v224 = vld [vmem:[%s0 + $0x450] sm:$0xff]
  %v225 = vld [vmem:[%s0 + $0x458] sm:$0xff]
  %v226 = vld [vmem:[%s0 + $0x460] sm:$0xff]
  %v227 = vld [vmem:[%s0 + $0x468] sm:$0xff]
  %v228 = vld [vmem:[%s0 + $0x470] sm:$0xff]
  %v229 = vld [vmem:[%s0 + $0x478] sm:$0xff]
  %v230 = vld [vmem:[%s2] sm:$0xff]
  %v231 = vld [vmem:[%s2 + $0x8] sm:$0xff]
  %v232 = vld [vmem:[%s2 + $0x10] sm:$0xff]
  %v233 = vld [vmem:[%s2 + $0x18] sm:$0xff]
  %v234 = vld [vmem:[%s2 + $0x20] sm:$0xff]
  %v235 = vld [vmem:[%s2 + $0x28] sm:$0xff]
  %v236 = vld [vmem:[%s2 + $0x30] sm:$0xff]
  %v237 = vld [vmem:[%s2 + $0x38] sm:$0xff]
  %239 = vset.pattern.permute.xlu0 0
  %240 = vperm.xlu0 %239, %v230
  %v241 = vpop.permute.xlu0 %240
  %244 = vset.pattern.permute.xlu0 0
  %245 = vperm.xlu0 %244, %v231
  %v246 = vpop.permute.xlu0 %245
  %249 = vset.pattern.permute.xlu0 0
  %250 = vperm.xlu0 %249, %v232
  %v251 = vpop.permute.xlu0 %250
  %254 = vset.pattern.permute.xlu0 0
  %255 = vperm.xlu0 %254, %v233
  %v256 = vpop.permute.xlu0 %255
  %259 = vset.pattern.permute.xlu0 0
  %260 = vperm.xlu0 %259, %v234
  %v261 = vpop.permute.xlu0 %260
  %264 = vset.pattern.permute.xlu0 0
  %265 = vperm.xlu0 %264, %v235
  %v266 = vpop.permute.xlu0 %265
  %269 = vset.pattern.permute.xlu0 0
  %270 = vperm.xlu0 %269, %v236
  %v271 = vpop.permute.xlu0 %270
  %274 = vset.pattern.permute.xlu0 0
  %275 = vperm.xlu0 %274, %v237
  %v276 = vpop.permute.xlu0 %275
  %278 = vmatpush.msra.mxu0 %v101
  %279 = vmatpush.msra.mxu0 %v100
  %280 = vmatpush.msra.mxu0 %v99
  %281 = vmatpush.msra.mxu0 %v98
  %282 = vmatpush.msra.mxu0 %v97
  %283 = vmatpush.msra.mxu0 %v96
  %284 = vmatpush.msra.mxu0 %v95
  %285 = vmatpush.msra.mxu0 %v94
  %286 = vmatpush.msra.mxu0 %v93
  %287 = vmatpush.msra.mxu0 %v92
  %288 = vmatpush.msra.mxu0 %v91
  %289 = vmatpush.msra.mxu0 %v90
  %290 = vmatpush.msra.mxu0 %v89
  %291 = vmatpush.msra.mxu0 %v88
  %292 = vmatpush.msra.mxu0 %v87
  %293 = vmatpush.msra.mxu0 %v86
  %294 = vmatmul.f32.gmra.mxu0 %v14
  %v295 = vpop.f32.mrf.mxu0
  %v296 = vadd.f32 %v241, %v295
  %297 = vmatmul.f32.gmra.mxu0 %v23
  %v298 = vpop.f32.mrf.mxu0
  %v299 = vadd.f32 %v246, %v298
  %300 = vmatmul.f32.gmra.mxu0 %v32
  %v301 = vpop.f32.mrf.mxu0
  %v302 = vadd.f32 %v251, %v301
  %303 = vmatmul.f32.gmra.mxu0 %v41
  %v304 = vpop.f32.mrf.mxu0
  %v305 = vadd.f32 %v256, %v304
  %306 = vmatmul.f32.gmra.mxu0 %v50
  %v307 = vpop.f32.mrf.mxu0
  %v308 = vadd.f32 %v261, %v307
  %309 = vmatmul.f32.gmra.mxu0 %v59
  %v310 = vpop.f32.mrf.mxu0
  %v311 = vadd.f32 %v266, %v310
  %312 = vmatmul.f32.gmra.mxu0 %v68
  %v313 = vpop.f32.mrf.mxu0
  %v314 = vadd.f32 %v271, %v313
  %315 = vmatmul.f32.gmra.mxu0 %v77
  %v316 = vpop.f32.mrf.mxu0
  %v317 = vadd.f32 %v276, %v316
  %318 = vdwg.mxu0
  %319 = vmatpush.msra.mxu0 %v117
  %320 = vmatpush.msra.mxu0 %v116
  %321 = vmatpush.msra.mxu0 %v115
  %322 = vmatpush.msra.mxu0 %v114
  %323 = vmatpush.msra.mxu0 %v113
  %324 = vmatpush.msra.mxu0 %v112
  %325 = vmatpush.msra.mxu0 %v111
  %326 = vmatpush.msra.mxu0 %v110
  %327 = vmatpush.msra.mxu0 %v109
  %328 = vmatpush.msra.mxu0 %v108
  %329 = vmatpush.msra.mxu0 %v107
  %330 = vmatpush.msra.mxu0 %v106
  %331 = vmatpush.msra.mxu0 %v105
  %332 = vmatpush.msra.mxu0 %v104
  %333 = vmatpush.msra.mxu0 %v103
  %334 = vmatpush.msra.mxu0 %v102
  %335 = vmatmul.f32.gmra.mxu0 %v15
  %v336 = vpop.f32.mrf.mxu0
  %v337 = vadd.f32 %v296, %v336
  %338 = vmatmul.f32.gmra.mxu0 %v24
  %v339 = vpop.f32.mrf.mxu0
  %v340 = vadd.f32 %v299, %v339
  %341 = vmatmul.f32.gmra.mxu0 %v33
  %v342 = vpop.f32.mrf.mxu0
  %v343 = vadd.f32 %v302, %v342
  %344 = vmatmul.f32.gmra.mxu0 %v42
  %v345 = vpop.f32.mrf.mxu0
  %v346 = vadd.f32 %v305, %v345
  %347 = vmatmul.f32.gmra.mxu0 %v51
  %v348 = vpop.f32.mrf.mxu0
  %v349 = vadd.f32 %v308, %v348
  %350 = vmatmul.f32.gmra.mxu0 %v60
  %v351 = vpop.f32.mrf.mxu0
  %v352 = vadd.f32 %v311, %v351
  %353 = vmatmul.f32.gmra.mxu0 %v69
  %v354 = vpop.f32.mrf.mxu0
  %v355 = vadd.f32 %v314, %v354
  %356 = vmatmul.f32.gmra.mxu0 %v78
  %v357 = vpop.f32.mrf.mxu0
  %v358 = vadd.f32 %v317, %v357
  %359 = vdwg.mxu0
  %360 = vmatpush.msra.mxu0 %v133
  %361 = vmatpush.msra.mxu0 %v132
  %362 = vmatpush.msra.mxu0 %v131
  %363 = vmatpush.msra.mxu0 %v130
  %364 = vmatpush.msra.mxu0 %v129
  %365 = vmatpush.msra.mxu0 %v128
  %366 = vmatpush.msra.mxu0 %v127
  %367 = vmatpush.msra.mxu0 %v126
  %368 = vmatpush.msra.mxu0 %v125
  %369 = vmatpush.msra.mxu0 %v124
  %370 = vmatpush.msra.mxu0 %v123
  %371 = vmatpush.msra.mxu0 %v122
  %372 = vmatpush.msra.mxu0 %v121
  %373 = vmatpush.msra.mxu0 %v120
  %374 = vmatpush.msra.mxu0 %v119
  %375 = vmatpush.msra.mxu0 %v118
  %376 = vmatmul.f32.gmra.mxu0 %v16
  %v377 = vpop.f32.mrf.mxu0
  %v378 = vadd.f32 %v337, %v377
  %379 = vmatmul.f32.gmra.mxu0 %v25
  %v380 = vpop.f32.mrf.mxu0
  %v381 = vadd.f32 %v340, %v380
  %382 = vmatmul.f32.gmra.mxu0 %v34
  %v383 = vpop.f32.mrf.mxu0
  %v384 = vadd.f32 %v343, %v383
  %385 = vmatmul.f32.gmra.mxu0 %v43
  %v386 = vpop.f32.mrf.mxu0
  %v387 = vadd.f32 %v346, %v386
  %388 = vmatmul.f32.gmra.mxu0 %v52
  %v389 = vpop.f32.mrf.mxu0
  %v390 = vadd.f32 %v349, %v389
  %391 = vmatmul.f32.gmra.mxu0 %v61
  %v392 = vpop.f32.mrf.mxu0
  %v393 = vadd.f32 %v352, %v392
  %394 = vmatmul.f32.gmra.mxu0 %v70
  %v395 = vpop.f32.mrf.mxu0
  %v396 = vadd.f32 %v355, %v395
  %397 = vmatmul.f32.gmra.mxu0 %v79
  %v398 = vpop.f32.mrf.mxu0
  %v399 = vadd.f32 %v358, %v398
  %400 = vdwg.mxu0
  %401 = vmatpush.msra.mxu0 %v149
  %402 = vmatpush.msra.mxu0 %v148
  %403 = vmatpush.msra.mxu0 %v147
  %404 = vmatpush.msra.mxu0 %v146
  %405 = vmatpush.msra.mxu0 %v145
  %406 = vmatpush.msra.mxu0 %v144
  %407 = vmatpush.msra.mxu0 %v143
  %408 = vmatpush.msra.mxu0 %v142
  %409 = vmatpush.msra.mxu0 %v141
  %410 = vmatpush.msra.mxu0 %v140
  %411 = vmatpush.msra.mxu0 %v139
  %412 = vmatpush.msra.mxu0 %v138
  %413 = vmatpush.msra.mxu0 %v137
  %414 = vmatpush.msra.mxu0 %v136
  %415 = vmatpush.msra.mxu0 %v135
  %416 = vmatpush.msra.mxu0 %v134
  %417 = vmatmul.f32.gmra.mxu0 %v17
  %v418 = vpop.f32.mrf.mxu0
  %v419 = vadd.f32 %v378, %v418
  %420 = vmatmul.f32.gmra.mxu0 %v26
  %v421 = vpop.f32.mrf.mxu0
  %v422 = vadd.f32 %v381, %v421
  %423 = vmatmul.f32.gmra.mxu0 %v35
  %v424 = vpop.f32.mrf.mxu0
  %v425 = vadd.f32 %v384, %v424
  %426 = vmatmul.f32.gmra.mxu0 %v44
  %v427 = vpop.f32.mrf.mxu0
  %v428 = vadd.f32 %v387, %v427
  %429 = vmatmul.f32.gmra.mxu0 %v53
  %v430 = vpop.f32.mrf.mxu0
  %v431 = vadd.f32 %v390, %v430
  %432 = vmatmul.f32.gmra.mxu0 %v62
  %v433 = vpop.f32.mrf.mxu0
  %v434 = vadd.f32 %v393, %v433
  %435 = vmatmul.f32.gmra.mxu0 %v71
  %v436 = vpop.f32.mrf.mxu0
  %v437 = vadd.f32 %v396, %v436
  %438 = vmatmul.f32.gmra.mxu0 %v80
  %v439 = vpop.f32.mrf.mxu0
  %v440 = vadd.f32 %v399, %v439
  %441 = vdwg.mxu0
  %442 = vmatpush.msra.mxu0 %v165
  %443 = vmatpush.msra.mxu0 %v164
  %444 = vmatpush.msra.mxu0 %v163
  %445 = vmatpush.msra.mxu0 %v162
  %446 = vmatpush.msra.mxu0 %v161
  %447 = vmatpush.msra.mxu0 %v160
  %448 = vmatpush.msra.mxu0 %v159
  %449 = vmatpush.msra.mxu0 %v158
  %450 = vmatpush.msra.mxu0 %v157
  %451 = vmatpush.msra.mxu0 %v156
  %452 = vmatpush.msra.mxu0 %v155
  %453 = vmatpush.msra.mxu0 %v154
  %454 = vmatpush.msra.mxu0 %v153
  %455 = vmatpush.msra.mxu0 %v152
  %456 = vmatpush.msra.mxu0 %v151
  %457 = vmatpush.msra.mxu0 %v150
  %458 = vmatmul.f32.gmra.mxu0 %v18
  %v459 = vpop.f32.mrf.mxu0
  %v460 = vadd.f32 %v419, %v459
  %461 = vmatmul.f32.gmra.mxu0 %v27
  %v462 = vpop.f32.mrf.mxu0
  %v463 = vadd.f32 %v422, %v462
  %464 = vmatmul.f32.gmra.mxu0 %v36
  %v465 = vpop.f32.mrf.mxu0
  %v466 = vadd.f32 %v425, %v465
  %467 = vmatmul.f32.gmra.mxu0 %v45
  %v468 = vpop.f32.mrf.mxu0
  %v469 = vadd.f32 %v428, %v468
  %470 = vmatmul.f32.gmra.mxu0 %v54
  %v471 = vpop.f32.mrf.mxu0
  %v472 = vadd.f32 %v431, %v471
  %473 = vmatmul.f32.gmra.mxu0 %v63
  %v474 = vpop.f32.mrf.mxu0
  %v475 = vadd.f32 %v434, %v474
  %476 = vmatmul.f32.gmra.mxu0 %v72
  %v477 = vpop.f32.mrf.mxu0
  %v478 = vadd.f32 %v437, %v477
  %479 = vmatmul.f32.gmra.mxu0 %v81
  %v480 = vpop.f32.mrf.mxu0
  %v481 = vadd.f32 %v440, %v480
  %482 = vdwg.mxu0
  %483 = vmatpush.msra.mxu0 %v181
  %484 = vmatpush.msra.mxu0 %v180
  %485 = vmatpush.msra.mxu0 %v179
  %486 = vmatpush.msra.mxu0 %v178
  %487 = vmatpush.msra.mxu0 %v177
  %488 = vmatpush.msra.mxu0 %v176
  %489 = vmatpush.msra.mxu0 %v175
  %490 = vmatpush.msra.mxu0 %v174
  %491 = vmatpush.msra.mxu0 %v173
  %492 = vmatpush.msra.mxu0 %v172
  %493 = vmatpush.msra.mxu0 %v171
  %494 = vmatpush.msra.mxu0 %v170
  %495 = vmatpush.msra.mxu0 %v169
  %496 = vmatpush.msra.mxu0 %v168
  %497 = vmatpush.msra.mxu0 %v167
  %498 = vmatpush.msra.mxu0 %v166
  %499 = vmatmul.f32.gmra.mxu0 %v19
  %v500 = vpop.f32.mrf.mxu0
  %v501 = vadd.f32 %v460, %v500
  %502 = vmatmul.f32.gmra.mxu0 %v28
  %v503 = vpop.f32.mrf.mxu0
  %v504 = vadd.f32 %v463, %v503
  %505 = vmatmul.f32.gmra.mxu0 %v37
  %v506 = vpop.f32.mrf.mxu0
  %v507 = vadd.f32 %v466, %v506
  %508 = vmatmul.f32.gmra.mxu0 %v46
  %v509 = vpop.f32.mrf.mxu0
  %v510 = vadd.f32 %v469, %v509
  %511 = vmatmul.f32.gmra.mxu0 %v55
  %v512 = vpop.f32.mrf.mxu0
  %v513 = vadd.f32 %v472, %v512
  %514 = vmatmul.f32.gmra.mxu0 %v64
  %v515 = vpop.f32.mrf.mxu0
  %v516 = vadd.f32 %v475, %v515
  %517 = vmatmul.f32.gmra.mxu0 %v73
  %v518 = vpop.f32.mrf.mxu0
  %v519 = vadd.f32 %v478, %v518
  %520 = vmatmul.f32.gmra.mxu0 %v82
  %v521 = vpop.f32.mrf.mxu0
  %v522 = vadd.f32 %v481, %v521
  %523 = vdwg.mxu0
  %524 = vmatpush.msra.mxu0 %v197
  %525 = vmatpush.msra.mxu0 %v196
  %526 = vmatpush.msra.mxu0 %v195
  %527 = vmatpush.msra.mxu0 %v194
  %528 = vmatpush.msra.mxu0 %v193
  %529 = vmatpush.msra.mxu0 %v192
  %530 = vmatpush.msra.mxu0 %v191
  %531 = vmatpush.msra.mxu0 %v190
  %532 = vmatpush.msra.mxu0 %v189
  %533 = vmatpush.msra.mxu0 %v188
  %534 = vmatpush.msra.mxu0 %v187
  %535 = vmatpush.msra.mxu0 %v186
  %536 = vmatpush.msra.mxu0 %v185
  %537 = vmatpush.msra.mxu0 %v184
  %538 = vmatpush.msra.mxu0 %v183
  %539 = vmatpush.msra.mxu0 %v182
  %540 = vmatmul.f32.gmra.mxu0 %v20
  %v541 = vpop.f32.mrf.mxu0
  %v542 = vadd.f32 %v501, %v541
  %543 = vmatmul.f32.gmra.mxu0 %v29
  %v544 = vpop.f32.mrf.mxu0
  %v545 = vadd.f32 %v504, %v544
  %546 = vmatmul.f32.gmra.mxu0 %v38
  %v547 = vpop.f32.mrf.mxu0
  %v548 = vadd.f32 %v507, %v547
  %549 = vmatmul.f32.gmra.mxu0 %v47
  %v550 = vpop.f32.mrf.mxu0
  %v551 = vadd.f32 %v510, %v550
  %552 = vmatmul.f32.gmra.mxu0 %v56
  %v553 = vpop.f32.mrf.mxu0
  %v554 = vadd.f32 %v513, %v553
  %555 = vmatmul.f32.gmra.mxu0 %v65
  %v556 = vpop.f32.mrf.mxu0
  %v557 = vadd.f32 %v516, %v556
  %558 = vmatmul.f32.gmra.mxu0 %v74
  %v559 = vpop.f32.mrf.mxu0
  %v560 = vadd.f32 %v519, %v559
  %561 = vmatmul.f32.gmra.mxu0 %v83
  %v562 = vpop.f32.mrf.mxu0
  %v563 = vadd.f32 %v522, %v562
  %564 = vdwg.mxu0
  %565 = vmatpush.msra.mxu0 %v213
  %566 = vmatpush.msra.mxu0 %v212
  %567 = vmatpush.msra.mxu0 %v211
  %568 = vmatpush.msra.mxu0 %v210
  %569 = vmatpush.msra.mxu0 %v209
  %570 = vmatpush.msra.mxu0 %v208
  %571 = vmatpush.msra.mxu0 %v207
  %572 = vmatpush.msra.mxu0 %v206
  %573 = vmatpush.msra.mxu0 %v205
  %574 = vmatpush.msra.mxu0 %v204
  %575 = vmatpush.msra.mxu0 %v203
  %576 = vmatpush.msra.mxu0 %v202
  %577 = vmatpush.msra.mxu0 %v201
  %578 = vmatpush.msra.mxu0 %v200
  %579 = vmatpush.msra.mxu0 %v199
  %580 = vmatpush.msra.mxu0 %v198
  %581 = vmatmul.f32.gmra.mxu0 %v21
  %v582 = vpop.f32.mrf.mxu0
  %v583 = vadd.f32 %v542, %v582
  %584 = vmatmul.f32.gmra.mxu0 %v30
  %v585 = vpop.f32.mrf.mxu0
  %v586 = vadd.f32 %v545, %v585
  %587 = vmatmul.f32.gmra.mxu0 %v39
  %v588 = vpop.f32.mrf.mxu0
  %v589 = vadd.f32 %v548, %v588
  %590 = vmatmul.f32.gmra.mxu0 %v48
  %v591 = vpop.f32.mrf.mxu0
  %v592 = vadd.f32 %v551, %v591
  %593 = vmatmul.f32.gmra.mxu0 %v57
  %v594 = vpop.f32.mrf.mxu0
  %v595 = vadd.f32 %v554, %v594
  %596 = vmatmul.f32.gmra.mxu0 %v66
  %v597 = vpop.f32.mrf.mxu0
  %v598 = vadd.f32 %v557, %v597
  %599 = vmatmul.f32.gmra.mxu0 %v75
  %v600 = vpop.f32.mrf.mxu0
  %v601 = vadd.f32 %v560, %v600
  %602 = vmatmul.f32.gmra.mxu0 %v84
  %v603 = vpop.f32.mrf.mxu0
  %v604 = vadd.f32 %v563, %v603
  %605 = vdwg.mxu0
  %606 = vmatpush.msra.mxu0 %v229
  %607 = vmatpush.msra.mxu0 %v228
  %608 = vmatpush.msra.mxu0 %v227
  %609 = vmatpush.msra.mxu0 %v226
  %610 = vmatpush.msra.mxu0 %v225
  %611 = vmatpush.msra.mxu0 %v224
  %612 = vmatpush.msra.mxu0 %v223
  %613 = vmatpush.msra.mxu0 %v222
  %614 = vmatpush.msra.mxu0 %v221
  %615 = vmatpush.msra.mxu0 %v220
  %616 = vmatpush.msra.mxu0 %v219
  %617 = vmatpush.msra.mxu0 %v218
  %618 = vmatpush.msra.mxu0 %v217
  %619 = vmatpush.msra.mxu0 %v216
  %620 = vmatpush.msra.mxu0 %v215
  %621 = vmatpush.msra.mxu0 %v214
  %622 = vmatmul.f32.gmra.mxu0 %v22
  %v623 = vpop.f32.mrf.mxu0
  %v624 = vadd.f32 %v583, %v623
  %625 = vmatmul.f32.gmra.mxu0 %v31
  %v626 = vpop.f32.mrf.mxu0
  %v627 = vadd.f32 %v586, %v626
  %628 = vmatmul.f32.gmra.mxu0 %v40
  %v629 = vpop.f32.mrf.mxu0
  %v630 = vadd.f32 %v589, %v629
  %631 = vmatmul.f32.gmra.mxu0 %v49
  %v632 = vpop.f32.mrf.mxu0
  %v633 = vadd.f32 %v592, %v632
  %634 = vmatmul.f32.gmra.mxu0 %v58
  %v635 = vpop.f32.mrf.mxu0
  %v636 = vadd.f32 %v595, %v635
  %637 = vmatmul.f32.gmra.mxu0 %v67
  %v638 = vpop.f32.mrf.mxu0
  %v639 = vadd.f32 %v598, %v638
  %640 = vmatmul.f32.gmra.mxu0 %v76
  %v641 = vpop.f32.mrf.mxu0
  %v642 = vadd.f32 %v601, %v641
  %643 = vmatmul.f32.gmra.mxu0 %v85
  %v644 = vpop.f32.mrf.mxu0
  %v645 = vadd.f32 %v604, %v644
  %646 = vdwg.mxu0
  %vm647 = vcmp.ge.f32.partialorder %v624, 0.0
  %vm648 = vcmp.ge.f32.partialorder %v627, 0.0
  %vm649 = vcmp.ge.f32.partialorder %v630, 0.0
  %vm650 = vcmp.ge.f32.partialorder %v633, 0.0
  %vm651 = vcmp.ge.f32.partialorder %v636, 0.0
  %vm652 = vcmp.ge.f32.partialorder %v639, 0.0
  %vm653 = vcmp.ge.f32.partialorder %v642, 0.0
  %vm654 = vcmp.ge.f32.partialorder %v645, 0.0
  %v655 = vmul.f32 %v624, 0.2
  %v656 = vmul.f32 %v627, 0.2
  %v657 = vmul.f32 %v630, 0.2
  %v658 = vmul.f32 %v633, 0.2
  %v659 = vmul.f32 %v636, 0.2
  %v660 = vmul.f32 %v639, 0.2
  %v661 = vmul.f32 %v642, 0.2
  %v662 = vmul.f32 %v645, 0.2
  %v663 = vsel %vm647, %v624, %v655
  %v664 = vsel %vm648, %v627, %v656
  %v665 = vsel %vm649, %v630, %v657
  %v666 = vsel %vm650, %v633, %v658
  %v667 = vsel %vm651, %v636, %v659
  %v668 = vsel %vm652, %v639, %v660
  %v669 = vsel %vm653, %v642, %v661
  %v670 = vsel %vm654, %v645, %v662
  %v671 = vmul.f32 %v663, %v663
  %v672 = vmul.f32 %v664, %v664
  %v673 = vmul.f32 %v665, %v665
  %v674 = vmul.f32 %v666, %v666
  %v675 = vmul.f32 %v667, %v667
  %v676 = vmul.f32 %v668, %v668
  %v677 = vmul.f32 %v669, %v669
  %v678 = vmul.f32 %v670, %v670
  %vm679 = vcmask 916480
  %v680 = vsel %vm679, %v671, 0.0
  %v681 = vsel %vm679, %v672, 0.0
  %v682 = vadd.f32 %v680, %v681
  %v683 = vsel %vm679, %v673, 0.0
  %v684 = vadd.f32 %v682, %v683
  %v685 = vsel %vm679, %v674, 0.0
  %v686 = vadd.f32 %v684, %v685
  %v687 = vsel %vm679, %v675, 0.0
  %v688 = vadd.f32 %v686, %v687
  %v689 = vsel %vm679, %v676, 0.0
  %v690 = vadd.f32 %v688, %v689
  %v691 = vsel %vm679, %v677, 0.0
  %v692 = vadd.f32 %v690, %v691
  %v693 = vsel %vm679, %v678, 0.0
  %v694 = vadd.f32 %v692, %v693
  %v695 = vrot.slane %v694, 4
  %v696 = vadd.f32 %v694, %v695
  %v697 = vrot.slane %v696, 2
  %v698 = vadd.f32 %v696, %v697
  %v699 = vrot.slane %v698, 1
  %v700 = vadd.f32 %v698, %v699
  %v701 = vmul.f32 %v700, 0.015625
  %v702 = vadd.f32 %v701, 1e-08
  %v703 = vrsqrt.pop %v702
  %v704 = vmul.f32 %v703, %v702
  %v705 = vmul.f32 %v704, %v703
  %v706 = vmul.f32 0.5, %v705
  %v707 = vsub.f32 1.5, %v706
  %v708 = vmul.f32 %v703, %v707
  %vm709 = vweird.f32 %v702
  %vm710 = vweird.f32 %v703
  %vm711 = vmor %vm709, %vm710
  %v712 = vsel %vm711, %v703, %v708
  %v713 = vmul.f32 %v663, %v712
  %v714 = vmul.f32 %v664, %v712
  %v715 = vmul.f32 %v665, %v712
  %v716 = vmul.f32 %v666, %v712
  %v717 = vmul.f32 %v667, %v712
  %v718 = vmul.f32 %v668, %v712
  %v719 = vmul.f32 %v669, %v712
  %v720 = vmul.f32 %v670, %v712
  %721 = vst.msk [vmem:[%s3] sm:$0xff] %vm679, %v713
  %722 = vst.msk [vmem:[%s3 + $0x8] sm:$0xff] %vm679, %v714
  %723 = vst.msk [vmem:[%s3 + $0x10] sm:$0xff] %vm679, %v715
  %724 = vst.msk [vmem:[%s3 + $0x18] sm:$0xff] %vm679, %v716
  %725 = vst.msk [vmem:[%s3 + $0x20] sm:$0xff] %vm679, %v717
  %726 = vst.msk [vmem:[%s3 + $0x28] sm:$0xff] %vm679, %v718
  %727 = vst.msk [vmem:[%s3 + $0x30] sm:$0xff] %vm679, %v719
  %728 = vst.msk [vmem:[%s3 + $0x38] sm:$0xff] %vm679, %v720
  // Predicated region
  $region14: #{unet_block_forward.12} parent=0 // pred_check
    _
  $region15: #{unet_block_forward.12} parent=0 // pred_check_branch
    %730 = sbr.rel (0) target = $region17
  $region16: #{unet_block_forward.12} parent=0 // pred_region
    _
  $region17: #{unet_block_forward.12} parent=0 // pred_fallthru
    _
  // Predicated region
  $region18: #{unet_block_forward.12} parent=0 // pred_check
    _
  $region19: #{unet_block_forward.12} parent=0 // pred_check_branch
    %732 = sbr.rel (0) target = $region21
  $region20: #{unet_block_forward.12} parent=0 // pred_region
    _
  $region21: #{unet_block_forward.12} parent=0 // pred_fallthru
    _

// kernel: unet_block_forward.13
$region0: #{unet_block_forward.13}
  #allocation0 [shape = 'u32[]', space=smem, size = 0x4, offset = 0x4, fixed_abs, tag = 'smem constant byte address 0x4 - core index']
  #allocation1 [shape = 'u32[72,128]{1,0:T(1,128)}', space=vmem, size = 0x9000, scoped, tag = 'internal scratch']
  %s0 = inlined_call_operand.vmem [shape: f32[1152,224], index: 0, kind: input, shape index: {}]
  %s1 = inlined_call_operand.vmem [shape: f32[64,1152], index: 1, kind: input, shape index: {}]
  %s2 = inlined_call_operand.vmem [shape: f32[64,1], index: 2, kind: input, shape index: {}]
  %s3 = inlined_call_operand.vmem [shape: f32[64,224], index: 3, kind: output, shape index: {}]
  %s4 = sld [smem:[#allocation0]]
  $region22: #{unet_block_forward.13} parent=0
    _
  %s6 = ssub.s32 1, %s4
  %s7 = scalar_select 0, %s6, %s4
  // Predicated region
  $region2: #{unet_block_forward.13} parent=0 // pred_check
    _
  $region3: #{unet_block_forward.13} parent=0 // pred_check_branch
    %9 = sbr.rel (0) target = $region5
  $region4: #{unet_block_forward.13} parent=0 // pred_region
    _
  $region5: #{unet_block_forward.13} parent=0 // pred_fallthru
    _
  // Predicated region
  $region6: #{unet_block_forward.13} parent=0 // pred_check
    _
  $region7: #{unet_block_forward.13} parent=0 // pred_check_branch
    %11 = sbr.rel (0) target = $region9
  $region8: #{unet_block_forward.13} parent=0 // pred_region
    _
  $region9: #{unet_block_forward.13} parent=0 // pred_fallthru
    _
  // Predicated region
  $region10: #{unet_block_forward.13} parent=0 // pred_check
    _
  $region11: #{unet_block_forward.13} parent=0 // pred_check_branch
    %13 = sbr.rel (0) target = $region13
  $region12: #{unet_block_forward.13} parent=0 // pred_region
    _
  $region13: #{unet_block_forward.13} parent=0 // pred_fallthru
    _
  %v14 = vld [vmem:[%s1] sm:$0xff]
  %v15 = vld [vmem:[%s1 + $0x8] sm:$0xff]
  %v16 = vld [vmem:[%s1 + $0x10] sm:$0xff]
  %v17 = vld [vmem:[%s1 + $0x18] sm:$0xff]
  %v18 = vld [vmem:[%s1 + $0x20] sm:$0xff]
  %v19 = vld [vmem:[%s1 + $0x28] sm:$0xff]
  %v20 = vld [vmem:[%s1 + $0x30] sm:$0xff]
  %v21 = vld [vmem:[%s1 + $0x38] sm:$0xff]
  %v22 = vld [vmem:[%s1 + $0x40] sm:$0xff]
  %v23 = vld [vmem:[%s1 + $0x48] sm:$0xff]
  %v24 = vld [vmem:[%s1 + $0x50] sm:$0xff]
  %v25 = vld [vmem:[%s1 + $0x58] sm:$0xff]
  %v26 = vld [vmem:[%s1 + $0x60] sm:$0xff]
  %v27 = vld [vmem:[%s1 + $0x68] sm:$0xff]
  %v28 = vld [vmem:[%s1 + $0x70] sm:$0xff]
  %v29 = vld [vmem:[%s1 + $0x78] sm:$0xff]
  %v30 = vld [vmem:[%s1 + $0x80] sm:$0xff]
  %v31 = vld [vmem:[%s1 + $0x88] sm:$0xff]
  %v32 = vld [vmem:[%s1 + $0x90] sm:$0xff]
  %v33 = vld [vmem:[%s1 + $0x98] sm:$0xff]
  %v34 = vld [vmem:[%s1 + $0xa0] sm:$0xff]
  %v35 = vld [vmem:[%s1 + $0xa8] sm:$0xff]
  %v36 = vld [vmem:[%s1 + $0xb0] sm:$0xff]
  %v37 = vld [vmem:[%s1 + $0xb8] sm:$0xff]
  %v38 = vld [vmem:[%s1 + $0xc0] sm:$0xff]
  %v39 = vld [vmem:[%s1 + $0xc8] sm:$0xff]
  %v40 = vld [vmem:[%s1 + $0xd0] sm:$0xff]
  %v41 = vld [vmem:[%s1 + $0xd8] sm:$0xff]
  %v42 = vld [vmem:[%s1 + $0xe0] sm:$0xff]
  %v43 = vld [vmem:[%s1 + $0xe8] sm:$0xff]
  %v44 = vld [vmem:[%s1 + $0xf0] sm:$0xff]
  %v45 = vld [vmem:[%s1 + $0xf8] sm:$0xff]
  %v46 = vld [vmem:[%s1 + $0x100] sm:$0xff]
  %v47 = vld [vmem:[%s1 + $0x108] sm:$0xff]
  %v48 = vld [vmem:[%s1 + $0x110] sm:$0xff]
  %v49 = vld [vmem:[%s1 + $0x118] sm:$0xff]
  %v50 = vld [vmem:[%s1 + $0x120] sm:$0xff]
  %v51 = vld [vmem:[%s1 + $0x128] sm:$0xff]
  %v52 = vld [vmem:[%s1 + $0x130] sm:$0xff]
  %v53 = vld [vmem:[%s1 + $0x138] sm:$0xff]
  %v54 = vld [vmem:[%s1 + $0x140] sm:$0xff]
  %v55 = vld [vmem:[%s1 + $0x148] sm:$0xff]
  %v56 = vld [vmem:[%s1 + $0x150] sm:$0xff]
  %v57 = vld [vmem:[%s1 + $0x158] sm:$0xff]
  %v58 = vld [vmem:[%s1 + $0x160] sm:$0xff]
  %v59 = vld [vmem:[%s1 + $0x168] sm:$0xff]
  %v60 = vld [vmem:[%s1 + $0x170] sm:$0xff]
  %v61 = vld [vmem:[%s1 + $0x178] sm:$0xff]
  %v62 = vld [vmem:[%s1 + $0x180] sm:$0xff]
  %v63 = vld [vmem:[%s1 + $0x188] sm:$0xff]
  %v64 = vld [vmem:[%s1 + $0x190] sm:$0xff]
  %v65 = vld [vmem:[%s1 + $0x198] sm:$0xff]
  %v66 = vld [vmem:[%s1 + $0x1a0] sm:$0xff]
  %v67 = vld [vmem:[%s1 + $0x1a8] sm:$0xff]
  %v68 = vld [vmem:[%s1 + $0x1b0] sm:$0xff]
  %v69 = vld [vmem:[%s1 + $0x1b8] sm:$0xff]
  %v70 = vld [vmem:[%s1 + $0x1c0] sm:$0xff]
  %v71 = vld [vmem:[%s1 + $0x1c8] sm:$0xff]
  %v72 = vld [vmem:[%s1 + $0x1d0] sm:$0xff]
  %v73 = vld [vmem:[%s1 + $0x1d8] sm:$0xff]
  %v74 = vld [vmem:[%s1 + $0x1e0] sm:$0xff]
  %v75 = vld [vmem:[%s1 + $0x1e8] sm:$0xff]
  %v76 = vld [vmem:[%s1 + $0x1f0] sm:$0xff]
  %v77 = vld [vmem:[%s1 + $0x1f8] sm:$0xff]
  %v78 = vld [vmem:[%s1 + $0x200] sm:$0xff]
  %v79 = vld [vmem:[%s1 + $0x208] sm:$0xff]
  %v80 = vld [vmem:[%s1 + $0x210] sm:$0xff]
  %v81 = vld [vmem:[%s1 + $0x218] sm:$0xff]
  %v82 = vld [vmem:[%s1 + $0x220] sm:$0xff]
  %v83 = vld [vmem:[%s1 + $0x228] sm:$0xff]
  %v84 = vld [vmem:[%s1 + $0x230] sm:$0xff]
  %v85 = vld [vmem:[%s1 + $0x238] sm:$0xff]
  %v86 = vld [vmem:[%s0] sm:$0xff]
  %v87 = vld [vmem:[%s0 + $0x8] sm:$0xff]
  %v88 = vld [vmem:[%s0 + $0x10] sm:$0xff]
  %v89 = vld [vmem:[%s0 + $0x18] sm:$0xff]
  %v90 = vld [vmem:[%s0 + $0x20] sm:$0xff]
  %v91 = vld [vmem:[%s0 + $0x28] sm:$0xff]
  %v92 = vld [vmem:[%s0 + $0x30] sm:$0xff]
  %v93 = vld [vmem:[%s0 + $0x38] sm:$0xff]
  %v94 = vld [vmem:[%s0 + $0x40] sm:$0xff]
  %v95 = vld [vmem:[%s0 + $0x48] sm:$0xff]
  %v96 = vld [vmem:[%s0 + $0x50] sm:$0xff]
  %v97 = vld [vmem:[%s0 + $0x58] sm:$0xff]
  %v98 = vld [vmem:[%s0 + $0x60] sm:$0xff]
  %v99 = vld [vmem:[%s0 + $0x68] sm:$0xff]
  %v100 = vld [vmem:[%s0 + $0x70] sm:$0xff]
  %v101 = vld [vmem:[%s0 + $0x78] sm:$0xff]
  %v102 = vld [vmem:[%s0 + $0x80] sm:$0xff]
  %v103 = vld [vmem:[%s0 + $0x88] sm:$0xff]
  %v104 = vld [vmem:[%s0 + $0x90] sm:$0xff]
  %v105 = vld [vmem:[%s0 + $0x98] sm:$0xff]
  %v106 = vld [vmem:[%s0 + $0xa0] sm:$0xff]
  %v107 = vld [vmem:[%s0 + $0xa8] sm:$0xff]
  %v108 = vld [vmem:[%s0 + $0xb0] sm:$0xff]
  %v109 = vld [vmem:[%s0 + $0xb8] sm:$0xff]
  %v110 = vld [vmem:[%s0 + $0xc0] sm:$0xff]
  %v111 = vld [vmem:[%s0 + $0xc8] sm:$0xff]
  %v112 = vld [vmem:[%s0 + $0xd0] sm:$0xff]
  %v113 = vld [vmem:[%s0 + $0xd8] sm:$0xff]
  %v114 = vld [vmem:[%s0 + $0xe0] sm:$0xff]
  %v115 = vld [vmem:[%s0 + $0xe8] sm:$0xff]
  %v116 = vld [vmem:[%s0 + $0xf0] sm:$0xff]
  %v117 = vld [vmem:[%s0 + $0xf8] sm:$0xff]
  %v118 = vld [vmem:[%s0 + $0x100] sm:$0xff]
  %v119 = vld [vmem:[%s0 + $0x108] sm:$0xff]
  %v120 = vld [vmem:[%s0 + $0x110] sm:$0xff]
  %v121 = vld [vmem:[%s0 + $0x118] sm:$0xff]
  %v122 = vld [vmem:[%s0 + $0x120] sm:$0xff]
  %v123 = vld [vmem:[%s0 + $0x128] sm:$0xff]
  %v124 = vld [vmem:[%s0 + $0x130] sm:$0xff]
  %v125 = vld [vmem:[%s0 + $0x138] sm:$0xff]
  %v126 = vld [vmem:[%s0 + $0x140] sm:$0xff]
  %v127 = vld [vmem:[%s0 + $0x148] sm:$0xff]
  %v128 = vld [vmem:[%s0 + $0x150] sm:$0xff]
  %v129 = vld [vmem:[%s0 + $0x158] sm:$0xff]
  %v130 = vld [vmem:[%s0 + $0x160] sm:$0xff]
  %v131 = vld [vmem:[%s0 + $0x168] sm:$0xff]
  %v132 = vld [vmem:[%s0 + $0x170] sm:$0xff]
  %v133 = vld [vmem:[%s0 + $0x178] sm:$0xff]
  %v134 = vld [vmem:[%s0 + $0x180] sm:$0xff]
  %v135 = vld [vmem:[%s0 + $0x188] sm:$0xff]
  %v136 = vld [vmem:[%s0 + $0x190] sm:$0xff]
  %v137 = vld [vmem:[%s0 + $0x198] sm:$0xff]
  %v138 = vld [vmem:[%s0 + $0x1a0] sm:$0xff]
  %v139 = vld [vmem:[%s0 + $0x1a8] sm:$0xff]
  %v140 = vld [vmem:[%s0 + $0x1b0] sm:$0xff]
  %v141 = vld [vmem:[%s0 + $0x1b8] sm:$0xff]
  %v142 = vld [vmem:[%s0 + $0x1c0] sm:$0xff]
  %v143 = vld [vmem:[%s0 + $0x1c8] sm:$0xff]
  %v144 = vld [vmem:[%s0 + $0x1d0] sm:$0xff]
  %v145 = vld [vmem:[%s0 + $0x1d8] sm:$0xff]
  %v146 = vld [vmem:[%s0 + $0x1e0] sm:$0xff]
  %v147 = vld [vmem:[%s0 + $0x1e8] sm:$0xff]
  %v148 = vld [vmem:[%s0 + $0x1f0] sm:$0xff]
  %v149 = vld [vmem:[%s0 + $0x1f8] sm:$0xff]
  %v150 = vld [vmem:[%s0 + $0x200] sm:$0xff]
  %v151 = vld [vmem:[%s0 + $0x208] sm:$0xff]
  %v152 = vld [vmem:[%s0 + $0x210] sm:$0xff]
  %v153 = vld [vmem:[%s0 + $0x218] sm:$0xff]
  %v154 = vld [vmem:[%s0 + $0x220] sm:$0xff]
  %v155 = vld [vmem:[%s0 + $0x228] sm:$0xff]
  %v156 = vld [vmem:[%s0 + $0x230] sm:$0xff]
  %v157 = vld [vmem:[%s0 + $0x238] sm:$0xff]
  %v158 = vld [vmem:[%s0 + $0x240] sm:$0xff]
  %v159 = vld [vmem:[%s0 + $0x248] sm:$0xff]
  %v160 = vld [vmem:[%s0 + $0x250] sm:$0xff]
  %v161 = vld [vmem:[%s0 + $0x258] sm:$0xff]
  %v162 = vld [vmem:[%s0 + $0x260] sm:$0xff]
  %v163 = vld [vmem:[%s0 + $0x268] sm:$0xff]
  %v164 = vld [vmem:[%s0 + $0x270] sm:$0xff]
  %v165 = vld [vmem:[%s0 + $0x278] sm:$0xff]
  %v166 = vld [vmem:[%s0 + $0x280] sm:$0xff]
  %v167 = vld [vmem:[%s0 + $0x288] sm:$0xff]
  %v168 = vld [vmem:[%s0 + $0x290] sm:$0xff]
  %v169 = vld [vmem:[%s0 + $0x298] sm:$0xff]
  %v170 = vld [vmem:[%s0 + $0x2a0] sm:$0xff]
  %v171 = vld [vmem:[%s0 + $0x2a8] sm:$0xff]
  %v172 = vld [vmem:[%s0 + $0x2b0] sm:$0xff]
  %v173 = vld [vmem:[%s0 + $0x2b8] sm:$0xff]
  %v174 = vld [vmem:[%s0 + $0x2c0] sm:$0xff]
  %v175 = vld [vmem:[%s0 + $0x2c8] sm:$0xff]
  %v176 = vld [vmem:[%s0 + $0x2d0] sm:$0xff]
  %v177 = vld [vmem:[%s0 + $0x2d8] sm:$0xff]
  %v178 = vld [vmem:[%s0 + $0x2e0] sm:$0xff]
  %v179 = vld [vmem:[%s0 + $0x2e8] sm:$0xff]
  %v180 = vld [vmem:[%s0 + $0x2f0] sm:$0xff]
  %v181 = vld [vmem:[%s0 + $0x2f8] sm:$0xff]
  %v182 = vld [vmem:[%s0 + $0x300] sm:$0xff]
  %v183 = vld [vmem:[%s0 + $0x308] sm:$0xff]
  %v184 = vld [vmem:[%s0 + $0x310] sm:$0xff]
  %v185 = vld [vmem:[%s0 + $0x318] sm:$0xff]
  %v186 = vld [vmem:[%s0 + $0x320] sm:$0xff]
  %v187 = vld [vmem:[%s0 + $0x328] sm:$0xff]
  %v188 = vld [vmem:[%s0 + $0x330] sm:$0xff]
  %v189 = vld [vmem:[%s0 + $0x338] sm:$0xff]
  %v190 = vld [vmem:[%s0 + $0x340] sm:$0xff]
  %v191 = vld [vmem:[%s0 + $0x348] sm:$0xff]
  %v192 = vld [vmem:[%s0 + $0x350] sm:$0xff]
  %v193 = vld [vmem:[%s0 + $0x358] sm:$0xff]
  %v194 = vld [vmem:[%s0 + $0x360] sm:$0xff]
  %v195 = vld [vmem:[%s0 + $0x368] sm:$0xff]
  %v196 = vld [vmem:[%s0 + $0x370] sm:$0xff]
  %v197 = vld [vmem:[%s0 + $0x378] sm:$0xff]
  %v198 = vld [vmem:[%s0 + $0x380] sm:$0xff]
  %v199 = vld [vmem:[%s0 + $0x388] sm:$0xff]
  %v200 = vld [vmem:[%s0 + $0x390] sm:$0xff]
  %v201 = vld [vmem:[%s0 + $0x398] sm:$0xff]
  %v202 = vld [vmem:[%s0 + $0x3a0] sm:$0xff]
  %v203 = vld [vmem:[%s0 + $0x3a8] sm:$0xff]
  %v204 = vld [vmem:[%s0 + $0x3b0] sm:$0xff]
  %v205 = vld [vmem:[%s0 + $0x3b8] sm:$0xff]
  %v206 = vld [vmem:[%s0 + $0x3c0] sm:$0xff]
  %v207 = vld [vmem:[%s0 + $0x3c8] sm:$0xff]
  %v208 = vld [vmem:[%s0 + $0x3d0] sm:$0xff]
  %v209 = vld [vmem:[%s0 + $0x3d8] sm:$0xff]
  %v210 = vld [vmem:[%s0 + $0x3e0] sm:$0xff]
  %v211 = vld [vmem:[%s0 + $0x3e8] sm:$0xff]
  %v212 = vld [vmem:[%s0 + $0x3f0] sm:$0xff]
  %v213 = vld [vmem:[%s0 + $0x3f8] sm:$0xff]
  %v214 = vld [vmem:[%s0 + $0x400] sm:$0xff]
  %v215 = vld [vmem:[%s0 + $0x408] sm:$0xff]
  %v216 = vld [vmem:[%s0 + $0x410] sm:$0xff]
  %v217 = vld [vmem:[%s0 + $0x418] sm:$0xff]
  %v218 = vld [vmem:[%s0 + $0x420] sm:$0xff]
  %v219 = vld [vmem:[%s0 + $0x428] sm:$0xff]
  %v220 = vld [vmem:[%s0 + $0x430] sm:$0xff]
  %v221 = vld [vmem:[%s0 + $0x438] sm:$0xff]
  %v222 = vld [vmem:[%s0 + $0x440] sm:$0xff]
  %v223 = vld [vmem:[%s0 + $0x448] sm:$0xff]
  %v224 = vld [vmem:[%s0 + $0x450] sm:$0xff]
  %v225 = vld [vmem:[%s0 + $0x458] sm:$0xff]
  %v226 = vld [vmem:[%s0 + $0x460] sm:$0xff]
  %v227 = vld [vmem:[%s0 + $0x468] sm:$0xff]
  %v228 = vld [vmem:[%s0 + $0x470] sm:$0xff]
  %v229 = vld [vmem:[%s0 + $0x478] sm:$0xff]
  %v230 = vld [vmem:[%s0 + $0x480] sm:$0xff]
  %v231 = vld [vmem:[%s0 + $0x488] sm:$0xff]
  %v232 = vld [vmem:[%s0 + $0x490] sm:$0xff]
  %v233 = vld [vmem:[%s0 + $0x498] sm:$0xff]
  %v234 = vld [vmem:[%s0 + $0x4a0] sm:$0xff]
  %v235 = vld [vmem:[%s0 + $0x4a8] sm:$0xff]
  %v236 = vld [vmem:[%s0 + $0x4b0] sm:$0xff]
  %v237 = vld [vmem:[%s0 + $0x4b8] sm:$0xff]
  %v238 = vld [vmem:[%s0 + $0x4c0] sm:$0xff]
  %v239 = vld [vmem:[%s0 + $0x4c8] sm:$0xff]
  %v240 = vld [vmem:[%s0 + $0x4d0] sm:$0xff]
  %v241 = vld [vmem:[%s0 + $0x4d8] sm:$0xff]
  %v242 = vld [vmem:[%s0 + $0x4e0] sm:$0xff]
  %v243 = vld [vmem:[%s0 + $0x4e8] sm:$0xff]
  %v244 = vld [vmem:[%s0 + $0x4f0] sm:$0xff]
  %v245 = vld [vmem:[%s0 + $0x4f8] sm:$0xff]
  %v246 = vld [vmem:[%s0 + $0x500] sm:$0xff]
  %v247 = vld [vmem:[%s0 + $0x508] sm:$0xff]
  %v248 = vld [vmem:[%s0 + $0x510] sm:$0xff]
  %v249 = vld [vmem:[%s0 + $0x518] sm:$0xff]
  %v250 = vld [vmem:[%s0 + $0x520] sm:$0xff]
  %v251 = vld [vmem:[%s0 + $0x528] sm:$0xff]
  %v252 = vld [vmem:[%s0 + $0x530] sm:$0xff]
  %v253 = vld [vmem:[%s0 + $0x538] sm:$0xff]
  %v254 = vld [vmem:[%s0 + $0x540] sm:$0xff]
  %v255 = vld [vmem:[%s0 + $0x548] sm:$0xff]
  %v256 = vld [vmem:[%s0 + $0x550] sm:$0xff]
  %v257 = vld [vmem:[%s0 + $0x558] sm:$0xff]
  %v258 = vld [vmem:[%s0 + $0x560] sm:$0xff]
  %v259 = vld [vmem:[%s0 + $0x568] sm:$0xff]
  %v260 = vld [vmem:[%s0 + $0x570] sm:$0xff]
  %v261 = vld [vmem:[%s0 + $0x578] sm:$0xff]
  %v262 = vld [vmem:[%s0 + $0x580] sm:$0xff]
  %v263 = vld [vmem:[%s0 + $0x588] sm:$0xff]
  %v264 = vld [vmem:[%s0 + $0x590] sm:$0xff]
  %v265 = vld [vmem:[%s0 + $0x598] sm:$0xff]
  %v266 = vld [vmem:[%s0 + $0x5a0] sm:$0xff]
  %v267 = vld [vmem:[%s0 + $0x5a8] sm:$0xff]
  %v268 = vld [vmem:[%s0 + $0x5b0] sm:$0xff]
  %v269 = vld [vmem:[%s0 + $0x5b8] sm:$0xff]
  %v270 = vld [vmem:[%s0 + $0x5c0] sm:$0xff]
  %v271 = vld [vmem:[%s0 + $0x5c8] sm:$0xff]
  %v272 = vld [vmem:[%s0 + $0x5d0] sm:$0xff]
  %v273 = vld [vmem:[%s0 + $0x5d8] sm:$0xff]
  %v274 = vld [vmem:[%s0 + $0x5e0] sm:$0xff]
  %v275 = vld [vmem:[%s0 + $0x5e8] sm:$0xff]
  %v276 = vld [vmem:[%s0 + $0x5f0] sm:$0xff]
  %v277 = vld [vmem:[%s0 + $0x5f8] sm:$0xff]
  %v278 = vld [vmem:[%s0 + $0x600] sm:$0xff]
  %v279 = vld [vmem:[%s0 + $0x608] sm:$0xff]
  %v280 = vld [vmem:[%s0 + $0x610] sm:$0xff]
  %v281 = vld [vmem:[%s0 + $0x618] sm:$0xff]
  %v282 = vld [vmem:[%s0 + $0x620] sm:$0xff]
  %v283 = vld [vmem:[%s0 + $0x628] sm:$0xff]
  %v284 = vld [vmem:[%s0 + $0x630] sm:$0xff]
  %v285 = vld [vmem:[%s0 + $0x638] sm:$0xff]
  %v286 = vld [vmem:[%s0 + $0x640] sm:$0xff]
  %v287 = vld [vmem:[%s0 + $0x648] sm:$0xff]
  %v288 = vld [vmem:[%s0 + $0x650] sm:$0xff]
  %v289 = vld [vmem:[%s0 + $0x658] sm:$0xff]
  %v290 = vld [vmem:[%s0 + $0x660] sm:$0xff]
  %v291 = vld [vmem:[%s0 + $0x668] sm:$0xff]
  %v292 = vld [vmem:[%s0 + $0x670] sm:$0xff]
  %v293 = vld [vmem:[%s0 + $0x678] sm:$0xff]
  %v294 = vld [vmem:[%s0 + $0x680] sm:$0xff]
  %v295 = vld [vmem:[%s0 + $0x688] sm:$0xff]
  %v296 = vld [vmem:[%s0 + $0x690] sm:$0xff]
  %v297 = vld [vmem:[%s0 + $0x698] sm:$0xff]
  %v298 = vld [vmem:[%s0 + $0x6a0] sm:$0xff]
  %v299 = vld [vmem:[%s0 + $0x6a8] sm:$0xff]
  %v300 = vld [vmem:[%s0 + $0x6b0] sm:$0xff]
  %v301 = vld [vmem:[%s0 + $0x6b8] sm:$0xff]
  %v302 = vld [vmem:[%s0 + $0x6c0] sm:$0xff]
  %v303 = vld [vmem:[%s0 + $0x6c8] sm:$0xff]
  %v304 = vld [vmem:[%s0 + $0x6d0] sm:$0xff]
  %v305 = vld [vmem:[%s0 + $0x6d8] sm:$0xff]
  %v306 = vld [vmem:[%s0 + $0x6e0] sm:$0xff]
  %v307 = vld [vmem:[%s0 + $0x6e8] sm:$0xff]
  %v308 = vld [vmem:[%s0 + $0x6f0] sm:$0xff]
  %v309 = vld [vmem:[%s0 + $0x6f8] sm:$0xff]
  %v310 = vld [vmem:[%s0 + $0x700] sm:$0xff]
  %v311 = vld [vmem:[%s0 + $0x708] sm:$0xff]
  %v312 = vld [vmem:[%s0 + $0x710] sm:$0xff]
  %v313 = vld [vmem:[%s0 + $0x718] sm:$0xff]
  %v314 = vld [vmem:[%s0 + $0x720] sm:$0xff]
  %v315 = vld [vmem:[%s0 + $0x728] sm:$0xff]
  %v316 = vld [vmem:[%s0 + $0x730] sm:$0xff]
  %v317 = vld [vmem:[%s0 + $0x738] sm:$0xff]
  %v318 = vld [vmem:[%s0 + $0x740] sm:$0xff]
  %v319 = vld [vmem:[%s0 + $0x748] sm:$0xff]
  %v320 = vld [vmem:[%s0 + $0x750] sm:$0xff]
  %v321 = vld [vmem:[%s0 + $0x758] sm:$0xff]
  %v322 = vld [vmem:[%s0 + $0x760] sm:$0xff]
  %v323 = vld [vmem:[%s0 + $0x768] sm:$0xff]
  %v324 = vld [vmem:[%s0 + $0x770] sm:$0xff]
  %v325 = vld [vmem:[%s0 + $0x778] sm:$0xff]
  %v326 = vld [vmem:[%s0 + $0x780] sm:$0xff]
  %v327 = vld [vmem:[%s0 + $0x788] sm:$0xff]
  %v328 = vld [vmem:[%s0 + $0x790] sm:$0xff]
  %v329 = vld [vmem:[%s0 + $0x798] sm:$0xff]
  %v330 = vld [vmem:[%s0 + $0x7a0] sm:$0xff]
  %v331 = vld [vmem:[%s0 + $0x7a8] sm:$0xff]
  %v332 = vld [vmem:[%s0 + $0x7b0] sm:$0xff]
  %v333 = vld [vmem:[%s0 + $0x7b8] sm:$0xff]
  %v334 = vld [vmem:[%s0 + $0x7c0] sm:$0xff]
  %v335 = vld [vmem:[%s0 + $0x7c8] sm:$0xff]
  %v336 = vld [vmem:[%s0 + $0x7d0] sm:$0xff]
  %v337 = vld [vmem:[%s0 + $0x7d8] sm:$0xff]
  %v338 = vld [vmem:[%s0 + $0x7e0] sm:$0xff]
  %v339 = vld [vmem:[%s0 + $0x7e8] sm:$0xff]
  %v340 = vld [vmem:[%s0 + $0x7f0] sm:$0xff]
  %v341 = vld [vmem:[%s0 + $0x7f8] sm:$0xff]
  %v342 = vld [vmem:[%s0 + $0x800] sm:$0xff]
  %v343 = vld [vmem:[%s0 + $0x808] sm:$0xff]
  %v344 = vld [vmem:[%s0 + $0x810] sm:$0xff]
  %v345 = vld [vmem:[%s0 + $0x818] sm:$0xff]
  %v346 = vld [vmem:[%s0 + $0x820] sm:$0xff]
  %v347 = vld [vmem:[%s0 + $0x828] sm:$0xff]
  %v348 = vld [vmem:[%s0 + $0x830] sm:$0xff]
  %v349 = vld [vmem:[%s0 + $0x838] sm:$0xff]
  %v350 = vld [vmem:[%s0 + $0x840] sm:$0xff]
  %v351 = vld [vmem:[%s0 + $0x848] sm:$0xff]
  %v352 = vld [vmem:[%s0 + $0x850] sm:$0xff]
  %v353 = vld [vmem:[%s0 + $0x858] sm:$0xff]
  %v354 = vld [vmem:[%s0 + $0x860] sm:$0xff]
  %v355 = vld [vmem:[%s0 + $0x868] sm:$0xff]
  %v356 = vld [vmem:[%s0 + $0x870] sm:$0xff]
  %v357 = vld [vmem:[%s0 + $0x878] sm:$0xff]
  %v358 = vld [vmem:[%s0 + $0x880] sm:$0xff]
  %v359 = vld [vmem:[%s0 + $0x888] sm:$0xff]
  %v360 = vld [vmem:[%s0 + $0x890] sm:$0xff]
  %v361 = vld [vmem:[%s0 + $0x898] sm:$0xff]
  %v362 = vld [vmem:[%s0 + $0x8a0] sm:$0xff]
  %v363 = vld [vmem:[%s0 + $0x8a8] sm:$0xff]
  %v364 = vld [vmem:[%s0 + $0x8b0] sm:$0xff]
  %v365 = vld [vmem:[%s0 + $0x8b8] sm:$0xff]
  %v366 = vld [vmem:[%s0 + $0x8c0] sm:$0xff]
  %v367 = vld [vmem:[%s0 + $0x8c8] sm:$0xff]
  %v368 = vld [vmem:[%s0 + $0x8d0] sm:$0xff]
  %v369 = vld [vmem:[%s0 + $0x8d8] sm:$0xff]
  %v370 = vld [vmem:[%s0 + $0x8e0] sm:$0xff]
  %v371 = vld [vmem:[%s0 + $0x8e8] sm:$0xff]
  %v372 = vld [vmem:[%s0 + $0x8f0] sm:$0xff]
  %v373 = vld [vmem:[%s0 + $0x8f8] sm:$0xff]
  %v374 = vld [vmem:[%s2] sm:$0xff]
  %v375 = vld [vmem:[%s2 + $0x8] sm:$0xff]
  %v376 = vld [vmem:[%s2 + $0x10] sm:$0xff]
  %v377 = vld [vmem:[%s2 + $0x18] sm:$0xff]
  %v378 = vld [vmem:[%s2 + $0x20] sm:$0xff]
  %v379 = vld [vmem:[%s2 + $0x28] sm:$0xff]
  %v380 = vld [vmem:[%s2 + $0x30] sm:$0xff]
  %v381 = vld [vmem:[%s2 + $0x38] sm:$0xff]
  %383 = vset.pattern.permute.xlu0 0
  %384 = vperm.xlu0 %383, %v374
  %v385 = vpop.permute.xlu0 %384
  %388 = vset.pattern.permute.xlu0 0
  %389 = vperm.xlu0 %388, %v375
  %v390 = vpop.permute.xlu0 %389
  %393 = vset.pattern.permute.xlu0 0
  %394 = vperm.xlu0 %393, %v376
  %v395 = vpop.permute.xlu0 %394
  %398 = vset.pattern.permute.xlu0 0
  %399 = vperm.xlu0 %398, %v377
  %v400 = vpop.permute.xlu0 %399
  %403 = vset.pattern.permute.xlu0 0
  %404 = vperm.xlu0 %403, %v378
  %v405 = vpop.permute.xlu0 %404
  %408 = vset.pattern.permute.xlu0 0
  %409 = vperm.xlu0 %408, %v379
  %v410 = vpop.permute.xlu0 %409
  %413 = vset.pattern.permute.xlu0 0
  %414 = vperm.xlu0 %413, %v380
  %v415 = vpop.permute.xlu0 %414
  %418 = vset.pattern.permute.xlu0 0
  %419 = vperm.xlu0 %418, %v381
  %v420 = vpop.permute.xlu0 %419
  %422 = vmatpush.msra.mxu0 %v116
  %423 = vmatpush.msra.mxu0 %v114
  %424 = vmatpush.msra.mxu0 %v112
  %425 = vmatpush.msra.mxu0 %v110
  %426 = vmatpush.msra.mxu0 %v108
  %427 = vmatpush.msra.mxu0 %v106
  %428 = vmatpush.msra.mxu0 %v104
  %429 = vmatpush.msra.mxu0 %v102
  %430 = vmatpush.msra.mxu0 %v100
  %431 = vmatpush.msra.mxu0 %v98
  %432 = vmatpush.msra.mxu0 %v96
  %433 = vmatpush.msra.mxu0 %v94
  %434 = vmatpush.msra.mxu0 %v92
  %435 = vmatpush.msra.mxu0 %v90
  %436 = vmatpush.msra.mxu0 %v88
  %437 = vmatpush.msra.mxu0 %v86
  %438 = vmatmul.f32.gmra.mxu0 %v14
  %v439 = vpop.f32.mrf.mxu0
  %v440 = vadd.f32 %v385, %v439
  %441 = vmatmul.f32.gmra.mxu0 %v23
  %v442 = vpop.f32.mrf.mxu0
  %v443 = vadd.f32 %v390, %v442
  %444 = vmatmul.f32.gmra.mxu0 %v32
  %v445 = vpop.f32.mrf.mxu0
  %v446 = vadd.f32 %v395, %v445
  %447 = vmatmul.f32.gmra.mxu0 %v41
  %v448 = vpop.f32.mrf.mxu0
  %v449 = vadd.f32 %v400, %v448
  %450 = vmatmul.f32.gmra.mxu0 %v50
  %v451 = vpop.f32.mrf.mxu0
  %v452 = vadd.f32 %v405, %v451
  %453 = vmatmul.f32.gmra.mxu0 %v59
  %v454 = vpop.f32.mrf.mxu0
  %v455 = vadd.f32 %v410, %v454
  %456 = vmatmul.f32.gmra.mxu0 %v68
  %v457 = vpop.f32.mrf.mxu0
  %v458 = vadd.f32 %v415, %v457
  %459 = vmatmul.f32.gmra.mxu0 %v77
  %v460 = vpop.f32.mrf.mxu0
  %v461 = vadd.f32 %v420, %v460
  %462 = vdwg.mxu0
  %463 = vmatpush.msra.mxu0 %v148
  %464 = vmatpush.msra.mxu0 %v146
  %465 = vmatpush.msra.mxu0 %v144
  %466 = vmatpush.msra.mxu0 %v142
  %467 = vmatpush.msra.mxu0 %v140
  %468 = vmatpush.msra.mxu0 %v138
  %469 = vmatpush.msra.mxu0 %v136
  %470 = vmatpush.msra.mxu0 %v134
  %471 = vmatpush.msra.mxu0 %v132
  %472 = vmatpush.msra.mxu0 %v130
  %473 = vmatpush.msra.mxu0 %v128
  %474 = vmatpush.msra.mxu0 %v126
  %475 = vmatpush.msra.mxu0 %v124
  %476 = vmatpush.msra.mxu0 %v122
  %477 = vmatpush.msra.mxu0 %v120
  %478 = vmatpush.msra.mxu0 %v118
  %479 = vmatmul.f32.gmra.mxu0 %v15
  %v480 = vpop.f32.mrf.mxu0
  %v481 = vadd.f32 %v440, %v480
  %482 = vmatmul.f32.gmra.mxu0 %v24
  %v483 = vpop.f32.mrf.mxu0
  %v484 = vadd.f32 %v443, %v483
  %485 = vmatmul.f32.gmra.mxu0 %v33
  %v486 = vpop.f32.mrf.mxu0
  %v487 = vadd.f32 %v446, %v486
  %488 = vmatmul.f32.gmra.mxu0 %v42
  %v489 = vpop.f32.mrf.mxu0
  %v490 = vadd.f32 %v449, %v489
  %491 = vmatmul.f32.gmra.mxu0 %v51
  %v492 = vpop.f32.mrf.mxu0
  %v493 = vadd.f32 %v452, %v492
  %494 = vmatmul.f32.gmra.mxu0 %v60
  %v495 = vpop.f32.mrf.mxu0
  %v496 = vadd.f32 %v455, %v495
  %497 = vmatmul.f32.gmra.mxu0 %v69
  %v498 = vpop.f32.mrf.mxu0
  %v499 = vadd.f32 %v458, %v498
  %500 = vmatmul.f32.gmra.mxu0 %v78
  %v501 = vpop.f32.mrf.mxu0
  %v502 = vadd.f32 %v461, %v501
  %503 = vdwg.mxu0
  %504 = vmatpush.msra.mxu0 %v180
  %505 = vmatpush.msra.mxu0 %v178
  %506 = vmatpush.msra.mxu0 %v176
  %507 = vmatpush.msra.mxu0 %v174
  %508 = vmatpush.msra.mxu0 %v172
  %509 = vmatpush.msra.mxu0 %v170
  %510 = vmatpush.msra.mxu0 %v168
  %511 = vmatpush.msra.mxu0 %v166
  %512 = vmatpush.msra.mxu0 %v164
  %513 = vmatpush.msra.mxu0 %v162
  %514 = vmatpush.msra.mxu0 %v160
  %515 = vmatpush.msra.mxu0 %v158
  %516 = vmatpush.msra.mxu0 %v156
  %517 = vmatpush.msra.mxu0 %v154
  %518 = vmatpush.msra.mxu0 %v152
  %519 = vmatpush.msra.mxu0 %v150
  %520 = vmatmul.f32.gmra.mxu0 %v16
  %v521 = vpop.f32.mrf.mxu0
  %v522 = vadd.f32 %v481, %v521
  %523 = vmatmul.f32.gmra.mxu0 %v25
  %v524 = vpop.f32.mrf.mxu0
  %v525 = vadd.f32 %v484, %v524
  %526 = vmatmul.f32.gmra.mxu0 %v34
  %v527 = vpop.f32.mrf.mxu0
  %v528 = vadd.f32 %v487, %v527
  %529 = vmatmul.f32.gmra.mxu0 %v43
  %v530 = vpop.f32.mrf.mxu0
  %v531 = vadd.f32 %v490, %v530
  %532 = vmatmul.f32.gmra.mxu0 %v52
  %v533 = vpop.f32.mrf.mxu0
  %v534 = vadd.f32 %v493, %v533
  %535 = vmatmul.f32.gmra.mxu0 %v61
  %v536 = vpop.f32.mrf.mxu0
  %v537 = vadd.f32 %v496, %v536
  %538 = vmatmul.f32.gmra.mxu0 %v70
  %v539 = vpop.f32.mrf.mxu0
  %v540 = vadd.f32 %v499, %v539
  %541 = vmatmul.f32.gmra.mxu0 %v79
  %v542 = vpop.f32.mrf.mxu0
  %v543 = vadd.f32 %v502, %v542
  %544 = vdwg.mxu0
  %545 = vmatpush.msra.mxu0 %v212
  %546 = vmatpush.msra.mxu0 %v210
  %547 = vmatpush.msra.mxu0 %v208
  %548 = vmatpush.msra.mxu0 %v206
  %549 = vmatpush.msra.mxu0 %v204
  %550 = vmatpush.msra.mxu0 %v202
  %551 = vmatpush.msra.mxu0 %v200
  %552 = vmatpush.msra.mxu0 %v198
  %553 = vmatpush.msra.mxu0 %v196
  %554 = vmatpush.msra.mxu0 %v194
  %555 = vmatpush.msra.mxu0 %v192
  %556 = vmatpush.msra.mxu0 %v190
  %557 = vmatpush.msra.mxu0 %v188
  %558 = vmatpush.msra.mxu0 %v186
  %559 = vmatpush.msra.mxu0 %v184
  %560 = vmatpush.msra.mxu0 %v182
  %561 = vmatmul.f32.gmra.mxu0 %v17
  %v562 = vpop.f32.mrf.mxu0
  %v563 = vadd.f32 %v522, %v562
  %564 = vmatmul.f32.gmra.mxu0 %v26
  %v565 = vpop.f32.mrf.mxu0
  %v566 = vadd.f32 %v525, %v565
  %567 = vmatmul.f32.gmra.mxu0 %v35
  %v568 = vpop.f32.mrf.mxu0
  %v569 = vadd.f32 %v528, %v568
  %570 = vmatmul.f32.gmra.mxu0 %v44
  %v571 = vpop.f32.mrf.mxu0
  %v572 = vadd.f32 %v531, %v571
  %573 = vmatmul.f32.gmra.mxu0 %v53
  %v574 = vpop.f32.mrf.mxu0
  %v575 = vadd.f32 %v534, %v574
  %576 = vmatmul.f32.gmra.mxu0 %v62
  %v577 = vpop.f32.mrf.mxu0
  %v578 = vadd.f32 %v537, %v577
  %579 = vmatmul.f32.gmra.mxu0 %v71
  %v580 = vpop.f32.mrf.mxu0
  %v581 = vadd.f32 %v540, %v580
  %582 = vmatmul.f32.gmra.mxu0 %v80
  %v583 = vpop.f32.mrf.mxu0
  %v584 = vadd.f32 %v543, %v583
  %585 = vdwg.mxu0
  %586 = vmatpush.msra.mxu0 %v244
  %587 = vmatpush.msra.mxu0 %v242
  %588 = vmatpush.msra.mxu0 %v240
  %589 = vmatpush.msra.mxu0 %v238
  %590 = vmatpush.msra.mxu0 %v236
  %591 = vmatpush.msra.mxu0 %v234
  %592 = vmatpush.msra.mxu0 %v232
  %593 = vmatpush.msra.mxu0 %v230
  %594 = vmatpush.msra.mxu0 %v228
  %595 = vmatpush.msra.mxu0 %v226
  %596 = vmatpush.msra.mxu0 %v224
  %597 = vmatpush.msra.mxu0 %v222
  %598 = vmatpush.msra.mxu0 %v220
  %599 = vmatpush.msra.mxu0 %v218
  %600 = vmatpush.msra.mxu0 %v216
  %601 = vmatpush.msra.mxu0 %v214
  %602 = vmatmul.f32.gmra.mxu0 %v18
  %v603 = vpop.f32.mrf.mxu0
  %v604 = vadd.f32 %v563, %v603
  %605 = vmatmul.f32.gmra.mxu0 %v27
  %v606 = vpop.f32.mrf.mxu0
  %v607 = vadd.f32 %v566, %v606
  %608 = vmatmul.f32.gmra.mxu0 %v36
  %v609 = vpop.f32.mrf.mxu0
  %v610 = vadd.f32 %v569, %v609
  %611 = vmatmul.f32.gmra.mxu0 %v45
  %v612 = vpop.f32.mrf.mxu0
  %v613 = vadd.f32 %v572, %v612
  %614 = vmatmul.f32.gmra.mxu0 %v54
  %v615 = vpop.f32.mrf.mxu0
  %v616 = vadd.f32 %v575, %v615
  %617 = vmatmul.f32.gmra.mxu0 %v63
  %v618 = vpop.f32.mrf.mxu0
  %v619 = vadd.f32 %v578, %v618
  %620 = vmatmul.f32.gmra.mxu0 %v72
  %v621 = vpop.f32.mrf.mxu0
  %v622 = vadd.f32 %v581, %v621
  %623 = vmatmul.f32.gmra.mxu0 %v81
  %v624 = vpop.f32.mrf.mxu0
  %v625 = vadd.f32 %v584, %v624
  %626 = vdwg.mxu0
  %627 = vmatpush.msra.mxu0 %v276
  %628 = vmatpush.msra.mxu0 %v274
  %629 = vmatpush.msra.mxu0 %v272
  %630 = vmatpush.msra.mxu0 %v270
  %631 = vmatpush.msra.mxu0 %v268
  %632 = vmatpush.msra.mxu0 %v266
  %633 = vmatpush.msra.mxu0 %v264
  %634 = vmatpush.msra.mxu0 %v262
  %635 = vmatpush.msra.mxu0 %v260
  %636 = vmatpush.msra.mxu0 %v258
  %637 = vmatpush.msra.mxu0 %v256
  %638 = vmatpush.msra.mxu0 %v254
  %639 = vmatpush.msra.mxu0 %v252
  %640 = vmatpush.msra.mxu0 %v250
  %641 = vmatpush.msra.mxu0 %v248
  %642 = vmatpush.msra.mxu0 %v246
  %643 = vmatmul.f32.gmra.mxu0 %v19
  %v644 = vpop.f32.mrf.mxu0
  %v645 = vadd.f32 %v604, %v644
  %646 = vmatmul.f32.gmra.mxu0 %v28
  %v647 = vpop.f32.mrf.mxu0
  %v648 = vadd.f32 %v607, %v647
  %649 = vmatmul.f32.gmra.mxu0 %v37
  %v650 = vpop.f32.mrf.mxu0
  %v651 = vadd.f32 %v610, %v650
  %652 = vmatmul.f32.gmra.mxu0 %v46
  %v653 = vpop.f32.mrf.mxu0
  %v654 = vadd.f32 %v613, %v653
  %655 = vmatmul.f32.gmra.mxu0 %v55
  %v656 = vpop.f32.mrf.mxu0
  %v657 = vadd.f32 %v616, %v656
  %658 = vmatmul.f32.gmra.mxu0 %v64
  %v659 = vpop.f32.mrf.mxu0
  %v660 = vadd.f32 %v619, %v659
  %661 = vmatmul.f32.gmra.mxu0 %v73
  %v662 = vpop.f32.mrf.mxu0
  %v663 = vadd.f32 %v622, %v662
  %664 = vmatmul.f32.gmra.mxu0 %v82
  %v665 = vpop.f32.mrf.mxu0
  %v666 = vadd.f32 %v625, %v665
  %667 = vdwg.mxu0
  %668 = vmatpush.msra.mxu0 %v308
  %669 = vmatpush.msra.mxu0 %v306
  %670 = vmatpush.msra.mxu0 %v304
  %671 = vmatpush.msra.mxu0 %v302
  %672 = vmatpush.msra.mxu0 %v300
  %673 = vmatpush.msra.mxu0 %v298
  %674 = vmatpush.msra.mxu0 %v296
  %675 = vmatpush.msra.mxu0 %v294
  %676 = vmatpush.msra.mxu0 %v292
  %677 = vmatpush.msra.mxu0 %v290
  %678 = vmatpush.msra.mxu0 %v288
  %679 = vmatpush.msra.mxu0 %v286
  %680 = vmatpush.msra.mxu0 %v284
  %681 = vmatpush.msra.mxu0 %v282
  %682 = vmatpush.msra.mxu0 %v280
  %683 = vmatpush.msra.mxu0 %v278
  %684 = vmatmul.f32.gmra.mxu0 %v20
  %v685 = vpop.f32.mrf.mxu0
  %v686 = vadd.f32 %v645, %v685
  %687 = vmatmul.f32.gmra.mxu0 %v29
  %v688 = vpop.f32.mrf.mxu0
  %v689 = vadd.f32 %v648, %v688
  %690 = vmatmul.f32.gmra.mxu0 %v38
  %v691 = vpop.f32.mrf.mxu0
  %v692 = vadd.f32 %v651, %v691
  %693 = vmatmul.f32.gmra.mxu0 %v47
  %v694 = vpop.f32.mrf.mxu0
  %v695 = vadd.f32 %v654, %v694
  %696 = vmatmul.f32.gmra.mxu0 %v56
  %v697 = vpop.f32.mrf.mxu0
  %v698 = vadd.f32 %v657, %v697
  %699 = vmatmul.f32.gmra.mxu0 %v65
  %v700 = vpop.f32.mrf.mxu0
  %v701 = vadd.f32 %v660, %v700
  %702 = vmatmul.f32.gmra.mxu0 %v74
  %v703 = vpop.f32.mrf.mxu0
  %v704 = vadd.f32 %v663, %v703
  %705 = vmatmul.f32.gmra.mxu0 %v83
  %v706 = vpop.f32.mrf.mxu0
  %v707 = vadd.f32 %v666, %v706
  %708 = vdwg.mxu0
  %709 = vmatpush.msra.mxu0 %v340
  %710 = vmatpush.msra.mxu0 %v338
  %711 = vmatpush.msra.mxu0 %v336
  %712 = vmatpush.msra.mxu0 %v334
  %713 = vmatpush.msra.mxu0 %v332
  %714 = vmatpush.msra.mxu0 %v330
  %715 = vmatpush.msra.mxu0 %v328
  %716 = vmatpush.msra.mxu0 %v326
  %717 = vmatpush.msra.mxu0 %v324
  %718 = vmatpush.msra.mxu0 %v322
  %719 = vmatpush.msra.mxu0 %v320
  %720 = vmatpush.msra.mxu0 %v318
  %721 = vmatpush.msra.mxu0 %v316
  %722 = vmatpush.msra.mxu0 %v314
  %723 = vmatpush.msra.mxu0 %v312
  %724 = vmatpush.msra.mxu0 %v310
  %725 = vmatmul.f32.gmra.mxu0 %v21
  %v726 = vpop.f32.mrf.mxu0
  %v727 = vadd.f32 %v686, %v726
  %728 = vmatmul.f32.gmra.mxu0 %v30
  %v729 = vpop.f32.mrf.mxu0
  %v730 = vadd.f32 %v689, %v729
  %731 = vmatmul.f32.gmra.mxu0 %v39
  %v732 = vpop.f32.mrf.mxu0
  %v733 = vadd.f32 %v692, %v732
  %734 = vmatmul.f32.gmra.mxu0 %v48
  %v735 = vpop.f32.mrf.mxu0
  %v736 = vadd.f32 %v695, %v735
  %737 = vmatmul.f32.gmra.mxu0 %v57
  %v738 = vpop.f32.mrf.mxu0
  %v739 = vadd.f32 %v698, %v738
  %740 = vmatmul.f32.gmra.mxu0 %v66
  %v741 = vpop.f32.mrf.mxu0
  %v742 = vadd.f32 %v701, %v741
  %743 = vmatmul.f32.gmra.mxu0 %v75
  %v744 = vpop.f32.mrf.mxu0
  %v745 = vadd.f32 %v704, %v744
  %746 = vmatmul.f32.gmra.mxu0 %v84
  %v747 = vpop.f32.mrf.mxu0
  %v748 = vadd.f32 %v707, %v747
  %749 = vdwg.mxu0
  %750 = vmatpush.msra.mxu0 %v372
  %751 = vmatpush.msra.mxu0 %v370
  %752 = vmatpush.msra.mxu0 %v368
  %753 = vmatpush.msra.mxu0 %v366
  %754 = vmatpush.msra.mxu0 %v364
  %755 = vmatpush.msra.mxu0 %v362
  %756 = vmatpush.msra.mxu0 %v360
  %757 = vmatpush.msra.mxu0 %v358
  %758 = vmatpush.msra.mxu0 %v356
  %759 = vmatpush.msra.mxu0 %v354
  %760 = vmatpush.msra.mxu0 %v352
  %761 = vmatpush.msra.mxu0 %v350
  %762 = vmatpush.msra.mxu0 %v348
  %763 = vmatpush.msra.mxu0 %v346
  %764 = vmatpush.msra.mxu0 %v344
  %765 = vmatpush.msra.mxu0 %v342
  %766 = vmatmul.f32.gmra.mxu0 %v22
  %v767 = vpop.f32.mrf.mxu0
  %v768 = vadd.f32 %v727, %v767
  %769 = vmatmul.f32.gmra.mxu0 %v31
  %v770 = vpop.f32.mrf.mxu0
  %v771 = vadd.f32 %v730, %v770
  %772 = vmatmul.f32.gmra.mxu0 %v40
  %v773 = vpop.f32.mrf.mxu0
  %v774 = vadd.f32 %v733, %v773
  %775 = vmatmul.f32.gmra.mxu0 %v49
  %v776 = vpop.f32.mrf.mxu0
  %v777 = vadd.f32 %v736, %v776
  %778 = vmatmul.f32.gmra.mxu0 %v58
  %v779 = vpop.f32.mrf.mxu0
  %v780 = vadd.f32 %v739, %v779
  %781 = vmatmul.f32.gmra.mxu0 %v67
  %v782 = vpop.f32.mrf.mxu0
  %v783 = vadd.f32 %v742, %v782
  %784 = vmatmul.f32.gmra.mxu0 %v76
  %v785 = vpop.f32.mrf.mxu0
  %v786 = vadd.f32 %v745, %v785
  %787 = vmatmul.f32.gmra.mxu0 %v85
  %v788 = vpop.f32.mrf.mxu0
  %v789 = vadd.f32 %v748, %v788
  %790 = vdwg.mxu0
  %791 = vmatpush.msra.mxu0 %v117
  %792 = vmatpush.msra.mxu0 %v115
  %793 = vmatpush.msra.mxu0 %v113
  %794 = vmatpush.msra.mxu0 %v111
  %795 = vmatpush.msra.mxu0 %v109
  %796 = vmatpush.msra.mxu0 %v107
  %797 = vmatpush.msra.mxu0 %v105
  %798 = vmatpush.msra.mxu0 %v103
  %799 = vmatpush.msra.mxu0 %v101
  %800 = vmatpush.msra.mxu0 %v99
  %801 = vmatpush.msra.mxu0 %v97
  %802 = vmatpush.msra.mxu0 %v95
  %803 = vmatpush.msra.mxu0 %v93
  %804 = vmatpush.msra.mxu0 %v91
  %805 = vmatpush.msra.mxu0 %v89
  %806 = vmatpush.msra.mxu0 %v87
  %807 = vmatmul.f32.gmra.mxu0 %v14
  %v808 = vpop.f32.mrf.mxu0
  %v809 = vadd.f32 %v385, %v808
  %810 = vmatmul.f32.gmra.mxu0 %v23
  %v811 = vpop.f32.mrf.mxu0
  %v812 = vadd.f32 %v390, %v811
  %813 = vmatmul.f32.gmra.mxu0 %v32
  %v814 = vpop.f32.mrf.mxu0
  %v815 = vadd.f32 %v395, %v814
  %816 = vmatmul.f32.gmra.mxu0 %v41
  %v817 = vpop.f32.mrf.mxu0
  %v818 = vadd.f32 %v400, %v817
  %819 = vmatmul.f32.gmra.mxu0 %v50
  %v820 = vpop.f32.mrf.mxu0
  %v821 = vadd.f32 %v405, %v820
  %822 = vmatmul.f32.gmra.mxu0 %v59
  %v823 = vpop.f32.mrf.mxu0
  %v824 = vadd.f32 %v410, %v823
  %825 = vmatmul.f32.gmra.mxu0 %v68
  %v826 = vpop.f32.mrf.mxu0
  %v827 = vadd.f32 %v415, %v826
  %828 = vmatmul.f32.gmra.mxu0 %v77
  %v829 = vpop.f32.mrf.mxu0
  %v830 = vadd.f32 %v420, %v829
  %831 = vdwg.mxu0
  %832 = vmatpush.msra.mxu0 %v149
  %833 = vmatpush.msra.mxu0 %v147
  %834 = vmatpush.msra.mxu0 %v145
  %835 = vmatpush.msra.mxu0 %v143
  %836 = vmatpush.msra.mxu0 %v141
  %837 = vmatpush.msra.mxu0 %v139
  %838 = vmatpush.msra.mxu0 %v137
  %839 = vmatpush.msra.mxu0 %v135
  %840 = vmatpush.msra.mxu0 %v133
  %841 = vmatpush.msra.mxu0 %v131
  %842 = vmatpush.msra.mxu0 %v129
  %843 = vmatpush.msra.mxu0 %v127
  %844 = vmatpush.msra.mxu0 %v125
  %845 = vmatpush.msra.mxu0 %v123
  %846 = vmatpush.msra.mxu0 %v121
  %847 = vmatpush.msra.mxu0 %v119
  %848 = vmatmul.f32.gmra.mxu0 %v15
  %v849 = vpop.f32.mrf.mxu0
  %v850 = vadd.f32 %v809, %v849
  %851 = vmatmul.f32.gmra.mxu0 %v24
  %v852 = vpop.f32.mrf.mxu0
  %v853 = vadd.f32 %v812, %v852
  %854 = vmatmul.f32.gmra.mxu0 %v33
  %v855 = vpop.f32.mrf.mxu0
  %v856 = vadd.f32 %v815, %v855
  %857 = vmatmul.f32.gmra.mxu0 %v42
  %v858 = vpop.f32.mrf.mxu0
  %v859 = vadd.f32 %v818, %v858
  %860 = vmatmul.f32.gmra.mxu0 %v51
  %v861 = vpop.f32.mrf.mxu0
  %v862 = vadd.f32 %v821, %v861
  %863 = vmatmul.f32.gmra.mxu0 %v60
  %v864 = vpop.f32.mrf.mxu0
  %v865 = vadd.f32 %v824, %v864
  %866 = vmatmul.f32.gmra.mxu0 %v69
  %v867 = vpop.f32.mrf.mxu0
  %v868 = vadd.f32 %v827, %v867
  %869 = vmatmul.f32.gmra.mxu0 %v78
  %v870 = vpop.f32.mrf.mxu0
  %v871 = vadd.f32 %v830, %v870
  %872 = vdwg.mxu0
  %873 = vmatpush.msra.mxu0 %v181
  %874 = vmatpush.msra.mxu0 %v179
  %875 = vmatpush.msra.mxu0 %v177
  %876 = vmatpush.msra.mxu0 %v175
  %877 = vmatpush.msra.mxu0 %v173
  %878 = vmatpush.msra.mxu0 %v171
  %879 = vmatpush.msra.mxu0 %v169
  %880 = vmatpush.msra.mxu0 %v167
  %881 = vmatpush.msra.mxu0 %v165
  %882 = vmatpush.msra.mxu0 %v163
  %883 = vmatpush.msra.mxu0 %v161
  %884 = vmatpush.msra.mxu0 %v159
  %885 = vmatpush.msra.mxu0 %v157
  %886 = vmatpush.msra.mxu0 %v155
  %887 = vmatpush.msra.mxu0 %v153
  %888 = vmatpush.msra.mxu0 %v151
  %889 = vmatmul.f32.gmra.mxu0 %v16
  %v890 = vpop.f32.mrf.mxu0
  %v891 = vadd.f32 %v850, %v890
  %892 = vmatmul.f32.gmra.mxu0 %v25
  %v893 = vpop.f32.mrf.mxu0
  %v894 = vadd.f32 %v853, %v893
  %895 = vmatmul.f32.gmra.mxu0 %v34
  %v896 = vpop.f32.mrf.mxu0
  %v897 = vadd.f32 %v856, %v896
  %898 = vmatmul.f32.gmra.mxu0 %v43
  %v899 = vpop.f32.mrf.mxu0
  %v900 = vadd.f32 %v859, %v899
  %901 = vmatmul.f32.gmra.mxu0 %v52
  %v902 = vpop.f32.mrf.mxu0
  %v903 = vadd.f32 %v862, %v902
  %904 = vmatmul.f32.gmra.mxu0 %v61
  %v905 = vpop.f32.mrf.mxu0
  %v906 = vadd.f32 %v865, %v905
  %907 = vmatmul.f32.gmra.mxu0 %v70
  %v908 = vpop.f32.mrf.mxu0
  %v909 = vadd.f32 %v868, %v908
  %910 = vmatmul.f32.gmra.mxu0 %v79
  %v911 = vpop.f32.mrf.mxu0
  %v912 = vadd.f32 %v871, %v911
  %913 = vdwg.mxu0
  %914 = vmatpush.msra.mxu0 %v213
  %915 = vmatpush.msra.mxu0 %v211
  %916 = vmatpush.msra.mxu0 %v209
  %917 = vmatpush.msra.mxu0 %v207
  %918 = vmatpush.msra.mxu0 %v205
  %919 = vmatpush.msra.mxu0 %v203
  %920 = vmatpush.msra.mxu0 %v201
  %921 = vmatpush.msra.mxu0 %v199
  %922 = vmatpush.msra.mxu0 %v197
  %923 = vmatpush.msra.mxu0 %v195
  %924 = vmatpush.msra.mxu0 %v193
  %925 = vmatpush.msra.mxu0 %v191
  %926 = vmatpush.msra.mxu0 %v189
  %927 = vmatpush.msra.mxu0 %v187
  %928 = vmatpush.msra.mxu0 %v185
  %929 = vmatpush.msra.mxu0 %v183
  %930 = vmatmul.f32.gmra.mxu0 %v17
  %v931 = vpop.f32.mrf.mxu0
  %v932 = vadd.f32 %v891, %v931
  %933 = vmatmul.f32.gmra.mxu0 %v26
  %v934 = vpop.f32.mrf.mxu0
  %v935 = vadd.f32 %v894, %v934
  %936 = vmatmul.f32.gmra.mxu0 %v35
  %v937 = vpop.f32.mrf.mxu0
  %v938 = vadd.f32 %v897, %v937
  %939 = vmatmul.f32.gmra.mxu0 %v44
  %v940 = vpop.f32.mrf.mxu0
  %v941 = vadd.f32 %v900, %v940
  %942 = vmatmul.f32.gmra.mxu0 %v53
  %v943 = vpop.f32.mrf.mxu0
  %v944 = vadd.f32 %v903, %v943
  %945 = vmatmul.f32.gmra.mxu0 %v62
  %v946 = vpop.f32.mrf.mxu0
  %v947 = vadd.f32 %v906, %v946
  %948 = vmatmul.f32.gmra.mxu0 %v71
  %v949 = vpop.f32.mrf.mxu0
  %v950 = vadd.f32 %v909, %v949
  %951 = vmatmul.f32.gmra.mxu0 %v80
  %v952 = vpop.f32.mrf.mxu0
  %v953 = vadd.f32 %v912, %v952
  %954 = vdwg.mxu0
  %955 = vmatpush.msra.mxu0 %v245
  %956 = vmatpush.msra.mxu0 %v243
  %957 = vmatpush.msra.mxu0 %v241
  %958 = vmatpush.msra.mxu0 %v239
  %959 = vmatpush.msra.mxu0 %v237
  %960 = vmatpush.msra.mxu0 %v235
  %961 = vmatpush.msra.mxu0 %v233
  %962 = vmatpush.msra.mxu0 %v231
  %963 = vmatpush.msra.mxu0 %v229
  %964 = vmatpush.msra.mxu0 %v227
  %965 = vmatpush.msra.mxu0 %v225
  %966 = vmatpush.msra.mxu0 %v223
  %967 = vmatpush.msra.mxu0 %v221
  %968 = vmatpush.msra.mxu0 %v219
  %969 = vmatpush.msra.mxu0 %v217
  %970 = vmatpush.msra.mxu0 %v215
  %971 = vmatmul.f32.gmra.mxu0 %v18
  %v972 = vpop.f32.mrf.mxu0
  %v973 = vadd.f32 %v932, %v972
  %974 = vmatmul.f32.gmra.mxu0 %v27
  %v975 = vpop.f32.mrf.mxu0
  %v976 = vadd.f32 %v935, %v975
  %977 = vmatmul.f32.gmra.mxu0 %v36
  %v978 = vpop.f32.mrf.mxu0
  %v979 = vadd.f32 %v938, %v978
  %980 = vmatmul.f32.gmra.mxu0 %v45
  %v981 = vpop.f32.mrf.mxu0
  %v982 = vadd.f32 %v941, %v981
  %983 = vmatmul.f32.gmra.mxu0 %v54
  %v984 = vpop.f32.mrf.mxu0
  %v985 = vadd.f32 %v944, %v984
  %986 = vmatmul.f32.gmra.mxu0 %v63
  %v987 = vpop.f32.mrf.mxu0
  %v988 = vadd.f32 %v947, %v987
  %989 = vmatmul.f32.gmra.mxu0 %v72
  %v990 = vpop.f32.mrf.mxu0
  %v991 = vadd.f32 %v950, %v990
  %992 = vmatmul.f32.gmra.mxu0 %v81
  %v993 = vpop.f32.mrf.mxu0
  %v994 = vadd.f32 %v953, %v993
  %995 = vdwg.mxu0
  %996 = vmatpush.msra.mxu0 %v277
  %997 = vmatpush.msra.mxu0 %v275
  %998 = vmatpush.msra.mxu0 %v273
  %999 = vmatpush.msra.mxu0 %v271
  %1000 = vmatpush.msra.mxu0 %v269
  %1001 = vmatpush.msra.mxu0 %v267
  %1002 = vmatpush.msra.mxu0 %v265
  %1003 = vmatpush.msra.mxu0 %v263
  %1004 = vmatpush.msra.mxu0 %v261
  %1005 = vmatpush.msra.mxu0 %v259
  %1006 = vmatpush.msra.mxu0 %v257
  %1007 = vmatpush.msra.mxu0 %v255
  %1008 = vmatpush.msra.mxu0 %v253
  %1009 = vmatpush.msra.mxu0 %v251
  %1010 = vmatpush.msra.mxu0 %v249
  %1011 = vmatpush.msra.mxu0 %v247
  %1012 = vmatmul.f32.gmra.mxu0 %v19
  %v1013 = vpop.f32.mrf.mxu0
  %v1014 = vadd.f32 %v973, %v1013
  %1015 = vmatmul.f32.gmra.mxu0 %v28
  %v1016 = vpop.f32.mrf.mxu0
  %v1017 = vadd.f32 %v976, %v1016
  %1018 = vmatmul.f32.gmra.mxu0 %v37
  %v1019 = vpop.f32.mrf.mxu0
  %v1020 = vadd.f32 %v979, %v1019
  %1021 = vmatmul.f32.gmra.mxu0 %v46
  %v1022 = vpop.f32.mrf.mxu0
  %v1023 = vadd.f32 %v982, %v1022
  %1024 = vmatmul.f32.gmra.mxu0 %v55
  %v1025 = vpop.f32.mrf.mxu0
  %v1026 = vadd.f32 %v985, %v1025
  %1027 = vmatmul.f32.gmra.mxu0 %v64
  %v1028 = vpop.f32.mrf.mxu0
  %v1029 = vadd.f32 %v988, %v1028
  %1030 = vmatmul.f32.gmra.mxu0 %v73
  %v1031 = vpop.f32.mrf.mxu0
  %v1032 = vadd.f32 %v991, %v1031
  %1033 = vmatmul.f32.gmra.mxu0 %v82
  %v1034 = vpop.f32.mrf.mxu0
  %v1035 = vadd.f32 %v994, %v1034
  %1036 = vdwg.mxu0
  %1037 = vmatpush.msra.mxu0 %v309
  %1038 = vmatpush.msra.mxu0 %v307
  %1039 = vmatpush.msra.mxu0 %v305
  %1040 = vmatpush.msra.mxu0 %v303
  %1041 = vmatpush.msra.mxu0 %v301
  %1042 = vmatpush.msra.mxu0 %v299
  %1043 = vmatpush.msra.mxu0 %v297
  %1044 = vmatpush.msra.mxu0 %v295
  %1045 = vmatpush.msra.mxu0 %v293
  %1046 = vmatpush.msra.mxu0 %v291
  %1047 = vmatpush.msra.mxu0 %v289
  %1048 = vmatpush.msra.mxu0 %v287
  %1049 = vmatpush.msra.mxu0 %v285
  %1050 = vmatpush.msra.mxu0 %v283
  %1051 = vmatpush.msra.mxu0 %v281
  %1052 = vmatpush.msra.mxu0 %v279
  %1053 = vmatmul.f32.gmra.mxu0 %v20
  %v1054 = vpop.f32.mrf.mxu0
  %v1055 = vadd.f32 %v1014, %v1054
  %1056 = vmatmul.f32.gmra.mxu0 %v29
  %v1057 = vpop.f32.mrf.mxu0
  %v1058 = vadd.f32 %v1017, %v1057
  %1059 = vmatmul.f32.gmra.mxu0 %v38
  %v1060 = vpop.f32.mrf.mxu0
  %v1061 = vadd.f32 %v1020, %v1060
  %1062 = vmatmul.f32.gmra.mxu0 %v47
  %v1063 = vpop.f32.mrf.mxu0
  %v1064 = vadd.f32 %v1023, %v1063
  %1065 = vmatmul.f32.gmra.mxu0 %v56
  %v1066 = vpop.f32.mrf.mxu0
  %v1067 = vadd.f32 %v1026, %v1066
  %1068 = vmatmul.f32.gmra.mxu0 %v65
  %v1069 = vpop.f32.mrf.mxu0
  %v1070 = vadd.f32 %v1029, %v1069
  %1071 = vmatmul.f32.gmra.mxu0 %v74
  %v1072 = vpop.f32.mrf.mxu0
  %v1073 = vadd.f32 %v1032, %v1072
  %1074 = vmatmul.f32.gmra.mxu0 %v83
  %v1075 = vpop.f32.mrf.mxu0
  %v1076 = vadd.f32 %v1035, %v1075
  %1077 = vdwg.mxu0
  %1078 = vmatpush.msra.mxu0 %v341
  %1079 = vmatpush.msra.mxu0 %v339
  %1080 = vmatpush.msra.mxu0 %v337
  %1081 = vmatpush.msra.mxu0 %v335
  %1082 = vmatpush.msra.mxu0 %v333
  %1083 = vmatpush.msra.mxu0 %v331
  %1084 = vmatpush.msra.mxu0 %v329
  %1085 = vmatpush.msra.mxu0 %v327
  %1086 = vmatpush.msra.mxu0 %v325
  %1087 = vmatpush.msra.mxu0 %v323
  %1088 = vmatpush.msra.mxu0 %v321
  %1089 = vmatpush.msra.mxu0 %v319
  %1090 = vmatpush.msra.mxu0 %v317
  %1091 = vmatpush.msra.mxu0 %v315
  %1092 = vmatpush.msra.mxu0 %v313
  %1093 = vmatpush.msra.mxu0 %v311
  %1094 = vmatmul.f32.gmra.mxu0 %v21
  %v1095 = vpop.f32.mrf.mxu0
  %v1096 = vadd.f32 %v1055, %v1095
  %1097 = vmatmul.f32.gmra.mxu0 %v30
  %v1098 = vpop.f32.mrf.mxu0
  %v1099 = vadd.f32 %v1058, %v1098
  %1100 = vmatmul.f32.gmra.mxu0 %v39
  %v1101 = vpop.f32.mrf.mxu0
  %v1102 = vadd.f32 %v1061, %v1101
  %1103 = vmatmul.f32.gmra.mxu0 %v48
  %v1104 = vpop.f32.mrf.mxu0
  %v1105 = vadd.f32 %v1064, %v1104
  %1106 = vmatmul.f32.gmra.mxu0 %v57
  %v1107 = vpop.f32.mrf.mxu0
  %v1108 = vadd.f32 %v1067, %v1107
  %1109 = vmatmul.f32.gmra.mxu0 %v66
  %v1110 = vpop.f32.mrf.mxu0
  %v1111 = vadd.f32 %v1070, %v1110
  %1112 = vmatmul.f32.gmra.mxu0 %v75
  %v1113 = vpop.f32.mrf.mxu0
  %v1114 = vadd.f32 %v1073, %v1113
  %1115 = vmatmul.f32.gmra.mxu0 %v84
  %v1116 = vpop.f32.mrf.mxu0
  %v1117 = vadd.f32 %v1076, %v1116
  %1118 = vdwg.mxu0
  %1119 = vmatpush.msra.mxu0 %v373
  %1120 = vmatpush.msra.mxu0 %v371
  %1121 = vmatpush.msra.mxu0 %v369
  %1122 = vmatpush.msra.mxu0 %v367
  %1123 = vmatpush.msra.mxu0 %v365
  %1124 = vmatpush.msra.mxu0 %v363
  %1125 = vmatpush.msra.mxu0 %v361
  %1126 = vmatpush.msra.mxu0 %v359
  %1127 = vmatpush.msra.mxu0 %v357
  %1128 = vmatpush.msra.mxu0 %v355
  %1129 = vmatpush.msra.mxu0 %v353
  %1130 = vmatpush.msra.mxu0 %v351
  %1131 = vmatpush.msra.mxu0 %v349
  %1132 = vmatpush.msra.mxu0 %v347
  %1133 = vmatpush.msra.mxu0 %v345
  %1134 = vmatpush.msra.mxu0 %v343
  %1135 = vmatmul.f32.gmra.mxu0 %v22
  %v1136 = vpop.f32.mrf.mxu0
  %v1137 = vadd.f32 %v1096, %v1136
  %1138 = vmatmul.f32.gmra.mxu0 %v31
  %v1139 = vpop.f32.mrf.mxu0
  %v1140 = vadd.f32 %v1099, %v1139
  %1141 = vmatmul.f32.gmra.mxu0 %v40
  %v1142 = vpop.f32.mrf.mxu0
  %v1143 = vadd.f32 %v1102, %v1142
  %1144 = vmatmul.f32.gmra.mxu0 %v49
  %v1145 = vpop.f32.mrf.mxu0
  %v1146 = vadd.f32 %v1105, %v1145
  %1147 = vmatmul.f32.gmra.mxu0 %v58
  %v1148 = vpop.f32.mrf.mxu0
  %v1149 = vadd.f32 %v1108, %v1148
  %1150 = vmatmul.f32.gmra.mxu0 %v67
  %v1151 = vpop.f32.mrf.mxu0
  %v1152 = vadd.f32 %v1111, %v1151
  %1153 = vmatmul.f32.gmra.mxu0 %v76
  %v1154 = vpop.f32.mrf.mxu0
  %v1155 = vadd.f32 %v1114, %v1154
  %1156 = vmatmul.f32.gmra.mxu0 %v85
  %v1157 = vpop.f32.mrf.mxu0
  %v1158 = vadd.f32 %v1117, %v1157
  %1159 = vdwg.mxu0
  %vm1160 = vcmp.ge.f32.partialorder %v768, 0.0
  %vm1161 = vcmp.ge.f32.partialorder %v1137, 0.0
  %vm1162 = vcmp.ge.f32.partialorder %v771, 0.0
  %vm1163 = vcmp.ge.f32.partialorder %v1140, 0.0
  %vm1164 = vcmp.ge.f32.partialorder %v774, 0.0
  %vm1165 = vcmp.ge.f32.partialorder %v1143, 0.0
  %vm1166 = vcmp.ge.f32.partialorder %v777, 0.0
  %vm1167 = vcmp.ge.f32.partialorder %v1146, 0.0
  %vm1168 = vcmp.ge.f32.partialorder %v780, 0.0
  %vm1169 = vcmp.ge.f32.partialorder %v1149, 0.0
  %vm1170 = vcmp.ge.f32.partialorder %v783, 0.0
  %vm1171 = vcmp.ge.f32.partialorder %v1152, 0.0
  %vm1172 = vcmp.ge.f32.partialorder %v786, 0.0
  %vm1173 = vcmp.ge.f32.partialorder %v1155, 0.0
  %vm1174 = vcmp.ge.f32.partialorder %v789, 0.0
  %vm1175 = vcmp.ge.f32.partialorder %v1158, 0.0
  %v1176 = vmul.f32 %v768, 0.2
  %v1177 = vmul.f32 %v1137, 0.2
  %v1178 = vmul.f32 %v771, 0.2
  %v1179 = vmul.f32 %v1140, 0.2
  %v1180 = vmul.f32 %v774, 0.2
  %v1181 = vmul.f32 %v1143, 0.2
  %v1182 = vmul.f32 %v777, 0.2
  %v1183 = vmul.f32 %v1146, 0.2
  %v1184 = vmul.f32 %v780, 0.2
  %v1185 = vmul.f32 %v1149, 0.2
  %v1186 = vmul.f32 %v783, 0.2
  %v1187 = vmul.f32 %v1152, 0.2
  %v1188 = vmul.f32 %v786, 0.2
  %v1189 = vmul.f32 %v1155, 0.2
  %v1190 = vmul.f32 %v789, 0.2
  %v1191 = vmul.f32 %v1158, 0.2
  %v1192 = vsel %vm1160, %v768, %v1176
  %v1193 = vsel %vm1161, %v1137, %v1177
  %v1194 = vsel %vm1162, %v771, %v1178
  %v1195 = vsel %vm1163, %v1140, %v1179
  %v1196 = vsel %vm1164, %v774, %v1180
  %v1197 = vsel %vm1165, %v1143, %v1181
  %v1198 = vsel %vm1166, %v777, %v1182
  %v1199 = vsel %vm1167, %v1146, %v1183
  %v1200 = vsel %vm1168, %v780, %v1184
  %v1201 = vsel %vm1169, %v1149, %v1185
  %v1202 = vsel %vm1170, %v783, %v1186
  %v1203 = vsel %vm1171, %v1152, %v1187
  %v1204 = vsel %vm1172, %v786, %v1188
  %v1205 = vsel %vm1173, %v1155, %v1189
  %v1206 = vsel %vm1174, %v789, %v1190
  %v1207 = vsel %vm1175, %v1158, %v1191
  %v1208 = vmul.f32 %v1192, %v1192
  %v1209 = vmul.f32 %v1193, %v1193
  %v1210 = vmul.f32 %v1194, %v1194
  %v1211 = vmul.f32 %v1195, %v1195
  %v1212 = vmul.f32 %v1196, %v1196
  %v1213 = vmul.f32 %v1197, %v1197
  %v1214 = vmul.f32 %v1198, %v1198
  %v1215 = vmul.f32 %v1199, %v1199
  %v1216 = vmul.f32 %v1200, %v1200
  %v1217 = vmul.f32 %v1201, %v1201
  %v1218 = vmul.f32 %v1202, %v1202
  %v1219 = vmul.f32 %v1203, %v1203
  %v1220 = vmul.f32 %v1204, %v1204
  %v1221 = vmul.f32 %v1205, %v1205
  %v1222 = vmul.f32 %v1206, %v1206
  %v1223 = vmul.f32 %v1207, %v1207
  %v1224 = vadd.f32 %v1208, %v1210
  %v1225 = vadd.f32 %v1224, %v1212
  %v1226 = vadd.f32 %v1225, %v1214
  %v1227 = vadd.f32 %v1226, %v1216
  %v1228 = vadd.f32 %v1227, %v1218
  %v1229 = vadd.f32 %v1228, %v1220
  %v1230 = vadd.f32 %v1229, %v1222
  %v1231 = vrot.slane %v1230, 4
  %v1232 = vadd.f32 %v1230, %v1231
  %v1233 = vrot.slane %v1232, 2
  %v1234 = vadd.f32 %v1232, %v1233
  %v1235 = vrot.slane %v1234, 1
  %v1236 = vadd.f32 %v1234, %v1235
  %vm1237 = vcmask 785408
  %v1238 = vsel %vm1237, %v1209, 0.0
  %v1239 = vsel %vm1237, %v1211, 0.0
  %v1240 = vadd.f32 %v1238, %v1239
  %v1241 = vsel %vm1237, %v1213, 0.0
  %v1242 = vadd.f32 %v1240, %v1241
  %v1243 = vsel %vm1237, %v1215, 0.0
  %v1244 = vadd.f32 %v1242, %v1243
  %v1245 = vsel %vm1237, %v1217, 0.0
  %v1246 = vadd.f32 %v1244, %v1245
  %v1247 = vsel %vm1237, %v1219, 0.0
  %v1248 = vadd.f32 %v1246, %v1247
  %v1249 = vsel %vm1237, %v1221, 0.0
  %v1250 = vadd.f32 %v1248, %v1249
  %v1251 = vsel %vm1237, %v1223, 0.0
  %v1252 = vadd.f32 %v1250, %v1251
  %v1253 = vrot.slane %v1252, 4
  %v1254 = vadd.f32 %v1252, %v1253
  %v1255 = vrot.slane %v1254, 2
  %v1256 = vadd.f32 %v1254, %v1255
  %v1257 = vrot.slane %v1256, 1
  %v1258 = vadd.f32 %v1256, %v1257
  %v1259 = vmul.f32 %v1236, 0.015625
  %v1260 = vmul.f32 %v1258, 0.015625
  %v1261 = vadd.f32 %v1259, 1e-08
  %v1262 = vadd.f32 %v1260, 1e-08
  %v1263 = vrsqrt.pop %v1261
  %v1264 = vmul.f32 %v1263, %v1261
  %v1265 = vmul.f32 %v1264, %v1263
  %v1266 = vmul.f32 0.5, %v1265
  %v1267 = vsub.f32 1.5, %v1266
  %v1268 = vmul.f32 %v1263, %v1267
  %vm1269 = vweird.f32 %v1261
  %vm1270 = vweird.f32 %v1263
  %vm1271 = vmor %vm1269, %vm1270
  %v1272 = vsel %vm1271, %v1263, %v1268
  %v1273 = vrsqrt.pop %v1262
  %v1274 = vmul.f32 %v1273, %v1262
  %v1275 = vmul.f32 %v1274, %v1273
  %v1276 = vmul.f32 0.5, %v1275
  %v1277 = vsub.f32 1.5, %v1276
  %v1278 = vmul.f32 %v1273, %v1277
  %vm1279 = vweird.f32 %v1262
  %vm1280 = vweird.f32 %v1273
  %vm1281 = vmor %vm1279, %vm1280
  %v1282 = vsel %vm1281, %v1273, %v1278
  %v1283 = vmul.f32 %v1192, %v1272
  %v1284 = vmul.f32 %v1193, %v1282
  %v1285 = vmul.f32 %v1194, %v1272
  %v1286 = vmul.f32 %v1195, %v1282
  %v1287 = vmul.f32 %v1196, %v1272
  %v1288 = vmul.f32 %v1197, %v1282
  %v1289 = vmul.f32 %v1198, %v1272
  %v1290 = vmul.f32 %v1199, %v1282
  %v1291 = vmul.f32 %v1200, %v1272
  %v1292 = vmul.f32 %v1201, %v1282
  %v1293 = vmul.f32 %v1202, %v1272
  %v1294 = vmul.f32 %v1203, %v1282
  %v1295 = vmul.f32 %v1204, %v1272
  %v1296 = vmul.f32 %v1205, %v1282
  %v1297 = vmul.f32 %v1206, %v1272
  %v1298 = vmul.f32 %v1207, %v1282
  %1299 = vst [vmem:[%s3] sm:$0xff] %v1283
  %1300 = vst.msk [vmem:[%s3 + $0x8] sm:$0xff] %vm1237, %v1284
  %1301 = vst [vmem:[%s3 + $0x10] sm:$0xff] %v1285
  %1302 = vst.msk [vmem:[%s3 + $0x18] sm:$0xff] %vm1237, %v1286
  %1303 = vst [vmem:[%s3 + $0x20] sm:$0xff] %v1287
  %1304 = vst.msk [vmem:[%s3 + $0x28] sm:$0xff] %vm1237, %v1288
  %1305 = vst [vmem:[%s3 + $0x30] sm:$0xff] %v1289
  %1306 = vst.msk [vmem:[%s3 + $0x38] sm:$0xff] %vm1237, %v1290
  %1307 = vst [vmem:[%s3 + $0x40] sm:$0xff] %v1291
  %1308 = vst.msk [vmem:[%s3 + $0x48] sm:$0xff] %vm1237, %v1292
  %1309 = vst [vmem:[%s3 + $0x50] sm:$0xff] %v1293
  %1310 = vst.msk [vmem:[%s3 + $0x58] sm:$0xff] %vm1237, %v1294
  %1311 = vst [vmem:[%s3 + $0x60] sm:$0xff] %v1295
  %1312 = vst.msk [vmem:[%s3 + $0x68] sm:$0xff] %vm1237, %v1296
  %1313 = vst [vmem:[%s3 + $0x70] sm:$0xff] %v1297
  %1314 = vst.msk [vmem:[%s3 + $0x78] sm:$0xff] %vm1237, %v1298
  // Predicated region
  $region14: #{unet_block_forward.13} parent=0 // pred_check
    _
  $region15: #{unet_block_forward.13} parent=0 // pred_check_branch
    %1316 = sbr.rel (0) target = $region17
  $region16: #{unet_block_forward.13} parent=0 // pred_region
    _
  $region17: #{unet_block_forward.13} parent=0 // pred_fallthru
    _
  // Predicated region
  $region18: #{unet_block_forward.13} parent=0 // pred_check
    _
  $region19: #{unet_block_forward.13} parent=0 // pred_check_branch
    %1318 = sbr.rel (0) target = $region21
  $region20: #{unet_block_forward.13} parent=0 // pred_region
    _
  $region21: #{unet_block_forward.13} parent=0 // pred_fallthru
    _

// kernel: unet_block_forward.14
$region0: #{unet_block_forward.14}
  #allocation0 [shape = 'u32[]', space=smem, size = 0x4, offset = 0x4, fixed_abs, tag = 'smem constant byte address 0x4 - core index']
  #allocation1 [shape = 'u32[72,128]{1,0:T(1,128)}', space=vmem, size = 0x9000, scoped, tag = 'internal scratch']
  %s0 = inlined_call_operand.vmem [shape: f32[1152,896], index: 0, kind: input, shape index: {}]
  %s1 = inlined_call_operand.vmem [shape: f32[32,1152], index: 1, kind: input, shape index: {}]
  %s2 = inlined_call_operand.vmem [shape: f32[32,1], index: 2, kind: input, shape index: {}]
  %s3 = inlined_call_operand.vmem [shape: f32[32,896], index: 3, kind: output, shape index: {}]
  %s4 = sld [smem:[#allocation0]]
  $region22: #{unet_block_forward.14} parent=0
    _
  %s6 = ssub.s32 1, %s4
  %s7 = scalar_select 0, %s6, %s4
  // Predicated region
  $region2: #{unet_block_forward.14} parent=0 // pred_check
    _
  $region3: #{unet_block_forward.14} parent=0 // pred_check_branch
    %9 = sbr.rel (0) target = $region5
  $region4: #{unet_block_forward.14} parent=0 // pred_region
    _
  $region5: #{unet_block_forward.14} parent=0 // pred_fallthru
    _
  // Predicated region
  $region6: #{unet_block_forward.14} parent=0 // pred_check
    _
  $region7: #{unet_block_forward.14} parent=0 // pred_check_branch
    %11 = sbr.rel (0) target = $region9
  $region8: #{unet_block_forward.14} parent=0 // pred_region
    _
  $region9: #{unet_block_forward.14} parent=0 // pred_fallthru
    _
  // Predicated region
  $region10: #{unet_block_forward.14} parent=0 // pred_check
    _
  $region11: #{unet_block_forward.14} parent=0 // pred_check_branch
    %13 = sbr.rel (0) target = $region13
  $region12: #{unet_block_forward.14} parent=0 // pred_region
    _
  $region13: #{unet_block_forward.14} parent=0 // pred_fallthru
    _
  %v14 = vld [vmem:[%s1] sm:$0xff]
  %v15 = vld [vmem:[%s1 + $0x8] sm:$0xff]
  %v16 = vld [vmem:[%s1 + $0x10] sm:$0xff]
  %v17 = vld [vmem:[%s1 + $0x18] sm:$0xff]
  %v18 = vld [vmem:[%s1 + $0x20] sm:$0xff]
  %v19 = vld [vmem:[%s1 + $0x28] sm:$0xff]
  %v20 = vld [vmem:[%s1 + $0x30] sm:$0xff]
  %v21 = vld [vmem:[%s1 + $0x38] sm:$0xff]
  %v22 = vld [vmem:[%s1 + $0x40] sm:$0xff]
  %v23 = vld [vmem:[%s1 + $0x48] sm:$0xff]
  %v24 = vld [vmem:[%s1 + $0x50] sm:$0xff]
  %v25 = vld [vmem:[%s1 + $0x58] sm:$0xff]
  %v26 = vld [vmem:[%s1 + $0x60] sm:$0xff]
  %v27 = vld [vmem:[%s1 + $0x68] sm:$0xff]
  %v28 = vld [vmem:[%s1 + $0x70] sm:$0xff]
  %v29 = vld [vmem:[%s1 + $0x78] sm:$0xff]
  %v30 = vld [vmem:[%s1 + $0x80] sm:$0xff]
  %v31 = vld [vmem:[%s1 + $0x88] sm:$0xff]
  %v32 = vld [vmem:[%s1 + $0x90] sm:$0xff]
  %v33 = vld [vmem:[%s1 + $0x98] sm:$0xff]
  %v34 = vld [vmem:[%s1 + $0xa0] sm:$0xff]
  %v35 = vld [vmem:[%s1 + $0xa8] sm:$0xff]
  %v36 = vld [vmem:[%s1 + $0xb0] sm:$0xff]
  %v37 = vld [vmem:[%s1 + $0xb8] sm:$0xff]
  %v38 = vld [vmem:[%s1 + $0xc0] sm:$0xff]
  %v39 = vld [vmem:[%s1 + $0xc8] sm:$0xff]
  %v40 = vld [vmem:[%s1 + $0xd0] sm:$0xff]
  %v41 = vld [vmem:[%s1 + $0xd8] sm:$0xff]
  %v42 = vld [vmem:[%s1 + $0xe0] sm:$0xff]
  %v43 = vld [vmem:[%s1 + $0xe8] sm:$0xff]
  %v44 = vld [vmem:[%s1 + $0xf0] sm:$0xff]
  %v45 = vld [vmem:[%s1 + $0xf8] sm:$0xff]
  %v46 = vld [vmem:[%s1 + $0x100] sm:$0xff]
  %v47 = vld [vmem:[%s1 + $0x108] sm:$0xff]
  %v48 = vld [vmem:[%s1 + $0x110] sm:$0xff]
  %v49 = vld [vmem:[%s1 + $0x118] sm:$0xff]
  %v50 = vld [vmem:[%s0] sm:$0xff]
  %v51 = vld [vmem:[%s0 + $0x8] sm:$0xff]
  %v52 = vld [vmem:[%s0 + $0x10] sm:$0xff]
  %v53 = vld [vmem:[%s0 + $0x18] sm:$0xff]
  %v54 = vld [vmem:[%s0 + $0x20] sm:$0xff]
  %v55 = vld [vmem:[%s0 + $0x28] sm:$0xff]
  %v56 = vld [vmem:[%s0 + $0x30] sm:$0xff]
  %v57 = vld [vmem:[%s0 + $0x38] sm:$0xff]
  %v58 = vld [vmem:[%s0 + $0x40] sm:$0xff]
  %v59 = vld [vmem:[%s0 + $0x48] sm:$0xff]
  %v60 = vld [vmem:[%s0 + $0x50] sm:$0xff]
  %v61 = vld [vmem:[%s0 + $0x58] sm:$0xff]
  %v62 = vld [vmem:[%s0 + $0x60] sm:$0xff]
  %v63 = vld [vmem:[%s0 + $0x68] sm:$0xff]
  %v64 = vld [vmem:[%s0 + $0x70] sm:$0xff]
  %v65 = vld [vmem:[%s0 + $0x78] sm:$0xff]
  %v66 = vld [vmem:[%s0 + $0x80] sm:$0xff]
  %v67 = vld [vmem:[%s0 + $0x88] sm:$0xff]
  %v68 = vld [vmem:[%s0 + $0x90] sm:$0xff]
  %v69 = vld [vmem:[%s0 + $0x98] sm:$0xff]
  %v70 = vld [vmem:[%s0 + $0xa0] sm:$0xff]
  %v71 = vld [vmem:[%s0 + $0xa8] sm:$0xff]
  %v72 = vld [vmem:[%s0 + $0xb0] sm:$0xff]
  %v73 = vld [vmem:[%s0 + $0xb8] sm:$0xff]
  %v74 = vld [vmem:[%s0 + $0xc0] sm:$0xff]
  %v75 = vld [vmem:[%s0 + $0xc8] sm:$0xff]
  %v76 = vld [vmem:[%s0 + $0xd0] sm:$0xff]
  %v77 = vld [vmem:[%s0 + $0xd8] sm:$0xff]
  %v78 = vld [vmem:[%s0 + $0xe0] sm:$0xff]
  %v79 = vld [vmem:[%s0 + $0xe8] sm:$0xff]
  %v80 = vld [vmem:[%s0 + $0xf0] sm:$0xff]
  %v81 = vld [vmem:[%s0 + $0xf8] sm:$0xff]
  %v82 = vld [vmem:[%s0 + $0x100] sm:$0xff]
  %v83 = vld [vmem:[%s0 + $0x108] sm:$0xff]
  %v84 = vld [vmem:[%s0 + $0x110] sm:$0xff]
  %v85 = vld [vmem:[%s0 + $0x118] sm:$0xff]
  %v86 = vld [vmem:[%s0 + $0x120] sm:$0xff]
  %v87 = vld [vmem:[%s0 + $0x128] sm:$0xff]
  %v88 = vld [vmem:[%s0 + $0x130] sm:$0xff]
  %v89 = vld [vmem:[%s0 + $0x138] sm:$0xff]
  %v90 = vld [vmem:[%s0 + $0x140] sm:$0xff]
  %v91 = vld [vmem:[%s0 + $0x148] sm:$0xff]
  %v92 = vld [vmem:[%s0 + $0x150] sm:$0xff]
  %v93 = vld [vmem:[%s0 + $0x158] sm:$0xff]
  %v94 = vld [vmem:[%s0 + $0x160] sm:$0xff]
  %v95 = vld [vmem:[%s0 + $0x168] sm:$0xff]
  %v96 = vld [vmem:[%s0 + $0x170] sm:$0xff]
  %v97 = vld [vmem:[%s0 + $0x178] sm:$0xff]
  %v98 = vld [vmem:[%s0 + $0x180] sm:$0xff]
  %v99 = vld [vmem:[%s0 + $0x188] sm:$0xff]
  %v100 = vld [vmem:[%s0 + $0x190] sm:$0xff]
  %v101 = vld [vmem:[%s0 + $0x198] sm:$0xff]
  %v102 = vld [vmem:[%s0 + $0x1a0] sm:$0xff]
  %v103 = vld [vmem:[%s0 + $0x1a8] sm:$0xff]
  %v104 = vld [vmem:[%s0 + $0x1b0] sm:$0xff]
  %v105 = vld [vmem:[%s0 + $0x1b8] sm:$0xff]
  %v106 = vld [vmem:[%s0 + $0x1c0] sm:$0xff]
  %v107 = vld [vmem:[%s0 + $0x1c8] sm:$0xff]
  %v108 = vld [vmem:[%s0 + $0x1d0] sm:$0xff]
  %v109 = vld [vmem:[%s0 + $0x1d8] sm:$0xff]
  %v110 = vld [vmem:[%s0 + $0x1e0] sm:$0xff]
  %v111 = vld [vmem:[%s0 + $0x1e8] sm:$0xff]
  %v112 = vld [vmem:[%s0 + $0x1f0] sm:$0xff]
  %v113 = vld [vmem:[%s0 + $0x1f8] sm:$0xff]
  %v114 = vld [vmem:[%s0 + $0x200] sm:$0xff]
  %v115 = vld [vmem:[%s0 + $0x208] sm:$0xff]
  %v116 = vld [vmem:[%s0 + $0x210] sm:$0xff]
  %v117 = vld [vmem:[%s0 + $0x218] sm:$0xff]
  %v118 = vld [vmem:[%s0 + $0x220] sm:$0xff]
  %v119 = vld [vmem:[%s0 + $0x228] sm:$0xff]
  %v120 = vld [vmem:[%s0 + $0x230] sm:$0xff]
  %v121 = vld [vmem:[%s0 + $0x238] sm:$0xff]
  %v122 = vld [vmem:[%s0 + $0x240] sm:$0xff]
  %v123 = vld [vmem:[%s0 + $0x248] sm:$0xff]
  %v124 = vld [vmem:[%s0 + $0x250] sm:$0xff]
  %v125 = vld [vmem:[%s0 + $0x258] sm:$0xff]
  %v126 = vld [vmem:[%s0 + $0x260] sm:$0xff]
  %v127 = vld [vmem:[%s0 + $0x268] sm:$0xff]
  %v128 = vld [vmem:[%s0 + $0x270] sm:$0xff]
  %v129 = vld [vmem:[%s0 + $0x278] sm:$0xff]
  %v130 = vld [vmem:[%s0 + $0x280] sm:$0xff]
  %v131 = vld [vmem:[%s0 + $0x288] sm:$0xff]
  %v132 = vld [vmem:[%s0 + $0x290] sm:$0xff]
  %v133 = vld [vmem:[%s0 + $0x298] sm:$0xff]
  %v134 = vld [vmem:[%s0 + $0x2a0] sm:$0xff]
  %v135 = vld [vmem:[%s0 + $0x2a8] sm:$0xff]
  %v136 = vld [vmem:[%s0 + $0x2b0] sm:$0xff]
  %v137 = vld [vmem:[%s0 + $0x2b8] sm:$0xff]
  %v138 = vld [vmem:[%s0 + $0x2c0] sm:$0xff]
  %v139 = vld [vmem:[%s0 + $0x2c8] sm:$0xff]
  %v140 = vld [vmem:[%s0 + $0x2d0] sm:$0xff]
  %v141 = vld [vmem:[%s0 + $0x2d8] sm:$0xff]
  %v142 = vld [vmem:[%s0 + $0x2e0] sm:$0xff]
  %v143 = vld [vmem:[%s0 + $0x2e8] sm:$0xff]
  %v144 = vld [vmem:[%s0 + $0x2f0] sm:$0xff]
  %v145 = vld [vmem:[%s0 + $0x2f8] sm:$0xff]
  %v146 = vld [vmem:[%s0 + $0x300] sm:$0xff]
  %v147 = vld [vmem:[%s0 + $0x308] sm:$0xff]
  %v148 = vld [vmem:[%s0 + $0x310] sm:$0xff]
  %v149 = vld [vmem:[%s0 + $0x318] sm:$0xff]
  %v150 = vld [vmem:[%s0 + $0x320] sm:$0xff]
  %v151 = vld [vmem:[%s0 + $0x328] sm:$0xff]
  %v152 = vld [vmem:[%s0 + $0x330] sm:$0xff]
  %v153 = vld [vmem:[%s0 + $0x338] sm:$0xff]
  %v154 = vld [vmem:[%s0 + $0x340] sm:$0xff]
  %v155 = vld [vmem:[%s0 + $0x348] sm:$0xff]
  %v156 = vld [vmem:[%s0 + $0x350] sm:$0xff]
  %v157 = vld [vmem:[%s0 + $0x358] sm:$0xff]
  %v158 = vld [vmem:[%s0 + $0x360] sm:$0xff]
  %v159 = vld [vmem:[%s0 + $0x368] sm:$0xff]
  %v160 = vld [vmem:[%s0 + $0x370] sm:$0xff]
  %v161 = vld [vmem:[%s0 + $0x378] sm:$0xff]
  %v162 = vld [vmem:[%s0 + $0x380] sm:$0xff]
  %v163 = vld [vmem:[%s0 + $0x388] sm:$0xff]
  %v164 = vld [vmem:[%s0 + $0x390] sm:$0xff]
  %v165 = vld [vmem:[%s0 + $0x398] sm:$0xff]
  %v166 = vld [vmem:[%s0 + $0x3a0] sm:$0xff]
  %v167 = vld [vmem:[%s0 + $0x3a8] sm:$0xff]
  %v168 = vld [vmem:[%s0 + $0x3b0] sm:$0xff]
  %v169 = vld [vmem:[%s0 + $0x3b8] sm:$0xff]
  %v170 = vld [vmem:[%s0 + $0x3c0] sm:$0xff]
  %v171 = vld [vmem:[%s0 + $0x3c8] sm:$0xff]
  %v172 = vld [vmem:[%s0 + $0x3d0] sm:$0xff]
  %v173 = vld [vmem:[%s0 + $0x3d8] sm:$0xff]
  %v174 = vld [vmem:[%s0 + $0x3e0] sm:$0xff]
  %v175 = vld [vmem:[%s0 + $0x3e8] sm:$0xff]
  %v176 = vld [vmem:[%s0 + $0x3f0] sm:$0xff]
  %v177 = vld [vmem:[%s0 + $0x3f8] sm:$0xff]
  %v178 = vld [vmem:[%s0 + $0x400] sm:$0xff]
  %v179 = vld [vmem:[%s0 + $0x408] sm:$0xff]
  %v180 = vld [vmem:[%s0 + $0x410] sm:$0xff]
  %v181 = vld [vmem:[%s0 + $0x418] sm:$0xff]
  %v182 = vld [vmem:[%s0 + $0x420] sm:$0xff]
  %v183 = vld [vmem:[%s0 + $0x428] sm:$0xff]
  %v184 = vld [vmem:[%s0 + $0x430] sm:$0xff]
  %v185 = vld [vmem:[%s0 + $0x438] sm:$0xff]
  %v186 = vld [vmem:[%s0 + $0x440] sm:$0xff]
  %v187 = vld [vmem:[%s0 + $0x448] sm:$0xff]
  %v188 = vld [vmem:[%s0 + $0x450] sm:$0xff]
  %v189 = vld [vmem:[%s0 + $0x458] sm:$0xff]
  %v190 = vld [vmem:[%s0 + $0x460] sm:$0xff]
  %v191 = vld [vmem:[%s0 + $0x468] sm:$0xff]
  %v192 = vld [vmem:[%s0 + $0x470] sm:$0xff]
  %v193 = vld [vmem:[%s0 + $0x478] sm:$0xff]
  %v194 = vld [vmem:[%s0 + $0x480] sm:$0xff]
  %v195 = vld [vmem:[%s0 + $0x488] sm:$0xff]
  %v196 = vld [vmem:[%s0 + $0x490] sm:$0xff]
  %v197 = vld [vmem:[%s0 + $0x498] sm:$0xff]
  %v198 = vld [vmem:[%s0 + $0x4a0] sm:$0xff]
  %v199 = vld [vmem:[%s0 + $0x4a8] sm:$0xff]
  %v200 = vld [vmem:[%s0 + $0x4b0] sm:$0xff]
  %v201 = vld [vmem:[%s0 + $0x4b8] sm:$0xff]
  %v202 = vld [vmem:[%s0 + $0x4c0] sm:$0xff]
  %v203 = vld [vmem:[%s0 + $0x4c8] sm:$0xff]
  %v204 = vld [vmem:[%s0 + $0x4d0] sm:$0xff]
  %v205 = vld [vmem:[%s0 + $0x4d8] sm:$0xff]
  %v206 = vld [vmem:[%s0 + $0x4e0] sm:$0xff]
  %v207 = vld [vmem:[%s0 + $0x4e8] sm:$0xff]
  %v208 = vld [vmem:[%s0 + $0x4f0] sm:$0xff]
  %v209 = vld [vmem:[%s0 + $0x4f8] sm:$0xff]
  %v210 = vld [vmem:[%s0 + $0x500] sm:$0xff]
  %v211 = vld [vmem:[%s0 + $0x508] sm:$0xff]
  %v212 = vld [vmem:[%s0 + $0x510] sm:$0xff]
  %v213 = vld [vmem:[%s0 + $0x518] sm:$0xff]
  %v214 = vld [vmem:[%s0 + $0x520] sm:$0xff]
  %v215 = vld [vmem:[%s0 + $0x528] sm:$0xff]
  %v216 = vld [vmem:[%s0 + $0x530] sm:$0xff]
  %v217 = vld [vmem:[%s0 + $0x538] sm:$0xff]
  %v218 = vld [vmem:[%s0 + $0x540] sm:$0xff]
  %v219 = vld [vmem:[%s0 + $0x548] sm:$0xff]
  %v220 = vld [vmem:[%s0 + $0x550] sm:$0xff]
  %v221 = vld [vmem:[%s0 + $0x558] sm:$0xff]
  %v222 = vld [vmem:[%s0 + $0x560] sm:$0xff]
  %v223 = vld [vmem:[%s0 + $0x568] sm:$0xff]
  %v224 = vld [vmem:[%s0 + $0x570] sm:$0xff]
  %v225 = vld [vmem:[%s0 + $0x578] sm:$0xff]
  %v226 = vld [vmem:[%s0 + $0x580] sm:$0xff]
  %v227 = vld [vmem:[%s0 + $0x588] sm:$0xff]
  %v228 = vld [vmem:[%s0 + $0x590] sm:$0xff]
  %v229 = vld [vmem:[%s0 + $0x598] sm:$0xff]
  %v230 = vld [vmem:[%s0 + $0x5a0] sm:$0xff]
  %v231 = vld [vmem:[%s0 + $0x5a8] sm:$0xff]
  %v232 = vld [vmem:[%s0 + $0x5b0] sm:$0xff]
  %v233 = vld [vmem:[%s0 + $0x5b8] sm:$0xff]
  %v234 = vld [vmem:[%s0 + $0x5c0] sm:$0xff]
  %v235 = vld [vmem:[%s0 + $0x5c8] sm:$0xff]
  %v236 = vld [vmem:[%s0 + $0x5d0] sm:$0xff]
  %v237 = vld [vmem:[%s0 + $0x5d8] sm:$0xff]
  %v238 = vld [vmem:[%s0 + $0x5e0] sm:$0xff]
  %v239 = vld [vmem:[%s0 + $0x5e8] sm:$0xff]
  %v240 = vld [vmem:[%s0 + $0x5f0] sm:$0xff]
  %v241 = vld [vmem:[%s0 + $0x5f8] sm:$0xff]
  %v242 = vld [vmem:[%s0 + $0x600] sm:$0xff]
  %v243 = vld [vmem:[%s0 + $0x608] sm:$0xff]
  %v244 = vld [vmem:[%s0 + $0x610] sm:$0xff]
  %v245 = vld [vmem:[%s0 + $0x618] sm:$0xff]
  %v246 = vld [vmem:[%s0 + $0x620] sm:$0xff]
  %v247 = vld [vmem:[%s0 + $0x628] sm:$0xff]
  %v248 = vld [vmem:[%s0 + $0x630] sm:$0xff]
  %v249 = vld [vmem:[%s0 + $0x638] sm:$0xff]
  %v250 = vld [vmem:[%s0 + $0x640] sm:$0xff]
  %v251 = vld [vmem:[%s0 + $0x648] sm:$0xff]
  %v252 = vld [vmem:[%s0 + $0x650] sm:$0xff]
  %v253 = vld [vmem:[%s0 + $0x658] sm:$0xff]
  %v254 = vld [vmem:[%s0 + $0x660] sm:$0xff]
  %v255 = vld [vmem:[%s0 + $0x668] sm:$0xff]
  %v256 = vld [vmem:[%s0 + $0x670] sm:$0xff]
  %v257 = vld [vmem:[%s0 + $0x678] sm:$0xff]
  %v258 = vld [vmem:[%s0 + $0x680] sm:$0xff]
  %v259 = vld [vmem:[%s0 + $0x688] sm:$0xff]
  %v260 = vld [vmem:[%s0 + $0x690] sm:$0xff]
  %v261 = vld [vmem:[%s0 + $0x698] sm:$0xff]
  %v262 = vld [vmem:[%s0 + $0x6a0] sm:$0xff]
  %v263 = vld [vmem:[%s0 + $0x6a8] sm:$0xff]
  %v264 = vld [vmem:[%s0 + $0x6b0] sm:$0xff]
  %v265 = vld [vmem:[%s0 + $0x6b8] sm:$0xff]
  %v266 = vld [vmem:[%s0 + $0x6c0] sm:$0xff]
  %v267 = vld [vmem:[%s0 + $0x6c8] sm:$0xff]
  %v268 = vld [vmem:[%s0 + $0x6d0] sm:$0xff]
  %v269 = vld [vmem:[%s0 + $0x6d8] sm:$0xff]
  %v270 = vld [vmem:[%s0 + $0x6e0] sm:$0xff]
  %v271 = vld [vmem:[%s0 + $0x6e8] sm:$0xff]
  %v272 = vld [vmem:[%s0 + $0x6f0] sm:$0xff]
  %v273 = vld [vmem:[%s0 + $0x6f8] sm:$0xff]
  %v274 = vld [vmem:[%s0 + $0x700] sm:$0xff]
  %v275 = vld [vmem:[%s0 + $0x708] sm:$0xff]
  %v276 = vld [vmem:[%s0 + $0x710] sm:$0xff]
  %v277 = vld [vmem:[%s0 + $0x718] sm:$0xff]
  %v278 = vld [vmem:[%s0 + $0x720] sm:$0xff]
  %v279 = vld [vmem:[%s0 + $0x728] sm:$0xff]
  %v280 = vld [vmem:[%s0 + $0x730] sm:$0xff]
  %v281 = vld [vmem:[%s0 + $0x738] sm:$0xff]
  %v282 = vld [vmem:[%s0 + $0x740] sm:$0xff]
  %v283 = vld [vmem:[%s0 + $0x748] sm:$0xff]
  %v284 = vld [vmem:[%s0 + $0x750] sm:$0xff]
  %v285 = vld [vmem:[%s0 + $0x758] sm:$0xff]
  %v286 = vld [vmem:[%s0 + $0x760] sm:$0xff]
  %v287 = vld [vmem:[%s0 + $0x768] sm:$0xff]
  %v288 = vld [vmem:[%s0 + $0x770] sm:$0xff]
  %v289 = vld [vmem:[%s0 + $0x778] sm:$0xff]
  %v290 = vld [vmem:[%s0 + $0x780] sm:$0xff]
  %v291 = vld [vmem:[%s0 + $0x788] sm:$0xff]
  %v292 = vld [vmem:[%s0 + $0x790] sm:$0xff]
  %v293 = vld [vmem:[%s0 + $0x798] sm:$0xff]
  %v294 = vld [vmem:[%s0 + $0x7a0] sm:$0xff]
  %v295 = vld [vmem:[%s0 + $0x7a8] sm:$0xff]
  %v296 = vld [vmem:[%s0 + $0x7b0] sm:$0xff]
  %v297 = vld [vmem:[%s0 + $0x7b8] sm:$0xff]
  %v298 = vld [vmem:[%s0 + $0x7c0] sm:$0xff]
  %v299 = vld [vmem:[%s0 + $0x7c8] sm:$0xff]
  %v300 = vld [vmem:[%s0 + $0x7d0] sm:$0xff]
  %v301 = vld [vmem:[%s0 + $0x7d8] sm:$0xff]
  %v302 = vld [vmem:[%s0 + $0x7e0] sm:$0xff]
  %v303 = vld [vmem:[%s0 + $0x7e8] sm:$0xff]
  %v304 = vld [vmem:[%s0 + $0x7f0] sm:$0xff]
  %v305 = vld [vmem:[%s0 + $0x7f8] sm:$0xff]
  %v306 = vld [vmem:[%s0 + $0x800] sm:$0xff]
  %v307 = vld [vmem:[%s0 + $0x808] sm:$0xff]
  %v308 = vld [vmem:[%s0 + $0x810] sm:$0xff]
  %v309 = vld [vmem:[%s0 + $0x818] sm:$0xff]
  %v310 = vld [vmem:[%s0 + $0x820] sm:$0xff]
  %v311 = vld [vmem:[%s0 + $0x828] sm:$0xff]
  %v312 = vld [vmem:[%s0 + $0x830] sm:$0xff]
  %v313 = vld [vmem:[%s0 + $0x838] sm:$0xff]
  %v314 = vld [vmem:[%s0 + $0x840] sm:$0xff]
  %v315 = vld [vmem:[%s0 + $0x848] sm:$0xff]
  %v316 = vld [vmem:[%s0 + $0x850] sm:$0xff]
  %v317 = vld [vmem:[%s0 + $0x858] sm:$0xff]
  %v318 = vld [vmem:[%s0 + $0x860] sm:$0xff]
  %v319 = vld [vmem:[%s0 + $0x868] sm:$0xff]
  %v320 = vld [vmem:[%s0 + $0x870] sm:$0xff]
  %v321 = vld [vmem:[%s0 + $0x878] sm:$0xff]
  %v322 = vld [vmem:[%s0 + $0x880] sm:$0xff]
  %v323 = vld [vmem:[%s0 + $0x888] sm:$0xff]
  %v324 = vld [vmem:[%s0 + $0x890] sm:$0xff]
  %v325 = vld [vmem:[%s0 + $0x898] sm:$0xff]
  %v326 = vld [vmem:[%s0 + $0x8a0] sm:$0xff]
  %v327 = vld [vmem:[%s0 + $0x8a8] sm:$0xff]
  %v328 = vld [vmem:[%s0 + $0x8b0] sm:$0xff]
  %v329 = vld [vmem:[%s0 + $0x8b8] sm:$0xff]
  %v330 = vld [vmem:[%s0 + $0x8c0] sm:$0xff]
  %v331 = vld [vmem:[%s0 + $0x8c8] sm:$0xff]
  %v332 = vld [vmem:[%s0 + $0x8d0] sm:$0xff]
  %v333 = vld [vmem:[%s0 + $0x8d8] sm:$0xff]
  %v334 = vld [vmem:[%s0 + $0x8e0] sm:$0xff]
  %v335 = vld [vmem:[%s0 + $0x8e8] sm:$0xff]
  %v336 = vld [vmem:[%s0 + $0x8f0] sm:$0xff]
  %v337 = vld [vmem:[%s0 + $0x8f8] sm:$0xff]
  %v338 = vld [vmem:[%s0 + $0x900] sm:$0xff]
  %v339 = vld [vmem:[%s0 + $0x908] sm:$0xff]
  %v340 = vld [vmem:[%s0 + $0x910] sm:$0xff]
  %v341 = vld [vmem:[%s0 + $0x918] sm:$0xff]
  %v342 = vld [vmem:[%s0 + $0x920] sm:$0xff]
  %v343 = vld [vmem:[%s0 + $0x928] sm:$0xff]
  %v344 = vld [vmem:[%s0 + $0x930] sm:$0xff]
  %v345 = vld [vmem:[%s0 + $0x938] sm:$0xff]
  %v346 = vld [vmem:[%s0 + $0x940] sm:$0xff]
  %v347 = vld [vmem:[%s0 + $0x948] sm:$0xff]
  %v348 = vld [vmem:[%s0 + $0x950] sm:$0xff]
  %v349 = vld [vmem:[%s0 + $0x958] sm:$0xff]
  %v350 = vld [vmem:[%s0 + $0x960] sm:$0xff]
  %v351 = vld [vmem:[%s0 + $0x968] sm:$0xff]
  %v352 = vld [vmem:[%s0 + $0x970] sm:$0xff]
  %v353 = vld [vmem:[%s0 + $0x978] sm:$0xff]
  %v354 = vld [vmem:[%s0 + $0x980] sm:$0xff]
  %v355 = vld [vmem:[%s0 + $0x988] sm:$0xff]
  %v356 = vld [vmem:[%s0 + $0x990] sm:$0xff]
  %v357 = vld [vmem:[%s0 + $0x998] sm:$0xff]
  %v358 = vld [vmem:[%s0 + $0x9a0] sm:$0xff]
  %v359 = vld [vmem:[%s0 + $0x9a8] sm:$0xff]
  %v360 = vld [vmem:[%s0 + $0x9b0] sm:$0xff]
  %v361 = vld [vmem:[%s0 + $0x9b8] sm:$0xff]
  %v362 = vld [vmem:[%s0 + $0x9c0] sm:$0xff]
  %v363 = vld [vmem:[%s0 + $0x9c8] sm:$0xff]
  %v364 = vld [vmem:[%s0 + $0x9d0] sm:$0xff]
  %v365 = vld [vmem:[%s0 + $0x9d8] sm:$0xff]
  %v366 = vld [vmem:[%s0 + $0x9e0] sm:$0xff]
  %v367 = vld [vmem:[%s0 + $0x9e8] sm:$0xff]
  %v368 = vld [vmem:[%s0 + $0x9f0] sm:$0xff]
  %v369 = vld [vmem:[%s0 + $0x9f8] sm:$0xff]
  %v370 = vld [vmem:[%s0 + $0xa00] sm:$0xff]
  %v371 = vld [vmem:[%s0 + $0xa08] sm:$0xff]
  %v372 = vld [vmem:[%s0 + $0xa10] sm:$0xff]
  %v373 = vld [vmem:[%s0 + $0xa18] sm:$0xff]
  %v374 = vld [vmem:[%s0 + $0xa20] sm:$0xff]
  %v375 = vld [vmem:[%s0 + $0xa28] sm:$0xff]
  %v376 = vld [vmem:[%s0 + $0xa30] sm:$0xff]
  %v377 = vld [vmem:[%s0 + $0xa38] sm:$0xff]
  %v378 = vld [vmem:[%s0 + $0xa40] sm:$0xff]
  %v379 = vld [vmem:[%s0 + $0xa48] sm:$0xff]
  %v380 = vld [vmem:[%s0 + $0xa50] sm:$0xff]
  %v381 = vld [vmem:[%s0 + $0xa58] sm:$0xff]
  %v382 = vld [vmem:[%s0 + $0xa60] sm:$0xff]
  %v383 = vld [vmem:[%s0 + $0xa68] sm:$0xff]
  %v384 = vld [vmem:[%s0 + $0xa70] sm:$0xff]
  %v385 = vld [vmem:[%s0 + $0xa78] sm:$0xff]
  %v386 = vld [vmem:[%s0 + $0xa80] sm:$0xff]
  %v387 = vld [vmem:[%s0 + $0xa88] sm:$0xff]
  %v388 = vld [vmem:[%s0 + $0xa90] sm:$0xff]
  %v389 = vld [vmem:[%s0 + $0xa98] sm:$0xff]
  %v390 = vld [vmem:[%s0 + $0xaa0] sm:$0xff]
  %v391 = vld [vmem:[%s0 + $0xaa8] sm:$0xff]
  %v392 = vld [vmem:[%s0 + $0xab0] sm:$0xff]
  %v393 = vld [vmem:[%s0 + $0xab8] sm:$0xff]
  %v394 = vld [vmem:[%s0 + $0xac0] sm:$0xff]
  %v395 = vld [vmem:[%s0 + $0xac8] sm:$0xff]
  %v396 = vld [vmem:[%s0 + $0xad0] sm:$0xff]
  %v397 = vld [vmem:[%s0 + $0xad8] sm:$0xff]
  %v398 = vld [vmem:[%s0 + $0xae0] sm:$0xff]
  %v399 = vld [vmem:[%s0 + $0xae8] sm:$0xff]
  %v400 = vld [vmem:[%s0 + $0xaf0] sm:$0xff]
  %v401 = vld [vmem:[%s0 + $0xaf8] sm:$0xff]
  %v402 = vld [vmem:[%s0 + $0xb00] sm:$0xff]
  %v403 = vld [vmem:[%s0 + $0xb08] sm:$0xff]
  %v404 = vld [vmem:[%s0 + $0xb10] sm:$0xff]
  %v405 = vld [vmem:[%s0 + $0xb18] sm:$0xff]
  %v406 = vld [vmem:[%s0 + $0xb20] sm:$0xff]
  %v407 = vld [vmem:[%s0 + $0xb28] sm:$0xff]
  %v408 = vld [vmem:[%s0 + $0xb30] sm:$0xff]
  %v409 = vld [vmem:[%s0 + $0xb38] sm:$0xff]
  %v410 = vld [vmem:[%s0 + $0xb40] sm:$0xff]
  %v411 = vld [vmem:[%s0 + $0xb48] sm:$0xff]
  %v412 = vld [vmem:[%s0 + $0xb50] sm:$0xff]
  %v413 = vld [vmem:[%s0 + $0xb58] sm:$0xff]
  %v414 = vld [vmem:[%s0 + $0xb60] sm:$0xff]
  %v415 = vld [vmem:[%s0 + $0xb68] sm:$0xff]
  %v416 = vld [vmem:[%s0 + $0xb70] sm:$0xff]
  %v417 = vld [vmem:[%s0 + $0xb78] sm:$0xff]
  %v418 = vld [vmem:[%s0 + $0xb80] sm:$0xff]
  %v419 = vld [vmem:[%s0 + $0xb88] sm:$0xff]
  %v420 = vld [vmem:[%s0 + $0xb90] sm:$0xff]
  %v421 = vld [vmem:[%s0 + $0xb98] sm:$0xff]
  %v422 = vld [vmem:[%s0 + $0xba0] sm:$0xff]
  %v423 = vld [vmem:[%s0 + $0xba8] sm:$0xff]
  %v424 = vld [vmem:[%s0 + $0xbb0] sm:$0xff]
  %v425 = vld [vmem:[%s0 + $0xbb8] sm:$0xff]
  %v426 = vld [vmem:[%s0 + $0xbc0] sm:$0xff]
  %v427 = vld [vmem:[%s0 + $0xbc8] sm:$0xff]
  %v428 = vld [vmem:[%s0 + $0xbd0] sm:$0xff]
  %v429 = vld [vmem:[%s0 + $0xbd8] sm:$0xff]
  %v430 = vld [vmem:[%s0 + $0xbe0] sm:$0xff]
  %v431 = vld [vmem:[%s0 + $0xbe8] sm:$0xff]
  %v432 = vld [vmem:[%s0 + $0xbf0] sm:$0xff]
  %v433 = vld [vmem:[%s0 + $0xbf8] sm:$0xff]
  %v434 = vld [vmem:[%s0 + $0xc00] sm:$0xff]
  %v435 = vld [vmem:[%s0 + $0xc08] sm:$0xff]
  %v436 = vld [vmem:[%s0 + $0xc10] sm:$0xff]
  %v437 = vld [vmem:[%s0 + $0xc18] sm:$0xff]
  %v438 = vld [vmem:[%s0 + $0xc20] sm:$0xff]
  %v439 = vld [vmem:[%s0 + $0xc28] sm:$0xff]
  %v440 = vld [vmem:[%s0 + $0xc30] sm:$0xff]
  %v441 = vld [vmem:[%s0 + $0xc38] sm:$0xff]
  %v442 = vld [vmem:[%s0 + $0xc40] sm:$0xff]
  %v443 = vld [vmem:[%s0 + $0xc48] sm:$0xff]
  %v444 = vld [vmem:[%s0 + $0xc50] sm:$0xff]
  %v445 = vld [vmem:[%s0 + $0xc58] sm:$0xff]
  %v446 = vld [vmem:[%s0 + $0xc60] sm:$0xff]
  %v447 = vld [vmem:[%s0 + $0xc68] sm:$0xff]
  %v448 = vld [vmem:[%s0 + $0xc70] sm:$0xff]
  %v449 = vld [vmem:[%s0 + $0xc78] sm:$0xff]
  %v450 = vld [vmem:[%s0 + $0xc80] sm:$0xff]
  %v451 = vld [vmem:[%s0 + $0xc88] sm:$0xff]
  %v452 = vld [vmem:[%s0 + $0xc90] sm:$0xff]
  %v453 = vld [vmem:[%s0 + $0xc98] sm:$0xff]
  %v454 = vld [vmem:[%s0 + $0xca0] sm:$0xff]
  %v455 = vld [vmem:[%s0 + $0xca8] sm:$0xff]
  %v456 = vld [vmem:[%s0 + $0xcb0] sm:$0xff]
  %v457 = vld [vmem:[%s0 + $0xcb8] sm:$0xff]
  %v458 = vld [vmem:[%s0 + $0xcc0] sm:$0xff]
  %v459 = vld [vmem:[%s0 + $0xcc8] sm:$0xff]
  %v460 = vld [vmem:[%s0 + $0xcd0] sm:$0xff]
  %v461 = vld [vmem:[%s0 + $0xcd8] sm:$0xff]
  %v462 = vld [vmem:[%s0 + $0xce0] sm:$0xff]
  %v463 = vld [vmem:[%s0 + $0xce8] sm:$0xff]
  %v464 = vld [vmem:[%s0 + $0xcf0] sm:$0xff]
  %v465 = vld [vmem:[%s0 + $0xcf8] sm:$0xff]
  %v466 = vld [vmem:[%s0 + $0xd00] sm:$0xff]
  %v467 = vld [vmem:[%s0 + $0xd08] sm:$0xff]
  %v468 = vld [vmem:[%s0 + $0xd10] sm:$0xff]
  %v469 = vld [vmem:[%s0 + $0xd18] sm:$0xff]
  %v470 = vld [vmem:[%s0 + $0xd20] sm:$0xff]
  %v471 = vld [vmem:[%s0 + $0xd28] sm:$0xff]
  %v472 = vld [vmem:[%s0 + $0xd30] sm:$0xff]
  %v473 = vld [vmem:[%s0 + $0xd38] sm:$0xff]
  %v474 = vld [vmem:[%s0 + $0xd40] sm:$0xff]
  %v475 = vld [vmem:[%s0 + $0xd48] sm:$0xff]
  %v476 = vld [vmem:[%s0 + $0xd50] sm:$0xff]
  %v477 = vld [vmem:[%s0 + $0xd58] sm:$0xff]
  %v478 = vld [vmem:[%s0 + $0xd60] sm:$0xff]
  %v479 = vld [vmem:[%s0 + $0xd68] sm:$0xff]
  %v480 = vld [vmem:[%s0 + $0xd70] sm:$0xff]
  %v481 = vld [vmem:[%s0 + $0xd78] sm:$0xff]
  %v482 = vld [vmem:[%s0 + $0xd80] sm:$0xff]
  %v483 = vld [vmem:[%s0 + $0xd88] sm:$0xff]
  %v484 = vld [vmem:[%s0 + $0xd90] sm:$0xff]
  %v485 = vld [vmem:[%s0 + $0xd98] sm:$0xff]
  %v486 = vld [vmem:[%s0 + $0xda0] sm:$0xff]
  %v487 = vld [vmem:[%s0 + $0xda8] sm:$0xff]
  %v488 = vld [vmem:[%s0 + $0xdb0] sm:$0xff]
  %v489 = vld [vmem:[%s0 + $0xdb8] sm:$0xff]
  %v490 = vld [vmem:[%s0 + $0xdc0] sm:$0xff]
  %v491 = vld [vmem:[%s0 + $0xdc8] sm:$0xff]
  %v492 = vld [vmem:[%s0 + $0xdd0] sm:$0xff]
  %v493 = vld [vmem:[%s0 + $0xdd8] sm:$0xff]
  %v494 = vld [vmem:[%s0 + $0xde0] sm:$0xff]
  %v495 = vld [vmem:[%s0 + $0xde8] sm:$0xff]
  %v496 = vld [vmem:[%s0 + $0xdf0] sm:$0xff]
  %v497 = vld [vmem:[%s0 + $0xdf8] sm:$0xff]
  %v498 = vld [vmem:[%s0 + $0xe00] sm:$0xff]
  %v499 = vld [vmem:[%s0 + $0xe08] sm:$0xff]
  %v500 = vld [vmem:[%s0 + $0xe10] sm:$0xff]
  %v501 = vld [vmem:[%s0 + $0xe18] sm:$0xff]
  %v502 = vld [vmem:[%s0 + $0xe20] sm:$0xff]
  %v503 = vld [vmem:[%s0 + $0xe28] sm:$0xff]
  %v504 = vld [vmem:[%s0 + $0xe30] sm:$0xff]
  %v505 = vld [vmem:[%s0 + $0xe38] sm:$0xff]
  %v506 = vld [vmem:[%s0 + $0xe40] sm:$0xff]
  %v507 = vld [vmem:[%s0 + $0xe48] sm:$0xff]
  %v508 = vld [vmem:[%s0 + $0xe50] sm:$0xff]
  %v509 = vld [vmem:[%s0 + $0xe58] sm:$0xff]
  %v510 = vld [vmem:[%s0 + $0xe60] sm:$0xff]
  %v511 = vld [vmem:[%s0 + $0xe68] sm:$0xff]
  %v512 = vld [vmem:[%s0 + $0xe70] sm:$0xff]
  %v513 = vld [vmem:[%s0 + $0xe78] sm:$0xff]
  %v514 = vld [vmem:[%s0 + $0xe80] sm:$0xff]
  %v515 = vld [vmem:[%s0 + $0xe88] sm:$0xff]
  %v516 = vld [vmem:[%s0 + $0xe90] sm:$0xff]
  %v517 = vld [vmem:[%s0 + $0xe98] sm:$0xff]
  %v518 = vld [vmem:[%s0 + $0xea0] sm:$0xff]
  %v519 = vld [vmem:[%s0 + $0xea8] sm:$0xff]
  %v520 = vld [vmem:[%s0 + $0xeb0] sm:$0xff]
  %v521 = vld [vmem:[%s0 + $0xeb8] sm:$0xff]
  %v522 = vld [vmem:[%s0 + $0xec0] sm:$0xff]
  %v523 = vld [vmem:[%s0 + $0xec8] sm:$0xff]
  %v524 = vld [vmem:[%s0 + $0xed0] sm:$0xff]
  %v525 = vld [vmem:[%s0 + $0xed8] sm:$0xff]
  %v526 = vld [vmem:[%s0 + $0xee0] sm:$0xff]
  %v527 = vld [vmem:[%s0 + $0xee8] sm:$0xff]
  %v528 = vld [vmem:[%s0 + $0xef0] sm:$0xff]
  %v529 = vld [vmem:[%s0 + $0xef8] sm:$0xff]
  %v530 = vld [vmem:[%s0 + $0xf00] sm:$0xff]
  %v531 = vld [vmem:[%s0 + $0xf08] sm:$0xff]
  %v532 = vld [vmem:[%s0 + $0xf10] sm:$0xff]
  %v533 = vld [vmem:[%s0 + $0xf18] sm:$0xff]
  %v534 = vld [vmem:[%s0 + $0xf20] sm:$0xff]
  %v535 = vld [vmem:[%s0 + $0xf28] sm:$0xff]
  %v536 = vld [vmem:[%s0 + $0xf30] sm:$0xff]
  %v537 = vld [vmem:[%s0 + $0xf38] sm:$0xff]
  %v538 = vld [vmem:[%s0 + $0xf40] sm:$0xff]
  %v539 = vld [vmem:[%s0 + $0xf48] sm:$0xff]
  %v540 = vld [vmem:[%s0 + $0xf50] sm:$0xff]
  %v541 = vld [vmem:[%s0 + $0xf58] sm:$0xff]
  %v542 = vld [vmem:[%s0 + $0xf60] sm:$0xff]
  %v543 = vld [vmem:[%s0 + $0xf68] sm:$0xff]
  %v544 = vld [vmem:[%s0 + $0xf70] sm:$0xff]
  %v545 = vld [vmem:[%s0 + $0xf78] sm:$0xff]
  %v546 = vld [vmem:[%s0 + $0xf80] sm:$0xff]
  %v547 = vld [vmem:[%s0 + $0xf88] sm:$0xff]
  %v548 = vld [vmem:[%s0 + $0xf90] sm:$0xff]
  %v549 = vld [vmem:[%s0 + $0xf98] sm:$0xff]
  %v550 = vld [vmem:[%s0 + $0xfa0] sm:$0xff]
  %v551 = vld [vmem:[%s0 + $0xfa8] sm:$0xff]
  %v552 = vld [vmem:[%s0 + $0xfb0] sm:$0xff]
  %v553 = vld [vmem:[%s0 + $0xfb8] sm:$0xff]
  %v554 = vld [vmem:[%s0 + $0xfc0] sm:$0xff]
  %v555 = vld [vmem:[%s0 + $0xfc8] sm:$0xff]
  %v556 = vld [vmem:[%s0 + $0xfd0] sm:$0xff]
  %v557 = vld [vmem:[%s0 + $0xfd8] sm:$0xff]
  %v558 = vld [vmem:[%s0 + $0xfe0] sm:$0xff]
  %v559 = vld [vmem:[%s0 + $0xfe8] sm:$0xff]
  %v560 = vld [vmem:[%s0 + $0xff0] sm:$0xff]
  %v561 = vld [vmem:[%s0 + $0xff8] sm:$0xff]
  %v562 = vld [vmem:[%s0 + $0x1000] sm:$0xff]
  %v563 = vld [vmem:[%s0 + $0x1008] sm:$0xff]
  %v564 = vld [vmem:[%s0 + $0x1010] sm:$0xff]
  %v565 = vld [vmem:[%s0 + $0x1018] sm:$0xff]
  %v566 = vld [vmem:[%s0 + $0x1020] sm:$0xff]
  %v567 = vld [vmem:[%s0 + $0x1028] sm:$0xff]
  %v568 = vld [vmem:[%s0 + $0x1030] sm:$0xff]
  %v569 = vld [vmem:[%s0 + $0x1038] sm:$0xff]
  %v570 = vld [vmem:[%s0 + $0x1040] sm:$0xff]
  %v571 = vld [vmem:[%s0 + $0x1048] sm:$0xff]
  %v572 = vld [vmem:[%s0 + $0x1050] sm:$0xff]
  %v573 = vld [vmem:[%s0 + $0x1058] sm:$0xff]
  %v574 = vld [vmem:[%s0 + $0x1060] sm:$0xff]
  %v575 = vld [vmem:[%s0 + $0x1068] sm:$0xff]
  %v576 = vld [vmem:[%s0 + $0x1070] sm:$0xff]
  %v577 = vld [vmem:[%s0 + $0x1078] sm:$0xff]
  %v578 = vld [vmem:[%s0 + $0x1080] sm:$0xff]
  %v579 = vld [vmem:[%s0 + $0x1088] sm:$0xff]
  %v580 = vld [vmem:[%s0 + $0x1090] sm:$0xff]
  %v581 = vld [vmem:[%s0 + $0x1098] sm:$0xff]
  %v582 = vld [vmem:[%s0 + $0x10a0] sm:$0xff]
  %v583 = vld [vmem:[%s0 + $0x10a8] sm:$0xff]
  %v584 = vld [vmem:[%s0 + $0x10b0] sm:$0xff]
  %v585 = vld [vmem:[%s0 + $0x10b8] sm:$0xff]
  %v586 = vld [vmem:[%s0 + $0x10c0] sm:$0xff]
  %v587 = vld [vmem:[%s0 + $0x10c8] sm:$0xff]
  %v588 = vld [vmem:[%s0 + $0x10d0] sm:$0xff]
  %v589 = vld [vmem:[%s0 + $0x10d8] sm:$0xff]
  %v590 = vld [vmem:[%s0 + $0x10e0] sm:$0xff]
  %v591 = vld [vmem:[%s0 + $0x10e8] sm:$0xff]
  %v592 = vld [vmem:[%s0 + $0x10f0] sm:$0xff]
  %v593 = vld [vmem:[%s0 + $0x10f8] sm:$0xff]
  %v594 = vld [vmem:[%s0 + $0x1100] sm:$0xff]
  %v595 = vld [vmem:[%s0 + $0x1108] sm:$0xff]
  %v596 = vld [vmem:[%s0 + $0x1110] sm:$0xff]
  %v597 = vld [vmem:[%s0 + $0x1118] sm:$0xff]
  %v598 = vld [vmem:[%s0 + $0x1120] sm:$0xff]
  %v599 = vld [vmem:[%s0 + $0x1128] sm:$0xff]
  %v600 = vld [vmem:[%s0 + $0x1130] sm:$0xff]
  %v601 = vld [vmem:[%s0 + $0x1138] sm:$0xff]
  %v602 = vld [vmem:[%s0 + $0x1140] sm:$0xff]
  %v603 = vld [vmem:[%s0 + $0x1148] sm:$0xff]
  %v604 = vld [vmem:[%s0 + $0x1150] sm:$0xff]
  %v605 = vld [vmem:[%s0 + $0x1158] sm:$0xff]
  %v606 = vld [vmem:[%s0 + $0x1160] sm:$0xff]
  %v607 = vld [vmem:[%s0 + $0x1168] sm:$0xff]
  %v608 = vld [vmem:[%s0 + $0x1170] sm:$0xff]
  %v609 = vld [vmem:[%s0 + $0x1178] sm:$0xff]
  %v610 = vld [vmem:[%s0 + $0x1180] sm:$0xff]
  %v611 = vld [vmem:[%s0 + $0x1188] sm:$0xff]
  %v612 = vld [vmem:[%s0 + $0x1190] sm:$0xff]
  %v613 = vld [vmem:[%s0 + $0x1198] sm:$0xff]
  %v614 = vld [vmem:[%s0 + $0x11a0] sm:$0xff]
  %v615 = vld [vmem:[%s0 + $0x11a8] sm:$0xff]
  %v616 = vld [vmem:[%s0 + $0x11b0] sm:$0xff]
  %v617 = vld [vmem:[%s0 + $0x11b8] sm:$0xff]
  %v618 = vld [vmem:[%s0 + $0x11c0] sm:$0xff]
  %v619 = vld [vmem:[%s0 + $0x11c8] sm:$0xff]
  %v620 = vld [vmem:[%s0 + $0x11d0] sm:$0xff]
  %v621 = vld [vmem:[%s0 + $0x11d8] sm:$0xff]
  %v622 = vld [vmem:[%s0 + $0x11e0] sm:$0xff]
  %v623 = vld [vmem:[%s0 + $0x11e8] sm:$0xff]
  %v624 = vld [vmem:[%s0 + $0x11f0] sm:$0xff]
  %v625 = vld [vmem:[%s0 + $0x11f8] sm:$0xff]
  %v626 = vld [vmem:[%s0 + $0x1200] sm:$0xff]
  %v627 = vld [vmem:[%s0 + $0x1208] sm:$0xff]
  %v628 = vld [vmem:[%s0 + $0x1210] sm:$0xff]
  %v629 = vld [vmem:[%s0 + $0x1218] sm:$0xff]
  %v630 = vld [vmem:[%s0 + $0x1220] sm:$0xff]
  %v631 = vld [vmem:[%s0 + $0x1228] sm:$0xff]
  %v632 = vld [vmem:[%s0 + $0x1230] sm:$0xff]
  %v633 = vld [vmem:[%s0 + $0x1238] sm:$0xff]
  %v634 = vld [vmem:[%s0 + $0x1240] sm:$0xff]
  %v635 = vld [vmem:[%s0 + $0x1248] sm:$0xff]
  %v636 = vld [vmem:[%s0 + $0x1250] sm:$0xff]
  %v637 = vld [vmem:[%s0 + $0x1258] sm:$0xff]
  %v638 = vld [vmem:[%s0 + $0x1260] sm:$0xff]
  %v639 = vld [vmem:[%s0 + $0x1268] sm:$0xff]
  %v640 = vld [vmem:[%s0 + $0x1270] sm:$0xff]
  %v641 = vld [vmem:[%s0 + $0x1278] sm:$0xff]
  %v642 = vld [vmem:[%s0 + $0x1280] sm:$0xff]
  %v643 = vld [vmem:[%s0 + $0x1288] sm:$0xff]
  %v644 = vld [vmem:[%s0 + $0x1290] sm:$0xff]
  %v645 = vld [vmem:[%s0 + $0x1298] sm:$0xff]
  %v646 = vld [vmem:[%s0 + $0x12a0] sm:$0xff]
  %v647 = vld [vmem:[%s0 + $0x12a8] sm:$0xff]
  %v648 = vld [vmem:[%s0 + $0x12b0] sm:$0xff]
  %v649 = vld [vmem:[%s0 + $0x12b8] sm:$0xff]
  %v650 = vld [vmem:[%s0 + $0x12c0] sm:$0xff]
  %v651 = vld [vmem:[%s0 + $0x12c8] sm:$0xff]
  %v652 = vld [vmem:[%s0 + $0x12d0] sm:$0xff]
  %v653 = vld [vmem:[%s0 + $0x12d8] sm:$0xff]
  %v654 = vld [vmem:[%s0 + $0x12e0] sm:$0xff]
  %v655 = vld [vmem:[%s0 + $0x12e8] sm:$0xff]
  %v656 = vld [vmem:[%s0 + $0x12f0] sm:$0xff]
  %v657 = vld [vmem:[%s0 + $0x12f8] sm:$0xff]
  %v658 = vld [vmem:[%s0 + $0x1300] sm:$0xff]
  %v659 = vld [vmem:[%s0 + $0x1308] sm:$0xff]
  %v660 = vld [vmem:[%s0 + $0x1310] sm:$0xff]
  %v661 = vld [vmem:[%s0 + $0x1318] sm:$0xff]
  %v662 = vld [vmem:[%s0 + $0x1320] sm:$0xff]
  %v663 = vld [vmem:[%s0 + $0x1328] sm:$0xff]
  %v664 = vld [vmem:[%s0 + $0x1330] sm:$0xff]
  %v665 = vld [vmem:[%s0 + $0x1338] sm:$0xff]
  %v666 = vld [vmem:[%s0 + $0x1340] sm:$0xff]
  %v667 = vld [vmem:[%s0 + $0x1348] sm:$0xff]
  %v668 = vld [vmem:[%s0 + $0x1350] sm:$0xff]
  %v669 = vld [vmem:[%s0 + $0x1358] sm:$0xff]
  %v670 = vld [vmem:[%s0 + $0x1360] sm:$0xff]
  %v671 = vld [vmem:[%s0 + $0x1368] sm:$0xff]
  %v672 = vld [vmem:[%s0 + $0x1370] sm:$0xff]
  %v673 = vld [vmem:[%s0 + $0x1378] sm:$0xff]
  %v674 = vld [vmem:[%s0 + $0x1380] sm:$0xff]
  %v675 = vld [vmem:[%s0 + $0x1388] sm:$0xff]
  %v676 = vld [vmem:[%s0 + $0x1390] sm:$0xff]
  %v677 = vld [vmem:[%s0 + $0x1398] sm:$0xff]
  %v678 = vld [vmem:[%s0 + $0x13a0] sm:$0xff]
  %v679 = vld [vmem:[%s0 + $0x13a8] sm:$0xff]
  %v680 = vld [vmem:[%s0 + $0x13b0] sm:$0xff]
  %v681 = vld [vmem:[%s0 + $0x13b8] sm:$0xff]
  %v682 = vld [vmem:[%s0 + $0x13c0] sm:$0xff]
  %v683 = vld [vmem:[%s0 + $0x13c8] sm:$0xff]
  %v684 = vld [vmem:[%s0 + $0x13d0] sm:$0xff]
  %v685 = vld [vmem:[%s0 + $0x13d8] sm:$0xff]
  %v686 = vld [vmem:[%s0 + $0x13e0] sm:$0xff]
  %v687 = vld [vmem:[%s0 + $0x13e8] sm:$0xff]
  %v688 = vld [vmem:[%s0 + $0x13f0] sm:$0xff]
  %v689 = vld [vmem:[%s0 + $0x13f8] sm:$0xff]
  %v690 = vld [vmem:[%s0 + $0x1400] sm:$0xff]
  %v691 = vld [vmem:[%s0 + $0x1408] sm:$0xff]
  %v692 = vld [vmem:[%s0 + $0x1410] sm:$0xff]
  %v693 = vld [vmem:[%s0 + $0x1418] sm:$0xff]
  %v694 = vld [vmem:[%s0 + $0x1420] sm:$0xff]
  %v695 = vld [vmem:[%s0 + $0x1428] sm:$0xff]
  %v696 = vld [vmem:[%s0 + $0x1430] sm:$0xff]
  %v697 = vld [vmem:[%s0 + $0x1438] sm:$0xff]
  %v698 = vld [vmem:[%s0 + $0x1440] sm:$0xff]
  %v699 = vld [vmem:[%s0 + $0x1448] sm:$0xff]
  %v700 = vld [vmem:[%s0 + $0x1450] sm:$0xff]
  %v701 = vld [vmem:[%s0 + $0x1458] sm:$0xff]
  %v702 = vld [vmem:[%s0 + $0x1460] sm:$0xff]
  %v703 = vld [vmem:[%s0 + $0x1468] sm:$0xff]
  %v704 = vld [vmem:[%s0 + $0x1470] sm:$0xff]
  %v705 = vld [vmem:[%s0 + $0x1478] sm:$0xff]
  %v706 = vld [vmem:[%s0 + $0x1480] sm:$0xff]
  %v707 = vld [vmem:[%s0 + $0x1488] sm:$0xff]
  %v708 = vld [vmem:[%s0 + $0x1490] sm:$0xff]
  %v709 = vld [vmem:[%s0 + $0x1498] sm:$0xff]
  %v710 = vld [vmem:[%s0 + $0x14a0] sm:$0xff]
  %v711 = vld [vmem:[%s0 + $0x14a8] sm:$0xff]
  %v712 = vld [vmem:[%s0 + $0x14b0] sm:$0xff]
  %v713 = vld [vmem:[%s0 + $0x14b8] sm:$0xff]
  %v714 = vld [vmem:[%s0 + $0x14c0] sm:$0xff]
  %v715 = vld [vmem:[%s0 + $0x14c8] sm:$0xff]
  %v716 = vld [vmem:[%s0 + $0x14d0] sm:$0xff]
  %v717 = vld [vmem:[%s0 + $0x14d8] sm:$0xff]
  %v718 = vld [vmem:[%s0 + $0x14e0] sm:$0xff]
  %v719 = vld [vmem:[%s0 + $0x14e8] sm:$0xff]
  %v720 = vld [vmem:[%s0 + $0x14f0] sm:$0xff]
  %v721 = vld [vmem:[%s0 + $0x14f8] sm:$0xff]
  %v722 = vld [vmem:[%s0 + $0x1500] sm:$0xff]
  %v723 = vld [vmem:[%s0 + $0x1508] sm:$0xff]
  %v724 = vld [vmem:[%s0 + $0x1510] sm:$0xff]
  %v725 = vld [vmem:[%s0 + $0x1518] sm:$0xff]
  %v726 = vld [vmem:[%s0 + $0x1520] sm:$0xff]
  %v727 = vld [vmem:[%s0 + $0x1528] sm:$0xff]
  %v728 = vld [vmem:[%s0 + $0x1530] sm:$0xff]
  %v729 = vld [vmem:[%s0 + $0x1538] sm:$0xff]
  %v730 = vld [vmem:[%s0 + $0x1540] sm:$0xff]
  %v731 = vld [vmem:[%s0 + $0x1548] sm:$0xff]
  %v732 = vld [vmem:[%s0 + $0x1550] sm:$0xff]
  %v733 = vld [vmem:[%s0 + $0x1558] sm:$0xff]
  %v734 = vld [vmem:[%s0 + $0x1560] sm:$0xff]
  %v735 = vld [vmem:[%s0 + $0x1568] sm:$0xff]
  %v736 = vld [vmem:[%s0 + $0x1570] sm:$0xff]
  %v737 = vld [vmem:[%s0 + $0x1578] sm:$0xff]
  %v738 = vld [vmem:[%s0 + $0x1580] sm:$0xff]
  %v739 = vld [vmem:[%s0 + $0x1588] sm:$0xff]
  %v740 = vld [vmem:[%s0 + $0x1590] sm:$0xff]
  %v741 = vld [vmem:[%s0 + $0x1598] sm:$0xff]
  %v742 = vld [vmem:[%s0 + $0x15a0] sm:$0xff]
  %v743 = vld [vmem:[%s0 + $0x15a8] sm:$0xff]
  %v744 = vld [vmem:[%s0 + $0x15b0] sm:$0xff]
  %v745 = vld [vmem:[%s0 + $0x15b8] sm:$0xff]
  %v746 = vld [vmem:[%s0 + $0x15c0] sm:$0xff]
  %v747 = vld [vmem:[%s0 + $0x15c8] sm:$0xff]
  %v748 = vld [vmem:[%s0 + $0x15d0] sm:$0xff]
  %v749 = vld [vmem:[%s0 + $0x15d8] sm:$0xff]
  %v750 = vld [vmem:[%s0 + $0x15e0] sm:$0xff]
  %v751 = vld [vmem:[%s0 + $0x15e8] sm:$0xff]
  %v752 = vld [vmem:[%s0 + $0x15f0] sm:$0xff]
  %v753 = vld [vmem:[%s0 + $0x15f8] sm:$0xff]
  %v754 = vld [vmem:[%s0 + $0x1600] sm:$0xff]
  %v755 = vld [vmem:[%s0 + $0x1608] sm:$0xff]
  %v756 = vld [vmem:[%s0 + $0x1610] sm:$0xff]
  %v757 = vld [vmem:[%s0 + $0x1618] sm:$0xff]
  %v758 = vld [vmem:[%s0 + $0x1620] sm:$0xff]
  %v759 = vld [vmem:[%s0 + $0x1628] sm:$0xff]
  %v760 = vld [vmem:[%s0 + $0x1630] sm:$0xff]
  %v761 = vld [vmem:[%s0 + $0x1638] sm:$0xff]
  %v762 = vld [vmem:[%s0 + $0x1640] sm:$0xff]
  %v763 = vld [vmem:[%s0 + $0x1648] sm:$0xff]
  %v764 = vld [vmem:[%s0 + $0x1650] sm:$0xff]
  %v765 = vld [vmem:[%s0 + $0x1658] sm:$0xff]
  %v766 = vld [vmem:[%s0 + $0x1660] sm:$0xff]
  %v767 = vld [vmem:[%s0 + $0x1668] sm:$0xff]
  %v768 = vld [vmem:[%s0 + $0x1670] sm:$0xff]
  %v769 = vld [vmem:[%s0 + $0x1678] sm:$0xff]
  %v770 = vld [vmem:[%s0 + $0x1680] sm:$0xff]
  %v771 = vld [vmem:[%s0 + $0x1688] sm:$0xff]
  %v772 = vld [vmem:[%s0 + $0x1690] sm:$0xff]
  %v773 = vld [vmem:[%s0 + $0x1698] sm:$0xff]
  %v774 = vld [vmem:[%s0 + $0x16a0] sm:$0xff]
  %v775 = vld [vmem:[%s0 + $0x16a8] sm:$0xff]
  %v776 = vld [vmem:[%s0 + $0x16b0] sm:$0xff]
  %v777 = vld [vmem:[%s0 + $0x16b8] sm:$0xff]
  %v778 = vld [vmem:[%s0 + $0x16c0] sm:$0xff]
  %v779 = vld [vmem:[%s0 + $0x16c8] sm:$0xff]
  %v780 = vld [vmem:[%s0 + $0x16d0] sm:$0xff]
  %v781 = vld [vmem:[%s0 + $0x16d8] sm:$0xff]
  %v782 = vld [vmem:[%s0 + $0x16e0] sm:$0xff]
  %v783 = vld [vmem:[%s0 + $0x16e8] sm:$0xff]
  %v784 = vld [vmem:[%s0 + $0x16f0] sm:$0xff]
  %v785 = vld [vmem:[%s0 + $0x16f8] sm:$0xff]
  %v786 = vld [vmem:[%s0 + $0x1700] sm:$0xff]
  %v787 = vld [vmem:[%s0 + $0x1708] sm:$0xff]
  %v788 = vld [vmem:[%s0 + $0x1710] sm:$0xff]
  %v789 = vld [vmem:[%s0 + $0x1718] sm:$0xff]
  %v790 = vld [vmem:[%s0 + $0x1720] sm:$0xff]
  %v791 = vld [vmem:[%s0 + $0x1728] sm:$0xff]
  %v792 = vld [vmem:[%s0 + $0x1730] sm:$0xff]
  %v793 = vld [vmem:[%s0 + $0x1738] sm:$0xff]
  %v794 = vld [vmem:[%s0 + $0x1740] sm:$0xff]
  %v795 = vld [vmem:[%s0 + $0x1748] sm:$0xff]
  %v796 = vld [vmem:[%s0 + $0x1750] sm:$0xff]
  %v797 = vld [vmem:[%s0 + $0x1758] sm:$0xff]
  %v798 = vld [vmem:[%s0 + $0x1760] sm:$0xff]
  %v799 = vld [vmem:[%s0 + $0x1768] sm:$0xff]
  %v800 = vld [vmem:[%s0 + $0x1770] sm:$0xff]
  %v801 = vld [vmem:[%s0 + $0x1778] sm:$0xff]
  %v802 = vld [vmem:[%s0 + $0x1780] sm:$0xff]
  %v803 = vld [vmem:[%s0 + $0x1788] sm:$0xff]
  %v804 = vld [vmem:[%s0 + $0x1790] sm:$0xff]
  %v805 = vld [vmem:[%s0 + $0x1798] sm:$0xff]
  %v806 = vld [vmem:[%s0 + $0x17a0] sm:$0xff]
  %v807 = vld [vmem:[%s0 + $0x17a8] sm:$0xff]
  %v808 = vld [vmem:[%s0 + $0x17b0] sm:$0xff]
  %v809 = vld [vmem:[%s0 + $0x17b8] sm:$0xff]
  %v810 = vld [vmem:[%s0 + $0x17c0] sm:$0xff]
  %v811 = vld [vmem:[%s0 + $0x17c8] sm:$0xff]
  %v812 = vld [vmem:[%s0 + $0x17d0] sm:$0xff]
  %v813 = vld [vmem:[%s0 + $0x17d8] sm:$0xff]
  %v814 = vld [vmem:[%s0 + $0x17e0] sm:$0xff]
  %v815 = vld [vmem:[%s0 + $0x17e8] sm:$0xff]
  %v816 = vld [vmem:[%s0 + $0x17f0] sm:$0xff]
  %v817 = vld [vmem:[%s0 + $0x17f8] sm:$0xff]
  %v818 = vld [vmem:[%s0 + $0x1800] sm:$0xff]
  %v819 = vld [vmem:[%s0 + $0x1808] sm:$0xff]
  %v820 = vld [vmem:[%s0 + $0x1810] sm:$0xff]
  %v821 = vld [vmem:[%s0 + $0x1818] sm:$0xff]
  %v822 = vld [vmem:[%s0 + $0x1820] sm:$0xff]
  %v823 = vld [vmem:[%s0 + $0x1828] sm:$0xff]
  %v824 = vld [vmem:[%s0 + $0x1830] sm:$0xff]
  %v825 = vld [vmem:[%s0 + $0x1838] sm:$0xff]
  %v826 = vld [vmem:[%s0 + $0x1840] sm:$0xff]
  %v827 = vld [vmem:[%s0 + $0x1848] sm:$0xff]
  %v828 = vld [vmem:[%s0 + $0x1850] sm:$0xff]
  %v829 = vld [vmem:[%s0 + $0x1858] sm:$0xff]
  %v830 = vld [vmem:[%s0 + $0x1860] sm:$0xff]
  %v831 = vld [vmem:[%s0 + $0x1868] sm:$0xff]
  %v832 = vld [vmem:[%s0 + $0x1870] sm:$0xff]
  %v833 = vld [vmem:[%s0 + $0x1878] sm:$0xff]
  %v834 = vld [vmem:[%s0 + $0x1880] sm:$0xff]
  %v835 = vld [vmem:[%s0 + $0x1888] sm:$0xff]
  %v836 = vld [vmem:[%s0 + $0x1890] sm:$0xff]
  %v837 = vld [vmem:[%s0 + $0x1898] sm:$0xff]
  %v838 = vld [vmem:[%s0 + $0x18a0] sm:$0xff]
  %v839 = vld [vmem:[%s0 + $0x18a8] sm:$0xff]
  %v840 = vld [vmem:[%s0 + $0x18b0] sm:$0xff]
  %v841 = vld [vmem:[%s0 + $0x18b8] sm:$0xff]
  %v842 = vld [vmem:[%s0 + $0x18c0] sm:$0xff]
  %v843 = vld [vmem:[%s0 + $0x18c8] sm:$0xff]
  %v844 = vld [vmem:[%s0 + $0x18d0] sm:$0xff]
  %v845 = vld [vmem:[%s0 + $0x18d8] sm:$0xff]
  %v846 = vld [vmem:[%s0 + $0x18e0] sm:$0xff]
  %v847 = vld [vmem:[%s0 + $0x18e8] sm:$0xff]
  %v848 = vld [vmem:[%s0 + $0x18f0] sm:$0xff]
  %v849 = vld [vmem:[%s0 + $0x18f8] sm:$0xff]
  %v850 = vld [vmem:[%s0 + $0x1900] sm:$0xff]
  %v851 = vld [vmem:[%s0 + $0x1908] sm:$0xff]
  %v852 = vld [vmem:[%s0 + $0x1910] sm:$0xff]
  %v853 = vld [vmem:[%s0 + $0x1918] sm:$0xff]
  %v854 = vld [vmem:[%s0 + $0x1920] sm:$0xff]
  %v855 = vld [vmem:[%s0 + $0x1928] sm:$0xff]
  %v856 = vld [vmem:[%s0 + $0x1930] sm:$0xff]
  %v857 = vld [vmem:[%s0 + $0x1938] sm:$0xff]
  %v858 = vld [vmem:[%s0 + $0x1940] sm:$0xff]
  %v859 = vld [vmem:[%s0 + $0x1948] sm:$0xff]
  %v860 = vld [vmem:[%s0 + $0x1950] sm:$0xff]
  %v861 = vld [vmem:[%s0 + $0x1958] sm:$0xff]
  %v862 = vld [vmem:[%s0 + $0x1960] sm:$0xff]
  %v863 = vld [vmem:[%s0 + $0x1968] sm:$0xff]
  %v864 = vld [vmem:[%s0 + $0x1970] sm:$0xff]
  %v865 = vld [vmem:[%s0 + $0x1978] sm:$0xff]
  %v866 = vld [vmem:[%s0 + $0x1980] sm:$0xff]
  %v867 = vld [vmem:[%s0 + $0x1988] sm:$0xff]
  %v868 = vld [vmem:[%s0 + $0x1990] sm:$0xff]
  %v869 = vld [vmem:[%s0 + $0x1998] sm:$0xff]
  %v870 = vld [vmem:[%s0 + $0x19a0] sm:$0xff]
  %v871 = vld [vmem:[%s0 + $0x19a8] sm:$0xff]
  %v872 = vld [vmem:[%s0 + $0x19b0] sm:$0xff]
  %v873 = vld [vmem:[%s0 + $0x19b8] sm:$0xff]
  %v874 = vld [vmem:[%s0 + $0x19c0] sm:$0xff]
  %v875 = vld [vmem:[%s0 + $0x19c8] sm:$0xff]
  %v876 = vld [vmem:[%s0 + $0x19d0] sm:$0xff]
  %v877 = vld [vmem:[%s0 + $0x19d8] sm:$0xff]
  %v878 = vld [vmem:[%s0 + $0x19e0] sm:$0xff]
  %v879 = vld [vmem:[%s0 + $0x19e8] sm:$0xff]
  %v880 = vld [vmem:[%s0 + $0x19f0] sm:$0xff]
  %v881 = vld [vmem:[%s0 + $0x19f8] sm:$0xff]
  %v882 = vld [vmem:[%s0 + $0x1a00] sm:$0xff]
  %v883 = vld [vmem:[%s0 + $0x1a08] sm:$0xff]
  %v884 = vld [vmem:[%s0 + $0x1a10] sm:$0xff]
  %v885 = vld [vmem:[%s0 + $0x1a18] sm:$0xff]
  %v886 = vld [vmem:[%s0 + $0x1a20] sm:$0xff]
  %v887 = vld [vmem:[%s0 + $0x1a28] sm:$0xff]
  %v888 = vld [vmem:[%s0 + $0x1a30] sm:$0xff]
  %v889 = vld [vmem:[%s0 + $0x1a38] sm:$0xff]
  %v890 = vld [vmem:[%s0 + $0x1a40] sm:$0xff]
  %v891 = vld [vmem:[%s0 + $0x1a48] sm:$0xff]
  %v892 = vld [vmem:[%s0 + $0x1a50] sm:$0xff]
  %v893 = vld [vmem:[%s0 + $0x1a58] sm:$0xff]
  %v894 = vld [vmem:[%s0 + $0x1a60] sm:$0xff]
  %v895 = vld [vmem:[%s0 + $0x1a68] sm:$0xff]
  %v896 = vld [vmem:[%s0 + $0x1a70] sm:$0xff]
  %v897 = vld [vmem:[%s0 + $0x1a78] sm:$0xff]
  %v898 = vld [vmem:[%s0 + $0x1a80] sm:$0xff]
  %v899 = vld [vmem:[%s0 + $0x1a88] sm:$0xff]
  %v900 = vld [vmem:[%s0 + $0x1a90] sm:$0xff]
  %v901 = vld [vmem:[%s0 + $0x1a98] sm:$0xff]
  %v902 = vld [vmem:[%s0 + $0x1aa0] sm:$0xff]
  %v903 = vld [vmem:[%s0 + $0x1aa8] sm:$0xff]
  %v904 = vld [vmem:[%s0 + $0x1ab0] sm:$0xff]
  %v905 = vld [vmem:[%s0 + $0x1ab8] sm:$0xff]
  %v906 = vld [vmem:[%s0 + $0x1ac0] sm:$0xff]
  %v907 = vld [vmem:[%s0 + $0x1ac8] sm:$0xff]
  %v908 = vld [vmem:[%s0 + $0x1ad0] sm:$0xff]
  %v909 = vld [vmem:[%s0 + $0x1ad8] sm:$0xff]
  %v910 = vld [vmem:[%s0 + $0x1ae0] sm:$0xff]
  %v911 = vld [vmem:[%s0 + $0x1ae8] sm:$0xff]
  %v912 = vld [vmem:[%s0 + $0x1af0] sm:$0xff]
  %v913 = vld [vmem:[%s0 + $0x1af8] sm:$0xff]
  %v914 = vld [vmem:[%s0 + $0x1b00] sm:$0xff]
  %v915 = vld [vmem:[%s0 + $0x1b08] sm:$0xff]
  %v916 = vld [vmem:[%s0 + $0x1b10] sm:$0xff]
  %v917 = vld [vmem:[%s0 + $0x1b18] sm:$0xff]
  %v918 = vld [vmem:[%s0 + $0x1b20] sm:$0xff]
  %v919 = vld [vmem:[%s0 + $0x1b28] sm:$0xff]
  %v920 = vld [vmem:[%s0 + $0x1b30] sm:$0xff]
  %v921 = vld [vmem:[%s0 + $0x1b38] sm:$0xff]
  %v922 = vld [vmem:[%s0 + $0x1b40] sm:$0xff]
  %v923 = vld [vmem:[%s0 + $0x1b48] sm:$0xff]
  %v924 = vld [vmem:[%s0 + $0x1b50] sm:$0xff]
  %v925 = vld [vmem:[%s0 + $0x1b58] sm:$0xff]
  %v926 = vld [vmem:[%s0 + $0x1b60] sm:$0xff]
  %v927 = vld [vmem:[%s0 + $0x1b68] sm:$0xff]
  %v928 = vld [vmem:[%s0 + $0x1b70] sm:$0xff]
  %v929 = vld [vmem:[%s0 + $0x1b78] sm:$0xff]
  %v930 = vld [vmem:[%s0 + $0x1b80] sm:$0xff]
  %v931 = vld [vmem:[%s0 + $0x1b88] sm:$0xff]
  %v932 = vld [vmem:[%s0 + $0x1b90] sm:$0xff]
  %v933 = vld [vmem:[%s0 + $0x1b98] sm:$0xff]
  %v934 = vld [vmem:[%s0 + $0x1ba0] sm:$0xff]
  %v935 = vld [vmem:[%s0 + $0x1ba8] sm:$0xff]
  %v936 = vld [vmem:[%s0 + $0x1bb0] sm:$0xff]
  %v937 = vld [vmem:[%s0 + $0x1bb8] sm:$0xff]
  %v938 = vld [vmem:[%s0 + $0x1bc0] sm:$0xff]
  %v939 = vld [vmem:[%s0 + $0x1bc8] sm:$0xff]
  %v940 = vld [vmem:[%s0 + $0x1bd0] sm:$0xff]
  %v941 = vld [vmem:[%s0 + $0x1bd8] sm:$0xff]
  %v942 = vld [vmem:[%s0 + $0x1be0] sm:$0xff]
  %v943 = vld [vmem:[%s0 + $0x1be8] sm:$0xff]
  %v944 = vld [vmem:[%s0 + $0x1bf0] sm:$0xff]
  %v945 = vld [vmem:[%s0 + $0x1bf8] sm:$0xff]
  %v946 = vld [vmem:[%s0 + $0x1c00] sm:$0xff]
  %v947 = vld [vmem:[%s0 + $0x1c08] sm:$0xff]
  %v948 = vld [vmem:[%s0 + $0x1c10] sm:$0xff]
  %v949 = vld [vmem:[%s0 + $0x1c18] sm:$0xff]
  %v950 = vld [vmem:[%s0 + $0x1c20] sm:$0xff]
  %v951 = vld [vmem:[%s0 + $0x1c28] sm:$0xff]
  %v952 = vld [vmem:[%s0 + $0x1c30] sm:$0xff]
  %v953 = vld [vmem:[%s0 + $0x1c38] sm:$0xff]
  %v954 = vld [vmem:[%s0 + $0x1c40] sm:$0xff]
  %v955 = vld [vmem:[%s0 + $0x1c48] sm:$0xff]
  %v956 = vld [vmem:[%s0 + $0x1c50] sm:$0xff]
  %v957 = vld [vmem:[%s0 + $0x1c58] sm:$0xff]
  %v958 = vld [vmem:[%s0 + $0x1c60] sm:$0xff]
  %v959 = vld [vmem:[%s0 + $0x1c68] sm:$0xff]
  %v960 = vld [vmem:[%s0 + $0x1c70] sm:$0xff]
  %v961 = vld [vmem:[%s0 + $0x1c78] sm:$0xff]
  %v962 = vld [vmem:[%s0 + $0x1c80] sm:$0xff]
  %v963 = vld [vmem:[%s0 + $0x1c88] sm:$0xff]
  %v964 = vld [vmem:[%s0 + $0x1c90] sm:$0xff]
  %v965 = vld [vmem:[%s0 + $0x1c98] sm:$0xff]
  %v966 = vld [vmem:[%s0 + $0x1ca0] sm:$0xff]
  %v967 = vld [vmem:[%s0 + $0x1ca8] sm:$0xff]
  %v968 = vld [vmem:[%s0 + $0x1cb0] sm:$0xff]
  %v969 = vld [vmem:[%s0 + $0x1cb8] sm:$0xff]
  %v970 = vld [vmem:[%s0 + $0x1cc0] sm:$0xff]
  %v971 = vld [vmem:[%s0 + $0x1cc8] sm:$0xff]
  %v972 = vld [vmem:[%s0 + $0x1cd0] sm:$0xff]
  %v973 = vld [vmem:[%s0 + $0x1cd8] sm:$0xff]
  %v974 = vld [vmem:[%s0 + $0x1ce0] sm:$0xff]
  %v975 = vld [vmem:[%s0 + $0x1ce8] sm:$0xff]
  %v976 = vld [vmem:[%s0 + $0x1cf0] sm:$0xff]
  %v977 = vld [vmem:[%s0 + $0x1cf8] sm:$0xff]
  %v978 = vld [vmem:[%s0 + $0x1d00] sm:$0xff]
  %v979 = vld [vmem:[%s0 + $0x1d08] sm:$0xff]
  %v980 = vld [vmem:[%s0 + $0x1d10] sm:$0xff]
  %v981 = vld [vmem:[%s0 + $0x1d18] sm:$0xff]
  %v982 = vld [vmem:[%s0 + $0x1d20] sm:$0xff]
  %v983 = vld [vmem:[%s0 + $0x1d28] sm:$0xff]
  %v984 = vld [vmem:[%s0 + $0x1d30] sm:$0xff]
  %v985 = vld [vmem:[%s0 + $0x1d38] sm:$0xff]
  %v986 = vld [vmem:[%s0 + $0x1d40] sm:$0xff]
  %v987 = vld [vmem:[%s0 + $0x1d48] sm:$0xff]
  %v988 = vld [vmem:[%s0 + $0x1d50] sm:$0xff]
  %v989 = vld [vmem:[%s0 + $0x1d58] sm:$0xff]
  %v990 = vld [vmem:[%s0 + $0x1d60] sm:$0xff]
  %v991 = vld [vmem:[%s0 + $0x1d68] sm:$0xff]
  %v992 = vld [vmem:[%s0 + $0x1d70] sm:$0xff]
  %v993 = vld [vmem:[%s0 + $0x1d78] sm:$0xff]
  %v994 = vld [vmem:[%s0 + $0x1d80] sm:$0xff]
  %v995 = vld [vmem:[%s0 + $0x1d88] sm:$0xff]
  %v996 = vld [vmem:[%s0 + $0x1d90] sm:$0xff]
  %v997 = vld [vmem:[%s0 + $0x1d98] sm:$0xff]
  %v998 = vld [vmem:[%s0 + $0x1da0] sm:$0xff]
  %v999 = vld [vmem:[%s0 + $0x1da8] sm:$0xff]
  %v1000 = vld [vmem:[%s0 + $0x1db0] sm:$0xff]
  %v1001 = vld [vmem:[%s0 + $0x1db8] sm:$0xff]
  %v1002 = vld [vmem:[%s0 + $0x1dc0] sm:$0xff]
  %v1003 = vld [vmem:[%s0 + $0x1dc8] sm:$0xff]
  %v1004 = vld [vmem:[%s0 + $0x1dd0] sm:$0xff]
  %v1005 = vld [vmem:[%s0 + $0x1dd8] sm:$0xff]
  %v1006 = vld [vmem:[%s0 + $0x1de0] sm:$0xff]
  %v1007 = vld [vmem:[%s0 + $0x1de8] sm:$0xff]
  %v1008 = vld [vmem:[%s0 + $0x1df0] sm:$0xff]
  %v1009 = vld [vmem:[%s0 + $0x1df8] sm:$0xff]
  %v1010 = vld [vmem:[%s0 + $0x1e00] sm:$0xff]
  %v1011 = vld [vmem:[%s0 + $0x1e08] sm:$0xff]
  %v1012 = vld [vmem:[%s0 + $0x1e10] sm:$0xff]
  %v1013 = vld [vmem:[%s0 + $0x1e18] sm:$0xff]
  %v1014 = vld [vmem:[%s0 + $0x1e20] sm:$0xff]
  %v1015 = vld [vmem:[%s0 + $0x1e28] sm:$0xff]
  %v1016 = vld [vmem:[%s0 + $0x1e30] sm:$0xff]
  %v1017 = vld [vmem:[%s0 + $0x1e38] sm:$0xff]
  %v1018 = vld [vmem:[%s0 + $0x1e40] sm:$0xff]
  %v1019 = vld [vmem:[%s0 + $0x1e48] sm:$0xff]
  %v1020 = vld [vmem:[%s0 + $0x1e50] sm:$0xff]
  %v1021 = vld [vmem:[%s0 + $0x1e58] sm:$0xff]
  %v1022 = vld [vmem:[%s0 + $0x1e60] sm:$0xff]
  %v1023 = vld [vmem:[%s0 + $0x1e68] sm:$0xff]
  %v1024 = vld [vmem:[%s0 + $0x1e70] sm:$0xff]
  %v1025 = vld [vmem:[%s0 + $0x1e78] sm:$0xff]
  %v1026 = vld [vmem:[%s0 + $0x1e80] sm:$0xff]
  %v1027 = vld [vmem:[%s0 + $0x1e88] sm:$0xff]
  %v1028 = vld [vmem:[%s0 + $0x1e90] sm:$0xff]
  %v1029 = vld [vmem:[%s0 + $0x1e98] sm:$0xff]
  %v1030 = vld [vmem:[%s0 + $0x1ea0] sm:$0xff]
  %v1031 = vld [vmem:[%s0 + $0x1ea8] sm:$0xff]
  %v1032 = vld [vmem:[%s0 + $0x1eb0] sm:$0xff]
  %v1033 = vld [vmem:[%s0 + $0x1eb8] sm:$0xff]
  %v1034 = vld [vmem:[%s0 + $0x1ec0] sm:$0xff]
  %v1035 = vld [vmem:[%s0 + $0x1ec8] sm:$0xff]
  %v1036 = vld [vmem:[%s0 + $0x1ed0] sm:$0xff]
  %v1037 = vld [vmem:[%s0 + $0x1ed8] sm:$0xff]
  %v1038 = vld [vmem:[%s0 + $0x1ee0] sm:$0xff]
  %v1039 = vld [vmem:[%s0 + $0x1ee8] sm:$0xff]
  %v1040 = vld [vmem:[%s0 + $0x1ef0] sm:$0xff]
  %v1041 = vld [vmem:[%s0 + $0x1ef8] sm:$0xff]
  %v1042 = vld [vmem:[%s0 + $0x1f00] sm:$0xff]
  %v1043 = vld [vmem:[%s0 + $0x1f08] sm:$0xff]
  %v1044 = vld [vmem:[%s0 + $0x1f10] sm:$0xff]
  %v1045 = vld [vmem:[%s0 + $0x1f18] sm:$0xff]
  %v1046 = vld [vmem:[%s0 + $0x1f20] sm:$0xff]
  %v1047 = vld [vmem:[%s0 + $0x1f28] sm:$0xff]
  %v1048 = vld [vmem:[%s0 + $0x1f30] sm:$0xff]
  %v1049 = vld [vmem:[%s0 + $0x1f38] sm:$0xff]
  %v1050 = vld [vmem:[%s0 + $0x1f40] sm:$0xff]
  %v1051 = vld [vmem:[%s0 + $0x1f48] sm:$0xff]
  %v1052 = vld [vmem:[%s0 + $0x1f50] sm:$0xff]
  %v1053 = vld [vmem:[%s0 + $0x1f58] sm:$0xff]
  %v1054 = vld [vmem:[%s0 + $0x1f60] sm:$0xff]
  %v1055 = vld [vmem:[%s0 + $0x1f68] sm:$0xff]
  %v1056 = vld [vmem:[%s0 + $0x1f70] sm:$0xff]
  %v1057 = vld [vmem:[%s0 + $0x1f78] sm:$0xff]
  %v1058 = vld [vmem:[%s2] sm:$0xff]
  %v1059 = vld [vmem:[%s2 + $0x8] sm:$0xff]
  %v1060 = vld [vmem:[%s2 + $0x10] sm:$0xff]
  %v1061 = vld [vmem:[%s2 + $0x18] sm:$0xff]
  %1063 = vset.pattern.permute.xlu0 0
  %1064 = vperm.xlu0 %1063, %v1058
  %v1065 = vpop.permute.xlu0 %1064
  %1068 = vset.pattern.permute.xlu0 0
  %1069 = vperm.xlu0 %1068, %v1059
  %v1070 = vpop.permute.xlu0 %1069
  %1073 = vset.pattern.permute.xlu0 0
  %1074 = vperm.xlu0 %1073, %v1060
  %v1075 = vpop.permute.xlu0 %1074
  %1078 = vset.pattern.permute.xlu0 0
  %1079 = vperm.xlu0 %1078, %v1061
  %v1080 = vpop.permute.xlu0 %1079
  %1082 = vmatpush.msra.mxu0 %v155
  %1083 = vmatpush.msra.mxu0 %v148
  %1084 = vmatpush.msra.mxu0 %v141
  %1085 = vmatpush.msra.mxu0 %v134
  %1086 = vmatpush.msra.mxu0 %v127
  %1087 = vmatpush.msra.mxu0 %v120
  %1088 = vmatpush.msra.mxu0 %v113
  %1089 = vmatpush.msra.mxu0 %v106
  %1090 = vmatpush.msra.mxu0 %v99
  %1091 = vmatpush.msra.mxu0 %v92
  %1092 = vmatpush.msra.mxu0 %v85
  %1093 = vmatpush.msra.mxu0 %v78
  %1094 = vmatpush.msra.mxu0 %v71
  %1095 = vmatpush.msra.mxu0 %v64
  %1096 = vmatpush.msra.mxu0 %v57
  %1097 = vmatpush.msra.mxu0 %v50
  %1098 = vmatmul.f32.gmra.mxu0 %v14
  %v1099 = vpop.f32.mrf.mxu0
  %v1100 = vadd.f32 %v1065, %v1099
  %1101 = vmatmul.f32.gmra.mxu0 %v23
  %v1102 = vpop.f32.mrf.mxu0
  %v1103 = vadd.f32 %v1070, %v1102
  %1104 = vmatmul.f32.gmra.mxu0 %v32
  %v1105 = vpop.f32.mrf.mxu0
  %v1106 = vadd.f32 %v1075, %v1105
  %1107 = vmatmul.f32.gmra.mxu0 %v41
  %v1108 = vpop.f32.mrf.mxu0
  %v1109 = vadd.f32 %v1080, %v1108
  %1110 = vdwg.mxu0
  %1111 = vmatpush.msra.mxu0 %v267
  %1112 = vmatpush.msra.mxu0 %v260
  %1113 = vmatpush.msra.mxu0 %v253
  %1114 = vmatpush.msra.mxu0 %v246
  %1115 = vmatpush.msra.mxu0 %v239
  %1116 = vmatpush.msra.mxu0 %v232
  %1117 = vmatpush.msra.mxu0 %v225
  %1118 = vmatpush.msra.mxu0 %v218
  %1119 = vmatpush.msra.mxu0 %v211
  %1120 = vmatpush.msra.mxu0 %v204
  %1121 = vmatpush.msra.mxu0 %v197
  %1122 = vmatpush.msra.mxu0 %v190
  %1123 = vmatpush.msra.mxu0 %v183
  %1124 = vmatpush.msra.mxu0 %v176
  %1125 = vmatpush.msra.mxu0 %v169
  %1126 = vmatpush.msra.mxu0 %v162
  %1127 = vmatmul.f32.gmra.mxu0 %v15
  %v1128 = vpop.f32.mrf.mxu0
  %v1129 = vadd.f32 %v1100, %v1128
  %1130 = vmatmul.f32.gmra.mxu0 %v24
  %v1131 = vpop.f32.mrf.mxu0
  %v1132 = vadd.f32 %v1103, %v1131
  %1133 = vmatmul.f32.gmra.mxu0 %v33
  %v1134 = vpop.f32.mrf.mxu0
  %v1135 = vadd.f32 %v1106, %v1134
  %1136 = vmatmul.f32.gmra.mxu0 %v42
  %v1137 = vpop.f32.mrf.mxu0
  %v1138 = vadd.f32 %v1109, %v1137
  %1139 = vdwg.mxu0
  %1140 = vmatpush.msra.mxu0 %v379
  %1141 = vmatpush.msra.mxu0 %v372
  %1142 = vmatpush.msra.mxu0 %v365
  %1143 = vmatpush.msra.mxu0 %v358
  %1144 = vmatpush.msra.mxu0 %v351
  %1145 = vmatpush.msra.mxu0 %v344
  %1146 = vmatpush.msra.mxu0 %v337
  %1147 = vmatpush.msra.mxu0 %v330
  %1148 = vmatpush.msra.mxu0 %v323
  %1149 = vmatpush.msra.mxu0 %v316
  %1150 = vmatpush.msra.mxu0 %v309
  %1151 = vmatpush.msra.mxu0 %v302
  %1152 = vmatpush.msra.mxu0 %v295
  %1153 = vmatpush.msra.mxu0 %v288
  %1154 = vmatpush.msra.mxu0 %v281
  %1155 = vmatpush.msra.mxu0 %v274
  %1156 = vmatmul.f32.gmra.mxu0 %v16
  %v1157 = vpop.f32.mrf.mxu0
  %v1158 = vadd.f32 %v1129, %v1157
  %1159 = vmatmul.f32.gmra.mxu0 %v25
  %v1160 = vpop.f32.mrf.mxu0
  %v1161 = vadd.f32 %v1132, %v1160
  %1162 = vmatmul.f32.gmra.mxu0 %v34
  %v1163 = vpop.f32.mrf.mxu0
  %v1164 = vadd.f32 %v1135, %v1163
  %1165 = vmatmul.f32.gmra.mxu0 %v43
  %v1166 = vpop.f32.mrf.mxu0
  %v1167 = vadd.f32 %v1138, %v1166
  %1168 = vdwg.mxu0
  %1169 = vmatpush.msra.mxu0 %v491
  %1170 = vmatpush.msra.mxu0 %v484
  %1171 = vmatpush.msra.mxu0 %v477
  %1172 = vmatpush.msra.mxu0 %v470
  %1173 = vmatpush.msra.mxu0 %v463
  %1174 = vmatpush.msra.mxu0 %v456
  %1175 = vmatpush.msra.mxu0 %v449
  %1176 = vmatpush.msra.mxu0 %v442
  %1177 = vmatpush.msra.mxu0 %v435
  %1178 = vmatpush.msra.mxu0 %v428
  %1179 = vmatpush.msra.mxu0 %v421
  %1180 = vmatpush.msra.mxu0 %v414
  %1181 = vmatpush.msra.mxu0 %v407
  %1182 = vmatpush.msra.mxu0 %v400
  %1183 = vmatpush.msra.mxu0 %v393
  %1184 = vmatpush.msra.mxu0 %v386
  %1185 = vmatmul.f32.gmra.mxu0 %v17
  %v1186 = vpop.f32.mrf.mxu0
  %v1187 = vadd.f32 %v1158, %v1186
  %1188 = vmatmul.f32.gmra.mxu0 %v26
  %v1189 = vpop.f32.mrf.mxu0
  %v1190 = vadd.f32 %v1161, %v1189
  %1191 = vmatmul.f32.gmra.mxu0 %v35
  %v1192 = vpop.f32.mrf.mxu0
  %v1193 = vadd.f32 %v1164, %v1192
  %1194 = vmatmul.f32.gmra.mxu0 %v44
  %v1195 = vpop.f32.mrf.mxu0
  %v1196 = vadd.f32 %v1167, %v1195
  %1197 = vdwg.mxu0
  %1198 = vmatpush.msra.mxu0 %v603
  %1199 = vmatpush.msra.mxu0 %v596
  %1200 = vmatpush.msra.mxu0 %v589
  %1201 = vmatpush.msra.mxu0 %v582
  %1202 = vmatpush.msra.mxu0 %v575
  %1203 = vmatpush.msra.mxu0 %v568
  %1204 = vmatpush.msra.mxu0 %v561
  %1205 = vmatpush.msra.mxu0 %v554
  %1206 = vmatpush.msra.mxu0 %v547
  %1207 = vmatpush.msra.mxu0 %v540
  %1208 = vmatpush.msra.mxu0 %v533
  %1209 = vmatpush.msra.mxu0 %v526
  %1210 = vmatpush.msra.mxu0 %v519
  %1211 = vmatpush.msra.mxu0 %v512
  %1212 = vmatpush.msra.mxu0 %v505
  %1213 = vmatpush.msra.mxu0 %v498
  %1214 = vmatmul.f32.gmra.mxu0 %v18
  %v1215 = vpop.f32.mrf.mxu0
  %v1216 = vadd.f32 %v1187, %v1215
  %1217 = vmatmul.f32.gmra.mxu0 %v27
  %v1218 = vpop.f32.mrf.mxu0
  %v1219 = vadd.f32 %v1190, %v1218
  %1220 = vmatmul.f32.gmra.mxu0 %v36
  %v1221 = vpop.f32.mrf.mxu0
  %v1222 = vadd.f32 %v1193, %v1221
  %1223 = vmatmul.f32.gmra.mxu0 %v45
  %v1224 = vpop.f32.mrf.mxu0
  %v1225 = vadd.f32 %v1196, %v1224
  %1226 = vdwg.mxu0
  %1227 = vmatpush.msra.mxu0 %v715
  %1228 = vmatpush.msra.mxu0 %v708
  %1229 = vmatpush.msra.mxu0 %v701
  %1230 = vmatpush.msra.mxu0 %v694
  %1231 = vmatpush.msra.mxu0 %v687
  %1232 = vmatpush.msra.mxu0 %v680
  %1233 = vmatpush.msra.mxu0 %v673
  %1234 = vmatpush.msra.mxu0 %v666
  %1235 = vmatpush.msra.mxu0 %v659
  %1236 = vmatpush.msra.mxu0 %v652
  %1237 = vmatpush.msra.mxu0 %v645
  %1238 = vmatpush.msra.mxu0 %v638
  %1239 = vmatpush.msra.mxu0 %v631
  %1240 = vmatpush.msra.mxu0 %v624
  %1241 = vmatpush.msra.mxu0 %v617
  %1242 = vmatpush.msra.mxu0 %v610
  %1243 = vmatmul.f32.gmra.mxu0 %v19
  %v1244 = vpop.f32.mrf.mxu0
  %v1245 = vadd.f32 %v1216, %v1244
  %1246 = vmatmul.f32.gmra.mxu0 %v28
  %v1247 = vpop.f32.mrf.mxu0
  %v1248 = vadd.f32 %v1219, %v1247
  %1249 = vmatmul.f32.gmra.mxu0 %v37
  %v1250 = vpop.f32.mrf.mxu0
  %v1251 = vadd.f32 %v1222, %v1250
  %1252 = vmatmul.f32.gmra.mxu0 %v46
  %v1253 = vpop.f32.mrf.mxu0
  %v1254 = vadd.f32 %v1225, %v1253
  %1255 = vdwg.mxu0
  %1256 = vmatpush.msra.mxu0 %v827
  %1257 = vmatpush.msra.mxu0 %v820
  %1258 = vmatpush.msra.mxu0 %v813
  %1259 = vmatpush.msra.mxu0 %v806
  %1260 = vmatpush.msra.mxu0 %v799
  %1261 = vmatpush.msra.mxu0 %v792
  %1262 = vmatpush.msra.mxu0 %v785
  %1263 = vmatpush.msra.mxu0 %v778
  %1264 = vmatpush.msra.mxu0 %v771
  %1265 = vmatpush.msra.mxu0 %v764
  %1266 = vmatpush.msra.mxu0 %v757
  %1267 = vmatpush.msra.mxu0 %v750
  %1268 = vmatpush.msra.mxu0 %v743
  %1269 = vmatpush.msra.mxu0 %v736
  %1270 = vmatpush.msra.mxu0 %v729
  %1271 = vmatpush.msra.mxu0 %v722
  %1272 = vmatmul.f32.gmra.mxu0 %v20
  %v1273 = vpop.f32.mrf.mxu0
  %v1274 = vadd.f32 %v1245, %v1273
  %1275 = vmatmul.f32.gmra.mxu0 %v29
  %v1276 = vpop.f32.mrf.mxu0
  %v1277 = vadd.f32 %v1248, %v1276
  %1278 = vmatmul.f32.gmra.mxu0 %v38
  %v1279 = vpop.f32.mrf.mxu0
  %v1280 = vadd.f32 %v1251, %v1279
  %1281 = vmatmul.f32.gmra.mxu0 %v47
  %v1282 = vpop.f32.mrf.mxu0
  %v1283 = vadd.f32 %v1254, %v1282
  %1284 = vdwg.mxu0
  %1285 = vmatpush.msra.mxu0 %v939
  %1286 = vmatpush.msra.mxu0 %v932
  %1287 = vmatpush.msra.mxu0 %v925
  %1288 = vmatpush.msra.mxu0 %v918
  %1289 = vmatpush.msra.mxu0 %v911
  %1290 = vmatpush.msra.mxu0 %v904
  %1291 = vmatpush.msra.mxu0 %v897
  %1292 = vmatpush.msra.mxu0 %v890
  %1293 = vmatpush.msra.mxu0 %v883
  %1294 = vmatpush.msra.mxu0 %v876
  %1295 = vmatpush.msra.mxu0 %v869
  %1296 = vmatpush.msra.mxu0 %v862
  %1297 = vmatpush.msra.mxu0 %v855
  %1298 = vmatpush.msra.mxu0 %v848
  %1299 = vmatpush.msra.mxu0 %v841
  %1300 = vmatpush.msra.mxu0 %v834
  %1301 = vmatmul.f32.gmra.mxu0 %v21
  %v1302 = vpop.f32.mrf.mxu0
  %v1303 = vadd.f32 %v1274, %v1302
  %1304 = vmatmul.f32.gmra.mxu0 %v30
  %v1305 = vpop.f32.mrf.mxu0
  %v1306 = vadd.f32 %v1277, %v1305
  %1307 = vmatmul.f32.gmra.mxu0 %v39
  %v1308 = vpop.f32.mrf.mxu0
  %v1309 = vadd.f32 %v1280, %v1308
  %1310 = vmatmul.f32.gmra.mxu0 %v48
  %v1311 = vpop.f32.mrf.mxu0
  %v1312 = vadd.f32 %v1283, %v1311
  %1313 = vdwg.mxu0
  %1314 = vmatpush.msra.mxu0 %v1051
  %1315 = vmatpush.msra.mxu0 %v1044
  %1316 = vmatpush.msra.mxu0 %v1037
  %1317 = vmatpush.msra.mxu0 %v1030
  %1318 = vmatpush.msra.mxu0 %v1023
  %1319 = vmatpush.msra.mxu0 %v1016
  %1320 = vmatpush.msra.mxu0 %v1009
  %1321 = vmatpush.msra.mxu0 %v1002
  %1322 = vmatpush.msra.mxu0 %v995
  %1323 = vmatpush.msra.mxu0 %v988
  %1324 = vmatpush.msra.mxu0 %v981
  %1325 = vmatpush.msra.mxu0 %v974
  %1326 = vmatpush.msra.mxu0 %v967
  %1327 = vmatpush.msra.mxu0 %v960
  %1328 = vmatpush.msra.mxu0 %v953
  %1329 = vmatpush.msra.mxu0 %v946
  %1330 = vmatmul.f32.gmra.mxu0 %v22
  %v1331 = vpop.f32.mrf.mxu0
  %v1332 = vadd.f32 %v1303, %v1331
  %1333 = vmatmul.f32.gmra.mxu0 %v31
  %v1334 = vpop.f32.mrf.mxu0
  %v1335 = vadd.f32 %v1306, %v1334
  %1336 = vmatmul.f32.gmra.mxu0 %v40
  %v1337 = vpop.f32.mrf.mxu0
  %v1338 = vadd.f32 %v1309, %v1337
  %1339 = vmatmul.f32.gmra.mxu0 %v49
  %v1340 = vpop.f32.mrf.mxu0
  %v1341 = vadd.f32 %v1312, %v1340
  %1342 = vdwg.mxu0
  %1343 = vmatpush.msra.mxu0 %v156
  %1344 = vmatpush.msra.mxu0 %v149
  %1345 = vmatpush.msra.mxu0 %v142
  %1346 = vmatpush.msra.mxu0 %v135
  %1347 = vmatpush.msra.mxu0 %v128
  %1348 = vmatpush.msra.mxu0 %v121
  %1349 = vmatpush.msra.mxu0 %v114
  %1350 = vmatpush.msra.mxu0 %v107
  %1351 = vmatpush.msra.mxu0 %v100
  %1352 = vmatpush.msra.mxu0 %v93
  %1353 = vmatpush.msra.mxu0 %v86
  %1354 = vmatpush.msra.mxu0 %v79
  %1355 = vmatpush.msra.mxu0 %v72
  %1356 = vmatpush.msra.mxu0 %v65
  %1357 = vmatpush.msra.mxu0 %v58
  %1358 = vmatpush.msra.mxu0 %v51
  %1359 = vmatmul.f32.gmra.mxu0 %v14
  %v1360 = vpop.f32.mrf.mxu0
  %v1361 = vadd.f32 %v1065, %v1360
  %1362 = vmatmul.f32.gmra.mxu0 %v23
  %v1363 = vpop.f32.mrf.mxu0
  %v1364 = vadd.f32 %v1070, %v1363
  %1365 = vmatmul.f32.gmra.mxu0 %v32
  %v1366 = vpop.f32.mrf.mxu0
  %v1367 = vadd.f32 %v1075, %v1366
  %1368 = vmatmul.f32.gmra.mxu0 %v41
  %v1369 = vpop.f32.mrf.mxu0
  %v1370 = vadd.f32 %v1080, %v1369
  %1371 = vdwg.mxu0
  %1372 = vmatpush.msra.mxu0 %v268
  %1373 = vmatpush.msra.mxu0 %v261
  %1374 = vmatpush.msra.mxu0 %v254
  %1375 = vmatpush.msra.mxu0 %v247
  %1376 = vmatpush.msra.mxu0 %v240
  %1377 = vmatpush.msra.mxu0 %v233
  %1378 = vmatpush.msra.mxu0 %v226
  %1379 = vmatpush.msra.mxu0 %v219
  %1380 = vmatpush.msra.mxu0 %v212
  %1381 = vmatpush.msra.mxu0 %v205
  %1382 = vmatpush.msra.mxu0 %v198
  %1383 = vmatpush.msra.mxu0 %v191
  %1384 = vmatpush.msra.mxu0 %v184
  %1385 = vmatpush.msra.mxu0 %v177
  %1386 = vmatpush.msra.mxu0 %v170
  %1387 = vmatpush.msra.mxu0 %v163
  %1388 = vmatmul.f32.gmra.mxu0 %v15
  %v1389 = vpop.f32.mrf.mxu0
  %v1390 = vadd.f32 %v1361, %v1389
  %1391 = vmatmul.f32.gmra.mxu0 %v24
  %v1392 = vpop.f32.mrf.mxu0
  %v1393 = vadd.f32 %v1364, %v1392
  %1394 = vmatmul.f32.gmra.mxu0 %v33
  %v1395 = vpop.f32.mrf.mxu0
  %v1396 = vadd.f32 %v1367, %v1395
  %1397 = vmatmul.f32.gmra.mxu0 %v42
  %v1398 = vpop.f32.mrf.mxu0
  %v1399 = vadd.f32 %v1370, %v1398
  %1400 = vdwg.mxu0
  %1401 = vmatpush.msra.mxu0 %v380
  %1402 = vmatpush.msra.mxu0 %v373
  %1403 = vmatpush.msra.mxu0 %v366
  %1404 = vmatpush.msra.mxu0 %v359
  %1405 = vmatpush.msra.mxu0 %v352
  %1406 = vmatpush.msra.mxu0 %v345
  %1407 = vmatpush.msra.mxu0 %v338
  %1408 = vmatpush.msra.mxu0 %v331
  %1409 = vmatpush.msra.mxu0 %v324
  %1410 = vmatpush.msra.mxu0 %v317
  %1411 = vmatpush.msra.mxu0 %v310
  %1412 = vmatpush.msra.mxu0 %v303
  %1413 = vmatpush.msra.mxu0 %v296
  %1414 = vmatpush.msra.mxu0 %v289
  %1415 = vmatpush.msra.mxu0 %v282
  %1416 = vmatpush.msra.mxu0 %v275
  %1417 = vmatmul.f32.gmra.mxu0 %v16
  %v1418 = vpop.f32.mrf.mxu0
  %v1419 = vadd.f32 %v1390, %v1418
  %1420 = vmatmul.f32.gmra.mxu0 %v25
  %v1421 = vpop.f32.mrf.mxu0
  %v1422 = vadd.f32 %v1393, %v1421
  %1423 = vmatmul.f32.gmra.mxu0 %v34
  %v1424 = vpop.f32.mrf.mxu0
  %v1425 = vadd.f32 %v1396, %v1424
  %1426 = vmatmul.f32.gmra.mxu0 %v43
  %v1427 = vpop.f32.mrf.mxu0
  %v1428 = vadd.f32 %v1399, %v1427
  %1429 = vdwg.mxu0
  %1430 = vmatpush.msra.mxu0 %v492
  %1431 = vmatpush.msra.mxu0 %v485
  %1432 = vmatpush.msra.mxu0 %v478
  %1433 = vmatpush.msra.mxu0 %v471
  %1434 = vmatpush.msra.mxu0 %v464
  %1435 = vmatpush.msra.mxu0 %v457
  %1436 = vmatpush.msra.mxu0 %v450
  %1437 = vmatpush.msra.mxu0 %v443
  %1438 = vmatpush.msra.mxu0 %v436
  %1439 = vmatpush.msra.mxu0 %v429
  %1440 = vmatpush.msra.mxu0 %v422
  %1441 = vmatpush.msra.mxu0 %v415
  %1442 = vmatpush.msra.mxu0 %v408
  %1443 = vmatpush.msra.mxu0 %v401
  %1444 = vmatpush.msra.mxu0 %v394
  %1445 = vmatpush.msra.mxu0 %v387
  %1446 = vmatmul.f32.gmra.mxu0 %v17
  %v1447 = vpop.f32.mrf.mxu0
  %v1448 = vadd.f32 %v1419, %v1447
  %1449 = vmatmul.f32.gmra.mxu0 %v26
  %v1450 = vpop.f32.mrf.mxu0
  %v1451 = vadd.f32 %v1422, %v1450
  %1452 = vmatmul.f32.gmra.mxu0 %v35
  %v1453 = vpop.f32.mrf.mxu0
  %v1454 = vadd.f32 %v1425, %v1453
  %1455 = vmatmul.f32.gmra.mxu0 %v44
  %v1456 = vpop.f32.mrf.mxu0
  %v1457 = vadd.f32 %v1428, %v1456
  %1458 = vdwg.mxu0
  %1459 = vmatpush.msra.mxu0 %v604
  %1460 = vmatpush.msra.mxu0 %v597
  %1461 = vmatpush.msra.mxu0 %v590
  %1462 = vmatpush.msra.mxu0 %v583
  %1463 = vmatpush.msra.mxu0 %v576
  %1464 = vmatpush.msra.mxu0 %v569
  %1465 = vmatpush.msra.mxu0 %v562
  %1466 = vmatpush.msra.mxu0 %v555
  %1467 = vmatpush.msra.mxu0 %v548
  %1468 = vmatpush.msra.mxu0 %v541
  %1469 = vmatpush.msra.mxu0 %v534
  %1470 = vmatpush.msra.mxu0 %v527
  %1471 = vmatpush.msra.mxu0 %v520
  %1472 = vmatpush.msra.mxu0 %v513
  %1473 = vmatpush.msra.mxu0 %v506
  %1474 = vmatpush.msra.mxu0 %v499
  %1475 = vmatmul.f32.gmra.mxu0 %v18
  %v1476 = vpop.f32.mrf.mxu0
  %v1477 = vadd.f32 %v1448, %v1476
  %1478 = vmatmul.f32.gmra.mxu0 %v27
  %v1479 = vpop.f32.mrf.mxu0
  %v1480 = vadd.f32 %v1451, %v1479
  %1481 = vmatmul.f32.gmra.mxu0 %v36
  %v1482 = vpop.f32.mrf.mxu0
  %v1483 = vadd.f32 %v1454, %v1482
  %1484 = vmatmul.f32.gmra.mxu0 %v45
  %v1485 = vpop.f32.mrf.mxu0
  %v1486 = vadd.f32 %v1457, %v1485
  %1487 = vdwg.mxu0
  %1488 = vmatpush.msra.mxu0 %v716
  %1489 = vmatpush.msra.mxu0 %v709
  %1490 = vmatpush.msra.mxu0 %v702
  %1491 = vmatpush.msra.mxu0 %v695
  %1492 = vmatpush.msra.mxu0 %v688
  %1493 = vmatpush.msra.mxu0 %v681
  %1494 = vmatpush.msra.mxu0 %v674
  %1495 = vmatpush.msra.mxu0 %v667
  %1496 = vmatpush.msra.mxu0 %v660
  %1497 = vmatpush.msra.mxu0 %v653
  %1498 = vmatpush.msra.mxu0 %v646
  %1499 = vmatpush.msra.mxu0 %v639
  %1500 = vmatpush.msra.mxu0 %v632
  %1501 = vmatpush.msra.mxu0 %v625
  %1502 = vmatpush.msra.mxu0 %v618
  %1503 = vmatpush.msra.mxu0 %v611
  %1504 = vmatmul.f32.gmra.mxu0 %v19
  %v1505 = vpop.f32.mrf.mxu0
  %v1506 = vadd.f32 %v1477, %v1505
  %1507 = vmatmul.f32.gmra.mxu0 %v28
  %v1508 = vpop.f32.mrf.mxu0
  %v1509 = vadd.f32 %v1480, %v1508
  %1510 = vmatmul.f32.gmra.mxu0 %v37
  %v1511 = vpop.f32.mrf.mxu0
  %v1512 = vadd.f32 %v1483, %v1511
  %1513 = vmatmul.f32.gmra.mxu0 %v46
  %v1514 = vpop.f32.mrf.mxu0
  %v1515 = vadd.f32 %v1486, %v1514
  %1516 = vdwg.mxu0
  %1517 = vmatpush.msra.mxu0 %v828
  %1518 = vmatpush.msra.mxu0 %v821
  %1519 = vmatpush.msra.mxu0 %v814
  %1520 = vmatpush.msra.mxu0 %v807
  %1521 = vmatpush.msra.mxu0 %v800
  %1522 = vmatpush.msra.mxu0 %v793
  %1523 = vmatpush.msra.mxu0 %v786
  %1524 = vmatpush.msra.mxu0 %v779
  %1525 = vmatpush.msra.mxu0 %v772
  %1526 = vmatpush.msra.mxu0 %v765
  %1527 = vmatpush.msra.mxu0 %v758
  %1528 = vmatpush.msra.mxu0 %v751
  %1529 = vmatpush.msra.mxu0 %v744
  %1530 = vmatpush.msra.mxu0 %v737
  %1531 = vmatpush.msra.mxu0 %v730
  %1532 = vmatpush.msra.mxu0 %v723
  %1533 = vmatmul.f32.gmra.mxu0 %v20
  %v1534 = vpop.f32.mrf.mxu0
  %v1535 = vadd.f32 %v1506, %v1534
  %1536 = vmatmul.f32.gmra.mxu0 %v29
  %v1537 = vpop.f32.mrf.mxu0
  %v1538 = vadd.f32 %v1509, %v1537
  %1539 = vmatmul.f32.gmra.mxu0 %v38
  %v1540 = vpop.f32.mrf.mxu0
  %v1541 = vadd.f32 %v1512, %v1540
  %1542 = vmatmul.f32.gmra.mxu0 %v47
  %v1543 = vpop.f32.mrf.mxu0
  %v1544 = vadd.f32 %v1515, %v1543
  %1545 = vdwg.mxu0
  %1546 = vmatpush.msra.mxu0 %v940
  %1547 = vmatpush.msra.mxu0 %v933
  %1548 = vmatpush.msra.mxu0 %v926
  %1549 = vmatpush.msra.mxu0 %v919
  %1550 = vmatpush.msra.mxu0 %v912
  %1551 = vmatpush.msra.mxu0 %v905
  %1552 = vmatpush.msra.mxu0 %v898
  %1553 = vmatpush.msra.mxu0 %v891
  %1554 = vmatpush.msra.mxu0 %v884
  %1555 = vmatpush.msra.mxu0 %v877
  %1556 = vmatpush.msra.mxu0 %v870
  %1557 = vmatpush.msra.mxu0 %v863
  %1558 = vmatpush.msra.mxu0 %v856
  %1559 = vmatpush.msra.mxu0 %v849
  %1560 = vmatpush.msra.mxu0 %v842
  %1561 = vmatpush.msra.mxu0 %v835
  %1562 = vmatmul.f32.gmra.mxu0 %v21
  %v1563 = vpop.f32.mrf.mxu0
  %v1564 = vadd.f32 %v1535, %v1563
  %1565 = vmatmul.f32.gmra.mxu0 %v30
  %v1566 = vpop.f32.mrf.mxu0
  %v1567 = vadd.f32 %v1538, %v1566
  %1568 = vmatmul.f32.gmra.mxu0 %v39
  %v1569 = vpop.f32.mrf.mxu0
  %v1570 = vadd.f32 %v1541, %v1569
  %1571 = vmatmul.f32.gmra.mxu0 %v48
  %v1572 = vpop.f32.mrf.mxu0
  %v1573 = vadd.f32 %v1544, %v1572
  %1574 = vdwg.mxu0
  %1575 = vmatpush.msra.mxu0 %v1052
  %1576 = vmatpush.msra.mxu0 %v1045
  %1577 = vmatpush.msra.mxu0 %v1038
  %1578 = vmatpush.msra.mxu0 %v1031
  %1579 = vmatpush.msra.mxu0 %v1024
  %1580 = vmatpush.msra.mxu0 %v1017
  %1581 = vmatpush.msra.mxu0 %v1010
  %1582 = vmatpush.msra.mxu0 %v1003
  %1583 = vmatpush.msra.mxu0 %v996
  %1584 = vmatpush.msra.mxu0 %v989
  %1585 = vmatpush.msra.mxu0 %v982
  %1586 = vmatpush.msra.mxu0 %v975
  %1587 = vmatpush.msra.mxu0 %v968
  %1588 = vmatpush.msra.mxu0 %v961
  %1589 = vmatpush.msra.mxu0 %v954
  %1590 = vmatpush.msra.mxu0 %v947
  %1591 = vmatmul.f32.gmra.mxu0 %v22
  %v1592 = vpop.f32.mrf.mxu0
  %v1593 = vadd.f32 %v1564, %v1592
  %1594 = vmatmul.f32.gmra.mxu0 %v31
  %v1595 = vpop.f32.mrf.mxu0
  %v1596 = vadd.f32 %v1567, %v1595
  %1597 = vmatmul.f32.gmra.mxu0 %v40
  %v1598 = vpop.f32.mrf.mxu0
  %v1599 = vadd.f32 %v1570, %v1598
  %1600 = vmatmul.f32.gmra.mxu0 %v49
  %v1601 = vpop.f32.mrf.mxu0
  %v1602 = vadd.f32 %v1573, %v1601
  %1603 = vdwg.mxu0
  %1604 = vmatpush.msra.mxu0 %v157
  %1605 = vmatpush.msra.mxu0 %v150
  %1606 = vmatpush.msra.mxu0 %v143
  %1607 = vmatpush.msra.mxu0 %v136
  %1608 = vmatpush.msra.mxu0 %v129
  %1609 = vmatpush.msra.mxu0 %v122
  %1610 = vmatpush.msra.mxu0 %v115
  %1611 = vmatpush.msra.mxu0 %v108
  %1612 = vmatpush.msra.mxu0 %v101
  %1613 = vmatpush.msra.mxu0 %v94
  %1614 = vmatpush.msra.mxu0 %v87
  %1615 = vmatpush.msra.mxu0 %v80
  %1616 = vmatpush.msra.mxu0 %v73
  %1617 = vmatpush.msra.mxu0 %v66
  %1618 = vmatpush.msra.mxu0 %v59
  %1619 = vmatpush.msra.mxu0 %v52
  %1620 = vmatmul.f32.gmra.mxu0 %v14
  %v1621 = vpop.f32.mrf.mxu0
  %v1622 = vadd.f32 %v1065, %v1621
  %1623 = vmatmul.f32.gmra.mxu0 %v23
  %v1624 = vpop.f32.mrf.mxu0
  %v1625 = vadd.f32 %v1070, %v1624
  %1626 = vmatmul.f32.gmra.mxu0 %v32
  %v1627 = vpop.f32.mrf.mxu0
  %v1628 = vadd.f32 %v1075, %v1627
  %1629 = vmatmul.f32.gmra.mxu0 %v41
  %v1630 = vpop.f32.mrf.mxu0
  %v1631 = vadd.f32 %v1080, %v1630
  %1632 = vdwg.mxu0
  %1633 = vmatpush.msra.mxu0 %v269
  %1634 = vmatpush.msra.mxu0 %v262
  %1635 = vmatpush.msra.mxu0 %v255
  %1636 = vmatpush.msra.mxu0 %v248
  %1637 = vmatpush.msra.mxu0 %v241
  %1638 = vmatpush.msra.mxu0 %v234
  %1639 = vmatpush.msra.mxu0 %v227
  %1640 = vmatpush.msra.mxu0 %v220
  %1641 = vmatpush.msra.mxu0 %v213
  %1642 = vmatpush.msra.mxu0 %v206
  %1643 = vmatpush.msra.mxu0 %v199
  %1644 = vmatpush.msra.mxu0 %v192
  %1645 = vmatpush.msra.mxu0 %v185
  %1646 = vmatpush.msra.mxu0 %v178
  %1647 = vmatpush.msra.mxu0 %v171
  %1648 = vmatpush.msra.mxu0 %v164
  %1649 = vmatmul.f32.gmra.mxu0 %v15
  %v1650 = vpop.f32.mrf.mxu0
  %v1651 = vadd.f32 %v1622, %v1650
  %1652 = vmatmul.f32.gmra.mxu0 %v24
  %v1653 = vpop.f32.mrf.mxu0
  %v1654 = vadd.f32 %v1625, %v1653
  %1655 = vmatmul.f32.gmra.mxu0 %v33
  %v1656 = vpop.f32.mrf.mxu0
  %v1657 = vadd.f32 %v1628, %v1656
  %1658 = vmatmul.f32.gmra.mxu0 %v42
  %v1659 = vpop.f32.mrf.mxu0
  %v1660 = vadd.f32 %v1631, %v1659
  %1661 = vdwg.mxu0
  %1662 = vmatpush.msra.mxu0 %v381
  %1663 = vmatpush.msra.mxu0 %v374
  %1664 = vmatpush.msra.mxu0 %v367
  %1665 = vmatpush.msra.mxu0 %v360
  %1666 = vmatpush.msra.mxu0 %v353
  %1667 = vmatpush.msra.mxu0 %v346
  %1668 = vmatpush.msra.mxu0 %v339
  %1669 = vmatpush.msra.mxu0 %v332
  %1670 = vmatpush.msra.mxu0 %v325
  %1671 = vmatpush.msra.mxu0 %v318
  %1672 = vmatpush.msra.mxu0 %v311
  %1673 = vmatpush.msra.mxu0 %v304
  %1674 = vmatpush.msra.mxu0 %v297
  %1675 = vmatpush.msra.mxu0 %v290
  %1676 = vmatpush.msra.mxu0 %v283
  %1677 = vmatpush.msra.mxu0 %v276
  %1678 = vmatmul.f32.gmra.mxu0 %v16
  %v1679 = vpop.f32.mrf.mxu0
  %v1680 = vadd.f32 %v1651, %v1679
  %1681 = vmatmul.f32.gmra.mxu0 %v25
  %v1682 = vpop.f32.mrf.mxu0
  %v1683 = vadd.f32 %v1654, %v1682
  %1684 = vmatmul.f32.gmra.mxu0 %v34
  %v1685 = vpop.f32.mrf.mxu0
  %v1686 = vadd.f32 %v1657, %v1685
  %1687 = vmatmul.f32.gmra.mxu0 %v43
  %v1688 = vpop.f32.mrf.mxu0
  %v1689 = vadd.f32 %v1660, %v1688
  %1690 = vdwg.mxu0
  %1691 = vmatpush.msra.mxu0 %v493
  %1692 = vmatpush.msra.mxu0 %v486
  %1693 = vmatpush.msra.mxu0 %v479
  %1694 = vmatpush.msra.mxu0 %v472
  %1695 = vmatpush.msra.mxu0 %v465
  %1696 = vmatpush.msra.mxu0 %v458
  %1697 = vmatpush.msra.mxu0 %v451
  %1698 = vmatpush.msra.mxu0 %v444
  %1699 = vmatpush.msra.mxu0 %v437
  %1700 = vmatpush.msra.mxu0 %v430
  %1701 = vmatpush.msra.mxu0 %v423
  %1702 = vmatpush.msra.mxu0 %v416
  %1703 = vmatpush.msra.mxu0 %v409
  %1704 = vmatpush.msra.mxu0 %v402
  %1705 = vmatpush.msra.mxu0 %v395
  %1706 = vmatpush.msra.mxu0 %v388
  %1707 = vmatmul.f32.gmra.mxu0 %v17
  %v1708 = vpop.f32.mrf.mxu0
  %v1709 = vadd.f32 %v1680, %v1708
  %1710 = vmatmul.f32.gmra.mxu0 %v26
  %v1711 = vpop.f32.mrf.mxu0
  %v1712 = vadd.f32 %v1683, %v1711
  %1713 = vmatmul.f32.gmra.mxu0 %v35
  %v1714 = vpop.f32.mrf.mxu0
  %v1715 = vadd.f32 %v1686, %v1714
  %1716 = vmatmul.f32.gmra.mxu0 %v44
  %v1717 = vpop.f32.mrf.mxu0
  %v1718 = vadd.f32 %v1689, %v1717
  %1719 = vdwg.mxu0
  %1720 = vmatpush.msra.mxu0 %v605
  %1721 = vmatpush.msra.mxu0 %v598
  %1722 = vmatpush.msra.mxu0 %v591
  %1723 = vmatpush.msra.mxu0 %v584
  %1724 = vmatpush.msra.mxu0 %v577
  %1725 = vmatpush.msra.mxu0 %v570
  %1726 = vmatpush.msra.mxu0 %v563
  %1727 = vmatpush.msra.mxu0 %v556
  %1728 = vmatpush.msra.mxu0 %v549
  %1729 = vmatpush.msra.mxu0 %v542
  %1730 = vmatpush.msra.mxu0 %v535
  %1731 = vmatpush.msra.mxu0 %v528
  %1732 = vmatpush.msra.mxu0 %v521
  %1733 = vmatpush.msra.mxu0 %v514
  %1734 = vmatpush.msra.mxu0 %v507
  %1735 = vmatpush.msra.mxu0 %v500
  %1736 = vmatmul.f32.gmra.mxu0 %v18
  %v1737 = vpop.f32.mrf.mxu0
  %v1738 = vadd.f32 %v1709, %v1737
  %1739 = vmatmul.f32.gmra.mxu0 %v27
  %v1740 = vpop.f32.mrf.mxu0
  %v1741 = vadd.f32 %v1712, %v1740
  %1742 = vmatmul.f32.gmra.mxu0 %v36
  %v1743 = vpop.f32.mrf.mxu0
  %v1744 = vadd.f32 %v1715, %v1743
  %1745 = vmatmul.f32.gmra.mxu0 %v45
  %v1746 = vpop.f32.mrf.mxu0
  %v1747 = vadd.f32 %v1718, %v1746
  %1748 = vdwg.mxu0
  %1749 = vmatpush.msra.mxu0 %v717
  %1750 = vmatpush.msra.mxu0 %v710
  %1751 = vmatpush.msra.mxu0 %v703
  %1752 = vmatpush.msra.mxu0 %v696
  %1753 = vmatpush.msra.mxu0 %v689
  %1754 = vmatpush.msra.mxu0 %v682
  %1755 = vmatpush.msra.mxu0 %v675
  %1756 = vmatpush.msra.mxu0 %v668
  %1757 = vmatpush.msra.mxu0 %v661
  %1758 = vmatpush.msra.mxu0 %v654
  %1759 = vmatpush.msra.mxu0 %v647
  %1760 = vmatpush.msra.mxu0 %v640
  %1761 = vmatpush.msra.mxu0 %v633
  %1762 = vmatpush.msra.mxu0 %v626
  %1763 = vmatpush.msra.mxu0 %v619
  %1764 = vmatpush.msra.mxu0 %v612
  %1765 = vmatmul.f32.gmra.mxu0 %v19
  %v1766 = vpop.f32.mrf.mxu0
  %v1767 = vadd.f32 %v1738, %v1766
  %1768 = vmatmul.f32.gmra.mxu0 %v28
  %v1769 = vpop.f32.mrf.mxu0
  %v1770 = vadd.f32 %v1741, %v1769
  %1771 = vmatmul.f32.gmra.mxu0 %v37
  %v1772 = vpop.f32.mrf.mxu0
  %v1773 = vadd.f32 %v1744, %v1772
  %1774 = vmatmul.f32.gmra.mxu0 %v46
  %v1775 = vpop.f32.mrf.mxu0
  %v1776 = vadd.f32 %v1747, %v1775
  %1777 = vdwg.mxu0
  %1778 = vmatpush.msra.mxu0 %v829
  %1779 = vmatpush.msra.mxu0 %v822
  %1780 = vmatpush.msra.mxu0 %v815
  %1781 = vmatpush.msra.mxu0 %v808
  %1782 = vmatpush.msra.mxu0 %v801
  %1783 = vmatpush.msra.mxu0 %v794
  %1784 = vmatpush.msra.mxu0 %v787
  %1785 = vmatpush.msra.mxu0 %v780
  %1786 = vmatpush.msra.mxu0 %v773
  %1787 = vmatpush.msra.mxu0 %v766
  %1788 = vmatpush.msra.mxu0 %v759
  %1789 = vmatpush.msra.mxu0 %v752
  %1790 = vmatpush.msra.mxu0 %v745
  %1791 = vmatpush.msra.mxu0 %v738
  %1792 = vmatpush.msra.mxu0 %v731
  %1793 = vmatpush.msra.mxu0 %v724
  %1794 = vmatmul.f32.gmra.mxu0 %v20
  %v1795 = vpop.f32.mrf.mxu0
  %v1796 = vadd.f32 %v1767, %v1795
  %1797 = vmatmul.f32.gmra.mxu0 %v29
  %v1798 = vpop.f32.mrf.mxu0
  %v1799 = vadd.f32 %v1770, %v1798
  %1800 = vmatmul.f32.gmra.mxu0 %v38
  %v1801 = vpop.f32.mrf.mxu0
  %v1802 = vadd.f32 %v1773, %v1801
  %1803 = vmatmul.f32.gmra.mxu0 %v47
  %v1804 = vpop.f32.mrf.mxu0
  %v1805 = vadd.f32 %v1776, %v1804
  %1806 = vdwg.mxu0
  %1807 = vmatpush.msra.mxu0 %v941
  %1808 = vmatpush.msra.mxu0 %v934
  %1809 = vmatpush.msra.mxu0 %v927
  %1810 = vmatpush.msra.mxu0 %v920
  %1811 = vmatpush.msra.mxu0 %v913
  %1812 = vmatpush.msra.mxu0 %v906
  %1813 = vmatpush.msra.mxu0 %v899
  %1814 = vmatpush.msra.mxu0 %v892
  %1815 = vmatpush.msra.mxu0 %v885
  %1816 = vmatpush.msra.mxu0 %v878
  %1817 = vmatpush.msra.mxu0 %v871
  %1818 = vmatpush.msra.mxu0 %v864
  %1819 = vmatpush.msra.mxu0 %v857
  %1820 = vmatpush.msra.mxu0 %v850
  %1821 = vmatpush.msra.mxu0 %v843
  %1822 = vmatpush.msra.mxu0 %v836
  %1823 = vmatmul.f32.gmra.mxu0 %v21
  %v1824 = vpop.f32.mrf.mxu0
  %v1825 = vadd.f32 %v1796, %v1824
  %1826 = vmatmul.f32.gmra.mxu0 %v30
  %v1827 = vpop.f32.mrf.mxu0
  %v1828 = vadd.f32 %v1799, %v1827
  %1829 = vmatmul.f32.gmra.mxu0 %v39
  %v1830 = vpop.f32.mrf.mxu0
  %v1831 = vadd.f32 %v1802, %v1830
  %1832 = vmatmul.f32.gmra.mxu0 %v48
  %v1833 = vpop.f32.mrf.mxu0
  %v1834 = vadd.f32 %v1805, %v1833
  %1835 = vdwg.mxu0
  %1836 = vmatpush.msra.mxu0 %v1053
  %1837 = vmatpush.msra.mxu0 %v1046
  %1838 = vmatpush.msra.mxu0 %v1039
  %1839 = vmatpush.msra.mxu0 %v1032
  %1840 = vmatpush.msra.mxu0 %v1025
  %1841 = vmatpush.msra.mxu0 %v1018
  %1842 = vmatpush.msra.mxu0 %v1011
  %1843 = vmatpush.msra.mxu0 %v1004
  %1844 = vmatpush.msra.mxu0 %v997
  %1845 = vmatpush.msra.mxu0 %v990
  %1846 = vmatpush.msra.mxu0 %v983
  %1847 = vmatpush.msra.mxu0 %v976
  %1848 = vmatpush.msra.mxu0 %v969
  %1849 = vmatpush.msra.mxu0 %v962
  %1850 = vmatpush.msra.mxu0 %v955
  %1851 = vmatpush.msra.mxu0 %v948
  %1852 = vmatmul.f32.gmra.mxu0 %v22
  %v1853 = vpop.f32.mrf.mxu0
  %v1854 = vadd.f32 %v1825, %v1853
  %1855 = vmatmul.f32.gmra.mxu0 %v31
  %v1856 = vpop.f32.mrf.mxu0
  %v1857 = vadd.f32 %v1828, %v1856
  %1858 = vmatmul.f32.gmra.mxu0 %v40
  %v1859 = vpop.f32.mrf.mxu0
  %v1860 = vadd.f32 %v1831, %v1859
  %1861 = vmatmul.f32.gmra.mxu0 %v49
  %v1862 = vpop.f32.mrf.mxu0
  %v1863 = vadd.f32 %v1834, %v1862
  %1864 = vdwg.mxu0
  %1865 = vmatpush.msra.mxu0 %v158
  %1866 = vmatpush.msra.mxu0 %v151
  %1867 = vmatpush.msra.mxu0 %v144
  %1868 = vmatpush.msra.mxu0 %v137
  %1869 = vmatpush.msra.mxu0 %v130
  %1870 = vmatpush.msra.mxu0 %v123
  %1871 = vmatpush.msra.mxu0 %v116
  %1872 = vmatpush.msra.mxu0 %v109
  %1873 = vmatpush.msra.mxu0 %v102
  %1874 = vmatpush.msra.mxu0 %v95
  %1875 = vmatpush.msra.mxu0 %v88
  %1876 = vmatpush.msra.mxu0 %v81
  %1877 = vmatpush.msra.mxu0 %v74
  %1878 = vmatpush.msra.mxu0 %v67
  %1879 = vmatpush.msra.mxu0 %v60
  %1880 = vmatpush.msra.mxu0 %v53
  %1881 = vmatmul.f32.gmra.mxu0 %v14
  %v1882 = vpop.f32.mrf.mxu0
  %v1883 = vadd.f32 %v1065, %v1882
  %1884 = vmatmul.f32.gmra.mxu0 %v23
  %v1885 = vpop.f32.mrf.mxu0
  %v1886 = vadd.f32 %v1070, %v1885
  %1887 = vmatmul.f32.gmra.mxu0 %v32
  %v1888 = vpop.f32.mrf.mxu0
  %v1889 = vadd.f32 %v1075, %v1888
  %1890 = vmatmul.f32.gmra.mxu0 %v41
  %v1891 = vpop.f32.mrf.mxu0
  %v1892 = vadd.f32 %v1080, %v1891
  %1893 = vdwg.mxu0
  %1894 = vmatpush.msra.mxu0 %v270
  %1895 = vmatpush.msra.mxu0 %v263
  %1896 = vmatpush.msra.mxu0 %v256
  %1897 = vmatpush.msra.mxu0 %v249
  %1898 = vmatpush.msra.mxu0 %v242
  %1899 = vmatpush.msra.mxu0 %v235
  %1900 = vmatpush.msra.mxu0 %v228
  %1901 = vmatpush.msra.mxu0 %v221
  %1902 = vmatpush.msra.mxu0 %v214
  %1903 = vmatpush.msra.mxu0 %v207
  %1904 = vmatpush.msra.mxu0 %v200
  %1905 = vmatpush.msra.mxu0 %v193
  %1906 = vmatpush.msra.mxu0 %v186
  %1907 = vmatpush.msra.mxu0 %v179
  %1908 = vmatpush.msra.mxu0 %v172
  %1909 = vmatpush.msra.mxu0 %v165
  %1910 = vmatmul.f32.gmra.mxu0 %v15
  %v1911 = vpop.f32.mrf.mxu0
  %v1912 = vadd.f32 %v1883, %v1911
  %1913 = vmatmul.f32.gmra.mxu0 %v24
  %v1914 = vpop.f32.mrf.mxu0
  %v1915 = vadd.f32 %v1886, %v1914
  %1916 = vmatmul.f32.gmra.mxu0 %v33
  %v1917 = vpop.f32.mrf.mxu0
  %v1918 = vadd.f32 %v1889, %v1917
  %1919 = vmatmul.f32.gmra.mxu0 %v42
  %v1920 = vpop.f32.mrf.mxu0
  %v1921 = vadd.f32 %v1892, %v1920
  %1922 = vdwg.mxu0
  %1923 = vmatpush.msra.mxu0 %v382
  %1924 = vmatpush.msra.mxu0 %v375
  %1925 = vmatpush.msra.mxu0 %v368
  %1926 = vmatpush.msra.mxu0 %v361
  %1927 = vmatpush.msra.mxu0 %v354
  %1928 = vmatpush.msra.mxu0 %v347
  %1929 = vmatpush.msra.mxu0 %v340
  %1930 = vmatpush.msra.mxu0 %v333
  %1931 = vmatpush.msra.mxu0 %v326
  %1932 = vmatpush.msra.mxu0 %v319
  %1933 = vmatpush.msra.mxu0 %v312
  %1934 = vmatpush.msra.mxu0 %v305
  %1935 = vmatpush.msra.mxu0 %v298
  %1936 = vmatpush.msra.mxu0 %v291
  %1937 = vmatpush.msra.mxu0 %v284
  %1938 = vmatpush.msra.mxu0 %v277
  %1939 = vmatmul.f32.gmra.mxu0 %v16
  %v1940 = vpop.f32.mrf.mxu0
  %v1941 = vadd.f32 %v1912, %v1940
  %1942 = vmatmul.f32.gmra.mxu0 %v25
  %v1943 = vpop.f32.mrf.mxu0
  %v1944 = vadd.f32 %v1915, %v1943
  %1945 = vmatmul.f32.gmra.mxu0 %v34
  %v1946 = vpop.f32.mrf.mxu0
  %v1947 = vadd.f32 %v1918, %v1946
  %1948 = vmatmul.f32.gmra.mxu0 %v43
  %v1949 = vpop.f32.mrf.mxu0
  %v1950 = vadd.f32 %v1921, %v1949
  %1951 = vdwg.mxu0
  %1952 = vmatpush.msra.mxu0 %v494
  %1953 = vmatpush.msra.mxu0 %v487
  %1954 = vmatpush.msra.mxu0 %v480
  %1955 = vmatpush.msra.mxu0 %v473
  %1956 = vmatpush.msra.mxu0 %v466
  %1957 = vmatpush.msra.mxu0 %v459
  %1958 = vmatpush.msra.mxu0 %v452
  %1959 = vmatpush.msra.mxu0 %v445
  %1960 = vmatpush.msra.mxu0 %v438
  %1961 = vmatpush.msra.mxu0 %v431
  %1962 = vmatpush.msra.mxu0 %v424
  %1963 = vmatpush.msra.mxu0 %v417
  %1964 = vmatpush.msra.mxu0 %v410
  %1965 = vmatpush.msra.mxu0 %v403
  %1966 = vmatpush.msra.mxu0 %v396
  %1967 = vmatpush.msra.mxu0 %v389
  %1968 = vmatmul.f32.gmra.mxu0 %v17
  %v1969 = vpop.f32.mrf.mxu0
  %v1970 = vadd.f32 %v1941, %v1969
  %1971 = vmatmul.f32.gmra.mxu0 %v26
  %v1972 = vpop.f32.mrf.mxu0
  %v1973 = vadd.f32 %v1944, %v1972
  %1974 = vmatmul.f32.gmra.mxu0 %v35
  %v1975 = vpop.f32.mrf.mxu0
  %v1976 = vadd.f32 %v1947, %v1975
  %1977 = vmatmul.f32.gmra.mxu0 %v44
  %v1978 = vpop.f32.mrf.mxu0
  %v1979 = vadd.f32 %v1950, %v1978
  %1980 = vdwg.mxu0
  %1981 = vmatpush.msra.mxu0 %v606
  %1982 = vmatpush.msra.mxu0 %v599
  %1983 = vmatpush.msra.mxu0 %v592
  %1984 = vmatpush.msra.mxu0 %v585
  %1985 = vmatpush.msra.mxu0 %v578
  %1986 = vmatpush.msra.mxu0 %v571
  %1987 = vmatpush.msra.mxu0 %v564
  %1988 = vmatpush.msra.mxu0 %v557
  %1989 = vmatpush.msra.mxu0 %v550
  %1990 = vmatpush.msra.mxu0 %v543
  %1991 = vmatpush.msra.mxu0 %v536
  %1992 = vmatpush.msra.mxu0 %v529
  %1993 = vmatpush.msra.mxu0 %v522
  %1994 = vmatpush.msra.mxu0 %v515
  %1995 = vmatpush.msra.mxu0 %v508
  %1996 = vmatpush.msra.mxu0 %v501
  %1997 = vmatmul.f32.gmra.mxu0 %v18
  %v1998 = vpop.f32.mrf.mxu0
  %v1999 = vadd.f32 %v1970, %v1998
  %2000 = vmatmul.f32.gmra.mxu0 %v27
  %v2001 = vpop.f32.mrf.mxu0
  %v2002 = vadd.f32 %v1973, %v2001
  %2003 = vmatmul.f32.gmra.mxu0 %v36
  %v2004 = vpop.f32.mrf.mxu0
  %v2005 = vadd.f32 %v1976, %v2004
  %2006 = vmatmul.f32.gmra.mxu0 %v45
  %v2007 = vpop.f32.mrf.mxu0
  %v2008 = vadd.f32 %v1979, %v2007
  %2009 = vdwg.mxu0
  %2010 = vmatpush.msra.mxu0 %v718
  %2011 = vmatpush.msra.mxu0 %v711
  %2012 = vmatpush.msra.mxu0 %v704
  %2013 = vmatpush.msra.mxu0 %v697
  %2014 = vmatpush.msra.mxu0 %v690
  %2015 = vmatpush.msra.mxu0 %v683
  %2016 = vmatpush.msra.mxu0 %v676
  %2017 = vmatpush.msra.mxu0 %v669
  %2018 = vmatpush.msra.mxu0 %v662
  %2019 = vmatpush.msra.mxu0 %v655
  %2020 = vmatpush.msra.mxu0 %v648
  %2021 = vmatpush.msra.mxu0 %v641
  %2022 = vmatpush.msra.mxu0 %v634
  %2023 = vmatpush.msra.mxu0 %v627
  %2024 = vmatpush.msra.mxu0 %v620
  %2025 = vmatpush.msra.mxu0 %v613
  %2026 = vmatmul.f32.gmra.mxu0 %v19
  %v2027 = vpop.f32.mrf.mxu0
  %v2028 = vadd.f32 %v1999, %v2027
  %2029 = vmatmul.f32.gmra.mxu0 %v28
  %v2030 = vpop.f32.mrf.mxu0
  %v2031 = vadd.f32 %v2002, %v2030
  %2032 = vmatmul.f32.gmra.mxu0 %v37
  %v2033 = vpop.f32.mrf.mxu0
  %v2034 = vadd.f32 %v2005, %v2033
  %2035 = vmatmul.f32.gmra.mxu0 %v46
  %v2036 = vpop.f32.mrf.mxu0
  %v2037 = vadd.f32 %v2008, %v2036
  %2038 = vdwg.mxu0
  %2039 = vmatpush.msra.mxu0 %v830
  %2040 = vmatpush.msra.mxu0 %v823
  %2041 = vmatpush.msra.mxu0 %v816
  %2042 = vmatpush.msra.mxu0 %v809
  %2043 = vmatpush.msra.mxu0 %v802
  %2044 = vmatpush.msra.mxu0 %v795
  %2045 = vmatpush.msra.mxu0 %v788
  %2046 = vmatpush.msra.mxu0 %v781
  %2047 = vmatpush.msra.mxu0 %v774
  %2048 = vmatpush.msra.mxu0 %v767
  %2049 = vmatpush.msra.mxu0 %v760
  %2050 = vmatpush.msra.mxu0 %v753
  %2051 = vmatpush.msra.mxu0 %v746
  %2052 = vmatpush.msra.mxu0 %v739
  %2053 = vmatpush.msra.mxu0 %v732
  %2054 = vmatpush.msra.mxu0 %v725
  %2055 = vmatmul.f32.gmra.mxu0 %v20
  %v2056 = vpop.f32.mrf.mxu0
  %v2057 = vadd.f32 %v2028, %v2056
  %2058 = vmatmul.f32.gmra.mxu0 %v29
  %v2059 = vpop.f32.mrf.mxu0
  %v2060 = vadd.f32 %v2031, %v2059
  %2061 = vmatmul.f32.gmra.mxu0 %v38
  %v2062 = vpop.f32.mrf.mxu0
  %v2063 = vadd.f32 %v2034, %v2062
  %2064 = vmatmul.f32.gmra.mxu0 %v47
  %v2065 = vpop.f32.mrf.mxu0
  %v2066 = vadd.f32 %v2037, %v2065
  %2067 = vdwg.mxu0
  %2068 = vmatpush.msra.mxu0 %v942
  %2069 = vmatpush.msra.mxu0 %v935
  %2070 = vmatpush.msra.mxu0 %v928
  %2071 = vmatpush.msra.mxu0 %v921
  %2072 = vmatpush.msra.mxu0 %v914
  %2073 = vmatpush.msra.mxu0 %v907
  %2074 = vmatpush.msra.mxu0 %v900
  %2075 = vmatpush.msra.mxu0 %v893
  %2076 = vmatpush.msra.mxu0 %v886
  %2077 = vmatpush.msra.mxu0 %v879
  %2078 = vmatpush.msra.mxu0 %v872
  %2079 = vmatpush.msra.mxu0 %v865
  %2080 = vmatpush.msra.mxu0 %v858
  %2081 = vmatpush.msra.mxu0 %v851
  %2082 = vmatpush.msra.mxu0 %v844
  %2083 = vmatpush.msra.mxu0 %v837
  %2084 = vmatmul.f32.gmra.mxu0 %v21
  %v2085 = vpop.f32.mrf.mxu0
  %v2086 = vadd.f32 %v2057, %v2085
  %2087 = vmatmul.f32.gmra.mxu0 %v30
  %v2088 = vpop.f32.mrf.mxu0
  %v2089 = vadd.f32 %v2060, %v2088
  %2090 = vmatmul.f32.gmra.mxu0 %v39
  %v2091 = vpop.f32.mrf.mxu0
  %v2092 = vadd.f32 %v2063, %v2091
  %2093 = vmatmul.f32.gmra.mxu0 %v48
  %v2094 = vpop.f32.mrf.mxu0
  %v2095 = vadd.f32 %v2066, %v2094
  %2096 = vdwg.mxu0
  %2097 = vmatpush.msra.mxu0 %v1054
  %2098 = vmatpush.msra.mxu0 %v1047
  %2099 = vmatpush.msra.mxu0 %v1040
  %2100 = vmatpush.msra.mxu0 %v1033
  %2101 = vmatpush.msra.mxu0 %v1026
  %2102 = vmatpush.msra.mxu0 %v1019
  %2103 = vmatpush.msra.mxu0 %v1012
  %2104 = vmatpush.msra.mxu0 %v1005
  %2105 = vmatpush.msra.mxu0 %v998
  %2106 = vmatpush.msra.mxu0 %v991
  %2107 = vmatpush.msra.mxu0 %v984
  %2108 = vmatpush.msra.mxu0 %v977
  %2109 = vmatpush.msra.mxu0 %v970
  %2110 = vmatpush.msra.mxu0 %v963
  %2111 = vmatpush.msra.mxu0 %v956
  %2112 = vmatpush.msra.mxu0 %v949
  %2113 = vmatmul.f32.gmra.mxu0 %v22
  %v2114 = vpop.f32.mrf.mxu0
  %v2115 = vadd.f32 %v2086, %v2114
  %2116 = vmatmul.f32.gmra.mxu0 %v31
  %v2117 = vpop.f32.mrf.mxu0
  %v2118 = vadd.f32 %v2089, %v2117
  %2119 = vmatmul.f32.gmra.mxu0 %v40
  %v2120 = vpop.f32.mrf.mxu0
  %v2121 = vadd.f32 %v2092, %v2120
  %2122 = vmatmul.f32.gmra.mxu0 %v49
  %v2123 = vpop.f32.mrf.mxu0
  %v2124 = vadd.f32 %v2095, %v2123
  %2125 = vdwg.mxu0
  %2126 = vmatpush.msra.mxu0 %v159
  %2127 = vmatpush.msra.mxu0 %v152
  %2128 = vmatpush.msra.mxu0 %v145
  %2129 = vmatpush.msra.mxu0 %v138
  %2130 = vmatpush.msra.mxu0 %v131
  %2131 = vmatpush.msra.mxu0 %v124
  %2132 = vmatpush.msra.mxu0 %v117
  %2133 = vmatpush.msra.mxu0 %v110
  %2134 = vmatpush.msra.mxu0 %v103
  %2135 = vmatpush.msra.mxu0 %v96
  %2136 = vmatpush.msra.mxu0 %v89
  %2137 = vmatpush.msra.mxu0 %v82
  %2138 = vmatpush.msra.mxu0 %v75
  %2139 = vmatpush.msra.mxu0 %v68
  %2140 = vmatpush.msra.mxu0 %v61
  %2141 = vmatpush.msra.mxu0 %v54
  %2142 = vmatmul.f32.gmra.mxu0 %v14
  %v2143 = vpop.f32.mrf.mxu0
  %v2144 = vadd.f32 %v1065, %v2143
  %2145 = vmatmul.f32.gmra.mxu0 %v23
  %v2146 = vpop.f32.mrf.mxu0
  %v2147 = vadd.f32 %v1070, %v2146
  %2148 = vmatmul.f32.gmra.mxu0 %v32
  %v2149 = vpop.f32.mrf.mxu0
  %v2150 = vadd.f32 %v1075, %v2149
  %2151 = vmatmul.f32.gmra.mxu0 %v41
  %v2152 = vpop.f32.mrf.mxu0
  %v2153 = vadd.f32 %v1080, %v2152
  %2154 = vdwg.mxu0
  %2155 = vmatpush.msra.mxu0 %v271
  %2156 = vmatpush.msra.mxu0 %v264
  %2157 = vmatpush.msra.mxu0 %v257
  %2158 = vmatpush.msra.mxu0 %v250
  %2159 = vmatpush.msra.mxu0 %v243
  %2160 = vmatpush.msra.mxu0 %v236
  %2161 = vmatpush.msra.mxu0 %v229
  %2162 = vmatpush.msra.mxu0 %v222
  %2163 = vmatpush.msra.mxu0 %v215
  %2164 = vmatpush.msra.mxu0 %v208
  %2165 = vmatpush.msra.mxu0 %v201
  %2166 = vmatpush.msra.mxu0 %v194
  %2167 = vmatpush.msra.mxu0 %v187
  %2168 = vmatpush.msra.mxu0 %v180
  %2169 = vmatpush.msra.mxu0 %v173
  %2170 = vmatpush.msra.mxu0 %v166
  %2171 = vmatmul.f32.gmra.mxu0 %v15
  %v2172 = vpop.f32.mrf.mxu0
  %v2173 = vadd.f32 %v2144, %v2172
  %2174 = vmatmul.f32.gmra.mxu0 %v24
  %v2175 = vpop.f32.mrf.mxu0
  %v2176 = vadd.f32 %v2147, %v2175
  %2177 = vmatmul.f32.gmra.mxu0 %v33
  %v2178 = vpop.f32.mrf.mxu0
  %v2179 = vadd.f32 %v2150, %v2178
  %2180 = vmatmul.f32.gmra.mxu0 %v42
  %v2181 = vpop.f32.mrf.mxu0
  %v2182 = vadd.f32 %v2153, %v2181
  %2183 = vdwg.mxu0
  %2184 = vmatpush.msra.mxu0 %v383
  %2185 = vmatpush.msra.mxu0 %v376
  %2186 = vmatpush.msra.mxu0 %v369
  %2187 = vmatpush.msra.mxu0 %v362
  %2188 = vmatpush.msra.mxu0 %v355
  %2189 = vmatpush.msra.mxu0 %v348
  %2190 = vmatpush.msra.mxu0 %v341
  %2191 = vmatpush.msra.mxu0 %v334
  %2192 = vmatpush.msra.mxu0 %v327
  %2193 = vmatpush.msra.mxu0 %v320
  %2194 = vmatpush.msra.mxu0 %v313
  %2195 = vmatpush.msra.mxu0 %v306
  %2196 = vmatpush.msra.mxu0 %v299
  %2197 = vmatpush.msra.mxu0 %v292
  %2198 = vmatpush.msra.mxu0 %v285
  %2199 = vmatpush.msra.mxu0 %v278
  %2200 = vmatmul.f32.gmra.mxu0 %v16
  %v2201 = vpop.f32.mrf.mxu0
  %v2202 = vadd.f32 %v2173, %v2201
  %2203 = vmatmul.f32.gmra.mxu0 %v25
  %v2204 = vpop.f32.mrf.mxu0
  %v2205 = vadd.f32 %v2176, %v2204
  %2206 = vmatmul.f32.gmra.mxu0 %v34
  %v2207 = vpop.f32.mrf.mxu0
  %v2208 = vadd.f32 %v2179, %v2207
  %2209 = vmatmul.f32.gmra.mxu0 %v43
  %v2210 = vpop.f32.mrf.mxu0
  %v2211 = vadd.f32 %v2182, %v2210
  %2212 = vdwg.mxu0
  %2213 = vmatpush.msra.mxu0 %v495
  %2214 = vmatpush.msra.mxu0 %v488
  %2215 = vmatpush.msra.mxu0 %v481
  %2216 = vmatpush.msra.mxu0 %v474
  %2217 = vmatpush.msra.mxu0 %v467
  %2218 = vmatpush.msra.mxu0 %v460
  %2219 = vmatpush.msra.mxu0 %v453
  %2220 = vmatpush.msra.mxu0 %v446
  %2221 = vmatpush.msra.mxu0 %v439
  %2222 = vmatpush.msra.mxu0 %v432
  %2223 = vmatpush.msra.mxu0 %v425
  %2224 = vmatpush.msra.mxu0 %v418
  %2225 = vmatpush.msra.mxu0 %v411
  %2226 = vmatpush.msra.mxu0 %v404
  %2227 = vmatpush.msra.mxu0 %v397
  %2228 = vmatpush.msra.mxu0 %v390
  %2229 = vmatmul.f32.gmra.mxu0 %v17
  %v2230 = vpop.f32.mrf.mxu0
  %v2231 = vadd.f32 %v2202, %v2230
  %2232 = vmatmul.f32.gmra.mxu0 %v26
  %v2233 = vpop.f32.mrf.mxu0
  %v2234 = vadd.f32 %v2205, %v2233
  %2235 = vmatmul.f32.gmra.mxu0 %v35
  %v2236 = vpop.f32.mrf.mxu0
  %v2237 = vadd.f32 %v2208, %v2236
  %2238 = vmatmul.f32.gmra.mxu0 %v44
  %v2239 = vpop.f32.mrf.mxu0
  %v2240 = vadd.f32 %v2211, %v2239
  %2241 = vdwg.mxu0
  %2242 = vmatpush.msra.mxu0 %v607
  %2243 = vmatpush.msra.mxu0 %v600
  %2244 = vmatpush.msra.mxu0 %v593
  %2245 = vmatpush.msra.mxu0 %v586
  %2246 = vmatpush.msra.mxu0 %v579
  %2247 = vmatpush.msra.mxu0 %v572
  %2248 = vmatpush.msra.mxu0 %v565
  %2249 = vmatpush.msra.mxu0 %v558
  %2250 = vmatpush.msra.mxu0 %v551
  %2251 = vmatpush.msra.mxu0 %v544
  %2252 = vmatpush.msra.mxu0 %v537
  %2253 = vmatpush.msra.mxu0 %v530
  %2254 = vmatpush.msra.mxu0 %v523
  %2255 = vmatpush.msra.mxu0 %v516
  %2256 = vmatpush.msra.mxu0 %v509
  %2257 = vmatpush.msra.mxu0 %v502
  %2258 = vmatmul.f32.gmra.mxu0 %v18
  %v2259 = vpop.f32.mrf.mxu0
  %v2260 = vadd.f32 %v2231, %v2259
  %2261 = vmatmul.f32.gmra.mxu0 %v27
  %v2262 = vpop.f32.mrf.mxu0
  %v2263 = vadd.f32 %v2234, %v2262
  %2264 = vmatmul.f32.gmra.mxu0 %v36
  %v2265 = vpop.f32.mrf.mxu0
  %v2266 = vadd.f32 %v2237, %v2265
  %2267 = vmatmul.f32.gmra.mxu0 %v45
  %v2268 = vpop.f32.mrf.mxu0
  %v2269 = vadd.f32 %v2240, %v2268
  %2270 = vdwg.mxu0
  %2271 = vmatpush.msra.mxu0 %v719
  %2272 = vmatpush.msra.mxu0 %v712
  %2273 = vmatpush.msra.mxu0 %v705
  %2274 = vmatpush.msra.mxu0 %v698
  %2275 = vmatpush.msra.mxu0 %v691
  %2276 = vmatpush.msra.mxu0 %v684
  %2277 = vmatpush.msra.mxu0 %v677
  %2278 = vmatpush.msra.mxu0 %v670
  %2279 = vmatpush.msra.mxu0 %v663
  %2280 = vmatpush.msra.mxu0 %v656
  %2281 = vmatpush.msra.mxu0 %v649
  %2282 = vmatpush.msra.mxu0 %v642
  %2283 = vmatpush.msra.mxu0 %v635
  %2284 = vmatpush.msra.mxu0 %v628
  %2285 = vmatpush.msra.mxu0 %v621
  %2286 = vmatpush.msra.mxu0 %v614
  %2287 = vmatmul.f32.gmra.mxu0 %v19
  %v2288 = vpop.f32.mrf.mxu0
  %v2289 = vadd.f32 %v2260, %v2288
  %2290 = vmatmul.f32.gmra.mxu0 %v28
  %v2291 = vpop.f32.mrf.mxu0
  %v2292 = vadd.f32 %v2263, %v2291
  %2293 = vmatmul.f32.gmra.mxu0 %v37
  %v2294 = vpop.f32.mrf.mxu0
  %v2295 = vadd.f32 %v2266, %v2294
  %2296 = vmatmul.f32.gmra.mxu0 %v46
  %v2297 = vpop.f32.mrf.mxu0
  %v2298 = vadd.f32 %v2269, %v2297
  %2299 = vdwg.mxu0
  %2300 = vmatpush.msra.mxu0 %v831
  %2301 = vmatpush.msra.mxu0 %v824
  %2302 = vmatpush.msra.mxu0 %v817
  %2303 = vmatpush.msra.mxu0 %v810
  %2304 = vmatpush.msra.mxu0 %v803
  %2305 = vmatpush.msra.mxu0 %v796
  %2306 = vmatpush.msra.mxu0 %v789
  %2307 = vmatpush.msra.mxu0 %v782
  %2308 = vmatpush.msra.mxu0 %v775
  %2309 = vmatpush.msra.mxu0 %v768
  %2310 = vmatpush.msra.mxu0 %v761
  %2311 = vmatpush.msra.mxu0 %v754
  %2312 = vmatpush.msra.mxu0 %v747
  %2313 = vmatpush.msra.mxu0 %v740
  %2314 = vmatpush.msra.mxu0 %v733
  %2315 = vmatpush.msra.mxu0 %v726
  %2316 = vmatmul.f32.gmra.mxu0 %v20
  %v2317 = vpop.f32.mrf.mxu0
  %v2318 = vadd.f32 %v2289, %v2317
  %2319 = vmatmul.f32.gmra.mxu0 %v29
  %v2320 = vpop.f32.mrf.mxu0
  %v2321 = vadd.f32 %v2292, %v2320
  %2322 = vmatmul.f32.gmra.mxu0 %v38
  %v2323 = vpop.f32.mrf.mxu0
  %v2324 = vadd.f32 %v2295, %v2323
  %2325 = vmatmul.f32.gmra.mxu0 %v47
  %v2326 = vpop.f32.mrf.mxu0
  %v2327 = vadd.f32 %v2298, %v2326
  %2328 = vdwg.mxu0
  %2329 = vmatpush.msra.mxu0 %v943
  %2330 = vmatpush.msra.mxu0 %v936
  %2331 = vmatpush.msra.mxu0 %v929
  %2332 = vmatpush.msra.mxu0 %v922
  %2333 = vmatpush.msra.mxu0 %v915
  %2334 = vmatpush.msra.mxu0 %v908
  %2335 = vmatpush.msra.mxu0 %v901
  %2336 = vmatpush.msra.mxu0 %v894
  %2337 = vmatpush.msra.mxu0 %v887
  %2338 = vmatpush.msra.mxu0 %v880
  %2339 = vmatpush.msra.mxu0 %v873
  %2340 = vmatpush.msra.mxu0 %v866
  %2341 = vmatpush.msra.mxu0 %v859
  %2342 = vmatpush.msra.mxu0 %v852
  %2343 = vmatpush.msra.mxu0 %v845
  %2344 = vmatpush.msra.mxu0 %v838
  %2345 = vmatmul.f32.gmra.mxu0 %v21
  %v2346 = vpop.f32.mrf.mxu0
  %v2347 = vadd.f32 %v2318, %v2346
  %2348 = vmatmul.f32.gmra.mxu0 %v30
  %v2349 = vpop.f32.mrf.mxu0
  %v2350 = vadd.f32 %v2321, %v2349
  %2351 = vmatmul.f32.gmra.mxu0 %v39
  %v2352 = vpop.f32.mrf.mxu0
  %v2353 = vadd.f32 %v2324, %v2352
  %2354 = vmatmul.f32.gmra.mxu0 %v48
  %v2355 = vpop.f32.mrf.mxu0
  %v2356 = vadd.f32 %v2327, %v2355
  %2357 = vdwg.mxu0
  %2358 = vmatpush.msra.mxu0 %v1055
  %2359 = vmatpush.msra.mxu0 %v1048
  %2360 = vmatpush.msra.mxu0 %v1041
  %2361 = vmatpush.msra.mxu0 %v1034
  %2362 = vmatpush.msra.mxu0 %v1027
  %2363 = vmatpush.msra.mxu0 %v1020
  %2364 = vmatpush.msra.mxu0 %v1013
  %2365 = vmatpush.msra.mxu0 %v1006
  %2366 = vmatpush.msra.mxu0 %v999
  %2367 = vmatpush.msra.mxu0 %v992
  %2368 = vmatpush.msra.mxu0 %v985
  %2369 = vmatpush.msra.mxu0 %v978
  %2370 = vmatpush.msra.mxu0 %v971
  %2371 = vmatpush.msra.mxu0 %v964
  %2372 = vmatpush.msra.mxu0 %v957
  %2373 = vmatpush.msra.mxu0 %v950
  %2374 = vmatmul.f32.gmra.mxu0 %v22
  %v2375 = vpop.f32.mrf.mxu0
  %v2376 = vadd.f32 %v2347, %v2375
  %2377 = vmatmul.f32.gmra.mxu0 %v31
  %v2378 = vpop.f32.mrf.mxu0
  %v2379 = vadd.f32 %v2350, %v2378
  %2380 = vmatmul.f32.gmra.mxu0 %v40
  %v2381 = vpop.f32.mrf.mxu0
  %v2382 = vadd.f32 %v2353, %v2381
  %2383 = vmatmul.f32.gmra.mxu0 %v49
  %v2384 = vpop.f32.mrf.mxu0
  %v2385 = vadd.f32 %v2356, %v2384
  %2386 = vdwg.mxu0
  %2387 = vmatpush.msra.mxu0 %v160
  %2388 = vmatpush.msra.mxu0 %v153
  %2389 = vmatpush.msra.mxu0 %v146
  %2390 = vmatpush.msra.mxu0 %v139
  %2391 = vmatpush.msra.mxu0 %v132
  %2392 = vmatpush.msra.mxu0 %v125
  %2393 = vmatpush.msra.mxu0 %v118
  %2394 = vmatpush.msra.mxu0 %v111
  %2395 = vmatpush.msra.mxu0 %v104
  %2396 = vmatpush.msra.mxu0 %v97
  %2397 = vmatpush.msra.mxu0 %v90
  %2398 = vmatpush.msra.mxu0 %v83
  %2399 = vmatpush.msra.mxu0 %v76
  %2400 = vmatpush.msra.mxu0 %v69
  %2401 = vmatpush.msra.mxu0 %v62
  %2402 = vmatpush.msra.mxu0 %v55
  %2403 = vmatmul.f32.gmra.mxu0 %v14
  %v2404 = vpop.f32.mrf.mxu0
  %v2405 = vadd.f32 %v1065, %v2404
  %2406 = vmatmul.f32.gmra.mxu0 %v23
  %v2407 = vpop.f32.mrf.mxu0
  %v2408 = vadd.f32 %v1070, %v2407
  %2409 = vmatmul.f32.gmra.mxu0 %v32
  %v2410 = vpop.f32.mrf.mxu0
  %v2411 = vadd.f32 %v1075, %v2410
  %2412 = vmatmul.f32.gmra.mxu0 %v41
  %v2413 = vpop.f32.mrf.mxu0
  %v2414 = vadd.f32 %v1080, %v2413
  %2415 = vdwg.mxu0
  %2416 = vmatpush.msra.mxu0 %v272
  %2417 = vmatpush.msra.mxu0 %v265
  %2418 = vmatpush.msra.mxu0 %v258
  %2419 = vmatpush.msra.mxu0 %v251
  %2420 = vmatpush.msra.mxu0 %v244
  %2421 = vmatpush.msra.mxu0 %v237
  %2422 = vmatpush.msra.mxu0 %v230
  %2423 = vmatpush.msra.mxu0 %v223
  %2424 = vmatpush.msra.mxu0 %v216
  %2425 = vmatpush.msra.mxu0 %v209
  %2426 = vmatpush.msra.mxu0 %v202
  %2427 = vmatpush.msra.mxu0 %v195
  %2428 = vmatpush.msra.mxu0 %v188
  %2429 = vmatpush.msra.mxu0 %v181
  %2430 = vmatpush.msra.mxu0 %v174
  %2431 = vmatpush.msra.mxu0 %v167
  %2432 = vmatmul.f32.gmra.mxu0 %v15
  %v2433 = vpop.f32.mrf.mxu0
  %v2434 = vadd.f32 %v2405, %v2433
  %2435 = vmatmul.f32.gmra.mxu0 %v24
  %v2436 = vpop.f32.mrf.mxu0
  %v2437 = vadd.f32 %v2408, %v2436
  %2438 = vmatmul.f32.gmra.mxu0 %v33
  %v2439 = vpop.f32.mrf.mxu0
  %v2440 = vadd.f32 %v2411, %v2439
  %2441 = vmatmul.f32.gmra.mxu0 %v42
  %v2442 = vpop.f32.mrf.mxu0
  %v2443 = vadd.f32 %v2414, %v2442
  %2444 = vdwg.mxu0
  %2445 = vmatpush.msra.mxu0 %v384
  %2446 = vmatpush.msra.mxu0 %v377
  %2447 = vmatpush.msra.mxu0 %v370
  %2448 = vmatpush.msra.mxu0 %v363
  %2449 = vmatpush.msra.mxu0 %v356
  %2450 = vmatpush.msra.mxu0 %v349
  %2451 = vmatpush.msra.mxu0 %v342
  %2452 = vmatpush.msra.mxu0 %v335
  %2453 = vmatpush.msra.mxu0 %v328
  %2454 = vmatpush.msra.mxu0 %v321
  %2455 = vmatpush.msra.mxu0 %v314
  %2456 = vmatpush.msra.mxu0 %v307
  %2457 = vmatpush.msra.mxu0 %v300
  %2458 = vmatpush.msra.mxu0 %v293
  %2459 = vmatpush.msra.mxu0 %v286
  %2460 = vmatpush.msra.mxu0 %v279
  %2461 = vmatmul.f32.gmra.mxu0 %v16
  %v2462 = vpop.f32.mrf.mxu0
  %v2463 = vadd.f32 %v2434, %v2462
  %2464 = vmatmul.f32.gmra.mxu0 %v25
  %v2465 = vpop.f32.mrf.mxu0
  %v2466 = vadd.f32 %v2437, %v2465
  %2467 = vmatmul.f32.gmra.mxu0 %v34
  %v2468 = vpop.f32.mrf.mxu0
  %v2469 = vadd.f32 %v2440, %v2468
  %2470 = vmatmul.f32.gmra.mxu0 %v43
  %v2471 = vpop.f32.mrf.mxu0
  %v2472 = vadd.f32 %v2443, %v2471
  %2473 = vdwg.mxu0
  %2474 = vmatpush.msra.mxu0 %v496
  %2475 = vmatpush.msra.mxu0 %v489
  %2476 = vmatpush.msra.mxu0 %v482
  %2477 = vmatpush.msra.mxu0 %v475
  %2478 = vmatpush.msra.mxu0 %v468
  %2479 = vmatpush.msra.mxu0 %v461
  %2480 = vmatpush.msra.mxu0 %v454
  %2481 = vmatpush.msra.mxu0 %v447
  %2482 = vmatpush.msra.mxu0 %v440
  %2483 = vmatpush.msra.mxu0 %v433
  %2484 = vmatpush.msra.mxu0 %v426
  %2485 = vmatpush.msra.mxu0 %v419
  %2486 = vmatpush.msra.mxu0 %v412
  %2487 = vmatpush.msra.mxu0 %v405
  %2488 = vmatpush.msra.mxu0 %v398
  %2489 = vmatpush.msra.mxu0 %v391
  %2490 = vmatmul.f32.gmra.mxu0 %v17
  %v2491 = vpop.f32.mrf.mxu0
  %v2492 = vadd.f32 %v2463, %v2491
  %2493 = vmatmul.f32.gmra.mxu0 %v26
  %v2494 = vpop.f32.mrf.mxu0
  %v2495 = vadd.f32 %v2466, %v2494
  %2496 = vmatmul.f32.gmra.mxu0 %v35
  %v2497 = vpop.f32.mrf.mxu0
  %v2498 = vadd.f32 %v2469, %v2497
  %2499 = vmatmul.f32.gmra.mxu0 %v44
  %v2500 = vpop.f32.mrf.mxu0
  %v2501 = vadd.f32 %v2472, %v2500
  %2502 = vdwg.mxu0
  %2503 = vmatpush.msra.mxu0 %v608
  %2504 = vmatpush.msra.mxu0 %v601
  %2505 = vmatpush.msra.mxu0 %v594
  %2506 = vmatpush.msra.mxu0 %v587
  %2507 = vmatpush.msra.mxu0 %v580
  %2508 = vmatpush.msra.mxu0 %v573
  %2509 = vmatpush.msra.mxu0 %v566
  %2510 = vmatpush.msra.mxu0 %v559
  %2511 = vmatpush.msra.mxu0 %v552
  %2512 = vmatpush.msra.mxu0 %v545
  %2513 = vmatpush.msra.mxu0 %v538
  %2514 = vmatpush.msra.mxu0 %v531
  %2515 = vmatpush.msra.mxu0 %v524
  %2516 = vmatpush.msra.mxu0 %v517
  %2517 = vmatpush.msra.mxu0 %v510
  %2518 = vmatpush.msra.mxu0 %v503
  %2519 = vmatmul.f32.gmra.mxu0 %v18
  %v2520 = vpop.f32.mrf.mxu0
  %v2521 = vadd.f32 %v2492, %v2520
  %2522 = vmatmul.f32.gmra.mxu0 %v27
  %v2523 = vpop.f32.mrf.mxu0
  %v2524 = vadd.f32 %v2495, %v2523
  %2525 = vmatmul.f32.gmra.mxu0 %v36
  %v2526 = vpop.f32.mrf.mxu0
  %v2527 = vadd.f32 %v2498, %v2526
  %2528 = vmatmul.f32.gmra.mxu0 %v45
  %v2529 = vpop.f32.mrf.mxu0
  %v2530 = vadd.f32 %v2501, %v2529
  %2531 = vdwg.mxu0
  %2532 = vmatpush.msra.mxu0 %v720
  %2533 = vmatpush.msra.mxu0 %v713
  %2534 = vmatpush.msra.mxu0 %v706
  %2535 = vmatpush.msra.mxu0 %v699
  %2536 = vmatpush.msra.mxu0 %v692
  %2537 = vmatpush.msra.mxu0 %v685
  %2538 = vmatpush.msra.mxu0 %v678
  %2539 = vmatpush.msra.mxu0 %v671
  %2540 = vmatpush.msra.mxu0 %v664
  %2541 = vmatpush.msra.mxu0 %v657
  %2542 = vmatpush.msra.mxu0 %v650
  %2543 = vmatpush.msra.mxu0 %v643
  %2544 = vmatpush.msra.mxu0 %v636
  %2545 = vmatpush.msra.mxu0 %v629
  %2546 = vmatpush.msra.mxu0 %v622
  %2547 = vmatpush.msra.mxu0 %v615
  %2548 = vmatmul.f32.gmra.mxu0 %v19
  %v2549 = vpop.f32.mrf.mxu0
  %v2550 = vadd.f32 %v2521, %v2549
  %2551 = vmatmul.f32.gmra.mxu0 %v28
  %v2552 = vpop.f32.mrf.mxu0
  %v2553 = vadd.f32 %v2524, %v2552
  %2554 = vmatmul.f32.gmra.mxu0 %v37
  %v2555 = vpop.f32.mrf.mxu0
  %v2556 = vadd.f32 %v2527, %v2555
  %2557 = vmatmul.f32.gmra.mxu0 %v46
  %v2558 = vpop.f32.mrf.mxu0
  %v2559 = vadd.f32 %v2530, %v2558
  %2560 = vdwg.mxu0
  %2561 = vmatpush.msra.mxu0 %v832
  %2562 = vmatpush.msra.mxu0 %v825
  %2563 = vmatpush.msra.mxu0 %v818
  %2564 = vmatpush.msra.mxu0 %v811
  %2565 = vmatpush.msra.mxu0 %v804
  %2566 = vmatpush.msra.mxu0 %v797
  %2567 = vmatpush.msra.mxu0 %v790
  %2568 = vmatpush.msra.mxu0 %v783
  %2569 = vmatpush.msra.mxu0 %v776
  %2570 = vmatpush.msra.mxu0 %v769
  %2571 = vmatpush.msra.mxu0 %v762
  %2572 = vmatpush.msra.mxu0 %v755
  %2573 = vmatpush.msra.mxu0 %v748
  %2574 = vmatpush.msra.mxu0 %v741
  %2575 = vmatpush.msra.mxu0 %v734
  %2576 = vmatpush.msra.mxu0 %v727
  %2577 = vmatmul.f32.gmra.mxu0 %v20
  %v2578 = vpop.f32.mrf.mxu0
  %v2579 = vadd.f32 %v2550, %v2578
  %2580 = vmatmul.f32.gmra.mxu0 %v29
  %v2581 = vpop.f32.mrf.mxu0
  %v2582 = vadd.f32 %v2553, %v2581
  %2583 = vmatmul.f32.gmra.mxu0 %v38
  %v2584 = vpop.f32.mrf.mxu0
  %v2585 = vadd.f32 %v2556, %v2584
  %2586 = vmatmul.f32.gmra.mxu0 %v47
  %v2587 = vpop.f32.mrf.mxu0
  %v2588 = vadd.f32 %v2559, %v2587
  %2589 = vdwg.mxu0
  %2590 = vmatpush.msra.mxu0 %v944
  %2591 = vmatpush.msra.mxu0 %v937
  %2592 = vmatpush.msra.mxu0 %v930
  %2593 = vmatpush.msra.mxu0 %v923
  %2594 = vmatpush.msra.mxu0 %v916
  %2595 = vmatpush.msra.mxu0 %v909
  %2596 = vmatpush.msra.mxu0 %v902
  %2597 = vmatpush.msra.mxu0 %v895
  %2598 = vmatpush.msra.mxu0 %v888
  %2599 = vmatpush.msra.mxu0 %v881
  %2600 = vmatpush.msra.mxu0 %v874
  %2601 = vmatpush.msra.mxu0 %v867
  %2602 = vmatpush.msra.mxu0 %v860
  %2603 = vmatpush.msra.mxu0 %v853
  %2604 = vmatpush.msra.mxu0 %v846
  %2605 = vmatpush.msra.mxu0 %v839
  %2606 = vmatmul.f32.gmra.mxu0 %v21
  %v2607 = vpop.f32.mrf.mxu0
  %v2608 = vadd.f32 %v2579, %v2607
  %2609 = vmatmul.f32.gmra.mxu0 %v30
  %v2610 = vpop.f32.mrf.mxu0
  %v2611 = vadd.f32 %v2582, %v2610
  %2612 = vmatmul.f32.gmra.mxu0 %v39
  %v2613 = vpop.f32.mrf.mxu0
  %v2614 = vadd.f32 %v2585, %v2613
  %2615 = vmatmul.f32.gmra.mxu0 %v48
  %v2616 = vpop.f32.mrf.mxu0
  %v2617 = vadd.f32 %v2588, %v2616
  %2618 = vdwg.mxu0
  %2619 = vmatpush.msra.mxu0 %v1056
  %2620 = vmatpush.msra.mxu0 %v1049
  %2621 = vmatpush.msra.mxu0 %v1042
  %2622 = vmatpush.msra.mxu0 %v1035
  %2623 = vmatpush.msra.mxu0 %v1028
  %2624 = vmatpush.msra.mxu0 %v1021
  %2625 = vmatpush.msra.mxu0 %v1014
  %2626 = vmatpush.msra.mxu0 %v1007
  %2627 = vmatpush.msra.mxu0 %v1000
  %2628 = vmatpush.msra.mxu0 %v993
  %2629 = vmatpush.msra.mxu0 %v986
  %2630 = vmatpush.msra.mxu0 %v979
  %2631 = vmatpush.msra.mxu0 %v972
  %2632 = vmatpush.msra.mxu0 %v965
  %2633 = vmatpush.msra.mxu0 %v958
  %2634 = vmatpush.msra.mxu0 %v951
  %2635 = vmatmul.f32.gmra.mxu0 %v22
  %v2636 = vpop.f32.mrf.mxu0
  %v2637 = vadd.f32 %v2608, %v2636
  %2638 = vmatmul.f32.gmra.mxu0 %v31
  %v2639 = vpop.f32.mrf.mxu0
  %v2640 = vadd.f32 %v2611, %v2639
  %2641 = vmatmul.f32.gmra.mxu0 %v40
  %v2642 = vpop.f32.mrf.mxu0
  %v2643 = vadd.f32 %v2614, %v2642
  %2644 = vmatmul.f32.gmra.mxu0 %v49
  %v2645 = vpop.f32.mrf.mxu0
  %v2646 = vadd.f32 %v2617, %v2645
  %2647 = vdwg.mxu0
  %2648 = vmatpush.msra.mxu0 %v161
  %2649 = vmatpush.msra.mxu0 %v154
  %2650 = vmatpush.msra.mxu0 %v147
  %2651 = vmatpush.msra.mxu0 %v140
  %2652 = vmatpush.msra.mxu0 %v133
  %2653 = vmatpush.msra.mxu0 %v126
  %2654 = vmatpush.msra.mxu0 %v119
  %2655 = vmatpush.msra.mxu0 %v112
  %2656 = vmatpush.msra.mxu0 %v105
  %2657 = vmatpush.msra.mxu0 %v98
  %2658 = vmatpush.msra.mxu0 %v91
  %2659 = vmatpush.msra.mxu0 %v84
  %2660 = vmatpush.msra.mxu0 %v77
  %2661 = vmatpush.msra.mxu0 %v70
  %2662 = vmatpush.msra.mxu0 %v63
  %2663 = vmatpush.msra.mxu0 %v56
  %2664 = vmatmul.f32.gmra.mxu0 %v14
  %v2665 = vpop.f32.mrf.mxu0
  %v2666 = vadd.f32 %v1065, %v2665
  %2667 = vmatmul.f32.gmra.mxu0 %v23
  %v2668 = vpop.f32.mrf.mxu0
  %v2669 = vadd.f32 %v1070, %v2668
  %2670 = vmatmul.f32.gmra.mxu0 %v32
  %v2671 = vpop.f32.mrf.mxu0
  %v2672 = vadd.f32 %v1075, %v2671
  %2673 = vmatmul.f32.gmra.mxu0 %v41
  %v2674 = vpop.f32.mrf.mxu0
  %v2675 = vadd.f32 %v1080, %v2674
  %2676 = vdwg.mxu0
  %2677 = vmatpush.msra.mxu0 %v273
  %2678 = vmatpush.msra.mxu0 %v266
  %2679 = vmatpush.msra.mxu0 %v259
  %2680 = vmatpush.msra.mxu0 %v252
  %2681 = vmatpush.msra.mxu0 %v245
  %2682 = vmatpush.msra.mxu0 %v238
  %2683 = vmatpush.msra.mxu0 %v231
  %2684 = vmatpush.msra.mxu0 %v224
  %2685 = vmatpush.msra.mxu0 %v217
  %2686 = vmatpush.msra.mxu0 %v210
  %2687 = vmatpush.msra.mxu0 %v203
  %2688 = vmatpush.msra.mxu0 %v196
  %2689 = vmatpush.msra.mxu0 %v189
  %2690 = vmatpush.msra.mxu0 %v182
  %2691 = vmatpush.msra.mxu0 %v175
  %2692 = vmatpush.msra.mxu0 %v168
  %2693 = vmatmul.f32.gmra.mxu0 %v15
  %v2694 = vpop.f32.mrf.mxu0
  %v2695 = vadd.f32 %v2666, %v2694
  %2696 = vmatmul.f32.gmra.mxu0 %v24
  %v2697 = vpop.f32.mrf.mxu0
  %v2698 = vadd.f32 %v2669, %v2697
  %2699 = vmatmul.f32.gmra.mxu0 %v33
  %v2700 = vpop.f32.mrf.mxu0
  %v2701 = vadd.f32 %v2672, %v2700
  %2702 = vmatmul.f32.gmra.mxu0 %v42
  %v2703 = vpop.f32.mrf.mxu0
  %v2704 = vadd.f32 %v2675, %v2703
  %2705 = vdwg.mxu0
  %2706 = vmatpush.msra.mxu0 %v385
  %2707 = vmatpush.msra.mxu0 %v378
  %2708 = vmatpush.msra.mxu0 %v371
  %2709 = vmatpush.msra.mxu0 %v364
  %2710 = vmatpush.msra.mxu0 %v357
  %2711 = vmatpush.msra.mxu0 %v350
  %2712 = vmatpush.msra.mxu0 %v343
  %2713 = vmatpush.msra.mxu0 %v336
  %2714 = vmatpush.msra.mxu0 %v329
  %2715 = vmatpush.msra.mxu0 %v322
  %2716 = vmatpush.msra.mxu0 %v315
  %2717 = vmatpush.msra.mxu0 %v308
  %2718 = vmatpush.msra.mxu0 %v301
  %2719 = vmatpush.msra.mxu0 %v294
  %2720 = vmatpush.msra.mxu0 %v287
  %2721 = vmatpush.msra.mxu0 %v280
  %2722 = vmatmul.f32.gmra.mxu0 %v16
  %v2723 = vpop.f32.mrf.mxu0
  %v2724 = vadd.f32 %v2695, %v2723
  %2725 = vmatmul.f32.gmra.mxu0 %v25
  %v2726 = vpop.f32.mrf.mxu0
  %v2727 = vadd.f32 %v2698, %v2726
  %2728 = vmatmul.f32.gmra.mxu0 %v34
  %v2729 = vpop.f32.mrf.mxu0
  %v2730 = vadd.f32 %v2701, %v2729
  %2731 = vmatmul.f32.gmra.mxu0 %v43
  %v2732 = vpop.f32.mrf.mxu0
  %v2733 = vadd.f32 %v2704, %v2732
  %2734 = vdwg.mxu0
  %2735 = vmatpush.msra.mxu0 %v497
  %2736 = vmatpush.msra.mxu0 %v490
  %2737 = vmatpush.msra.mxu0 %v483
  %2738 = vmatpush.msra.mxu0 %v476
  %2739 = vmatpush.msra.mxu0 %v469
  %2740 = vmatpush.msra.mxu0 %v462
  %2741 = vmatpush.msra.mxu0 %v455
  %2742 = vmatpush.msra.mxu0 %v448
  %2743 = vmatpush.msra.mxu0 %v441
  %2744 = vmatpush.msra.mxu0 %v434
  %2745 = vmatpush.msra.mxu0 %v427
  %2746 = vmatpush.msra.mxu0 %v420
  %2747 = vmatpush.msra.mxu0 %v413
  %2748 = vmatpush.msra.mxu0 %v406
  %2749 = vmatpush.msra.mxu0 %v399
  %2750 = vmatpush.msra.mxu0 %v392
  %2751 = vmatmul.f32.gmra.mxu0 %v17
  %v2752 = vpop.f32.mrf.mxu0
  %v2753 = vadd.f32 %v2724, %v2752
  %2754 = vmatmul.f32.gmra.mxu0 %v26
  %v2755 = vpop.f32.mrf.mxu0
  %v2756 = vadd.f32 %v2727, %v2755
  %2757 = vmatmul.f32.gmra.mxu0 %v35
  %v2758 = vpop.f32.mrf.mxu0
  %v2759 = vadd.f32 %v2730, %v2758
  %2760 = vmatmul.f32.gmra.mxu0 %v44
  %v2761 = vpop.f32.mrf.mxu0
  %v2762 = vadd.f32 %v2733, %v2761
  %2763 = vdwg.mxu0
  %2764 = vmatpush.msra.mxu0 %v609
  %2765 = vmatpush.msra.mxu0 %v602
  %2766 = vmatpush.msra.mxu0 %v595
  %2767 = vmatpush.msra.mxu0 %v588
  %2768 = vmatpush.msra.mxu0 %v581
  %2769 = vmatpush.msra.mxu0 %v574
  %2770 = vmatpush.msra.mxu0 %v567
  %2771 = vmatpush.msra.mxu0 %v560
  %2772 = vmatpush.msra.mxu0 %v553
  %2773 = vmatpush.msra.mxu0 %v546
  %2774 = vmatpush.msra.mxu0 %v539
  %2775 = vmatpush.msra.mxu0 %v532
  %2776 = vmatpush.msra.mxu0 %v525
  %2777 = vmatpush.msra.mxu0 %v518
  %2778 = vmatpush.msra.mxu0 %v511
  %2779 = vmatpush.msra.mxu0 %v504
  %2780 = vmatmul.f32.gmra.mxu0 %v18
  %v2781 = vpop.f32.mrf.mxu0
  %v2782 = vadd.f32 %v2753, %v2781
  %2783 = vmatmul.f32.gmra.mxu0 %v27
  %v2784 = vpop.f32.mrf.mxu0
  %v2785 = vadd.f32 %v2756, %v2784
  %2786 = vmatmul.f32.gmra.mxu0 %v36
  %v2787 = vpop.f32.mrf.mxu0
  %v2788 = vadd.f32 %v2759, %v2787
  %2789 = vmatmul.f32.gmra.mxu0 %v45
  %v2790 = vpop.f32.mrf.mxu0
  %v2791 = vadd.f32 %v2762, %v2790
  %2792 = vdwg.mxu0
  %2793 = vmatpush.msra.mxu0 %v721
  %2794 = vmatpush.msra.mxu0 %v714
  %2795 = vmatpush.msra.mxu0 %v707
  %2796 = vmatpush.msra.mxu0 %v700
  %2797 = vmatpush.msra.mxu0 %v693
  %2798 = vmatpush.msra.mxu0 %v686
  %2799 = vmatpush.msra.mxu0 %v679
  %2800 = vmatpush.msra.mxu0 %v672
  %2801 = vmatpush.msra.mxu0 %v665
  %2802 = vmatpush.msra.mxu0 %v658
  %2803 = vmatpush.msra.mxu0 %v651
  %2804 = vmatpush.msra.mxu0 %v644
  %2805 = vmatpush.msra.mxu0 %v637
  %2806 = vmatpush.msra.mxu0 %v630
  %2807 = vmatpush.msra.mxu0 %v623
  %2808 = vmatpush.msra.mxu0 %v616
  %2809 = vmatmul.f32.gmra.mxu0 %v19
  %v2810 = vpop.f32.mrf.mxu0
  %v2811 = vadd.f32 %v2782, %v2810
  %2812 = vmatmul.f32.gmra.mxu0 %v28
  %v2813 = vpop.f32.mrf.mxu0
  %v2814 = vadd.f32 %v2785, %v2813
  %2815 = vmatmul.f32.gmra.mxu0 %v37
  %v2816 = vpop.f32.mrf.mxu0
  %v2817 = vadd.f32 %v2788, %v2816
  %2818 = vmatmul.f32.gmra.mxu0 %v46
  %v2819 = vpop.f32.mrf.mxu0
  %v2820 = vadd.f32 %v2791, %v2819
  %2821 = vdwg.mxu0
  %2822 = vmatpush.msra.mxu0 %v833
  %2823 = vmatpush.msra.mxu0 %v826
  %2824 = vmatpush.msra.mxu0 %v819
  %2825 = vmatpush.msra.mxu0 %v812
  %2826 = vmatpush.msra.mxu0 %v805
  %2827 = vmatpush.msra.mxu0 %v798
  %2828 = vmatpush.msra.mxu0 %v791
  %2829 = vmatpush.msra.mxu0 %v784
  %2830 = vmatpush.msra.mxu0 %v777
  %2831 = vmatpush.msra.mxu0 %v770
  %2832 = vmatpush.msra.mxu0 %v763
  %2833 = vmatpush.msra.mxu0 %v756
  %2834 = vmatpush.msra.mxu0 %v749
  %2835 = vmatpush.msra.mxu0 %v742
  %2836 = vmatpush.msra.mxu0 %v735
  %2837 = vmatpush.msra.mxu0 %v728
  %2838 = vmatmul.f32.gmra.mxu0 %v20
  %v2839 = vpop.f32.mrf.mxu0
  %v2840 = vadd.f32 %v2811, %v2839
  %2841 = vmatmul.f32.gmra.mxu0 %v29
  %v2842 = vpop.f32.mrf.mxu0
  %v2843 = vadd.f32 %v2814, %v2842
  %2844 = vmatmul.f32.gmra.mxu0 %v38
  %v2845 = vpop.f32.mrf.mxu0
  %v2846 = vadd.f32 %v2817, %v2845
  %2847 = vmatmul.f32.gmra.mxu0 %v47
  %v2848 = vpop.f32.mrf.mxu0
  %v2849 = vadd.f32 %v2820, %v2848
  %2850 = vdwg.mxu0
  %2851 = vmatpush.msra.mxu0 %v945
  %2852 = vmatpush.msra.mxu0 %v938
  %2853 = vmatpush.msra.mxu0 %v931
  %2854 = vmatpush.msra.mxu0 %v924
  %2855 = vmatpush.msra.mxu0 %v917
  %2856 = vmatpush.msra.mxu0 %v910
  %2857 = vmatpush.msra.mxu0 %v903
  %2858 = vmatpush.msra.mxu0 %v896
  %2859 = vmatpush.msra.mxu0 %v889
  %2860 = vmatpush.msra.mxu0 %v882
  %2861 = vmatpush.msra.mxu0 %v875
  %2862 = vmatpush.msra.mxu0 %v868
  %2863 = vmatpush.msra.mxu0 %v861
  %2864 = vmatpush.msra.mxu0 %v854
  %2865 = vmatpush.msra.mxu0 %v847
  %2866 = vmatpush.msra.mxu0 %v840
  %2867 = vmatmul.f32.gmra.mxu0 %v21
  %v2868 = vpop.f32.mrf.mxu0
  %v2869 = vadd.f32 %v2840, %v2868
  %2870 = vmatmul.f32.gmra.mxu0 %v30
  %v2871 = vpop.f32.mrf.mxu0
  %v2872 = vadd.f32 %v2843, %v2871
  %2873 = vmatmul.f32.gmra.mxu0 %v39
  %v2874 = vpop.f32.mrf.mxu0
  %v2875 = vadd.f32 %v2846, %v2874
  %2876 = vmatmul.f32.gmra.mxu0 %v48
  %v2877 = vpop.f32.mrf.mxu0
  %v2878 = vadd.f32 %v2849, %v2877
  %2879 = vdwg.mxu0
  %2880 = vmatpush.msra.mxu0 %v1057
  %2881 = vmatpush.msra.mxu0 %v1050
  %2882 = vmatpush.msra.mxu0 %v1043
  %2883 = vmatpush.msra.mxu0 %v1036
  %2884 = vmatpush.msra.mxu0 %v1029
  %2885 = vmatpush.msra.mxu0 %v1022
  %2886 = vmatpush.msra.mxu0 %v1015
  %2887 = vmatpush.msra.mxu0 %v1008
  %2888 = vmatpush.msra.mxu0 %v1001
  %2889 = vmatpush.msra.mxu0 %v994
  %2890 = vmatpush.msra.mxu0 %v987
  %2891 = vmatpush.msra.mxu0 %v980
  %2892 = vmatpush.msra.mxu0 %v973
  %2893 = vmatpush.msra.mxu0 %v966
  %2894 = vmatpush.msra.mxu0 %v959
  %2895 = vmatpush.msra.mxu0 %v952
  %2896 = vmatmul.f32.gmra.mxu0 %v22
  %v2897 = vpop.f32.mrf.mxu0
  %v2898 = vadd.f32 %v2869, %v2897
  %2899 = vmatmul.f32.gmra.mxu0 %v31
  %v2900 = vpop.f32.mrf.mxu0
  %v2901 = vadd.f32 %v2872, %v2900
  %2902 = vmatmul.f32.gmra.mxu0 %v40
  %v2903 = vpop.f32.mrf.mxu0
  %v2904 = vadd.f32 %v2875, %v2903
  %2905 = vmatmul.f32.gmra.mxu0 %v49
  %v2906 = vpop.f32.mrf.mxu0
  %v2907 = vadd.f32 %v2878, %v2906
  %2908 = vdwg.mxu0
  %vm2909 = vcmp.ge.f32.partialorder %v1332, 0.0
  %vm2910 = vcmp.ge.f32.partialorder %v1593, 0.0
  %vm2911 = vcmp.ge.f32.partialorder %v1854, 0.0
  %vm2912 = vcmp.ge.f32.partialorder %v2115, 0.0
  %vm2913 = vcmp.ge.f32.partialorder %v2376, 0.0
  %vm2914 = vcmp.ge.f32.partialorder %v2637, 0.0
  %vm2915 = vcmp.ge.f32.partialorder %v2898, 0.0
  %vm2916 = vcmp.ge.f32.partialorder %v1335, 0.0
  %vm2917 = vcmp.ge.f32.partialorder %v1596, 0.0
  %vm2918 = vcmp.ge.f32.partialorder %v1857, 0.0
  %vm2919 = vcmp.ge.f32.partialorder %v2118, 0.0
  %vm2920 = vcmp.ge.f32.partialorder %v2379, 0.0
  %vm2921 = vcmp.ge.f32.partialorder %v2640, 0.0
  %vm2922 = vcmp.ge.f32.partialorder %v2901, 0.0
  %vm2923 = vcmp.ge.f32.partialorder %v1338, 0.0
  %vm2924 = vcmp.ge.f32.partialorder %v1599, 0.0
  %vm2925 = vcmp.ge.f32.partialorder %v1860, 0.0
  %vm2926 = vcmp.ge.f32.partialorder %v2121, 0.0
  %vm2927 = vcmp.ge.f32.partialorder %v2382, 0.0
  %vm2928 = vcmp.ge.f32.partialorder %v2643, 0.0
  %vm2929 = vcmp.ge.f32.partialorder %v2904, 0.0
  %vm2930 = vcmp.ge.f32.partialorder %v1341, 0.0
  %vm2931 = vcmp.ge.f32.partialorder %v1602, 0.0
  %vm2932 = vcmp.ge.f32.partialorder %v1863, 0.0
  %vm2933 = vcmp.ge.f32.partialorder %v2124, 0.0
  %vm2934 = vcmp.ge.f32.partialorder %v2385, 0.0
  %vm2935 = vcmp.ge.f32.partialorder %v2646, 0.0
  %vm2936 = vcmp.ge.f32.partialorder %v2907, 0.0
  %v2937 = vmul.f32 %v1332, 0.2
  %v2938 = vmul.f32 %v1593, 0.2
  %v2939 = vmul.f32 %v1854, 0.2
  %v2940 = vmul.f32 %v2115, 0.2
  %v2941 = vmul.f32 %v2376, 0.2
  %v2942 = vmul.f32 %v2637, 0.2
  %v2943 = vmul.f32 %v2898, 0.2
  %v2944 = vmul.f32 %v1335, 0.2
  %v2945 = vmul.f32 %v1596, 0.2
  %v2946 = vmul.f32 %v1857, 0.2
  %v2947 = vmul.f32 %v2118, 0.2
  %v2948 = vmul.f32 %v2379, 0.2
  %v2949 = vmul.f32 %v2640, 0.2
  %v2950 = vmul.f32 %v2901, 0.2
  %v2951 = vmul.f32 %v1338, 0.2
  %v2952 = vmul.f32 %v1599, 0.2
  %v2953 = vmul.f32 %v1860, 0.2
  %v2954 = vmul.f32 %v2121, 0.2
  %v2955 = vmul.f32 %v2382, 0.2
  %v2956 = vmul.f32 %v2643, 0.2
  %v2957 = vmul.f32 %v2904, 0.2
  %v2958 = vmul.f32 %v1341, 0.2
  %v2959 = vmul.f32 %v1602, 0.2
  %v2960 = vmul.f32 %v1863, 0.2
  %v2961 = vmul.f32 %v2124, 0.2
  %v2962 = vmul.f32 %v2385, 0.2
  %v2963 = vmul.f32 %v2646, 0.2
  %v2964 = vmul.f32 %v2907, 0.2
  %v2965 = vsel %vm2909, %v1332, %v2937
  %v2966 = vsel %vm2910, %v1593, %v2938
  %v2967 = vsel %vm2911, %v1854, %v2939
  %v2968 = vsel %vm2912, %v2115, %v2940
  %v2969 = vsel %vm2913, %v2376, %v2941
  %v2970 = vsel %vm2914, %v2637, %v2942
  %v2971 = vsel %vm2915, %v2898, %v2943
  %v2972 = vsel %vm2916, %v1335, %v2944
  %v2973 = vsel %vm2917, %v1596, %v2945
  %v2974 = vsel %vm2918, %v1857, %v2946
  %v2975 = vsel %vm2919, %v2118, %v2947
  %v2976 = vsel %vm2920, %v2379, %v2948
  %v2977 = vsel %vm2921, %v2640, %v2949
  %v2978 = vsel %vm2922, %v2901, %v2950
  %v2979 = vsel %vm2923, %v1338, %v2951
  %v2980 = vsel %vm2924, %v1599, %v2952
  %v2981 = vsel %vm2925, %v1860, %v2953
  %v2982 = vsel %vm2926, %v2121, %v2954
  %v2983 = vsel %vm2927, %v2382, %v2955
  %v2984 = vsel %vm2928, %v2643, %v2956
  %v2985 = vsel %vm2929, %v2904, %v2957
  %v2986 = vsel %vm2930, %v1341, %v2958
  %v2987 = vsel %vm2931, %v1602, %v2959
  %v2988 = vsel %vm2932, %v1863, %v2960
  %v2989 = vsel %vm2933, %v2124, %v2961
  %v2990 = vsel %vm2934, %v2385, %v2962
  %v2991 = vsel %vm2935, %v2646, %v2963
  %v2992 = vsel %vm2936, %v2907, %v2964
  %v2993 = vmul.f32 %v2965, %v2965
  %v2994 = vmul.f32 %v2966, %v2966
  %v2995 = vmul.f32 %v2967, %v2967
  %v2996 = vmul.f32 %v2968, %v2968
  %v2997 = vmul.f32 %v2969, %v2969
  %v2998 = vmul.f32 %v2970, %v2970
  %v2999 = vmul.f32 %v2971, %v2971
  %v3000 = vmul.f32 %v2972, %v2972
  %v3001 = vmul.f32 %v2973, %v2973
  %v3002 = vmul.f32 %v2974, %v2974
  %v3003 = vmul.f32 %v2975, %v2975
  %v3004 = vmul.f32 %v2976, %v2976
  %v3005 = vmul.f32 %v2977, %v2977
  %v3006 = vmul.f32 %v2978, %v2978
  %v3007 = vmul.f32 %v2979, %v2979
  %v3008 = vmul.f32 %v2980, %v2980
  %v3009 = vmul.f32 %v2981, %v2981
  %v3010 = vmul.f32 %v2982, %v2982
  %v3011 = vmul.f32 %v2983, %v2983
  %v3012 = vmul.f32 %v2984, %v2984
  %v3013 = vmul.f32 %v2985, %v2985
  %v3014 = vmul.f32 %v2986, %v2986
  %v3015 = vmul.f32 %v2987, %v2987
  %v3016 = vmul.f32 %v2988, %v2988
  %v3017 = vmul.f32 %v2989, %v2989
  %v3018 = vmul.f32 %v2990, %v2990
  %v3019 = vmul.f32 %v2991, %v2991
  %v3020 = vmul.f32 %v2992, %v2992
  %v3021 = vadd.f32 %v2993, %v3000
  %v3022 = vadd.f32 %v3021, %v3007
  %v3023 = vadd.f32 %v3022, %v3014
  %v3024 = vrot.slane %v3023, 4
  %v3025 = vadd.f32 %v3023, %v3024
  %v3026 = vrot.slane %v3025, 2
  %v3027 = vadd.f32 %v3025, %v3026
  %v3028 = vrot.slane %v3027, 1
  %v3029 = vadd.f32 %v3027, %v3028
  %v3030 = vadd.f32 %v2994, %v3001
  %v3031 = vadd.f32 %v3030, %v3008
  %v3032 = vadd.f32 %v3031, %v3015
  %v3033 = vrot.slane %v3032, 4
  %v3034 = vadd.f32 %v3032, %v3033
  %v3035 = vrot.slane %v3034, 2
  %v3036 = vadd.f32 %v3034, %v3035
  %v3037 = vrot.slane %v3036, 1
  %v3038 = vadd.f32 %v3036, %v3037
  %v3039 = vadd.f32 %v2995, %v3002
  %v3040 = vadd.f32 %v3039, %v3009
  %v3041 = vadd.f32 %v3040, %v3016
  %v3042 = vrot.slane %v3041, 4
  %v3043 = vadd.f32 %v3041, %v3042
  %v3044 = vrot.slane %v3043, 2
  %v3045 = vadd.f32 %v3043, %v3044
  %v3046 = vrot.slane %v3045, 1
  %v3047 = vadd.f32 %v3045, %v3046
  %v3048 = vadd.f32 %v2996, %v3003
  %v3049 = vadd.f32 %v3048, %v3010
  %v3050 = vadd.f32 %v3049, %v3017
  %v3051 = vrot.slane %v3050, 4
  %v3052 = vadd.f32 %v3050, %v3051
  %v3053 = vrot.slane %v3052, 2
  %v3054 = vadd.f32 %v3052, %v3053
  %v3055 = vrot.slane %v3054, 1
  %v3056 = vadd.f32 %v3054, %v3055
  %v3057 = vadd.f32 %v2997, %v3004
  %v3058 = vadd.f32 %v3057, %v3011
  %v3059 = vadd.f32 %v3058, %v3018
  %v3060 = vrot.slane %v3059, 4
  %v3061 = vadd.f32 %v3059, %v3060
  %v3062 = vrot.slane %v3061, 2
  %v3063 = vadd.f32 %v3061, %v3062
  %v3064 = vrot.slane %v3063, 1
  %v3065 = vadd.f32 %v3063, %v3064
  %v3066 = vadd.f32 %v2998, %v3005
  %v3067 = vadd.f32 %v3066, %v3012
  %v3068 = vadd.f32 %v3067, %v3019
  %v3069 = vrot.slane %v3068, 4
  %v3070 = vadd.f32 %v3068, %v3069
  %v3071 = vrot.slane %v3070, 2
  %v3072 = vadd.f32 %v3070, %v3071
  %v3073 = vrot.slane %v3072, 1
  %v3074 = vadd.f32 %v3072, %v3073
  %v3075 = vadd.f32 %v2999, %v3006
  %v3076 = vadd.f32 %v3075, %v3013
  %v3077 = vadd.f32 %v3076, %v3020
  %v3078 = vrot.slane %v3077, 4
  %v3079 = vadd.f32 %v3077, %v3078
  %v3080 = vrot.slane %v3079, 2
  %v3081 = vadd.f32 %v3079, %v3080
  %v3082 = vrot.slane %v3081, 1
  %v3083 = vadd.f32 %v3081, %v3082
  %v3084 = vmul.f32 %v3029, 0.03125
  %v3085 = vmul.f32 %v3038, 0.03125
  %v3086 = vmul.f32 %v3047, 0.03125
  %v3087 = vmul.f32 %v3056, 0.03125
  %v3088 = vmul.f32 %v3065, 0.03125
  %v3089 = vmul.f32 %v3074, 0.03125
  %v3090 = vmul.f32 %v3083, 0.03125
  %v3091 = vadd.f32 %v3084, 1e-08
  %v3092 = vadd.f32 %v3085, 1e-08
  %v3093 = vadd.f32 %v3086, 1e-08
  %v3094 = vadd.f32 %v3087, 1e-08
  %v3095 = vadd.f32 %v3088, 1e-08
  %v3096 = vadd.f32 %v3089, 1e-08
  %v3097 = vadd.f32 %v3090, 1e-08
  %v3098 = vrsqrt.pop %v3091
  %v3099 = vmul.f32 %v3098, %v3091
  %v3100 = vmul.f32 %v3099, %v3098
  %v3101 = vmul.f32 0.5, %v3100
  %v3102 = vsub.f32 1.5, %v3101
  %v3103 = vmul.f32 %v3098, %v3102
  %vm3104 = vweird.f32 %v3091
  %vm3105 = vweird.f32 %v3098
  %vm3106 = vmor %vm3104, %vm3105
  %v3107 = vsel %vm3106, %v3098, %v3103
  %v3108 = vrsqrt.pop %v3092
  %v3109 = vmul.f32 %v3108, %v3092
  %v3110 = vmul.f32 %v3109, %v3108
  %v3111 = vmul.f32 0.5, %v3110
  %v3112 = vsub.f32 1.5, %v3111
  %v3113 = vmul.f32 %v3108, %v3112
  %vm3114 = vweird.f32 %v3092
  %vm3115 = vweird.f32 %v3108
  %vm3116 = vmor %vm3114, %vm3115
  %v3117 = vsel %vm3116, %v3108, %v3113
  %v3118 = vrsqrt.pop %v3093
  %v3119 = vmul.f32 %v3118, %v3093
  %v3120 = vmul.f32 %v3119, %v3118
  %v3121 = vmul.f32 0.5, %v3120
  %v3122 = vsub.f32 1.5, %v3121
  %v3123 = vmul.f32 %v3118, %v3122
  %vm3124 = vweird.f32 %v3093
  %vm3125 = vweird.f32 %v3118
  %vm3126 = vmor %vm3124, %vm3125
  %v3127 = vsel %vm3126, %v3118, %v3123
  %v3128 = vrsqrt.pop %v3094
  %v3129 = vmul.f32 %v3128, %v3094
  %v3130 = vmul.f32 %v3129, %v3128
  %v3131 = vmul.f32 0.5, %v3130
  %v3132 = vsub.f32 1.5, %v3131
  %v3133 = vmul.f32 %v3128, %v3132
  %vm3134 = vweird.f32 %v3094
  %vm3135 = vweird.f32 %v3128
  %vm3136 = vmor %vm3134, %vm3135
  %v3137 = vsel %vm3136, %v3128, %v3133
  %v3138 = vrsqrt.pop %v3095
  %v3139 = vmul.f32 %v3138, %v3095
  %v3140 = vmul.f32 %v3139, %v3138
  %v3141 = vmul.f32 0.5, %v3140
  %v3142 = vsub.f32 1.5, %v3141
  %v3143 = vmul.f32 %v3138, %v3142
  %vm3144 = vweird.f32 %v3095
  %vm3145 = vweird.f32 %v3138
  %vm3146 = vmor %vm3144, %vm3145
  %v3147 = vsel %vm3146, %v3138, %v3143
  %v3148 = vrsqrt.pop %v3096
  %v3149 = vmul.f32 %v3148, %v3096
  %v3150 = vmul.f32 %v3149, %v3148
  %v3151 = vmul.f32 0.5, %v3150
  %v3152 = vsub.f32 1.5, %v3151
  %v3153 = vmul.f32 %v3148, %v3152
  %vm3154 = vweird.f32 %v3096
  %vm3155 = vweird.f32 %v3148
  %vm3156 = vmor %vm3154, %vm3155
  %v3157 = vsel %vm3156, %v3148, %v3153
  %v3158 = vrsqrt.pop %v3097
  %v3159 = vmul.f32 %v3158, %v3097
  %v3160 = vmul.f32 %v3159, %v3158
  %v3161 = vmul.f32 0.5, %v3160
  %v3162 = vsub.f32 1.5, %v3161
  %v3163 = vmul.f32 %v3158, %v3162
  %vm3164 = vweird.f32 %v3097
  %vm3165 = vweird.f32 %v3158
  %vm3166 = vmor %vm3164, %vm3165
  %v3167 = vsel %vm3166, %v3158, %v3163
  %v3168 = vmul.f32 %v2965, %v3107
  %v3169 = vmul.f32 %v2966, %v3117
  %v3170 = vmul.f32 %v2967, %v3127
  %v3171 = vmul.f32 %v2968, %v3137
  %v3172 = vmul.f32 %v2969, %v3147
  %v3173 = vmul.f32 %v2970, %v3157
  %v3174 = vmul.f32 %v2971, %v3167
  %v3175 = vmul.f32 %v2972, %v3107
  %v3176 = vmul.f32 %v2973, %v3117
  %v3177 = vmul.f32 %v2974, %v3127
  %v3178 = vmul.f32 %v2975, %v3137
  %v3179 = vmul.f32 %v2976, %v3147
  %v3180 = vmul.f32 %v2977, %v3157
  %v3181 = vmul.f32 %v2978, %v3167
  %v3182 = vmul.f32 %v2979, %v3107
  %v3183 = vmul.f32 %v2980, %v3117
  %v3184 = vmul.f32 %v2981, %v3127
  %v3185 = vmul.f32 %v2982, %v3137
  %v3186 = vmul.f32 %v2983, %v3147
  %v3187 = vmul.f32 %v2984, %v3157
  %v3188 = vmul.f32 %v2985, %v3167
  %v3189 = vmul.f32 %v2986, %v3107
  %v3190 = vmul.f32 %v2987, %v3117
  %v3191 = vmul.f32 %v2988, %v3127
  %v3192 = vmul.f32 %v2989, %v3137
  %v3193 = vmul.f32 %v2990, %v3147
  %v3194 = vmul.f32 %v2991, %v3157
  %v3195 = vmul.f32 %v2992, %v3167
  %3196 = vst [vmem:[%s3] sm:$0xff] %v3168
  %3197 = vst [vmem:[%s3 + $0x8] sm:$0xff] %v3169
  %3198 = vst [vmem:[%s3 + $0x10] sm:$0xff] %v3170
  %3199 = vst [vmem:[%s3 + $0x18] sm:$0xff] %v3171
  %3200 = vst [vmem:[%s3 + $0x20] sm:$0xff] %v3172
  %3201 = vst [vmem:[%s3 + $0x28] sm:$0xff] %v3173
  %3202 = vst [vmem:[%s3 + $0x30] sm:$0xff] %v3174
  %3203 = vst [vmem:[%s3 + $0x38] sm:$0xff] %v3175
  %3204 = vst [vmem:[%s3 + $0x40] sm:$0xff] %v3176
  %3205 = vst [vmem:[%s3 + $0x48] sm:$0xff] %v3177
  %3206 = vst [vmem:[%s3 + $0x50] sm:$0xff] %v3178
  %3207 = vst [vmem:[%s3 + $0x58] sm:$0xff] %v3179
  %3208 = vst [vmem:[%s3 + $0x60] sm:$0xff] %v3180
  %3209 = vst [vmem:[%s3 + $0x68] sm:$0xff] %v3181
  %3210 = vst [vmem:[%s3 + $0x70] sm:$0xff] %v3182
  %3211 = vst [vmem:[%s3 + $0x78] sm:$0xff] %v3183
  %3212 = vst [vmem:[%s3 + $0x80] sm:$0xff] %v3184
  %3213 = vst [vmem:[%s3 + $0x88] sm:$0xff] %v3185
  %3214 = vst [vmem:[%s3 + $0x90] sm:$0xff] %v3186
  %3215 = vst [vmem:[%s3 + $0x98] sm:$0xff] %v3187
  %3216 = vst [vmem:[%s3 + $0xa0] sm:$0xff] %v3188
  %3217 = vst [vmem:[%s3 + $0xa8] sm:$0xff] %v3189
  %3218 = vst [vmem:[%s3 + $0xb0] sm:$0xff] %v3190
  %3219 = vst [vmem:[%s3 + $0xb8] sm:$0xff] %v3191
  %3220 = vst [vmem:[%s3 + $0xc0] sm:$0xff] %v3192
  %3221 = vst [vmem:[%s3 + $0xc8] sm:$0xff] %v3193
  %3222 = vst [vmem:[%s3 + $0xd0] sm:$0xff] %v3194
  %3223 = vst [vmem:[%s3 + $0xd8] sm:$0xff] %v3195
  // Predicated region
  $region14: #{unet_block_forward.14} parent=0 // pred_check
    _
  $region15: #{unet_block_forward.14} parent=0 // pred_check_branch
    %3225 = sbr.rel (0) target = $region17
  $region16: #{unet_block_forward.14} parent=0 // pred_region
    _
  $region17: #{unet_block_forward.14} parent=0 // pred_fallthru
    _
  // Predicated region
  $region18: #{unet_block_forward.14} parent=0 // pred_check
    _
  $region19: #{unet_block_forward.14} parent=0 // pred_check_branch
    %3227 = sbr.rel (0) target = $region21
  $region20: #{unet_block_forward.14} parent=0 // pred_region
    _
  $region21: #{unet_block_forward.14} parent=0 // pred_fallthru
    _

// kernel: unet_block_forward.15
$region0: #{unet_block_forward.15}
  #allocation0 [shape = 'u32[]', space=smem, size = 0x4, offset = 0x4, fixed_abs, tag = 'smem constant byte address 0x4 - core index']
  #allocation1 [shape = 'u32[72,128]{1,0:T(1,128)}', space=vmem, size = 0x9000, scoped, tag = 'internal scratch']
  %s0 = inlined_call_operand.vmem [shape: f32[576,3584], index: 0, kind: input, shape index: {}]
  %s1 = inlined_call_operand.vmem [shape: f32[4,576], index: 1, kind: input, shape index: {}]
  %s2 = inlined_call_operand.vmem [shape: f32[4,1], index: 2, kind: input, shape index: {}]
  %s3 = inlined_call_operand.vmem [shape: f32[4,3584], index: 3, kind: output, shape index: {}]
  %s4 = sld [smem:[#allocation0]]
  $region68: #{unet_block_forward.15} parent=0
    _
  %s6 = ssub.s32 1, %s4
  %s7 = scalar_select 0, %s6, %s4
  $region1: #{unet_block_forward.15} parent=0
    #allocation2 [shape = 'u8[4128768]{0}', space=vmem, size = 0x3f0000, scoped, tag = 'input window, operand 0']
    loop: start=0, step=1, limit=6
    $region2: #{unet_block_forward.15} parent=1 // loop_pre_header
      _
    $region3: #{unet_block_forward.15} parent=1 // loop_header
      %s9 = sphi 0, %s13
      %p10 = scmp.ge.s32.totalorder %s9, 6
      %s19 = sphi 0, %s21
      %s22 = sphi 0, %s19
      %s23 = sphi 0, %s22
      %s39 = sphi 0, %s23
      %s43 = sphi 0, %s43
      %s45 = sphi 0, %s43
      %s46 = sphi 0, %s45
      %s60 = sphi 0, %s46
      %s64 = sphi 0, %s64
      %s66 = sphi 0, %s64
      %s67 = sphi 0, %s66
      %s81 = sphi 0, %s67
      %s87 = sphi 0, %s89
      %s90 = sphi 0, %s87
      %s91 = sphi 0, %s90
      %s107 = sphi 0, %s91
    $region4: #{unet_block_forward.15} parent=1 // loop_header_branch
      %12 = sbr.rel (%p10) target = $region8
    $region5: #{unet_block_forward.15} parent=1 // loop_body
      %s14 = ssub.s32 %s9, 1
      %s15 = ssub.s32 %s9, 2
      %s16 = sadd.s32 %s9, 1
      %s17 = ssub.s32 %s9, %s16
      %p18 = scmp.eq.s32.totalorder %s17, 0
      %s20 = sadd.s32 %s19, 1
      %s21 = scalar_select %p18, %s19, %s20
      %p24 = pneg %p18
      %p25 = scmp.eq.s32.totalorder %s9, 3
      %p26 = por %p24, %p25
      %p27 = scmp.ne.s32.totalorder %s19, %s22
      %p28 = scmp.eq.s32.totalorder %s9, 0
      %p29 = por %p27, %p28
      %p30 = scmp.ne.s32.totalorder %s19, %s22
      %p31 = scmp.eq.s32.totalorder %s14, 3
      %p32 = por %p30, %p31
      %p33 = scmp.ne.s32.totalorder %s22, %s23
      %p34 = scmp.eq.s32.totalorder %s14, 0
      %p35 = por %p33, %p34
      %p36 = scmp.ne.s32.totalorder %s22, %s23
      %p37 = scmp.eq.s32.totalorder %s15, 3
      %p38 = por %p36, %p37
      %p40 = scmp.ne.s32.totalorder %s23, %s39
      %p41 = scmp.eq.s32.totalorder %s15, 0
      %p42 = por %p40, %p41
      %s44 = sadd.s32 %s43, 1
      %p47 = scmp.eq.s32.totalorder %s9, 3
      %p48 = scmp.ne.s32.totalorder %s43, %s45
      %p49 = scmp.eq.s32.totalorder %s9, 0
      %p50 = por %p48, %p49
      %p51 = scmp.ne.s32.totalorder %s43, %s45
      %p52 = scmp.eq.s32.totalorder %s14, 3
      %p53 = por %p51, %p52
      %p54 = scmp.ne.s32.totalorder %s45, %s46
      %p55 = scmp.eq.s32.totalorder %s14, 0
      %p56 = por %p54, %p55
      %p57 = scmp.ne.s32.totalorder %s45, %s46
      %p58 = scmp.eq.s32.totalorder %s15, 3
      %p59 = por %p57, %p58
      %p61 = scmp.ne.s32.totalorder %s46, %s60
      %p62 = scmp.eq.s32.totalorder %s15, 0
      %p63 = por %p61, %p62
      %s65 = sadd.s32 %s64, 1
      %p68 = scmp.eq.s32.totalorder %s9, 3
      %p69 = scmp.ne.s32.totalorder %s64, %s66
      %p70 = scmp.eq.s32.totalorder %s9, 0
      %p71 = por %p69, %p70
      %p72 = scmp.ne.s32.totalorder %s64, %s66
      %p73 = scmp.eq.s32.totalorder %s14, 3
      %p74 = por %p72, %p73
      %p75 = scmp.ne.s32.totalorder %s66, %s67
      %p76 = scmp.eq.s32.totalorder %s14, 0
      %p77 = por %p75, %p76
      %p78 = scmp.ne.s32.totalorder %s66, %s67
      %p79 = scmp.eq.s32.totalorder %s15, 3
      %p80 = por %p78, %p79
      %p82 = scmp.ne.s32.totalorder %s67, %s81
      %p83 = scmp.eq.s32.totalorder %s15, 0
      %p84 = por %p82, %p83
      %s85 = ssub.s32 %s9, %s16
      %p86 = scmp.eq.s32.totalorder %s85, 0
      %s88 = sadd.s32 %s87, 1
      %s89 = scalar_select %p86, %s87, %s88
      %p92 = pneg %p86
      %p93 = scmp.eq.s32.totalorder %s9, 3
      %p94 = por %p92, %p93
      %p95 = scmp.ne.s32.totalorder %s87, %s90
      %p96 = scmp.eq.s32.totalorder %s9, 0
      %p97 = por %p95, %p96
      %p98 = scmp.ne.s32.totalorder %s87, %s90
      %p99 = scmp.eq.s32.totalorder %s14, 3
      %p100 = por %p98, %p99
      %p101 = scmp.ne.s32.totalorder %s90, %s91
      %p102 = scmp.eq.s32.totalorder %s14, 0
      %p103 = por %p101, %p102
      %p104 = scmp.ne.s32.totalorder %s90, %s91
      %p105 = scmp.eq.s32.totalorder %s15, 3
      %p106 = por %p104, %p105
      %p108 = scmp.ne.s32.totalorder %s91, %s107
      %p109 = scmp.eq.s32.totalorder %s15, 0
      %p110 = por %p108, %p109
      %p111 = scmp.le.s32.totalorder 1, %s9
      %p112 = scmp.lt.s32.totalorder %s9, 5
      %p113 = pnand %p111, %p112
      %p114 = pneg %p113
      // Predicated region
      $region9: #{unet_block_forward.15} parent=5 // pred_check
        _
      $region10: #{unet_block_forward.15} parent=5 // pred_check_branch
        %116 = sbr.rel (%p113) target = $region12
      $region11: #{unet_block_forward.15} parent=5 // pred_region
        %s117 = ssub.s32 %s9, 1
        // Predicated region
        $region13: #{unet_block_forward.15} parent=11 // pred_check
          %p118 = pneg %p56
        $region14: #{unet_block_forward.15} parent=11 // pred_check_branch
          %120 = sbr.rel (%p118) target = $region16
        $region15: #{unet_block_forward.15} parent=11 // pred_region
          _
        $region16: #{unet_block_forward.15} parent=11 // pred_fallthru
          _
        // Predicated region
        $region17: #{unet_block_forward.15} parent=11 // pred_check
          %p121 = pneg %p77
        $region18: #{unet_block_forward.15} parent=11 // pred_check_branch
          %123 = sbr.rel (%p121) target = $region20
        $region19: #{unet_block_forward.15} parent=11 // pred_region
          _
        $region20: #{unet_block_forward.15} parent=11 // pred_fallthru
          _
      $region12: #{unet_block_forward.15} parent=5 // pred_fallthru
        _
      %p124 = scmp.lt.s32.totalorder %s9, 4
      // Predicated region
      $region21: #{unet_block_forward.15} parent=5 // pred_check
        %p125 = pneg %p124
      $region22: #{unet_block_forward.15} parent=5 // pred_check_branch
        %127 = sbr.rel (%p125) target = $region24
      $region23: #{unet_block_forward.15} parent=5 // pred_region
        // Predicated region
        $region25: #{unet_block_forward.15} parent=23 // pred_check
          %p128 = pneg %p29
        $region26: #{unet_block_forward.15} parent=23 // pred_check_branch
          %130 = sbr.rel (%p128) target = $region28
        $region27: #{unet_block_forward.15} parent=23 // pred_region
          %s131 = sand.u32 %s19, 1
          %s132 = sand.u32 %s19, 1
          %s133 = smul.addr %s132, 4032
          %s134 = scalar_lea.vmem [#allocation2], %s133
          %s135 = smul.u32 7, %s9
          %s136 = smul.addr %s135, 8
          %s137 = scalar_lea.vmem %s0, %s136
          // Predicated region
          $region29: #{unet_block_forward.15} parent=27 // pred_check
            _
          $region30: #{unet_block_forward.15} parent=27 // pred_check_branch
            %139 = sbr.rel (0) target = $region32
          $region31: #{unet_block_forward.15} parent=27 // pred_region
            // Predicated region
            $region33: #{unet_block_forward.15} parent=31 // pred_check
              _
            $region34: #{unet_block_forward.15} parent=31 // pred_check_branch
              %141 = sbr.rel (0) target = $region36
            $region35: #{unet_block_forward.15} parent=31 // pred_region
              loop: start=0, step=1, limit=1
              $region37: #{unet_block_forward.15} parent=35 // loop_pre_header
                _
              $region38: #{unet_block_forward.15} parent=35 // loop_header
                %s143 = sphi 0, %s147
                %p144 = scmp.ge.s32.totalorder %s143, 1
                %s148 = sphi %s137, %s137
                %s149 = sphi %s134, %s134
              $region39: #{unet_block_forward.15} parent=35 // loop_header_branch
                %146 = sbr.rel (%p144) target = $region43
              $region40: #{unet_block_forward.15} parent=35 // loop_body
                %v150 = vld [vmem:[%s148] sm:$0xff]
                %151 = vst [vmem:[%s149] sm:$0xff] %v150
                %v152 = vld [vmem:[%s148 + $0x8] sm:$0xff]
                %153 = vst [vmem:[%s149 + $0x8] sm:$0xff] %v152
                %v154 = vld [vmem:[%s148 + $0x10] sm:$0xff]
                %155 = vst [vmem:[%s149 + $0x10] sm:$0xff] %v154
                %v156 = vld [vmem:[%s148 + $0x18] sm:$0xff]
                %157 = vst [vmem:[%s149 + $0x18] sm:$0xff] %v156
                %v158 = vld [vmem:[%s148 + $0x20] sm:$0xff]
                %159 = vst [vmem:[%s149 + $0x20] sm:$0xff] %v158
                %v160 = vld [vmem:[%s148 + $0x28] sm:$0xff]
                %161 = vst [vmem:[%s149 + $0x28] sm:$0xff] %v160
                %v162 = vld [vmem:[%s148 + $0x30] sm:$0xff]
                %163 = vst [vmem:[%s149 + $0x30] sm:$0xff] %v162
                %v164 = vld [vmem:[%s148 + $0xe0] sm:$0xff]
                %165 = vst [vmem:[%s149 + $0x38] sm:$0xff] %v164
                %v166 = vld [vmem:[%s148 + $0xe8] sm:$0xff]
                %167 = vst [vmem:[%s149 + $0x40] sm:$0xff] %v166
                %v168 = vld [vmem:[%s148 + $0xf0] sm:$0xff]
                %169 = vst [vmem:[%s149 + $0x48] sm:$0xff] %v168
                %v170 = vld [vmem:[%s148 + $0xf8] sm:$0xff]
                %171 = vst [vmem:[%s149 + $0x50] sm:$0xff] %v170
                %v172 = vld [vmem:[%s148 + $0x100] sm:$0xff]
                %173 = vst [vmem:[%s149 + $0x58] sm:$0xff] %v172
                %v174 = vld [vmem:[%s148 + $0x108] sm:$0xff]
                %175 = vst [vmem:[%s149 + $0x60] sm:$0xff] %v174
                %v176 = vld [vmem:[%s148 + $0x110] sm:$0xff]
                %177 = vst [vmem:[%s149 + $0x68] sm:$0xff] %v176
                %v178 = vld [vmem:[%s148 + $0x1c0] sm:$0xff]
                %179 = vst [vmem:[%s149 + $0x70] sm:$0xff] %v178
                %v180 = vld [vmem:[%s148 + $0x1c8] sm:$0xff]
                %181 = vst [vmem:[%s149 + $0x78] sm:$0xff] %v180
                %v182 = vld [vmem:[%s148 + $0x1d0] sm:$0xff]
                %183 = vst [vmem:[%s149 + $0x80] sm:$0xff] %v182
                %v184 = vld [vmem:[%s148 + $0x1d8] sm:$0xff]
                %185 = vst [vmem:[%s149 + $0x88] sm:$0xff] %v184
                %v186 = vld [vmem:[%s148 + $0x1e0] sm:$0xff]
                %187 = vst [vmem:[%s149 + $0x90] sm:$0xff] %v186
                %v188 = vld [vmem:[%s148 + $0x1e8] sm:$0xff]
                %189 = vst [vmem:[%s149 + $0x98] sm:$0xff] %v188
                %v190 = vld [vmem:[%s148 + $0x1f0] sm:$0xff]
                %191 = vst [vmem:[%s149 + $0xa0] sm:$0xff] %v190
                %v192 = vld [vmem:[%s148 + $0x2a0] sm:$0xff]
                %193 = vst [vmem:[%s149 + $0xa8] sm:$0xff] %v192
                %v194 = vld [vmem:[%s148 + $0x2a8] sm:$0xff]
                %195 = vst [vmem:[%s149 + $0xb0] sm:$0xff] %v194
                %v196 = vld [vmem:[%s148 + $0x2b0] sm:$0xff]
                %197 = vst [vmem:[%s149 + $0xb8] sm:$0xff] %v196
                %v198 = vld [vmem:[%s148 + $0x2b8] sm:$0xff]
                %199 = vst [vmem:[%s149 + $0xc0] sm:$0xff] %v198
                %v200 = vld [vmem:[%s148 + $0x2c0] sm:$0xff]
                %201 = vst [vmem:[%s149 + $0xc8] sm:$0xff] %v200
                %v202 = vld [vmem:[%s148 + $0x2c8] sm:$0xff]
                %203 = vst [vmem:[%s149 + $0xd0] sm:$0xff] %v202
                %v204 = vld [vmem:[%s148 + $0x2d0] sm:$0xff]
                %205 = vst [vmem:[%s149 + $0xd8] sm:$0xff] %v204
                %v206 = vld [vmem:[%s148 + $0x380] sm:$0xff]
                %207 = vst [vmem:[%s149 + $0xe0] sm:$0xff] %v206
                %v208 = vld [vmem:[%s148 + $0x388] sm:$0xff]
                %209 = vst [vmem:[%s149 + $0xe8] sm:$0xff] %v208
                %v210 = vld [vmem:[%s148 + $0x390] sm:$0xff]
                %211 = vst [vmem:[%s149 + $0xf0] sm:$0xff] %v210
                %v212 = vld [vmem:[%s148 + $0x398] sm:$0xff]
                %213 = vst [vmem:[%s149 + $0xf8] sm:$0xff] %v212
                %v214 = vld [vmem:[%s148 + $0x3a0] sm:$0xff]
                %215 = vst [vmem:[%s149 + $0x100] sm:$0xff] %v214
                %v216 = vld [vmem:[%s148 + $0x3a8] sm:$0xff]
                %217 = vst [vmem:[%s149 + $0x108] sm:$0xff] %v216
                %v218 = vld [vmem:[%s148 + $0x3b0] sm:$0xff]
                %219 = vst [vmem:[%s149 + $0x110] sm:$0xff] %v218
                %v220 = vld [vmem:[%s148 + $0x460] sm:$0xff]
                %221 = vst [vmem:[%s149 + $0x118] sm:$0xff] %v220
                %v222 = vld [vmem:[%s148 + $0x468] sm:$0xff]
                %223 = vst [vmem:[%s149 + $0x120] sm:$0xff] %v222
                %v224 = vld [vmem:[%s148 + $0x470] sm:$0xff]
                %225 = vst [vmem:[%s149 + $0x128] sm:$0xff] %v224
                %v226 = vld [vmem:[%s148 + $0x478] sm:$0xff]
                %227 = vst [vmem:[%s149 + $0x130] sm:$0xff] %v226
                %v228 = vld [vmem:[%s148 + $0x480] sm:$0xff]
                %229 = vst [vmem:[%s149 + $0x138] sm:$0xff] %v228
                %v230 = vld [vmem:[%s148 + $0x488] sm:$0xff]
                %231 = vst [vmem:[%s149 + $0x140] sm:$0xff] %v230
                %v232 = vld [vmem:[%s148 + $0x490] sm:$0xff]
                %233 = vst [vmem:[%s149 + $0x148] sm:$0xff] %v232
                %v234 = vld [vmem:[%s148 + $0x540] sm:$0xff]
                %235 = vst [vmem:[%s149 + $0x150] sm:$0xff] %v234
                %v236 = vld [vmem:[%s148 + $0x548] sm:$0xff]
                %237 = vst [vmem:[%s149 + $0x158] sm:$0xff] %v236
                %v238 = vld [vmem:[%s148 + $0x550] sm:$0xff]
                %239 = vst [vmem:[%s149 + $0x160] sm:$0xff] %v238
                %v240 = vld [vmem:[%s148 + $0x558] sm:$0xff]
                %241 = vst [vmem:[%s149 + $0x168] sm:$0xff] %v240
                %v242 = vld [vmem:[%s148 + $0x560] sm:$0xff]
                %243 = vst [vmem:[%s149 + $0x170] sm:$0xff] %v242
                %v244 = vld [vmem:[%s148 + $0x568] sm:$0xff]
                %245 = vst [vmem:[%s149 + $0x178] sm:$0xff] %v244
                %v246 = vld [vmem:[%s148 + $0x570] sm:$0xff]
                %247 = vst [vmem:[%s149 + $0x180] sm:$0xff] %v246
                %v248 = vld [vmem:[%s148 + $0x620] sm:$0xff]
                %249 = vst [vmem:[%s149 + $0x188] sm:$0xff] %v248
                %v250 = vld [vmem:[%s148 + $0x628] sm:$0xff]
                %251 = vst [vmem:[%s149 + $0x190] sm:$0xff] %v250
                %v252 = vld [vmem:[%s148 + $0x630] sm:$0xff]
                %253 = vst [vmem:[%s149 + $0x198] sm:$0xff] %v252
                %v254 = vld [vmem:[%s148 + $0x638] sm:$0xff]
                %255 = vst [vmem:[%s149 + $0x1a0] sm:$0xff] %v254
                %v256 = vld [vmem:[%s148 + $0x640] sm:$0xff]
                %257 = vst [vmem:[%s149 + $0x1a8] sm:$0xff] %v256
                %v258 = vld [vmem:[%s148 + $0x648] sm:$0xff]
                %259 = vst [vmem:[%s149 + $0x1b0] sm:$0xff] %v258
                %v260 = vld [vmem:[%s148 + $0x650] sm:$0xff]
                %261 = vst [vmem:[%s149 + $0x1b8] sm:$0xff] %v260
                %v262 = vld [vmem:[%s148 + $0x700] sm:$0xff]
                %263 = vst [vmem:[%s149 + $0x1c0] sm:$0xff] %v262
                %v264 = vld [vmem:[%s148 + $0x708] sm:$0xff]
                %265 = vst [vmem:[%s149 + $0x1c8] sm:$0xff] %v264
                %v266 = vld [vmem:[%s148 + $0x710] sm:$0xff]
                %267 = vst [vmem:[%s149 + $0x1d0] sm:$0xff] %v266
                %v268 = vld [vmem:[%s148 + $0x718] sm:$0xff]
                %269 = vst [vmem:[%s149 + $0x1d8] sm:$0xff] %v268
                %v270 = vld [vmem:[%s148 + $0x720] sm:$0xff]
                %271 = vst [vmem:[%s149 + $0x1e0] sm:$0xff] %v270
                %v272 = vld [vmem:[%s148 + $0x728] sm:$0xff]
                %273 = vst [vmem:[%s149 + $0x1e8] sm:$0xff] %v272
                %v274 = vld [vmem:[%s148 + $0x730] sm:$0xff]
                %275 = vst [vmem:[%s149 + $0x1f0] sm:$0xff] %v274
                %v276 = vld [vmem:[%s148 + $0x7e0] sm:$0xff]
                %277 = vst [vmem:[%s149 + $0x1f8] sm:$0xff] %v276
                %v278 = vld [vmem:[%s148 + $0x7e8] sm:$0xff]
                %279 = vst [vmem:[%s149 + $0x200] sm:$0xff] %v278
                %v280 = vld [vmem:[%s148 + $0x7f0] sm:$0xff]
                %281 = vst [vmem:[%s149 + $0x208] sm:$0xff] %v280
                %v282 = vld [vmem:[%s148 + $0x7f8] sm:$0xff]
                %283 = vst [vmem:[%s149 + $0x210] sm:$0xff] %v282
                %v284 = vld [vmem:[%s148 + $0x800] sm:$0xff]
                %285 = vst [vmem:[%s149 + $0x218] sm:$0xff] %v284
                %v286 = vld [vmem:[%s148 + $0x808] sm:$0xff]
                %287 = vst [vmem:[%s149 + $0x220] sm:$0xff] %v286
                %v288 = vld [vmem:[%s148 + $0x810] sm:$0xff]
                %289 = vst [vmem:[%s149 + $0x228] sm:$0xff] %v288
                %v290 = vld [vmem:[%s148 + $0x8c0] sm:$0xff]
                %291 = vst [vmem:[%s149 + $0x230] sm:$0xff] %v290
                %v292 = vld [vmem:[%s148 + $0x8c8] sm:$0xff]
                %293 = vst [vmem:[%s149 + $0x238] sm:$0xff] %v292
                %v294 = vld [vmem:[%s148 + $0x8d0] sm:$0xff]
                %295 = vst [vmem:[%s149 + $0x240] sm:$0xff] %v294
                %v296 = vld [vmem:[%s148 + $0x8d8] sm:$0xff]
                %297 = vst [vmem:[%s149 + $0x248] sm:$0xff] %v296
                %v298 = vld [vmem:[%s148 + $0x8e0] sm:$0xff]
                %299 = vst [vmem:[%s149 + $0x250] sm:$0xff] %v298
                %v300 = vld [vmem:[%s148 + $0x8e8] sm:$0xff]
                %301 = vst [vmem:[%s149 + $0x258] sm:$0xff] %v300
                %v302 = vld [vmem:[%s148 + $0x8f0] sm:$0xff]
                %303 = vst [vmem:[%s149 + $0x260] sm:$0xff] %v302
                %v304 = vld [vmem:[%s148 + $0x9a0] sm:$0xff]
                %305 = vst [vmem:[%s149 + $0x268] sm:$0xff] %v304
                %v306 = vld [vmem:[%s148 + $0x9a8] sm:$0xff]
                %307 = vst [vmem:[%s149 + $0x270] sm:$0xff] %v306
                %v308 = vld [vmem:[%s148 + $0x9b0] sm:$0xff]
                %309 = vst [vmem:[%s149 + $0x278] sm:$0xff] %v308
                %v310 = vld [vmem:[%s148 + $0x9b8] sm:$0xff]
                %311 = vst [vmem:[%s149 + $0x280] sm:$0xff] %v310
                %v312 = vld [vmem:[%s148 + $0x9c0] sm:$0xff]
                %313 = vst [vmem:[%s149 + $0x288] sm:$0xff] %v312
                %v314 = vld [vmem:[%s148 + $0x9c8] sm:$0xff]
                %315 = vst [vmem:[%s149 + $0x290] sm:$0xff] %v314
                %v316 = vld [vmem:[%s148 + $0x9d0] sm:$0xff]
                %317 = vst [vmem:[%s149 + $0x298] sm:$0xff] %v316
                %v318 = vld [vmem:[%s148 + $0xa80] sm:$0xff]
                %319 = vst [vmem:[%s149 + $0x2a0] sm:$0xff] %v318
                %v320 = vld [vmem:[%s148 + $0xa88] sm:$0xff]
                %321 = vst [vmem:[%s149 + $0x2a8] sm:$0xff] %v320
                %v322 = vld [vmem:[%s148 + $0xa90] sm:$0xff]
                %323 = vst [vmem:[%s149 + $0x2b0] sm:$0xff] %v322
                %v324 = vld [vmem:[%s148 + $0xa98] sm:$0xff]
                %325 = vst [vmem:[%s149 + $0x2b8] sm:$0xff] %v324
                %v326 = vld [vmem:[%s148 + $0xaa0] sm:$0xff]
                %327 = vst [vmem:[%s149 + $0x2c0] sm:$0xff] %v326
                %v328 = vld [vmem:[%s148 + $0xaa8] sm:$0xff]
                %329 = vst [vmem:[%s149 + $0x2c8] sm:$0xff] %v328
                %v330 = vld [vmem:[%s148 + $0xab0] sm:$0xff]
                %331 = vst [vmem:[%s149 + $0x2d0] sm:$0xff] %v330
                %v332 = vld [vmem:[%s148 + $0xb60] sm:$0xff]
                %333 = vst [vmem:[%s149 + $0x2d8] sm:$0xff] %v332
                %v334 = vld [vmem:[%s148 + $0xb68] sm:$0xff]
                %335 = vst [vmem:[%s149 + $0x2e0] sm:$0xff] %v334
                %v336 = vld [vmem:[%s148 + $0xb70] sm:$0xff]
                %337 = vst [vmem:[%s149 + $0x2e8] sm:$0xff] %v336
                %v338 = vld [vmem:[%s148 + $0xb78] sm:$0xff]
                %339 = vst [vmem:[%s149 + $0x2f0] sm:$0xff] %v338
                %v340 = vld [vmem:[%s148 + $0xb80] sm:$0xff]
                %341 = vst [vmem:[%s149 + $0x2f8] sm:$0xff] %v340
                %v342 = vld [vmem:[%s148 + $0xb88] sm:$0xff]
                %343 = vst [vmem:[%s149 + $0x300] sm:$0xff] %v342
                %v344 = vld [vmem:[%s148 + $0xb90] sm:$0xff]
                %345 = vst [vmem:[%s149 + $0x308] sm:$0xff] %v344
                %v346 = vld [vmem:[%s148 + $0xc40] sm:$0xff]
                %347 = vst [vmem:[%s149 + $0x310] sm:$0xff] %v346
                %v348 = vld [vmem:[%s148 + $0xc48] sm:$0xff]
                %349 = vst [vmem:[%s149 + $0x318] sm:$0xff] %v348
                %v350 = vld [vmem:[%s148 + $0xc50] sm:$0xff]
                %351 = vst [vmem:[%s149 + $0x320] sm:$0xff] %v350
                %v352 = vld [vmem:[%s148 + $0xc58] sm:$0xff]
                %353 = vst [vmem:[%s149 + $0x328] sm:$0xff] %v352
                %v354 = vld [vmem:[%s148 + $0xc60] sm:$0xff]
                %355 = vst [vmem:[%s149 + $0x330] sm:$0xff] %v354
                %v356 = vld [vmem:[%s148 + $0xc68] sm:$0xff]
                %357 = vst [vmem:[%s149 + $0x338] sm:$0xff] %v356
                %v358 = vld [vmem:[%s148 + $0xc70] sm:$0xff]
                %359 = vst [vmem:[%s149 + $0x340] sm:$0xff] %v358
                %v360 = vld [vmem:[%s148 + $0xd20] sm:$0xff]
                %361 = vst [vmem:[%s149 + $0x348] sm:$0xff] %v360
                %v362 = vld [vmem:[%s148 + $0xd28] sm:$0xff]
                %363 = vst [vmem:[%s149 + $0x350] sm:$0xff] %v362
                %v364 = vld [vmem:[%s148 + $0xd30] sm:$0xff]
                %365 = vst [vmem:[%s149 + $0x358] sm:$0xff] %v364
                %v366 = vld [vmem:[%s148 + $0xd38] sm:$0xff]
                %367 = vst [vmem:[%s149 + $0x360] sm:$0xff] %v366
                %v368 = vld [vmem:[%s148 + $0xd40] sm:$0xff]
                %369 = vst [vmem:[%s149 + $0x368] sm:$0xff] %v368
                %v370 = vld [vmem:[%s148 + $0xd48] sm:$0xff]
                %371 = vst [vmem:[%s149 + $0x370] sm:$0xff] %v370
                %v372 = vld [vmem:[%s148 + $0xd50] sm:$0xff]
                %373 = vst [vmem:[%s149 + $0x378] sm:$0xff] %v372
                %v374 = vld [vmem:[%s148 + $0xe00] sm:$0xff]
                %375 = vst [vmem:[%s149 + $0x380] sm:$0xff] %v374
                %v376 = vld [vmem:[%s148 + $0xe08] sm:$0xff]
                %377 = vst [vmem:[%s149 + $0x388] sm:$0xff] %v376
                %v378 = vld [vmem:[%s148 + $0xe10] sm:$0xff]
                %379 = vst [vmem:[%s149 + $0x390] sm:$0xff] %v378
                %v380 = vld [vmem:[%s148 + $0xe18] sm:$0xff]
                %381 = vst [vmem:[%s149 + $0x398] sm:$0xff] %v380
                %v382 = vld [vmem:[%s148 + $0xe20] sm:$0xff]
                %383 = vst [vmem:[%s149 + $0x3a0] sm:$0xff] %v382
                %v384 = vld [vmem:[%s148 + $0xe28] sm:$0xff]
                %385 = vst [vmem:[%s149 + $0x3a8] sm:$0xff] %v384
                %v386 = vld [vmem:[%s148 + $0xe30] sm:$0xff]
                %387 = vst [vmem:[%s149 + $0x3b0] sm:$0xff] %v386
                %v388 = vld [vmem:[%s148 + $0xee0] sm:$0xff]
                %389 = vst [vmem:[%s149 + $0x3b8] sm:$0xff] %v388
                %v390 = vld [vmem:[%s148 + $0xee8] sm:$0xff]
                %391 = vst [vmem:[%s149 + $0x3c0] sm:$0xff] %v390
                %v392 = vld [vmem:[%s148 + $0xef0] sm:$0xff]
                %393 = vst [vmem:[%s149 + $0x3c8] sm:$0xff] %v392
                %v394 = vld [vmem:[%s148 + $0xef8] sm:$0xff]
                %395 = vst [vmem:[%s149 + $0x3d0] sm:$0xff] %v394
                %v396 = vld [vmem:[%s148 + $0xf00] sm:$0xff]
                %397 = vst [vmem:[%s149 + $0x3d8] sm:$0xff] %v396
                %v398 = vld [vmem:[%s148 + $0xf08] sm:$0xff]
                %399 = vst [vmem:[%s149 + $0x3e0] sm:$0xff] %v398
                %v400 = vld [vmem:[%s148 + $0xf10] sm:$0xff]
                %401 = vst [vmem:[%s149 + $0x3e8] sm:$0xff] %v400
                %v402 = vld [vmem:[%s148 + $0xfc0] sm:$0xff]
                %403 = vst [vmem:[%s149 + $0x3f0] sm:$0xff] %v402
                %v404 = vld [vmem:[%s148 + $0xfc8] sm:$0xff]
                %405 = vst [vmem:[%s149 + $0x3f8] sm:$0xff] %v404
                %v406 = vld [vmem:[%s148 + $0xfd0] sm:$0xff]
                %407 = vst [vmem:[%s149 + $0x400] sm:$0xff] %v406
                %v408 = vld [vmem:[%s148 + $0xfd8] sm:$0xff]
                %409 = vst [vmem:[%s149 + $0x408] sm:$0xff] %v408
                %v410 = vld [vmem:[%s148 + $0xfe0] sm:$0xff]
                %411 = vst [vmem:[%s149 + $0x410] sm:$0xff] %v410
                %v412 = vld [vmem:[%s148 + $0xfe8] sm:$0xff]
                %413 = vst [vmem:[%s149 + $0x418] sm:$0xff] %v412
                %v414 = vld [vmem:[%s148 + $0xff0] sm:$0xff]
                %415 = vst [vmem:[%s149 + $0x420] sm:$0xff] %v414
                %v416 = vld [vmem:[%s148 + $0x10a0] sm:$0xff]
                %417 = vst [vmem:[%s149 + $0x428] sm:$0xff] %v416
                %v418 = vld [vmem:[%s148 + $0x10a8] sm:$0xff]
                %419 = vst [vmem:[%s149 + $0x430] sm:$0xff] %v418
                %v420 = vld [vmem:[%s148 + $0x10b0] sm:$0xff]
                %421 = vst [vmem:[%s149 + $0x438] sm:$0xff] %v420
                %v422 = vld [vmem:[%s148 + $0x10b8] sm:$0xff]
                %423 = vst [vmem:[%s149 + $0x440] sm:$0xff] %v422
                %v424 = vld [vmem:[%s148 + $0x10c0] sm:$0xff]
                %425 = vst [vmem:[%s149 + $0x448] sm:$0xff] %v424
                %v426 = vld [vmem:[%s148 + $0x10c8] sm:$0xff]
                %427 = vst [vmem:[%s149 + $0x450] sm:$0xff] %v426
                %v428 = vld [vmem:[%s148 + $0x10d0] sm:$0xff]
                %429 = vst [vmem:[%s149 + $0x458] sm:$0xff] %v428
                %v430 = vld [vmem:[%s148 + $0x1180] sm:$0xff]
                %431 = vst [vmem:[%s149 + $0x460] sm:$0xff] %v430
                %v432 = vld [vmem:[%s148 + $0x1188] sm:$0xff]
                %433 = vst [vmem:[%s149 + $0x468] sm:$0xff] %v432
                %v434 = vld [vmem:[%s148 + $0x1190] sm:$0xff]
                %435 = vst [vmem:[%s149 + $0x470] sm:$0xff] %v434
                %v436 = vld [vmem:[%s148 + $0x1198] sm:$0xff]
                %437 = vst [vmem:[%s149 + $0x478] sm:$0xff] %v436
                %v438 = vld [vmem:[%s148 + $0x11a0] sm:$0xff]
                %439 = vst [vmem:[%s149 + $0x480] sm:$0xff] %v438
                %v440 = vld [vmem:[%s148 + $0x11a8] sm:$0xff]
                %441 = vst [vmem:[%s149 + $0x488] sm:$0xff] %v440
                %v442 = vld [vmem:[%s148 + $0x11b0] sm:$0xff]
                %443 = vst [vmem:[%s149 + $0x490] sm:$0xff] %v442
                %v444 = vld [vmem:[%s148 + $0x1260] sm:$0xff]
                %445 = vst [vmem:[%s149 + $0x498] sm:$0xff] %v444
                %v446 = vld [vmem:[%s148 + $0x1268] sm:$0xff]
                %447 = vst [vmem:[%s149 + $0x4a0] sm:$0xff] %v446
                %v448 = vld [vmem:[%s148 + $0x1270] sm:$0xff]
                %449 = vst [vmem:[%s149 + $0x4a8] sm:$0xff] %v448
                %v450 = vld [vmem:[%s148 + $0x1278] sm:$0xff]
                %451 = vst [vmem:[%s149 + $0x4b0] sm:$0xff] %v450
                %v452 = vld [vmem:[%s148 + $0x1280] sm:$0xff]
                %453 = vst [vmem:[%s149 + $0x4b8] sm:$0xff] %v452
                %v454 = vld [vmem:[%s148 + $0x1288] sm:$0xff]
                %455 = vst [vmem:[%s149 + $0x4c0] sm:$0xff] %v454
                %v456 = vld [vmem:[%s148 + $0x1290] sm:$0xff]
                %457 = vst [vmem:[%s149 + $0x4c8] sm:$0xff] %v456
                %v458 = vld [vmem:[%s148 + $0x1340] sm:$0xff]
                %459 = vst [vmem:[%s149 + $0x4d0] sm:$0xff] %v458
                %v460 = vld [vmem:[%s148 + $0x1348] sm:$0xff]
                %461 = vst [vmem:[%s149 + $0x4d8] sm:$0xff] %v460
                %v462 = vld [vmem:[%s148 + $0x1350] sm:$0xff]
                %463 = vst [vmem:[%s149 + $0x4e0] sm:$0xff] %v462
                %v464 = vld [vmem:[%s148 + $0x1358] sm:$0xff]
                %465 = vst [vmem:[%s149 + $0x4e8] sm:$0xff] %v464
                %v466 = vld [vmem:[%s148 + $0x1360] sm:$0xff]
                %467 = vst [vmem:[%s149 + $0x4f0] sm:$0xff] %v466
                %v468 = vld [vmem:[%s148 + $0x1368] sm:$0xff]
                %469 = vst [vmem:[%s149 + $0x4f8] sm:$0xff] %v468
                %v470 = vld [vmem:[%s148 + $0x1370] sm:$0xff]
                %471 = vst [vmem:[%s149 + $0x500] sm:$0xff] %v470
                %v472 = vld [vmem:[%s148 + $0x1420] sm:$0xff]
                %473 = vst [vmem:[%s149 + $0x508] sm:$0xff] %v472
                %v474 = vld [vmem:[%s148 + $0x1428] sm:$0xff]
                %475 = vst [vmem:[%s149 + $0x510] sm:$0xff] %v474
                %v476 = vld [vmem:[%s148 + $0x1430] sm:$0xff]
                %477 = vst [vmem:[%s149 + $0x518] sm:$0xff] %v476
                %v478 = vld [vmem:[%s148 + $0x1438] sm:$0xff]
                %479 = vst [vmem:[%s149 + $0x520] sm:$0xff] %v478
                %v480 = vld [vmem:[%s148 + $0x1440] sm:$0xff]
                %481 = vst [vmem:[%s149 + $0x528] sm:$0xff] %v480
                %v482 = vld [vmem:[%s148 + $0x1448] sm:$0xff]
                %483 = vst [vmem:[%s149 + $0x530] sm:$0xff] %v482
                %v484 = vld [vmem:[%s148 + $0x1450] sm:$0xff]
                %485 = vst [vmem:[%s149 + $0x538] sm:$0xff] %v484
                %v486 = vld [vmem:[%s148 + $0x1500] sm:$0xff]
                %487 = vst [vmem:[%s149 + $0x540] sm:$0xff] %v486
                %v488 = vld [vmem:[%s148 + $0x1508] sm:$0xff]
                %489 = vst [vmem:[%s149 + $0x548] sm:$0xff] %v488
                %v490 = vld [vmem:[%s148 + $0x1510] sm:$0xff]
                %491 = vst [vmem:[%s149 + $0x550] sm:$0xff] %v490
                %v492 = vld [vmem:[%s148 + $0x1518] sm:$0xff]
                %493 = vst [vmem:[%s149 + $0x558] sm:$0xff] %v492
                %v494 = vld [vmem:[%s148 + $0x1520] sm:$0xff]
                %495 = vst [vmem:[%s149 + $0x560] sm:$0xff] %v494
                %v496 = vld [vmem:[%s148 + $0x1528] sm:$0xff]
                %497 = vst [vmem:[%s149 + $0x568] sm:$0xff] %v496
                %v498 = vld [vmem:[%s148 + $0x1530] sm:$0xff]
                %499 = vst [vmem:[%s149 + $0x570] sm:$0xff] %v498
                %v500 = vld [vmem:[%s148 + $0x15e0] sm:$0xff]
                %501 = vst [vmem:[%s149 + $0x578] sm:$0xff] %v500
                %v502 = vld [vmem:[%s148 + $0x15e8] sm:$0xff]
                %503 = vst [vmem:[%s149 + $0x580] sm:$0xff] %v502
                %v504 = vld [vmem:[%s148 + $0x15f0] sm:$0xff]
                %505 = vst [vmem:[%s149 + $0x588] sm:$0xff] %v504
                %v506 = vld [vmem:[%s148 + $0x15f8] sm:$0xff]
                %507 = vst [vmem:[%s149 + $0x590] sm:$0xff] %v506
                %v508 = vld [vmem:[%s148 + $0x1600] sm:$0xff]
                %509 = vst [vmem:[%s149 + $0x598] sm:$0xff] %v508
                %v510 = vld [vmem:[%s148 + $0x1608] sm:$0xff]
                %511 = vst [vmem:[%s149 + $0x5a0] sm:$0xff] %v510
                %v512 = vld [vmem:[%s148 + $0x1610] sm:$0xff]
                %513 = vst [vmem:[%s149 + $0x5a8] sm:$0xff] %v512
                %v514 = vld [vmem:[%s148 + $0x16c0] sm:$0xff]
                %515 = vst [vmem:[%s149 + $0x5b0] sm:$0xff] %v514
                %v516 = vld [vmem:[%s148 + $0x16c8] sm:$0xff]
                %517 = vst [vmem:[%s149 + $0x5b8] sm:$0xff] %v516
                %v518 = vld [vmem:[%s148 + $0x16d0] sm:$0xff]
                %519 = vst [vmem:[%s149 + $0x5c0] sm:$0xff] %v518
                %v520 = vld [vmem:[%s148 + $0x16d8] sm:$0xff]
                %521 = vst [vmem:[%s149 + $0x5c8] sm:$0xff] %v520
                %v522 = vld [vmem:[%s148 + $0x16e0] sm:$0xff]
                %523 = vst [vmem:[%s149 + $0x5d0] sm:$0xff] %v522
                %v524 = vld [vmem:[%s148 + $0x16e8] sm:$0xff]
                %525 = vst [vmem:[%s149 + $0x5d8] sm:$0xff] %v524
                %v526 = vld [vmem:[%s148 + $0x16f0] sm:$0xff]
                %527 = vst [vmem:[%s149 + $0x5e0] sm:$0xff] %v526
                %v528 = vld [vmem:[%s148 + $0x17a0] sm:$0xff]
                %529 = vst [vmem:[%s149 + $0x5e8] sm:$0xff] %v528
                %v530 = vld [vmem:[%s148 + $0x17a8] sm:$0xff]
                %531 = vst [vmem:[%s149 + $0x5f0] sm:$0xff] %v530
                %v532 = vld [vmem:[%s148 + $0x17b0] sm:$0xff]
                %533 = vst [vmem:[%s149 + $0x5f8] sm:$0xff] %v532
                %v534 = vld [vmem:[%s148 + $0x17b8] sm:$0xff]
                %535 = vst [vmem:[%s149 + $0x600] sm:$0xff] %v534
                %v536 = vld [vmem:[%s148 + $0x17c0] sm:$0xff]
                %537 = vst [vmem:[%s149 + $0x608] sm:$0xff] %v536
                %v538 = vld [vmem:[%s148 + $0x17c8] sm:$0xff]
                %539 = vst [vmem:[%s149 + $0x610] sm:$0xff] %v538
                %v540 = vld [vmem:[%s148 + $0x17d0] sm:$0xff]
                %541 = vst [vmem:[%s149 + $0x618] sm:$0xff] %v540
                %v542 = vld [vmem:[%s148 + $0x1880] sm:$0xff]
                %543 = vst [vmem:[%s149 + $0x620] sm:$0xff] %v542
                %v544 = vld [vmem:[%s148 + $0x1888] sm:$0xff]
                %545 = vst [vmem:[%s149 + $0x628] sm:$0xff] %v544
                %v546 = vld [vmem:[%s148 + $0x1890] sm:$0xff]
                %547 = vst [vmem:[%s149 + $0x630] sm:$0xff] %v546
                %v548 = vld [vmem:[%s148 + $0x1898] sm:$0xff]
                %549 = vst [vmem:[%s149 + $0x638] sm:$0xff] %v548
                %v550 = vld [vmem:[%s148 + $0x18a0] sm:$0xff]
                %551 = vst [vmem:[%s149 + $0x640] sm:$0xff] %v550
                %v552 = vld [vmem:[%s148 + $0x18a8] sm:$0xff]
                %553 = vst [vmem:[%s149 + $0x648] sm:$0xff] %v552
                %v554 = vld [vmem:[%s148 + $0x18b0] sm:$0xff]
                %555 = vst [vmem:[%s149 + $0x650] sm:$0xff] %v554
                %v556 = vld [vmem:[%s148 + $0x1960] sm:$0xff]
                %557 = vst [vmem:[%s149 + $0x658] sm:$0xff] %v556
                %v558 = vld [vmem:[%s148 + $0x1968] sm:$0xff]
                %559 = vst [vmem:[%s149 + $0x660] sm:$0xff] %v558
                %v560 = vld [vmem:[%s148 + $0x1970] sm:$0xff]
                %561 = vst [vmem:[%s149 + $0x668] sm:$0xff] %v560
                %v562 = vld [vmem:[%s148 + $0x1978] sm:$0xff]
                %563 = vst [vmem:[%s149 + $0x670] sm:$0xff] %v562
                %v564 = vld [vmem:[%s148 + $0x1980] sm:$0xff]
                %565 = vst [vmem:[%s149 + $0x678] sm:$0xff] %v564
                %v566 = vld [vmem:[%s148 + $0x1988] sm:$0xff]
                %567 = vst [vmem:[%s149 + $0x680] sm:$0xff] %v566
                %v568 = vld [vmem:[%s148 + $0x1990] sm:$0xff]
                %569 = vst [vmem:[%s149 + $0x688] sm:$0xff] %v568
                %v570 = vld [vmem:[%s148 + $0x1a40] sm:$0xff]
                %571 = vst [vmem:[%s149 + $0x690] sm:$0xff] %v570
                %v572 = vld [vmem:[%s148 + $0x1a48] sm:$0xff]
                %573 = vst [vmem:[%s149 + $0x698] sm:$0xff] %v572
                %v574 = vld [vmem:[%s148 + $0x1a50] sm:$0xff]
                %575 = vst [vmem:[%s149 + $0x6a0] sm:$0xff] %v574
                %v576 = vld [vmem:[%s148 + $0x1a58] sm:$0xff]
                %577 = vst [vmem:[%s149 + $0x6a8] sm:$0xff] %v576
                %v578 = vld [vmem:[%s148 + $0x1a60] sm:$0xff]
                %579 = vst [vmem:[%s149 + $0x6b0] sm:$0xff] %v578
                %v580 = vld [vmem:[%s148 + $0x1a68] sm:$0xff]
                %581 = vst [vmem:[%s149 + $0x6b8] sm:$0xff] %v580
                %v582 = vld [vmem:[%s148 + $0x1a70] sm:$0xff]
                %583 = vst [vmem:[%s149 + $0x6c0] sm:$0xff] %v582
                %v584 = vld [vmem:[%s148 + $0x1b20] sm:$0xff]
                %585 = vst [vmem:[%s149 + $0x6c8] sm:$0xff] %v584
                %v586 = vld [vmem:[%s148 + $0x1b28] sm:$0xff]
                %587 = vst [vmem:[%s149 + $0x6d0] sm:$0xff] %v586
                %v588 = vld [vmem:[%s148 + $0x1b30] sm:$0xff]
                %589 = vst [vmem:[%s149 + $0x6d8] sm:$0xff] %v588
                %v590 = vld [vmem:[%s148 + $0x1b38] sm:$0xff]
                %591 = vst [vmem:[%s149 + $0x6e0] sm:$0xff] %v590
                %v592 = vld [vmem:[%s148 + $0x1b40] sm:$0xff]
                %593 = vst [vmem:[%s149 + $0x6e8] sm:$0xff] %v592
                %v594 = vld [vmem:[%s148 + $0x1b48] sm:$0xff]
                %595 = vst [vmem:[%s149 + $0x6f0] sm:$0xff] %v594
                %v596 = vld [vmem:[%s148 + $0x1b50] sm:$0xff]
                %597 = vst [vmem:[%s149 + $0x6f8] sm:$0xff] %v596
                %v598 = vld [vmem:[%s148 + $0x1c00] sm:$0xff]
                %599 = vst [vmem:[%s149 + $0x700] sm:$0xff] %v598
                %v600 = vld [vmem:[%s148 + $0x1c08] sm:$0xff]
                %601 = vst [vmem:[%s149 + $0x708] sm:$0xff] %v600
                %v602 = vld [vmem:[%s148 + $0x1c10] sm:$0xff]
                %603 = vst [vmem:[%s149 + $0x710] sm:$0xff] %v602
                %v604 = vld [vmem:[%s148 + $0x1c18] sm:$0xff]
                %605 = vst [vmem:[%s149 + $0x718] sm:$0xff] %v604
                %v606 = vld [vmem:[%s148 + $0x1c20] sm:$0xff]
                %607 = vst [vmem:[%s149 + $0x720] sm:$0xff] %v606
                %v608 = vld [vmem:[%s148 + $0x1c28] sm:$0xff]
                %609 = vst [vmem:[%s149 + $0x728] sm:$0xff] %v608
                %v610 = vld [vmem:[%s148 + $0x1c30] sm:$0xff]
                %611 = vst [vmem:[%s149 + $0x730] sm:$0xff] %v610
                %v612 = vld [vmem:[%s148 + $0x1ce0] sm:$0xff]
                %613 = vst [vmem:[%s149 + $0x738] sm:$0xff] %v612
                %v614 = vld [vmem:[%s148 + $0x1ce8] sm:$0xff]
                %615 = vst [vmem:[%s149 + $0x740] sm:$0xff] %v614
                %v616 = vld [vmem:[%s148 + $0x1cf0] sm:$0xff]
                %617 = vst [vmem:[%s149 + $0x748] sm:$0xff] %v616
                %v618 = vld [vmem:[%s148 + $0x1cf8] sm:$0xff]
                %619 = vst [vmem:[%s149 + $0x750] sm:$0xff] %v618
                %v620 = vld [vmem:[%s148 + $0x1d00] sm:$0xff]
                %621 = vst [vmem:[%s149 + $0x758] sm:$0xff] %v620
                %v622 = vld [vmem:[%s148 + $0x1d08] sm:$0xff]
                %623 = vst [vmem:[%s149 + $0x760] sm:$0xff] %v622
                %v624 = vld [vmem:[%s148 + $0x1d10] sm:$0xff]
                %625 = vst [vmem:[%s149 + $0x768] sm:$0xff] %v624
                %v626 = vld [vmem:[%s148 + $0x1dc0] sm:$0xff]
                %627 = vst [vmem:[%s149 + $0x770] sm:$0xff] %v626
                %v628 = vld [vmem:[%s148 + $0x1dc8] sm:$0xff]
                %629 = vst [vmem:[%s149 + $0x778] sm:$0xff] %v628
                %v630 = vld [vmem:[%s148 + $0x1dd0] sm:$0xff]
                %631 = vst [vmem:[%s149 + $0x780] sm:$0xff] %v630
                %v632 = vld [vmem:[%s148 + $0x1dd8] sm:$0xff]
                %633 = vst [vmem:[%s149 + $0x788] sm:$0xff] %v632
                %v634 = vld [vmem:[%s148 + $0x1de0] sm:$0xff]
                %635 = vst [vmem:[%s149 + $0x790] sm:$0xff] %v634
                %v636 = vld [vmem:[%s148 + $0x1de8] sm:$0xff]
                %637 = vst [vmem:[%s149 + $0x798] sm:$0xff] %v636
                %v638 = vld [vmem:[%s148 + $0x1df0] sm:$0xff]
                %639 = vst [vmem:[%s149 + $0x7a0] sm:$0xff] %v638
                %v640 = vld [vmem:[%s148 + $0x1ea0] sm:$0xff]
                %641 = vst [vmem:[%s149 + $0x7a8] sm:$0xff] %v640
                %v642 = vld [vmem:[%s148 + $0x1ea8] sm:$0xff]
                %643 = vst [vmem:[%s149 + $0x7b0] sm:$0xff] %v642
                %v644 = vld [vmem:[%s148 + $0x1eb0] sm:$0xff]
                %645 = vst [vmem:[%s149 + $0x7b8] sm:$0xff] %v644
                %v646 = vld [vmem:[%s148 + $0x1eb8] sm:$0xff]
                %647 = vst [vmem:[%s149 + $0x7c0] sm:$0xff] %v646
                %v648 = vld [vmem:[%s148 + $0x1ec0] sm:$0xff]
                %649 = vst [vmem:[%s149 + $0x7c8] sm:$0xff] %v648
                %v650 = vld [vmem:[%s148 + $0x1ec8] sm:$0xff]
                %651 = vst [vmem:[%s149 + $0x7d0] sm:$0xff] %v650
                %v652 = vld [vmem:[%s148 + $0x1ed0] sm:$0xff]
                %653 = vst [vmem:[%s149 + $0x7d8] sm:$0xff] %v652
                %v654 = vld [vmem:[%s148 + $0x1f80] sm:$0xff]
                %655 = vst [vmem:[%s149 + $0x7e0] sm:$0xff] %v654
                %v656 = vld [vmem:[%s148 + $0x1f88] sm:$0xff]
                %657 = vst [vmem:[%s149 + $0x7e8] sm:$0xff] %v656
                %v658 = vld [vmem:[%s148 + $0x1f90] sm:$0xff]
                %659 = vst [vmem:[%s149 + $0x7f0] sm:$0xff] %v658
                %v660 = vld [vmem:[%s148 + $0x1f98] sm:$0xff]
                %661 = vst [vmem:[%s149 + $0x7f8] sm:$0xff] %v660
                %v662 = vld [vmem:[%s148 + $0x1fa0] sm:$0xff]
                %663 = vst [vmem:[%s149 + $0x800] sm:$0xff] %v662
                %v664 = vld [vmem:[%s148 + $0x1fa8] sm:$0xff]
                %665 = vst [vmem:[%s149 + $0x808] sm:$0xff] %v664
                %v666 = vld [vmem:[%s148 + $0x1fb0] sm:$0xff]
                %667 = vst [vmem:[%s149 + $0x810] sm:$0xff] %v666
                %v668 = vld [vmem:[%s148 + $0x2060] sm:$0xff]
                %669 = vst [vmem:[%s149 + $0x818] sm:$0xff] %v668
                %v670 = vld [vmem:[%s148 + $0x2068] sm:$0xff]
                %671 = vst [vmem:[%s149 + $0x820] sm:$0xff] %v670
                %v672 = vld [vmem:[%s148 + $0x2070] sm:$0xff]
                %673 = vst [vmem:[%s149 + $0x828] sm:$0xff] %v672
                %v674 = vld [vmem:[%s148 + $0x2078] sm:$0xff]
                %675 = vst [vmem:[%s149 + $0x830] sm:$0xff] %v674
                %v676 = vld [vmem:[%s148 + $0x2080] sm:$0xff]
                %677 = vst [vmem:[%s149 + $0x838] sm:$0xff] %v676
                %v678 = vld [vmem:[%s148 + $0x2088] sm:$0xff]
                %679 = vst [vmem:[%s149 + $0x840] sm:$0xff] %v678
                %v680 = vld [vmem:[%s148 + $0x2090] sm:$0xff]
                %681 = vst [vmem:[%s149 + $0x848] sm:$0xff] %v680
                %v682 = vld [vmem:[%s148 + $0x2140] sm:$0xff]
                %683 = vst [vmem:[%s149 + $0x850] sm:$0xff] %v682
                %v684 = vld [vmem:[%s148 + $0x2148] sm:$0xff]
                %685 = vst [vmem:[%s149 + $0x858] sm:$0xff] %v684
                %v686 = vld [vmem:[%s148 + $0x2150] sm:$0xff]
                %687 = vst [vmem:[%s149 + $0x860] sm:$0xff] %v686
                %v688 = vld [vmem:[%s148 + $0x2158] sm:$0xff]
                %689 = vst [vmem:[%s149 + $0x868] sm:$0xff] %v688
                %v690 = vld [vmem:[%s148 + $0x2160] sm:$0xff]
                %691 = vst [vmem:[%s149 + $0x870] sm:$0xff] %v690
                %v692 = vld [vmem:[%s148 + $0x2168] sm:$0xff]
                %693 = vst [vmem:[%s149 + $0x878] sm:$0xff] %v692
                %v694 = vld [vmem:[%s148 + $0x2170] sm:$0xff]
                %695 = vst [vmem:[%s149 + $0x880] sm:$0xff] %v694
                %v696 = vld [vmem:[%s148 + $0x2220] sm:$0xff]
                %697 = vst [vmem:[%s149 + $0x888] sm:$0xff] %v696
                %v698 = vld [vmem:[%s148 + $0x2228] sm:$0xff]
                %699 = vst [vmem:[%s149 + $0x890] sm:$0xff] %v698
                %v700 = vld [vmem:[%s148 + $0x2230] sm:$0xff]
                %701 = vst [vmem:[%s149 + $0x898] sm:$0xff] %v700
                %v702 = vld [vmem:[%s148 + $0x2238] sm:$0xff]
                %703 = vst [vmem:[%s149 + $0x8a0] sm:$0xff] %v702
                %v704 = vld [vmem:[%s148 + $0x2240] sm:$0xff]
                %705 = vst [vmem:[%s149 + $0x8a8] sm:$0xff] %v704
                %v706 = vld [vmem:[%s148 + $0x2248] sm:$0xff]
                %707 = vst [vmem:[%s149 + $0x8b0] sm:$0xff] %v706
                %v708 = vld [vmem:[%s148 + $0x2250] sm:$0xff]
                %709 = vst [vmem:[%s149 + $0x8b8] sm:$0xff] %v708
                %v710 = vld [vmem:[%s148 + $0x2300] sm:$0xff]
                %711 = vst [vmem:[%s149 + $0x8c0] sm:$0xff] %v710
                %v712 = vld [vmem:[%s148 + $0x2308] sm:$0xff]
                %713 = vst [vmem:[%s149 + $0x8c8] sm:$0xff] %v712
                %v714 = vld [vmem:[%s148 + $0x2310] sm:$0xff]
                %715 = vst [vmem:[%s149 + $0x8d0] sm:$0xff] %v714
                %v716 = vld [vmem:[%s148 + $0x2318] sm:$0xff]
                %717 = vst [vmem:[%s149 + $0x8d8] sm:$0xff] %v716
                %v718 = vld [vmem:[%s148 + $0x2320] sm:$0xff]
                %719 = vst [vmem:[%s149 + $0x8e0] sm:$0xff] %v718
                %v720 = vld [vmem:[%s148 + $0x2328] sm:$0xff]
                %721 = vst [vmem:[%s149 + $0x8e8] sm:$0xff] %v720
                %v722 = vld [vmem:[%s148 + $0x2330] sm:$0xff]
                %723 = vst [vmem:[%s149 + $0x8f0] sm:$0xff] %v722
                %v724 = vld [vmem:[%s148 + $0x23e0] sm:$0xff]
                %725 = vst [vmem:[%s149 + $0x8f8] sm:$0xff] %v724
                %v726 = vld [vmem:[%s148 + $0x23e8] sm:$0xff]
                %727 = vst [vmem:[%s149 + $0x900] sm:$0xff] %v726
                %v728 = vld [vmem:[%s148 + $0x23f0] sm:$0xff]
                %729 = vst [vmem:[%s149 + $0x908] sm:$0xff] %v728
                %v730 = vld [vmem:[%s148 + $0x23f8] sm:$0xff]
                %731 = vst [vmem:[%s149 + $0x910] sm:$0xff] %v730
                %v732 = vld [vmem:[%s148 + $0x2400] sm:$0xff]
                %733 = vst [vmem:[%s149 + $0x918] sm:$0xff] %v732
                %v734 = vld [vmem:[%s148 + $0x2408] sm:$0xff]
                %735 = vst [vmem:[%s149 + $0x920] sm:$0xff] %v734
                %v736 = vld [vmem:[%s148 + $0x2410] sm:$0xff]
                %737 = vst [vmem:[%s149 + $0x928] sm:$0xff] %v736
                %v738 = vld [vmem:[%s148 + $0x24c0] sm:$0xff]
                %739 = vst [vmem:[%s149 + $0x930] sm:$0xff] %v738
                %v740 = vld [vmem:[%s148 + $0x24c8] sm:$0xff]
                %741 = vst [vmem:[%s149 + $0x938] sm:$0xff] %v740
                %v742 = vld [vmem:[%s148 + $0x24d0] sm:$0xff]
                %743 = vst [vmem:[%s149 + $0x940] sm:$0xff] %v742
                %v744 = vld [vmem:[%s148 + $0x24d8] sm:$0xff]
                %745 = vst [vmem:[%s149 + $0x948] sm:$0xff] %v744
                %v746 = vld [vmem:[%s148 + $0x24e0] sm:$0xff]
                %747 = vst [vmem:[%s149 + $0x950] sm:$0xff] %v746
                %v748 = vld [vmem:[%s148 + $0x24e8] sm:$0xff]
                %749 = vst [vmem:[%s149 + $0x958] sm:$0xff] %v748
                %v750 = vld [vmem:[%s148 + $0x24f0] sm:$0xff]
                %751 = vst [vmem:[%s149 + $0x960] sm:$0xff] %v750
                %v752 = vld [vmem:[%s148 + $0x25a0] sm:$0xff]
                %753 = vst [vmem:[%s149 + $0x968] sm:$0xff] %v752
                %v754 = vld [vmem:[%s148 + $0x25a8] sm:$0xff]
                %755 = vst [vmem:[%s149 + $0x970] sm:$0xff] %v754
                %v756 = vld [vmem:[%s148 + $0x25b0] sm:$0xff]
                %757 = vst [vmem:[%s149 + $0x978] sm:$0xff] %v756
                %v758 = vld [vmem:[%s148 + $0x25b8] sm:$0xff]
                %759 = vst [vmem:[%s149 + $0x980] sm:$0xff] %v758
                %v760 = vld [vmem:[%s148 + $0x25c0] sm:$0xff]
                %761 = vst [vmem:[%s149 + $0x988] sm:$0xff] %v760
                %v762 = vld [vmem:[%s148 + $0x25c8] sm:$0xff]
                %763 = vst [vmem:[%s149 + $0x990] sm:$0xff] %v762
                %v764 = vld [vmem:[%s148 + $0x25d0] sm:$0xff]
                %765 = vst [vmem:[%s149 + $0x998] sm:$0xff] %v764
                %v766 = vld [vmem:[%s148 + $0x2680] sm:$0xff]
                %767 = vst [vmem:[%s149 + $0x9a0] sm:$0xff] %v766
                %v768 = vld [vmem:[%s148 + $0x2688] sm:$0xff]
                %769 = vst [vmem:[%s149 + $0x9a8] sm:$0xff] %v768
                %v770 = vld [vmem:[%s148 + $0x2690] sm:$0xff]
                %771 = vst [vmem:[%s149 + $0x9b0] sm:$0xff] %v770
                %v772 = vld [vmem:[%s148 + $0x2698] sm:$0xff]
                %773 = vst [vmem:[%s149 + $0x9b8] sm:$0xff] %v772
                %v774 = vld [vmem:[%s148 + $0x26a0] sm:$0xff]
                %775 = vst [vmem:[%s149 + $0x9c0] sm:$0xff] %v774
                %v776 = vld [vmem:[%s148 + $0x26a8] sm:$0xff]
                %777 = vst [vmem:[%s149 + $0x9c8] sm:$0xff] %v776
                %v778 = vld [vmem:[%s148 + $0x26b0] sm:$0xff]
                %779 = vst [vmem:[%s149 + $0x9d0] sm:$0xff] %v778
                %v780 = vld [vmem:[%s148 + $0x2760] sm:$0xff]
                %781 = vst [vmem:[%s149 + $0x9d8] sm:$0xff] %v780
                %v782 = vld [vmem:[%s148 + $0x2768] sm:$0xff]
                %783 = vst [vmem:[%s149 + $0x9e0] sm:$0xff] %v782
                %v784 = vld [vmem:[%s148 + $0x2770] sm:$0xff]
                %785 = vst [vmem:[%s149 + $0x9e8] sm:$0xff] %v784
                %v786 = vld [vmem:[%s148 + $0x2778] sm:$0xff]
                %787 = vst [vmem:[%s149 + $0x9f0] sm:$0xff] %v786
                %v788 = vld [vmem:[%s148 + $0x2780] sm:$0xff]
                %789 = vst [vmem:[%s149 + $0x9f8] sm:$0xff] %v788
                %v790 = vld [vmem:[%s148 + $0x2788] sm:$0xff]
                %791 = vst [vmem:[%s149 + $0xa00] sm:$0xff] %v790
                %v792 = vld [vmem:[%s148 + $0x2790] sm:$0xff]
                %793 = vst [vmem:[%s149 + $0xa08] sm:$0xff] %v792
                %v794 = vld [vmem:[%s148 + $0x2840] sm:$0xff]
                %795 = vst [vmem:[%s149 + $0xa10] sm:$0xff] %v794
                %v796 = vld [vmem:[%s148 + $0x2848] sm:$0xff]
                %797 = vst [vmem:[%s149 + $0xa18] sm:$0xff] %v796
                %v798 = vld [vmem:[%s148 + $0x2850] sm:$0xff]
                %799 = vst [vmem:[%s149 + $0xa20] sm:$0xff] %v798
                %v800 = vld [vmem:[%s148 + $0x2858] sm:$0xff]
                %801 = vst [vmem:[%s149 + $0xa28] sm:$0xff] %v800
                %v802 = vld [vmem:[%s148 + $0x2860] sm:$0xff]
                %803 = vst [vmem:[%s149 + $0xa30] sm:$0xff] %v802
                %v804 = vld [vmem:[%s148 + $0x2868] sm:$0xff]
                %805 = vst [vmem:[%s149 + $0xa38] sm:$0xff] %v804
                %v806 = vld [vmem:[%s148 + $0x2870] sm:$0xff]
                %807 = vst [vmem:[%s149 + $0xa40] sm:$0xff] %v806
                %v808 = vld [vmem:[%s148 + $0x2920] sm:$0xff]
                %809 = vst [vmem:[%s149 + $0xa48] sm:$0xff] %v808
                %v810 = vld [vmem:[%s148 + $0x2928] sm:$0xff]
                %811 = vst [vmem:[%s149 + $0xa50] sm:$0xff] %v810
                %v812 = vld [vmem:[%s148 + $0x2930] sm:$0xff]
                %813 = vst [vmem:[%s149 + $0xa58] sm:$0xff] %v812
                %v814 = vld [vmem:[%s148 + $0x2938] sm:$0xff]
                %815 = vst [vmem:[%s149 + $0xa60] sm:$0xff] %v814
                %v816 = vld [vmem:[%s148 + $0x2940] sm:$0xff]
                %817 = vst [vmem:[%s149 + $0xa68] sm:$0xff] %v816
                %v818 = vld [vmem:[%s148 + $0x2948] sm:$0xff]
                %819 = vst [vmem:[%s149 + $0xa70] sm:$0xff] %v818
                %v820 = vld [vmem:[%s148 + $0x2950] sm:$0xff]
                %821 = vst [vmem:[%s149 + $0xa78] sm:$0xff] %v820
                %v822 = vld [vmem:[%s148 + $0x2a00] sm:$0xff]
                %823 = vst [vmem:[%s149 + $0xa80] sm:$0xff] %v822
                %v824 = vld [vmem:[%s148 + $0x2a08] sm:$0xff]
                %825 = vst [vmem:[%s149 + $0xa88] sm:$0xff] %v824
                %v826 = vld [vmem:[%s148 + $0x2a10] sm:$0xff]
                %827 = vst [vmem:[%s149 + $0xa90] sm:$0xff] %v826
                %v828 = vld [vmem:[%s148 + $0x2a18] sm:$0xff]
                %829 = vst [vmem:[%s149 + $0xa98] sm:$0xff] %v828
                %v830 = vld [vmem:[%s148 + $0x2a20] sm:$0xff]
                %831 = vst [vmem:[%s149 + $0xaa0] sm:$0xff] %v830
                %v832 = vld [vmem:[%s148 + $0x2a28] sm:$0xff]
                %833 = vst [vmem:[%s149 + $0xaa8] sm:$0xff] %v832
                %v834 = vld [vmem:[%s148 + $0x2a30] sm:$0xff]
                %835 = vst [vmem:[%s149 + $0xab0] sm:$0xff] %v834
                %v836 = vld [vmem:[%s148 + $0x2ae0] sm:$0xff]
                %837 = vst [vmem:[%s149 + $0xab8] sm:$0xff] %v836
                %v838 = vld [vmem:[%s148 + $0x2ae8] sm:$0xff]
                %839 = vst [vmem:[%s149 + $0xac0] sm:$0xff] %v838
                %v840 = vld [vmem:[%s148 + $0x2af0] sm:$0xff]
                %841 = vst [vmem:[%s149 + $0xac8] sm:$0xff] %v840
                %v842 = vld [vmem:[%s148 + $0x2af8] sm:$0xff]
                %843 = vst [vmem:[%s149 + $0xad0] sm:$0xff] %v842
                %v844 = vld [vmem:[%s148 + $0x2b00] sm:$0xff]
                %845 = vst [vmem:[%s149 + $0xad8] sm:$0xff] %v844
                %v846 = vld [vmem:[%s148 + $0x2b08] sm:$0xff]
                %847 = vst [vmem:[%s149 + $0xae0] sm:$0xff] %v846
                %v848 = vld [vmem:[%s148 + $0x2b10] sm:$0xff]
                %849 = vst [vmem:[%s149 + $0xae8] sm:$0xff] %v848
                %v850 = vld [vmem:[%s148 + $0x2bc0] sm:$0xff]
                %851 = vst [vmem:[%s149 + $0xaf0] sm:$0xff] %v850
                %v852 = vld [vmem:[%s148 + $0x2bc8] sm:$0xff]
                %853 = vst [vmem:[%s149 + $0xaf8] sm:$0xff] %v852
                %v854 = vld [vmem:[%s148 + $0x2bd0] sm:$0xff]
                %855 = vst [vmem:[%s149 + $0xb00] sm:$0xff] %v854
                %v856 = vld [vmem:[%s148 + $0x2bd8] sm:$0xff]
                %857 = vst [vmem:[%s149 + $0xb08] sm:$0xff] %v856
                %v858 = vld [vmem:[%s148 + $0x2be0] sm:$0xff]
                %859 = vst [vmem:[%s149 + $0xb10] sm:$0xff] %v858
                %v860 = vld [vmem:[%s148 + $0x2be8] sm:$0xff]
                %861 = vst [vmem:[%s149 + $0xb18] sm:$0xff] %v860
                %v862 = vld [vmem:[%s148 + $0x2bf0] sm:$0xff]
                %863 = vst [vmem:[%s149 + $0xb20] sm:$0xff] %v862
                %v864 = vld [vmem:[%s148 + $0x2ca0] sm:$0xff]
                %865 = vst [vmem:[%s149 + $0xb28] sm:$0xff] %v864
                %v866 = vld [vmem:[%s148 + $0x2ca8] sm:$0xff]
                %867 = vst [vmem:[%s149 + $0xb30] sm:$0xff] %v866
                %v868 = vld [vmem:[%s148 + $0x2cb0] sm:$0xff]
                %869 = vst [vmem:[%s149 + $0xb38] sm:$0xff] %v868
                %v870 = vld [vmem:[%s148 + $0x2cb8] sm:$0xff]
                %871 = vst [vmem:[%s149 + $0xb40] sm:$0xff] %v870
                %v872 = vld [vmem:[%s148 + $0x2cc0] sm:$0xff]
                %873 = vst [vmem:[%s149 + $0xb48] sm:$0xff] %v872
                %v874 = vld [vmem:[%s148 + $0x2cc8] sm:$0xff]
                %875 = vst [vmem:[%s149 + $0xb50] sm:$0xff] %v874
                %v876 = vld [vmem:[%s148 + $0x2cd0] sm:$0xff]
                %877 = vst [vmem:[%s149 + $0xb58] sm:$0xff] %v876
                %v878 = vld [vmem:[%s148 + $0x2d80] sm:$0xff]
                %879 = vst [vmem:[%s149 + $0xb60] sm:$0xff] %v878
                %v880 = vld [vmem:[%s148 + $0x2d88] sm:$0xff]
                %881 = vst [vmem:[%s149 + $0xb68] sm:$0xff] %v880
                %v882 = vld [vmem:[%s148 + $0x2d90] sm:$0xff]
                %883 = vst [vmem:[%s149 + $0xb70] sm:$0xff] %v882
                %v884 = vld [vmem:[%s148 + $0x2d98] sm:$0xff]
                %885 = vst [vmem:[%s149 + $0xb78] sm:$0xff] %v884
                %v886 = vld [vmem:[%s148 + $0x2da0] sm:$0xff]
                %887 = vst [vmem:[%s149 + $0xb80] sm:$0xff] %v886
                %v888 = vld [vmem:[%s148 + $0x2da8] sm:$0xff]
                %889 = vst [vmem:[%s149 + $0xb88] sm:$0xff] %v888
                %v890 = vld [vmem:[%s148 + $0x2db0] sm:$0xff]
                %891 = vst [vmem:[%s149 + $0xb90] sm:$0xff] %v890
                %v892 = vld [vmem:[%s148 + $0x2e60] sm:$0xff]
                %893 = vst [vmem:[%s149 + $0xb98] sm:$0xff] %v892
                %v894 = vld [vmem:[%s148 + $0x2e68] sm:$0xff]
                %895 = vst [vmem:[%s149 + $0xba0] sm:$0xff] %v894
                %v896 = vld [vmem:[%s148 + $0x2e70] sm:$0xff]
                %897 = vst [vmem:[%s149 + $0xba8] sm:$0xff] %v896
                %v898 = vld [vmem:[%s148 + $0x2e78] sm:$0xff]
                %899 = vst [vmem:[%s149 + $0xbb0] sm:$0xff] %v898
                %v900 = vld [vmem:[%s148 + $0x2e80] sm:$0xff]
                %901 = vst [vmem:[%s149 + $0xbb8] sm:$0xff] %v900
                %v902 = vld [vmem:[%s148 + $0x2e88] sm:$0xff]
                %903 = vst [vmem:[%s149 + $0xbc0] sm:$0xff] %v902
                %v904 = vld [vmem:[%s148 + $0x2e90] sm:$0xff]
                %905 = vst [vmem:[%s149 + $0xbc8] sm:$0xff] %v904
                %v906 = vld [vmem:[%s148 + $0x2f40] sm:$0xff]
                %907 = vst [vmem:[%s149 + $0xbd0] sm:$0xff] %v906
                %v908 = vld [vmem:[%s148 + $0x2f48] sm:$0xff]
                %909 = vst [vmem:[%s149 + $0xbd8] sm:$0xff] %v908
                %v910 = vld [vmem:[%s148 + $0x2f50] sm:$0xff]
                %911 = vst [vmem:[%s149 + $0xbe0] sm:$0xff] %v910
                %v912 = vld [vmem:[%s148 + $0x2f58] sm:$0xff]
                %913 = vst [vmem:[%s149 + $0xbe8] sm:$0xff] %v912
                %v914 = vld [vmem:[%s148 + $0x2f60] sm:$0xff]
                %915 = vst [vmem:[%s149 + $0xbf0] sm:$0xff] %v914
                %v916 = vld [vmem:[%s148 + $0x2f68] sm:$0xff]
                %917 = vst [vmem:[%s149 + $0xbf8] sm:$0xff] %v916
                %v918 = vld [vmem:[%s148 + $0x2f70] sm:$0xff]
                %919 = vst [vmem:[%s149 + $0xc00] sm:$0xff] %v918
                %v920 = vld [vmem:[%s148 + $0x3020] sm:$0xff]
                %921 = vst [vmem:[%s149 + $0xc08] sm:$0xff] %v920
                %v922 = vld [vmem:[%s148 + $0x3028] sm:$0xff]
                %923 = vst [vmem:[%s149 + $0xc10] sm:$0xff] %v922
                %v924 = vld [vmem:[%s148 + $0x3030] sm:$0xff]
                %925 = vst [vmem:[%s149 + $0xc18] sm:$0xff] %v924
                %v926 = vld [vmem:[%s148 + $0x3038] sm:$0xff]
                %927 = vst [vmem:[%s149 + $0xc20] sm:$0xff] %v926
                %v928 = vld [vmem:[%s148 + $0x3040] sm:$0xff]
                %929 = vst [vmem:[%s149 + $0xc28] sm:$0xff] %v928
                %v930 = vld [vmem:[%s148 + $0x3048] sm:$0xff]
                %931 = vst [vmem:[%s149 + $0xc30] sm:$0xff] %v930
                %v932 = vld [vmem:[%s148 + $0x3050] sm:$0xff]
                %933 = vst [vmem:[%s149 + $0xc38] sm:$0xff] %v932
                %v934 = vld [vmem:[%s148 + $0x3100] sm:$0xff]
                %935 = vst [vmem:[%s149 + $0xc40] sm:$0xff] %v934
                %v936 = vld [vmem:[%s148 + $0x3108] sm:$0xff]
                %937 = vst [vmem:[%s149 + $0xc48] sm:$0xff] %v936
                %v938 = vld [vmem:[%s148 + $0x3110] sm:$0xff]
                %939 = vst [vmem:[%s149 + $0xc50] sm:$0xff] %v938
                %v940 = vld [vmem:[%s148 + $0x3118] sm:$0xff]
                %941 = vst [vmem:[%s149 + $0xc58] sm:$0xff] %v940
                %v942 = vld [vmem:[%s148 + $0x3120] sm:$0xff]
                %943 = vst [vmem:[%s149 + $0xc60] sm:$0xff] %v942
                %v944 = vld [vmem:[%s148 + $0x3128] sm:$0xff]
                %945 = vst [vmem:[%s149 + $0xc68] sm:$0xff] %v944
                %v946 = vld [vmem:[%s148 + $0x3130] sm:$0xff]
                %947 = vst [vmem:[%s149 + $0xc70] sm:$0xff] %v946
                %v948 = vld [vmem:[%s148 + $0x31e0] sm:$0xff]
                %949 = vst [vmem:[%s149 + $0xc78] sm:$0xff] %v948
                %v950 = vld [vmem:[%s148 + $0x31e8] sm:$0xff]
                %951 = vst [vmem:[%s149 + $0xc80] sm:$0xff] %v950
                %v952 = vld [vmem:[%s148 + $0x31f0] sm:$0xff]
                %953 = vst [vmem:[%s149 + $0xc88] sm:$0xff] %v952
                %v954 = vld [vmem:[%s148 + $0x31f8] sm:$0xff]
                %955 = vst [vmem:[%s149 + $0xc90] sm:$0xff] %v954
                %v956 = vld [vmem:[%s148 + $0x3200] sm:$0xff]
                %957 = vst [vmem:[%s149 + $0xc98] sm:$0xff] %v956
                %v958 = vld [vmem:[%s148 + $0x3208] sm:$0xff]
                %959 = vst [vmem:[%s149 + $0xca0] sm:$0xff] %v958
                %v960 = vld [vmem:[%s148 + $0x3210] sm:$0xff]
                %961 = vst [vmem:[%s149 + $0xca8] sm:$0xff] %v960
                %v962 = vld [vmem:[%s148 + $0x32c0] sm:$0xff]
                %963 = vst [vmem:[%s149 + $0xcb0] sm:$0xff] %v962
                %v964 = vld [vmem:[%s148 + $0x32c8] sm:$0xff]
                %965 = vst [vmem:[%s149 + $0xcb8] sm:$0xff] %v964
                %v966 = vld [vmem:[%s148 + $0x32d0] sm:$0xff]
                %967 = vst [vmem:[%s149 + $0xcc0] sm:$0xff] %v966
                %v968 = vld [vmem:[%s148 + $0x32d8] sm:$0xff]
                %969 = vst [vmem:[%s149 + $0xcc8] sm:$0xff] %v968
                %v970 = vld [vmem:[%s148 + $0x32e0] sm:$0xff]
                %971 = vst [vmem:[%s149 + $0xcd0] sm:$0xff] %v970
                %v972 = vld [vmem:[%s148 + $0x32e8] sm:$0xff]
                %973 = vst [vmem:[%s149 + $0xcd8] sm:$0xff] %v972
                %v974 = vld [vmem:[%s148 + $0x32f0] sm:$0xff]
                %975 = vst [vmem:[%s149 + $0xce0] sm:$0xff] %v974
                %v976 = vld [vmem:[%s148 + $0x33a0] sm:$0xff]
                %977 = vst [vmem:[%s149 + $0xce8] sm:$0xff] %v976
                %v978 = vld [vmem:[%s148 + $0x33a8] sm:$0xff]
                %979 = vst [vmem:[%s149 + $0xcf0] sm:$0xff] %v978
                %v980 = vld [vmem:[%s148 + $0x33b0] sm:$0xff]
                %981 = vst [vmem:[%s149 + $0xcf8] sm:$0xff] %v980
                %v982 = vld [vmem:[%s148 + $0x33b8] sm:$0xff]
                %983 = vst [vmem:[%s149 + $0xd00] sm:$0xff] %v982
                %v984 = vld [vmem:[%s148 + $0x33c0] sm:$0xff]
                %985 = vst [vmem:[%s149 + $0xd08] sm:$0xff] %v984
                %v986 = vld [vmem:[%s148 + $0x33c8] sm:$0xff]
                %987 = vst [vmem:[%s149 + $0xd10] sm:$0xff] %v986
                %v988 = vld [vmem:[%s148 + $0x33d0] sm:$0xff]
                %989 = vst [vmem:[%s149 + $0xd18] sm:$0xff] %v988
                %v990 = vld [vmem:[%s148 + $0x3480] sm:$0xff]
                %991 = vst [vmem:[%s149 + $0xd20] sm:$0xff] %v990
                %v992 = vld [vmem:[%s148 + $0x3488] sm:$0xff]
                %993 = vst [vmem:[%s149 + $0xd28] sm:$0xff] %v992
                %v994 = vld [vmem:[%s148 + $0x3490] sm:$0xff]
                %995 = vst [vmem:[%s149 + $0xd30] sm:$0xff] %v994
                %v996 = vld [vmem:[%s148 + $0x3498] sm:$0xff]
                %997 = vst [vmem:[%s149 + $0xd38] sm:$0xff] %v996
                %v998 = vld [vmem:[%s148 + $0x34a0] sm:$0xff]
                %999 = vst [vmem:[%s149 + $0xd40] sm:$0xff] %v998
                %v1000 = vld [vmem:[%s148 + $0x34a8] sm:$0xff]
                %1001 = vst [vmem:[%s149 + $0xd48] sm:$0xff] %v1000
                %v1002 = vld [vmem:[%s148 + $0x34b0] sm:$0xff]
                %1003 = vst [vmem:[%s149 + $0xd50] sm:$0xff] %v1002
                %v1004 = vld [vmem:[%s148 + $0x3560] sm:$0xff]
                %1005 = vst [vmem:[%s149 + $0xd58] sm:$0xff] %v1004
                %v1006 = vld [vmem:[%s148 + $0x3568] sm:$0xff]
                %1007 = vst [vmem:[%s149 + $0xd60] sm:$0xff] %v1006
                %v1008 = vld [vmem:[%s148 + $0x3570] sm:$0xff]
                %1009 = vst [vmem:[%s149 + $0xd68] sm:$0xff] %v1008
                %v1010 = vld [vmem:[%s148 + $0x3578] sm:$0xff]
                %1011 = vst [vmem:[%s149 + $0xd70] sm:$0xff] %v1010
                %v1012 = vld [vmem:[%s148 + $0x3580] sm:$0xff]
                %1013 = vst [vmem:[%s149 + $0xd78] sm:$0xff] %v1012
                %v1014 = vld [vmem:[%s148 + $0x3588] sm:$0xff]
                %1015 = vst [vmem:[%s149 + $0xd80] sm:$0xff] %v1014
                %v1016 = vld [vmem:[%s148 + $0x3590] sm:$0xff]
                %1017 = vst [vmem:[%s149 + $0xd88] sm:$0xff] %v1016
                %v1018 = vld [vmem:[%s148 + $0x3640] sm:$0xff]
                %1019 = vst [vmem:[%s149 + $0xd90] sm:$0xff] %v1018
                %v1020 = vld [vmem:[%s148 + $0x3648] sm:$0xff]
                %1021 = vst [vmem:[%s149 + $0xd98] sm:$0xff] %v1020
                %v1022 = vld [vmem:[%s148 + $0x3650] sm:$0xff]
                %1023 = vst [vmem:[%s149 + $0xda0] sm:$0xff] %v1022
                %v1024 = vld [vmem:[%s148 + $0x3658] sm:$0xff]
                %1025 = vst [vmem:[%s149 + $0xda8] sm:$0xff] %v1024
                %v1026 = vld [vmem:[%s148 + $0x3660] sm:$0xff]
                %1027 = vst [vmem:[%s149 + $0xdb0] sm:$0xff] %v1026
                %v1028 = vld [vmem:[%s148 + $0x3668] sm:$0xff]
                %1029 = vst [vmem:[%s149 + $0xdb8] sm:$0xff] %v1028
                %v1030 = vld [vmem:[%s148 + $0x3670] sm:$0xff]
                %1031 = vst [vmem:[%s149 + $0xdc0] sm:$0xff] %v1030
                %v1032 = vld [vmem:[%s148 + $0x3720] sm:$0xff]
                %1033 = vst [vmem:[%s149 + $0xdc8] sm:$0xff] %v1032
                %v1034 = vld [vmem:[%s148 + $0x3728] sm:$0xff]
                %1035 = vst [vmem:[%s149 + $0xdd0] sm:$0xff] %v1034
                %v1036 = vld [vmem:[%s148 + $0x3730] sm:$0xff]
                %1037 = vst [vmem:[%s149 + $0xdd8] sm:$0xff] %v1036
                %v1038 = vld [vmem:[%s148 + $0x3738] sm:$0xff]
                %1039 = vst [vmem:[%s149 + $0xde0] sm:$0xff] %v1038
                %v1040 = vld [vmem:[%s148 + $0x3740] sm:$0xff]
                %1041 = vst [vmem:[%s149 + $0xde8] sm:$0xff] %v1040
                %v1042 = vld [vmem:[%s148 + $0x3748] sm:$0xff]
                %1043 = vst [vmem:[%s149 + $0xdf0] sm:$0xff] %v1042
                %v1044 = vld [vmem:[%s148 + $0x3750] sm:$0xff]
                %1045 = vst [vmem:[%s149 + $0xdf8] sm:$0xff] %v1044
                %v1046 = vld [vmem:[%s148 + $0x3800] sm:$0xff]
                %1047 = vst [vmem:[%s149 + $0xe00] sm:$0xff] %v1046
                %v1048 = vld [vmem:[%s148 + $0x3808] sm:$0xff]
                %1049 = vst [vmem:[%s149 + $0xe08] sm:$0xff] %v1048
                %v1050 = vld [vmem:[%s148 + $0x3810] sm:$0xff]
                %1051 = vst [vmem:[%s149 + $0xe10] sm:$0xff] %v1050
                %v1052 = vld [vmem:[%s148 + $0x3818] sm:$0xff]
                %1053 = vst [vmem:[%s149 + $0xe18] sm:$0xff] %v1052
                %v1054 = vld [vmem:[%s148 + $0x3820] sm:$0xff]
                %1055 = vst [vmem:[%s149 + $0xe20] sm:$0xff] %v1054
                %v1056 = vld [vmem:[%s148 + $0x3828] sm:$0xff]
                %1057 = vst [vmem:[%s149 + $0xe28] sm:$0xff] %v1056
                %v1058 = vld [vmem:[%s148 + $0x3830] sm:$0xff]
                %1059 = vst [vmem:[%s149 + $0xe30] sm:$0xff] %v1058
                %v1060 = vld [vmem:[%s148 + $0x38e0] sm:$0xff]
                %1061 = vst [vmem:[%s149 + $0xe38] sm:$0xff] %v1060
                %v1062 = vld [vmem:[%s148 + $0x38e8] sm:$0xff]
                %1063 = vst [vmem:[%s149 + $0xe40] sm:$0xff] %v1062
                %v1064 = vld [vmem:[%s148 + $0x38f0] sm:$0xff]
                %1065 = vst [vmem:[%s149 + $0xe48] sm:$0xff] %v1064
                %v1066 = vld [vmem:[%s148 + $0x38f8] sm:$0xff]
                %1067 = vst [vmem:[%s149 + $0xe50] sm:$0xff] %v1066
                %v1068 = vld [vmem:[%s148 + $0x3900] sm:$0xff]
                %1069 = vst [vmem:[%s149 + $0xe58] sm:$0xff] %v1068
                %v1070 = vld [vmem:[%s148 + $0x3908] sm:$0xff]
                %1071 = vst [vmem:[%s149 + $0xe60] sm:$0xff] %v1070
                %v1072 = vld [vmem:[%s148 + $0x3910] sm:$0xff]
                %1073 = vst [vmem:[%s149 + $0xe68] sm:$0xff] %v1072
                %v1074 = vld [vmem:[%s148 + $0x39c0] sm:$0xff]
                %1075 = vst [vmem:[%s149 + $0xe70] sm:$0xff] %v1074
                %v1076 = vld [vmem:[%s148 + $0x39c8] sm:$0xff]
                %1077 = vst [vmem:[%s149 + $0xe78] sm:$0xff] %v1076
                %v1078 = vld [vmem:[%s148 + $0x39d0] sm:$0xff]
                %1079 = vst [vmem:[%s149 + $0xe80] sm:$0xff] %v1078
                %v1080 = vld [vmem:[%s148 + $0x39d8] sm:$0xff]
                %1081 = vst [vmem:[%s149 + $0xe88] sm:$0xff] %v1080
                %v1082 = vld [vmem:[%s148 + $0x39e0] sm:$0xff]
                %1083 = vst [vmem:[%s149 + $0xe90] sm:$0xff] %v1082
                %v1084 = vld [vmem:[%s148 + $0x39e8] sm:$0xff]
                %1085 = vst [vmem:[%s149 + $0xe98] sm:$0xff] %v1084
                %v1086 = vld [vmem:[%s148 + $0x39f0] sm:$0xff]
                %1087 = vst [vmem:[%s149 + $0xea0] sm:$0xff] %v1086
                %v1088 = vld [vmem:[%s148 + $0x3aa0] sm:$0xff]
                %1089 = vst [vmem:[%s149 + $0xea8] sm:$0xff] %v1088
                %v1090 = vld [vmem:[%s148 + $0x3aa8] sm:$0xff]
                %1091 = vst [vmem:[%s149 + $0xeb0] sm:$0xff] %v1090
                %v1092 = vld [vmem:[%s148 + $0x3ab0] sm:$0xff]
                %1093 = vst [vmem:[%s149 + $0xeb8] sm:$0xff] %v1092
                %v1094 = vld [vmem:[%s148 + $0x3ab8] sm:$0xff]
                %1095 = vst [vmem:[%s149 + $0xec0] sm:$0xff] %v1094
                %v1096 = vld [vmem:[%s148 + $0x3ac0] sm:$0xff]
                %1097 = vst [vmem:[%s149 + $0xec8] sm:$0xff] %v1096
                %v1098 = vld [vmem:[%s148 + $0x3ac8] sm:$0xff]
                %1099 = vst [vmem:[%s149 + $0xed0] sm:$0xff] %v1098
                %v1100 = vld [vmem:[%s148 + $0x3ad0] sm:$0xff]
                %1101 = vst [vmem:[%s149 + $0xed8] sm:$0xff] %v1100
                %v1102 = vld [vmem:[%s148 + $0x3b80] sm:$0xff]
                %1103 = vst [vmem:[%s149 + $0xee0] sm:$0xff] %v1102
                %v1104 = vld [vmem:[%s148 + $0x3b88] sm:$0xff]
                %1105 = vst [vmem:[%s149 + $0xee8] sm:$0xff] %v1104
                %v1106 = vld [vmem:[%s148 + $0x3b90] sm:$0xff]
                %1107 = vst [vmem:[%s149 + $0xef0] sm:$0xff] %v1106
                %v1108 = vld [vmem:[%s148 + $0x3b98] sm:$0xff]
                %1109 = vst [vmem:[%s149 + $0xef8] sm:$0xff] %v1108
                %v1110 = vld [vmem:[%s148 + $0x3ba0] sm:$0xff]
                %1111 = vst [vmem:[%s149 + $0xf00] sm:$0xff] %v1110
                %v1112 = vld [vmem:[%s148 + $0x3ba8] sm:$0xff]
                %1113 = vst [vmem:[%s149 + $0xf08] sm:$0xff] %v1112
                %v1114 = vld [vmem:[%s148 + $0x3bb0] sm:$0xff]
                %1115 = vst [vmem:[%s149 + $0xf10] sm:$0xff] %v1114
                %v1116 = vld [vmem:[%s148 + $0x3c60] sm:$0xff]
                %1117 = vst [vmem:[%s149 + $0xf18] sm:$0xff] %v1116
                %v1118 = vld [vmem:[%s148 + $0x3c68] sm:$0xff]
                %1119 = vst [vmem:[%s149 + $0xf20] sm:$0xff] %v1118
                %v1120 = vld [vmem:[%s148 + $0x3c70] sm:$0xff]
                %1121 = vst [vmem:[%s149 + $0xf28] sm:$0xff] %v1120
                %v1122 = vld [vmem:[%s148 + $0x3c78] sm:$0xff]
                %1123 = vst [vmem:[%s149 + $0xf30] sm:$0xff] %v1122
                %v1124 = vld [vmem:[%s148 + $0x3c80] sm:$0xff]
                %1125 = vst [vmem:[%s149 + $0xf38] sm:$0xff] %v1124
                %v1126 = vld [vmem:[%s148 + $0x3c88] sm:$0xff]
                %1127 = vst [vmem:[%s149 + $0xf40] sm:$0xff] %v1126
                %v1128 = vld [vmem:[%s148 + $0x3c90] sm:$0xff]
                %1129 = vst [vmem:[%s149 + $0xf48] sm:$0xff] %v1128
                %v1130 = vld [vmem:[%s148 + $0x3d40] sm:$0xff]
                %1131 = vst [vmem:[%s149 + $0xf50] sm:$0xff] %v1130
                %v1132 = vld [vmem:[%s148 + $0x3d48] sm:$0xff]
                %1133 = vst [vmem:[%s149 + $0xf58] sm:$0xff] %v1132
                %v1134 = vld [vmem:[%s148 + $0x3d50] sm:$0xff]
                %1135 = vst [vmem:[%s149 + $0xf60] sm:$0xff] %v1134
                %v1136 = vld [vmem:[%s148 + $0x3d58] sm:$0xff]
                %1137 = vst [vmem:[%s149 + $0xf68] sm:$0xff] %v1136
                %v1138 = vld [vmem:[%s148 + $0x3d60] sm:$0xff]
                %1139 = vst [vmem:[%s149 + $0xf70] sm:$0xff] %v1138
                %v1140 = vld [vmem:[%s148 + $0x3d68] sm:$0xff]
                %1141 = vst [vmem:[%s149 + $0xf78] sm:$0xff] %v1140
                %v1142 = vld [vmem:[%s148 + $0x3d70] sm:$0xff]
                %1143 = vst [vmem:[%s149 + $0xf80] sm:$0xff] %v1142
                %v1144 = vld [vmem:[%s148 + $0x3e20] sm:$0xff]
                %1145 = vst [vmem:[%s149 + $0xf88] sm:$0xff] %v1144
                %v1146 = vld [vmem:[%s148 + $0x3e28] sm:$0xff]
                %1147 = vst [vmem:[%s149 + $0xf90] sm:$0xff] %v1146
                %v1148 = vld [vmem:[%s148 + $0x3e30] sm:$0xff]
                %1149 = vst [vmem:[%s149 + $0xf98] sm:$0xff] %v1148
                %v1150 = vld [vmem:[%s148 + $0x3e38] sm:$0xff]
                %1151 = vst [vmem:[%s149 + $0xfa0] sm:$0xff] %v1150
                %v1152 = vld [vmem:[%s148 + $0x3e40] sm:$0xff]
                %1153 = vst [vmem:[%s149 + $0xfa8] sm:$0xff] %v1152
                %v1154 = vld [vmem:[%s148 + $0x3e48] sm:$0xff]
                %1155 = vst [vmem:[%s149 + $0xfb0] sm:$0xff] %v1154
                %v1156 = vld [vmem:[%s148 + $0x3e50] sm:$0xff]
                %1157 = vst [vmem:[%s149 + $0xfb8] sm:$0xff] %v1156
              $region41: #{unet_block_forward.15} parent=35 // loop_footer
                %s147 = sadd.s32 1, %s143
              $region42: #{unet_block_forward.15} parent=35 // loop_footer_branch
                %142 = sbr.rel target = $region38
              $region43: #{unet_block_forward.15} parent=35 // loop_exit
                _
            $region36: #{unet_block_forward.15} parent=31 // pred_fallthru
              _
            // Predicated region
            $region44: #{unet_block_forward.15} parent=31 // pred_check
              _
            $region45: #{unet_block_forward.15} parent=31 // pred_check_branch
              %1159 = sbr.rel target = $region47
            $region46: #{unet_block_forward.15} parent=31 // pred_region
              _
            $region47: #{unet_block_forward.15} parent=31 // pred_fallthru
              _
          $region32: #{unet_block_forward.15} parent=27 // pred_fallthru
            _
          %1160 = vnop
        $region28: #{unet_block_forward.15} parent=23 // pred_fallthru
          _
      $region24: #{unet_block_forward.15} parent=5 // pred_fallthru
        _
      %p1161 = scmp.le.s32.totalorder 1, %s9
      %p1162 = scmp.lt.s32.totalorder %s9, 5
      %p1163 = pnand %p1161, %p1162
      %p1164 = pneg %p1163
      // Predicated region
      $region48: #{unet_block_forward.15} parent=5 // pred_check
        _
      $region49: #{unet_block_forward.15} parent=5 // pred_check_branch
        %1166 = sbr.rel (%p1163) target = $region51
      $region50: #{unet_block_forward.15} parent=5 // pred_region
        %s1167 = ssub.s32 %s9, 1
        %s1168 = sand.u32 %s22, 1
        %s1169 = sand.u32 %s22, 1
        %s1170 = smul.addr %s1169, 4032
        %s1171 = scalar_lea.vmem [#allocation2], %s1170
        // Predicated region
        $region52: #{unet_block_forward.15} parent=50 // pred_check
          %p1172 = pneg %p35
        $region53: #{unet_block_forward.15} parent=50 // pred_check_branch
          %1174 = sbr.rel (%p1172) target = $region55
        $region54: #{unet_block_forward.15} parent=50 // pred_region
          _
        $region55: #{unet_block_forward.15} parent=50 // pred_fallthru
          _
        %s1175 = sand.u32 %s22, 1
        %s1176 = sand.u32 %s22, 1
        %s1177 = smul.addr %s1176, 4032
        %s1178 = scalar_lea.vmem [#allocation2], %s1177
        %p1179 = pneg %p35
        %p1180 = pneg %p32
        %p1181 = pneg %p56
        %p1182 = pneg %p53
        %p1183 = pneg %p77
        %p1184 = pneg %p74
        %p1185 = pneg %p103
        %p1186 = pneg %p100
        %s1187 = smul.u32 7, %s14
        %p1188 = scmp.lt.s32.totalorder %s1187, 27
        %s1189 = scalar_select %p1188, %s1187, 27
        %s1190 = smul.addr %s1189, 4
        %s1191 = scalar_lea.vmem %s3, %s1190
        %s1192 = smul.u32 7, %s14
        %s1193 = smul.u32 7, %s14
        %p1194 = scmp.lt.s32.totalorder %s1193, 27
        %s1195 = scalar_select %p1194, %s1193, 27
        %s1196 = smul.addr %s1195, 4
        %s1197 = scalar_lea.vmem %s3, %s1196
        %s1198 = smul.u32 7, %s14
        %v1199 = vld [vmem:[%s1] sm:$0xff]
        %v1200 = vld [vmem:[%s1 + $0x8] sm:$0xff]
        %v1201 = vld [vmem:[%s1 + $0x10] sm:$0xf]
        %v1202 = vld [vmem:[%s1171] sm:$0xff]
        %v1203 = vld [vmem:[%s1171 + $0x8] sm:$0xff]
        %v1204 = vld [vmem:[%s1171 + $0x10] sm:$0xff]
        %v1205 = vld [vmem:[%s1171 + $0x18] sm:$0xff]
        %v1206 = vld [vmem:[%s1171 + $0x20] sm:$0xff]
        %v1207 = vld [vmem:[%s1171 + $0x28] sm:$0xff]
        %v1208 = vld [vmem:[%s1171 + $0x30] sm:$0xff]
        %v1209 = vld [vmem:[%s1171 + $0x38] sm:$0xff]
        %v1210 = vld [vmem:[%s1171 + $0x40] sm:$0xff]
        %v1211 = vld [vmem:[%s1171 + $0x48] sm:$0xff]
        %v1212 = vld [vmem:[%s1171 + $0x50] sm:$0xff]
        %v1213 = vld [vmem:[%s1171 + $0x58] sm:$0xff]
        %v1214 = vld [vmem:[%s1171 + $0x60] sm:$0xff]
        %v1215 = vld [vmem:[%s1171 + $0x68] sm:$0xff]
        %v1216 = vld [vmem:[%s1171 + $0x70] sm:$0xff]
        %v1217 = vld [vmem:[%s1171 + $0x78] sm:$0xff]
        %v1218 = vld [vmem:[%s1171 + $0x80] sm:$0xff]
        %v1219 = vld [vmem:[%s1171 + $0x88] sm:$0xff]
        %v1220 = vld [vmem:[%s1171 + $0x90] sm:$0xff]
        %v1221 = vld [vmem:[%s1171 + $0x98] sm:$0xff]
        %v1222 = vld [vmem:[%s1171 + $0xa0] sm:$0xff]
        %v1223 = vld [vmem:[%s1171 + $0xa8] sm:$0xff]
        %v1224 = vld [vmem:[%s1171 + $0xb0] sm:$0xff]
        %v1225 = vld [vmem:[%s1171 + $0xb8] sm:$0xff]
        %v1226 = vld [vmem:[%s1171 + $0xc0] sm:$0xff]
        %v1227 = vld [vmem:[%s1171 + $0xc8] sm:$0xff]
        %v1228 = vld [vmem:[%s1171 + $0xd0] sm:$0xff]
        %v1229 = vld [vmem:[%s1171 + $0xd8] sm:$0xff]
        %v1230 = vld [vmem:[%s1171 + $0xe0] sm:$0xff]
        %v1231 = vld [vmem:[%s1171 + $0xe8] sm:$0xff]
        %v1232 = vld [vmem:[%s1171 + $0xf0] sm:$0xff]
        %v1233 = vld [vmem:[%s1171 + $0xf8] sm:$0xff]
        %v1234 = vld [vmem:[%s1171 + $0x100] sm:$0xff]
        %v1235 = vld [vmem:[%s1171 + $0x108] sm:$0xff]
        %v1236 = vld [vmem:[%s1171 + $0x110] sm:$0xff]
        %v1237 = vld [vmem:[%s1171 + $0x118] sm:$0xff]
        %v1238 = vld [vmem:[%s1171 + $0x120] sm:$0xff]
        %v1239 = vld [vmem:[%s1171 + $0x128] sm:$0xff]
        %v1240 = vld [vmem:[%s1171 + $0x130] sm:$0xff]
        %v1241 = vld [vmem:[%s1171 + $0x138] sm:$0xff]
        %v1242 = vld [vmem:[%s1171 + $0x140] sm:$0xff]
        %v1243 = vld [vmem:[%s1171 + $0x148] sm:$0xff]
        %v1244 = vld [vmem:[%s1171 + $0x150] sm:$0xff]
        %v1245 = vld [vmem:[%s1171 + $0x158] sm:$0xff]
        %v1246 = vld [vmem:[%s1171 + $0x160] sm:$0xff]
        %v1247 = vld [vmem:[%s1171 + $0x168] sm:$0xff]
        %v1248 = vld [vmem:[%s1171 + $0x170] sm:$0xff]
        %v1249 = vld [vmem:[%s1171 + $0x178] sm:$0xff]
        %v1250 = vld [vmem:[%s1171 + $0x180] sm:$0xff]
        %v1251 = vld [vmem:[%s1171 + $0x188] sm:$0xff]
        %v1252 = vld [vmem:[%s1171 + $0x190] sm:$0xff]
        %v1253 = vld [vmem:[%s1171 + $0x198] sm:$0xff]
        %v1254 = vld [vmem:[%s1171 + $0x1a0] sm:$0xff]
        %v1255 = vld [vmem:[%s1171 + $0x1a8] sm:$0xff]
        %v1256 = vld [vmem:[%s1171 + $0x1b0] sm:$0xff]
        %v1257 = vld [vmem:[%s1171 + $0x1b8] sm:$0xff]
        %v1258 = vld [vmem:[%s1171 + $0x1c0] sm:$0xff]
        %v1259 = vld [vmem:[%s1171 + $0x1c8] sm:$0xff]
        %v1260 = vld [vmem:[%s1171 + $0x1d0] sm:$0xff]
        %v1261 = vld [vmem:[%s1171 + $0x1d8] sm:$0xff]
        %v1262 = vld [vmem:[%s1171 + $0x1e0] sm:$0xff]
        %v1263 = vld [vmem:[%s1171 + $0x1e8] sm:$0xff]
        %v1264 = vld [vmem:[%s1171 + $0x1f0] sm:$0xff]
        %v1265 = vld [vmem:[%s1171 + $0x1f8] sm:$0xff]
        %v1266 = vld [vmem:[%s1171 + $0x200] sm:$0xff]
        %v1267 = vld [vmem:[%s1171 + $0x208] sm:$0xff]
        %v1268 = vld [vmem:[%s1171 + $0x210] sm:$0xff]
        %v1269 = vld [vmem:[%s1171 + $0x218] sm:$0xff]
        %v1270 = vld [vmem:[%s1171 + $0x220] sm:$0xff]
        %v1271 = vld [vmem:[%s1171 + $0x228] sm:$0xff]
        %v1272 = vld [vmem:[%s1171 + $0x230] sm:$0xff]
        %v1273 = vld [vmem:[%s1171 + $0x238] sm:$0xff]
        %v1274 = vld [vmem:[%s1171 + $0x240] sm:$0xff]
        %v1275 = vld [vmem:[%s1171 + $0x248] sm:$0xff]
        %v1276 = vld [vmem:[%s1171 + $0x250] sm:$0xff]
        %v1277 = vld [vmem:[%s1171 + $0x258] sm:$0xff]
        %v1278 = vld [vmem:[%s1171 + $0x260] sm:$0xff]
        %v1279 = vld [vmem:[%s1171 + $0x268] sm:$0xff]
        %v1280 = vld [vmem:[%s1171 + $0x270] sm:$0xff]
        %v1281 = vld [vmem:[%s1171 + $0x278] sm:$0xff]
        %v1282 = vld [vmem:[%s1171 + $0x280] sm:$0xff]
        %v1283 = vld [vmem:[%s1171 + $0x288] sm:$0xff]
        %v1284 = vld [vmem:[%s1171 + $0x290] sm:$0xff]
        %v1285 = vld [vmem:[%s1171 + $0x298] sm:$0xff]
        %v1286 = vld [vmem:[%s1171 + $0x2a0] sm:$0xff]
        %v1287 = vld [vmem:[%s1171 + $0x2a8] sm:$0xff]
        %v1288 = vld [vmem:[%s1171 + $0x2b0] sm:$0xff]
        %v1289 = vld [vmem:[%s1171 + $0x2b8] sm:$0xff]
        %v1290 = vld [vmem:[%s1171 + $0x2c0] sm:$0xff]
        %v1291 = vld [vmem:[%s1171 + $0x2c8] sm:$0xff]
        %v1292 = vld [vmem:[%s1171 + $0x2d0] sm:$0xff]
        %v1293 = vld [vmem:[%s1171 + $0x2d8] sm:$0xff]
        %v1294 = vld [vmem:[%s1171 + $0x2e0] sm:$0xff]
        %v1295 = vld [vmem:[%s1171 + $0x2e8] sm:$0xff]
        %v1296 = vld [vmem:[%s1171 + $0x2f0] sm:$0xff]
        %v1297 = vld [vmem:[%s1171 + $0x2f8] sm:$0xff]
        %v1298 = vld [vmem:[%s1171 + $0x300] sm:$0xff]
        %v1299 = vld [vmem:[%s1171 + $0x308] sm:$0xff]
        %v1300 = vld [vmem:[%s1171 + $0x310] sm:$0xff]
        %v1301 = vld [vmem:[%s1171 + $0x318] sm:$0xff]
        %v1302 = vld [vmem:[%s1171 + $0x320] sm:$0xff]
        %v1303 = vld [vmem:[%s1171 + $0x328] sm:$0xff]
        %v1304 = vld [vmem:[%s1171 + $0x330] sm:$0xff]
        %v1305 = vld [vmem:[%s1171 + $0x338] sm:$0xff]
        %v1306 = vld [vmem:[%s1171 + $0x340] sm:$0xff]
        %v1307 = vld [vmem:[%s1171 + $0x348] sm:$0xff]
        %v1308 = vld [vmem:[%s1171 + $0x350] sm:$0xff]
        %v1309 = vld [vmem:[%s1171 + $0x358] sm:$0xff]
        %v1310 = vld [vmem:[%s1171 + $0x360] sm:$0xff]
        %v1311 = vld [vmem:[%s1171 + $0x368] sm:$0xff]
        %v1312 = vld [vmem:[%s1171 + $0x370] sm:$0xff]
        %v1313 = vld [vmem:[%s1171 + $0x378] sm:$0xff]
        %v1314 = vld [vmem:[%s1171 + $0x380] sm:$0xff]
        %v1315 = vld [vmem:[%s1171 + $0x388] sm:$0xff]
        %v1316 = vld [vmem:[%s1171 + $0x390] sm:$0xff]
        %v1317 = vld [vmem:[%s1171 + $0x398] sm:$0xff]
        %v1318 = vld [vmem:[%s1171 + $0x3a0] sm:$0xff]
        %v1319 = vld [vmem:[%s1171 + $0x3a8] sm:$0xff]
        %v1320 = vld [vmem:[%s1171 + $0x3b0] sm:$0xff]
        %v1321 = vld [vmem:[%s1171 + $0x3b8] sm:$0xff]
        %v1322 = vld [vmem:[%s1171 + $0x3c0] sm:$0xff]
        %v1323 = vld [vmem:[%s1171 + $0x3c8] sm:$0xff]
        %v1324 = vld [vmem:[%s1171 + $0x3d0] sm:$0xff]
        %v1325 = vld [vmem:[%s1171 + $0x3d8] sm:$0xff]
        %v1326 = vld [vmem:[%s1171 + $0x3e0] sm:$0xff]
        %v1327 = vld [vmem:[%s1171 + $0x3e8] sm:$0xff]
        %v1328 = vld [vmem:[%s1171 + $0x3f0] sm:$0xff]
        %v1329 = vld [vmem:[%s1171 + $0x3f8] sm:$0xff]
        %v1330 = vld [vmem:[%s1171 + $0x400] sm:$0xff]
        %v1331 = vld [vmem:[%s1171 + $0x408] sm:$0xff]
        %v1332 = vld [vmem:[%s1171 + $0x410] sm:$0xff]
        %v1333 = vld [vmem:[%s1171 + $0x418] sm:$0xff]
        %v1334 = vld [vmem:[%s1171 + $0x420] sm:$0xff]
        %v1335 = vld [vmem:[%s1171 + $0x428] sm:$0xff]
        %v1336 = vld [vmem:[%s1171 + $0x430] sm:$0xff]
        %v1337 = vld [vmem:[%s1171 + $0x438] sm:$0xff]
        %v1338 = vld [vmem:[%s1171 + $0x440] sm:$0xff]
        %v1339 = vld [vmem:[%s1171 + $0x448] sm:$0xff]
        %v1340 = vld [vmem:[%s1171 + $0x450] sm:$0xff]
        %v1341 = vld [vmem:[%s1171 + $0x458] sm:$0xff]
        %v1342 = vld [vmem:[%s1171 + $0x460] sm:$0xff]
        %v1343 = vld [vmem:[%s1171 + $0x468] sm:$0xff]
        %v1344 = vld [vmem:[%s1171 + $0x470] sm:$0xff]
        %v1345 = vld [vmem:[%s1171 + $0x478] sm:$0xff]
        %v1346 = vld [vmem:[%s1171 + $0x480] sm:$0xff]
        %v1347 = vld [vmem:[%s1171 + $0x488] sm:$0xff]
        %v1348 = vld [vmem:[%s1171 + $0x490] sm:$0xff]
        %v1349 = vld [vmem:[%s1171 + $0x498] sm:$0xff]
        %v1350 = vld [vmem:[%s1171 + $0x4a0] sm:$0xff]
        %v1351 = vld [vmem:[%s1171 + $0x4a8] sm:$0xff]
        %v1352 = vld [vmem:[%s1171 + $0x4b0] sm:$0xff]
        %v1353 = vld [vmem:[%s1171 + $0x4b8] sm:$0xff]
        %v1354 = vld [vmem:[%s1171 + $0x4c0] sm:$0xff]
        %v1355 = vld [vmem:[%s1171 + $0x4c8] sm:$0xff]
        %v1356 = vld [vmem:[%s1171 + $0x4d0] sm:$0xff]
        %v1357 = vld [vmem:[%s1171 + $0x4d8] sm:$0xff]
        %v1358 = vld [vmem:[%s1171 + $0x4e0] sm:$0xff]
        %v1359 = vld [vmem:[%s1171 + $0x4e8] sm:$0xff]
        %v1360 = vld [vmem:[%s1171 + $0x4f0] sm:$0xff]
        %v1361 = vld [vmem:[%s1171 + $0x4f8] sm:$0xff]
        %v1362 = vld [vmem:[%s1171 + $0x500] sm:$0xff]
        %v1363 = vld [vmem:[%s1171 + $0x508] sm:$0xff]
        %v1364 = vld [vmem:[%s1171 + $0x510] sm:$0xff]
        %v1365 = vld [vmem:[%s1171 + $0x518] sm:$0xff]
        %v1366 = vld [vmem:[%s1171 + $0x520] sm:$0xff]
        %v1367 = vld [vmem:[%s1171 + $0x528] sm:$0xff]
        %v1368 = vld [vmem:[%s1171 + $0x530] sm:$0xff]
        %v1369 = vld [vmem:[%s1171 + $0x538] sm:$0xff]
        %v1370 = vld [vmem:[%s1171 + $0x540] sm:$0xff]
        %v1371 = vld [vmem:[%s1171 + $0x548] sm:$0xff]
        %v1372 = vld [vmem:[%s1171 + $0x550] sm:$0xff]
        %v1373 = vld [vmem:[%s1171 + $0x558] sm:$0xff]
        %v1374 = vld [vmem:[%s1171 + $0x560] sm:$0xff]
        %v1375 = vld [vmem:[%s1171 + $0x568] sm:$0xff]
        %v1376 = vld [vmem:[%s1171 + $0x570] sm:$0xff]
        %v1377 = vld [vmem:[%s1171 + $0x578] sm:$0xff]
        %v1378 = vld [vmem:[%s1171 + $0x580] sm:$0xff]
        %v1379 = vld [vmem:[%s1171 + $0x588] sm:$0xff]
        %v1380 = vld [vmem:[%s1171 + $0x590] sm:$0xff]
        %v1381 = vld [vmem:[%s1171 + $0x598] sm:$0xff]
        %v1382 = vld [vmem:[%s1171 + $0x5a0] sm:$0xff]
        %v1383 = vld [vmem:[%s1171 + $0x5a8] sm:$0xff]
        %v1384 = vld [vmem:[%s1171 + $0x5b0] sm:$0xff]
        %v1385 = vld [vmem:[%s1171 + $0x5b8] sm:$0xff]
        %v1386 = vld [vmem:[%s1171 + $0x5c0] sm:$0xff]
        %v1387 = vld [vmem:[%s1171 + $0x5c8] sm:$0xff]
        %v1388 = vld [vmem:[%s1171 + $0x5d0] sm:$0xff]
        %v1389 = vld [vmem:[%s1171 + $0x5d8] sm:$0xff]
        %v1390 = vld [vmem:[%s1171 + $0x5e0] sm:$0xff]
        %v1391 = vld [vmem:[%s1171 + $0x5e8] sm:$0xff]
        %v1392 = vld [vmem:[%s1171 + $0x5f0] sm:$0xff]
        %v1393 = vld [vmem:[%s1171 + $0x5f8] sm:$0xff]
        %v1394 = vld [vmem:[%s1171 + $0x600] sm:$0xff]
        %v1395 = vld [vmem:[%s1171 + $0x608] sm:$0xff]
        %v1396 = vld [vmem:[%s1171 + $0x610] sm:$0xff]
        %v1397 = vld [vmem:[%s1171 + $0x618] sm:$0xff]
        %v1398 = vld [vmem:[%s1171 + $0x620] sm:$0xff]
        %v1399 = vld [vmem:[%s1171 + $0x628] sm:$0xff]
        %v1400 = vld [vmem:[%s1171 + $0x630] sm:$0xff]
        %v1401 = vld [vmem:[%s1171 + $0x638] sm:$0xff]
        %v1402 = vld [vmem:[%s1171 + $0x640] sm:$0xff]
        %v1403 = vld [vmem:[%s1171 + $0x648] sm:$0xff]
        %v1404 = vld [vmem:[%s1171 + $0x650] sm:$0xff]
        %v1405 = vld [vmem:[%s1171 + $0x658] sm:$0xff]
        %v1406 = vld [vmem:[%s1171 + $0x660] sm:$0xff]
        %v1407 = vld [vmem:[%s1171 + $0x668] sm:$0xff]
        %v1408 = vld [vmem:[%s1171 + $0x670] sm:$0xff]
        %v1409 = vld [vmem:[%s1171 + $0x678] sm:$0xff]
        %v1410 = vld [vmem:[%s1171 + $0x680] sm:$0xff]
        %v1411 = vld [vmem:[%s1171 + $0x688] sm:$0xff]
        %v1412 = vld [vmem:[%s1171 + $0x690] sm:$0xff]
        %v1413 = vld [vmem:[%s1171 + $0x698] sm:$0xff]
        %v1414 = vld [vmem:[%s1171 + $0x6a0] sm:$0xff]
        %v1415 = vld [vmem:[%s1171 + $0x6a8] sm:$0xff]
        %v1416 = vld [vmem:[%s1171 + $0x6b0] sm:$0xff]
        %v1417 = vld [vmem:[%s1171 + $0x6b8] sm:$0xff]
        %v1418 = vld [vmem:[%s1171 + $0x6c0] sm:$0xff]
        %v1419 = vld [vmem:[%s1171 + $0x6c8] sm:$0xff]
        %v1420 = vld [vmem:[%s1171 + $0x6d0] sm:$0xff]
        %v1421 = vld [vmem:[%s1171 + $0x6d8] sm:$0xff]
        %v1422 = vld [vmem:[%s1171 + $0x6e0] sm:$0xff]
        %v1423 = vld [vmem:[%s1171 + $0x6e8] sm:$0xff]
        %v1424 = vld [vmem:[%s1171 + $0x6f0] sm:$0xff]
        %v1425 = vld [vmem:[%s1171 + $0x6f8] sm:$0xff]
        %v1426 = vld [vmem:[%s1171 + $0x700] sm:$0xff]
        %v1427 = vld [vmem:[%s1171 + $0x708] sm:$0xff]
        %v1428 = vld [vmem:[%s1171 + $0x710] sm:$0xff]
        %v1429 = vld [vmem:[%s1171 + $0x718] sm:$0xff]
        %v1430 = vld [vmem:[%s1171 + $0x720] sm:$0xff]
        %v1431 = vld [vmem:[%s1171 + $0x728] sm:$0xff]
        %v1432 = vld [vmem:[%s1171 + $0x730] sm:$0xff]
        %v1433 = vld [vmem:[%s1171 + $0x738] sm:$0xff]
        %v1434 = vld [vmem:[%s1171 + $0x740] sm:$0xff]
        %v1435 = vld [vmem:[%s1171 + $0x748] sm:$0xff]
        %v1436 = vld [vmem:[%s1171 + $0x750] sm:$0xff]
        %v1437 = vld [vmem:[%s1171 + $0x758] sm:$0xff]
        %v1438 = vld [vmem:[%s1171 + $0x760] sm:$0xff]
        %v1439 = vld [vmem:[%s1171 + $0x768] sm:$0xff]
        %v1440 = vld [vmem:[%s1171 + $0x770] sm:$0xff]
        %v1441 = vld [vmem:[%s1171 + $0x778] sm:$0xff]
        %v1442 = vld [vmem:[%s1171 + $0x780] sm:$0xff]
        %v1443 = vld [vmem:[%s1171 + $0x788] sm:$0xff]
        %v1444 = vld [vmem:[%s1171 + $0x790] sm:$0xff]
        %v1445 = vld [vmem:[%s1171 + $0x798] sm:$0xff]
        %v1446 = vld [vmem:[%s1171 + $0x7a0] sm:$0xff]
        %v1447 = vld [vmem:[%s1171 + $0x7a8] sm:$0xff]
        %v1448 = vld [vmem:[%s1171 + $0x7b0] sm:$0xff]
        %v1449 = vld [vmem:[%s1171 + $0x7b8] sm:$0xff]
        %v1450 = vld [vmem:[%s1171 + $0x7c0] sm:$0xff]
        %v1451 = vld [vmem:[%s1171 + $0x7c8] sm:$0xff]
        %v1452 = vld [vmem:[%s1171 + $0x7d0] sm:$0xff]
        %v1453 = vld [vmem:[%s1171 + $0x7d8] sm:$0xff]
        %v1454 = vld [vmem:[%s1171 + $0x7e0] sm:$0xff]
        %v1455 = vld [vmem:[%s1171 + $0x7e8] sm:$0xff]
        %v1456 = vld [vmem:[%s1171 + $0x7f0] sm:$0xff]
        %v1457 = vld [vmem:[%s1171 + $0x7f8] sm:$0xff]
        %v1458 = vld [vmem:[%s1171 + $0x800] sm:$0xff]
        %v1459 = vld [vmem:[%s1171 + $0x808] sm:$0xff]
        %v1460 = vld [vmem:[%s1171 + $0x810] sm:$0xff]
        %v1461 = vld [vmem:[%s1171 + $0x818] sm:$0xff]
        %v1462 = vld [vmem:[%s1171 + $0x820] sm:$0xff]
        %v1463 = vld [vmem:[%s1171 + $0x828] sm:$0xff]
        %v1464 = vld [vmem:[%s1171 + $0x830] sm:$0xff]
        %v1465 = vld [vmem:[%s1171 + $0x838] sm:$0xff]
        %v1466 = vld [vmem:[%s1171 + $0x840] sm:$0xff]
        %v1467 = vld [vmem:[%s1171 + $0x848] sm:$0xff]
        %v1468 = vld [vmem:[%s1171 + $0x850] sm:$0xff]
        %v1469 = vld [vmem:[%s1171 + $0x858] sm:$0xff]
        %v1470 = vld [vmem:[%s1171 + $0x860] sm:$0xff]
        %v1471 = vld [vmem:[%s1171 + $0x868] sm:$0xff]
        %v1472 = vld [vmem:[%s1171 + $0x870] sm:$0xff]
        %v1473 = vld [vmem:[%s1171 + $0x878] sm:$0xff]
        %v1474 = vld [vmem:[%s1171 + $0x880] sm:$0xff]
        %v1475 = vld [vmem:[%s1171 + $0x888] sm:$0xff]
        %v1476 = vld [vmem:[%s1171 + $0x890] sm:$0xff]
        %v1477 = vld [vmem:[%s1171 + $0x898] sm:$0xff]
        %v1478 = vld [vmem:[%s1171 + $0x8a0] sm:$0xff]
        %v1479 = vld [vmem:[%s1171 + $0x8a8] sm:$0xff]
        %v1480 = vld [vmem:[%s1171 + $0x8b0] sm:$0xff]
        %v1481 = vld [vmem:[%s1171 + $0x8b8] sm:$0xff]
        %v1482 = vld [vmem:[%s1171 + $0x8c0] sm:$0xff]
        %v1483 = vld [vmem:[%s1171 + $0x8c8] sm:$0xff]
        %v1484 = vld [vmem:[%s1171 + $0x8d0] sm:$0xff]
        %v1485 = vld [vmem:[%s1171 + $0x8d8] sm:$0xff]
        %v1486 = vld [vmem:[%s1171 + $0x8e0] sm:$0xff]
        %v1487 = vld [vmem:[%s1171 + $0x8e8] sm:$0xff]
        %v1488 = vld [vmem:[%s1171 + $0x8f0] sm:$0xff]
        %v1489 = vld [vmem:[%s1171 + $0x8f8] sm:$0xff]
        %v1490 = vld [vmem:[%s1171 + $0x900] sm:$0xff]
        %v1491 = vld [vmem:[%s1171 + $0x908] sm:$0xff]
        %v1492 = vld [vmem:[%s1171 + $0x910] sm:$0xff]
        %v1493 = vld [vmem:[%s1171 + $0x918] sm:$0xff]
        %v1494 = vld [vmem:[%s1171 + $0x920] sm:$0xff]
        %v1495 = vld [vmem:[%s1171 + $0x928] sm:$0xff]
        %v1496 = vld [vmem:[%s1171 + $0x930] sm:$0xff]
        %v1497 = vld [vmem:[%s1171 + $0x938] sm:$0xff]
        %v1498 = vld [vmem:[%s1171 + $0x940] sm:$0xff]
        %v1499 = vld [vmem:[%s1171 + $0x948] sm:$0xff]
        %v1500 = vld [vmem:[%s1171 + $0x950] sm:$0xff]
        %v1501 = vld [vmem:[%s1171 + $0x958] sm:$0xff]
        %v1502 = vld [vmem:[%s1171 + $0x960] sm:$0xff]
        %v1503 = vld [vmem:[%s1171 + $0x968] sm:$0xff]
        %v1504 = vld [vmem:[%s1171 + $0x970] sm:$0xff]
        %v1505 = vld [vmem:[%s1171 + $0x978] sm:$0xff]
        %v1506 = vld [vmem:[%s1171 + $0x980] sm:$0xff]
        %v1507 = vld [vmem:[%s1171 + $0x988] sm:$0xff]
        %v1508 = vld [vmem:[%s1171 + $0x990] sm:$0xff]
        %v1509 = vld [vmem:[%s1171 + $0x998] sm:$0xff]
        %v1510 = vld [vmem:[%s1171 + $0x9a0] sm:$0xff]
        %v1511 = vld [vmem:[%s1171 + $0x9a8] sm:$0xff]
        %v1512 = vld [vmem:[%s1171 + $0x9b0] sm:$0xff]
        %v1513 = vld [vmem:[%s1171 + $0x9b8] sm:$0xff]
        %v1514 = vld [vmem:[%s1171 + $0x9c0] sm:$0xff]
        %v1515 = vld [vmem:[%s1171 + $0x9c8] sm:$0xff]
        %v1516 = vld [vmem:[%s1171 + $0x9d0] sm:$0xff]
        %v1517 = vld [vmem:[%s1171 + $0x9d8] sm:$0xff]
        %v1518 = vld [vmem:[%s1171 + $0x9e0] sm:$0xff]
        %v1519 = vld [vmem:[%s1171 + $0x9e8] sm:$0xff]
        %v1520 = vld [vmem:[%s1171 + $0x9f0] sm:$0xff]
        %v1521 = vld [vmem:[%s1171 + $0x9f8] sm:$0xff]
        %v1522 = vld [vmem:[%s1171 + $0xa00] sm:$0xff]
        %v1523 = vld [vmem:[%s1171 + $0xa08] sm:$0xff]
        %v1524 = vld [vmem:[%s1171 + $0xa10] sm:$0xff]
        %v1525 = vld [vmem:[%s1171 + $0xa18] sm:$0xff]
        %v1526 = vld [vmem:[%s1171 + $0xa20] sm:$0xff]
        %v1527 = vld [vmem:[%s1171 + $0xa28] sm:$0xff]
        %v1528 = vld [vmem:[%s1171 + $0xa30] sm:$0xff]
        %v1529 = vld [vmem:[%s1171 + $0xa38] sm:$0xff]
        %v1530 = vld [vmem:[%s1171 + $0xa40] sm:$0xff]
        %v1531 = vld [vmem:[%s1171 + $0xa48] sm:$0xff]
        %v1532 = vld [vmem:[%s1171 + $0xa50] sm:$0xff]
        %v1533 = vld [vmem:[%s1171 + $0xa58] sm:$0xff]
        %v1534 = vld [vmem:[%s1171 + $0xa60] sm:$0xff]
        %v1535 = vld [vmem:[%s1171 + $0xa68] sm:$0xff]
        %v1536 = vld [vmem:[%s1171 + $0xa70] sm:$0xff]
        %v1537 = vld [vmem:[%s1171 + $0xa78] sm:$0xff]
        %v1538 = vld [vmem:[%s1171 + $0xa80] sm:$0xff]
        %v1539 = vld [vmem:[%s1171 + $0xa88] sm:$0xff]
        %v1540 = vld [vmem:[%s1171 + $0xa90] sm:$0xff]
        %v1541 = vld [vmem:[%s1171 + $0xa98] sm:$0xff]
        %v1542 = vld [vmem:[%s1171 + $0xaa0] sm:$0xff]
        %v1543 = vld [vmem:[%s1171 + $0xaa8] sm:$0xff]
        %v1544 = vld [vmem:[%s1171 + $0xab0] sm:$0xff]
        %v1545 = vld [vmem:[%s1171 + $0xab8] sm:$0xff]
        %v1546 = vld [vmem:[%s1171 + $0xac0] sm:$0xff]
        %v1547 = vld [vmem:[%s1171 + $0xac8] sm:$0xff]
        %v1548 = vld [vmem:[%s1171 + $0xad0] sm:$0xff]
        %v1549 = vld [vmem:[%s1171 + $0xad8] sm:$0xff]
        %v1550 = vld [vmem:[%s1171 + $0xae0] sm:$0xff]
        %v1551 = vld [vmem:[%s1171 + $0xae8] sm:$0xff]
        %v1552 = vld [vmem:[%s1171 + $0xaf0] sm:$0xff]
        %v1553 = vld [vmem:[%s1171 + $0xaf8] sm:$0xff]
        %v1554 = vld [vmem:[%s1171 + $0xb00] sm:$0xff]
        %v1555 = vld [vmem:[%s1171 + $0xb08] sm:$0xff]
        %v1556 = vld [vmem:[%s1171 + $0xb10] sm:$0xff]
        %v1557 = vld [vmem:[%s1171 + $0xb18] sm:$0xff]
        %v1558 = vld [vmem:[%s1171 + $0xb20] sm:$0xff]
        %v1559 = vld [vmem:[%s1171 + $0xb28] sm:$0xff]
        %v1560 = vld [vmem:[%s1171 + $0xb30] sm:$0xff]
        %v1561 = vld [vmem:[%s1171 + $0xb38] sm:$0xff]
        %v1562 = vld [vmem:[%s1171 + $0xb40] sm:$0xff]
        %v1563 = vld [vmem:[%s1171 + $0xb48] sm:$0xff]
        %v1564 = vld [vmem:[%s1171 + $0xb50] sm:$0xff]
        %v1565 = vld [vmem:[%s1171 + $0xb58] sm:$0xff]
        %v1566 = vld [vmem:[%s1171 + $0xb60] sm:$0xff]
        %v1567 = vld [vmem:[%s1171 + $0xb68] sm:$0xff]
        %v1568 = vld [vmem:[%s1171 + $0xb70] sm:$0xff]
        %v1569 = vld [vmem:[%s1171 + $0xb78] sm:$0xff]
        %v1570 = vld [vmem:[%s1171 + $0xb80] sm:$0xff]
        %v1571 = vld [vmem:[%s1171 + $0xb88] sm:$0xff]
        %v1572 = vld [vmem:[%s1171 + $0xb90] sm:$0xff]
        %v1573 = vld [vmem:[%s1171 + $0xb98] sm:$0xff]
        %v1574 = vld [vmem:[%s1171 + $0xba0] sm:$0xff]
        %v1575 = vld [vmem:[%s1171 + $0xba8] sm:$0xff]
        %v1576 = vld [vmem:[%s1171 + $0xbb0] sm:$0xff]
        %v1577 = vld [vmem:[%s1171 + $0xbb8] sm:$0xff]
        %v1578 = vld [vmem:[%s1171 + $0xbc0] sm:$0xff]
        %v1579 = vld [vmem:[%s1171 + $0xbc8] sm:$0xff]
        %v1580 = vld [vmem:[%s1171 + $0xbd0] sm:$0xff]
        %v1581 = vld [vmem:[%s1171 + $0xbd8] sm:$0xff]
        %v1582 = vld [vmem:[%s1171 + $0xbe0] sm:$0xff]
        %v1583 = vld [vmem:[%s1171 + $0xbe8] sm:$0xff]
        %v1584 = vld [vmem:[%s1171 + $0xbf0] sm:$0xff]
        %v1585 = vld [vmem:[%s1171 + $0xbf8] sm:$0xff]
        %v1586 = vld [vmem:[%s1171 + $0xc00] sm:$0xff]
        %v1587 = vld [vmem:[%s1171 + $0xc08] sm:$0xff]
        %v1588 = vld [vmem:[%s1171 + $0xc10] sm:$0xff]
        %v1589 = vld [vmem:[%s1171 + $0xc18] sm:$0xff]
        %v1590 = vld [vmem:[%s1171 + $0xc20] sm:$0xff]
        %v1591 = vld [vmem:[%s1171 + $0xc28] sm:$0xff]
        %v1592 = vld [vmem:[%s1171 + $0xc30] sm:$0xff]
        %v1593 = vld [vmem:[%s1171 + $0xc38] sm:$0xff]
        %v1594 = vld [vmem:[%s1171 + $0xc40] sm:$0xff]
        %v1595 = vld [vmem:[%s1171 + $0xc48] sm:$0xff]
        %v1596 = vld [vmem:[%s1171 + $0xc50] sm:$0xff]
        %v1597 = vld [vmem:[%s1171 + $0xc58] sm:$0xff]
        %v1598 = vld [vmem:[%s1171 + $0xc60] sm:$0xff]
        %v1599 = vld [vmem:[%s1171 + $0xc68] sm:$0xff]
        %v1600 = vld [vmem:[%s1171 + $0xc70] sm:$0xff]
        %v1601 = vld [vmem:[%s1171 + $0xc78] sm:$0xff]
        %v1602 = vld [vmem:[%s1171 + $0xc80] sm:$0xff]
        %v1603 = vld [vmem:[%s1171 + $0xc88] sm:$0xff]
        %v1604 = vld [vmem:[%s1171 + $0xc90] sm:$0xff]
        %v1605 = vld [vmem:[%s1171 + $0xc98] sm:$0xff]
        %v1606 = vld [vmem:[%s1171 + $0xca0] sm:$0xff]
        %v1607 = vld [vmem:[%s1171 + $0xca8] sm:$0xff]
        %v1608 = vld [vmem:[%s1171 + $0xcb0] sm:$0xff]
        %v1609 = vld [vmem:[%s1171 + $0xcb8] sm:$0xff]
        %v1610 = vld [vmem:[%s1171 + $0xcc0] sm:$0xff]
        %v1611 = vld [vmem:[%s1171 + $0xcc8] sm:$0xff]
        %v1612 = vld [vmem:[%s1171 + $0xcd0] sm:$0xff]
        %v1613 = vld [vmem:[%s1171 + $0xcd8] sm:$0xff]
        %v1614 = vld [vmem:[%s1171 + $0xce0] sm:$0xff]
        %v1615 = vld [vmem:[%s1171 + $0xce8] sm:$0xff]
        %v1616 = vld [vmem:[%s1171 + $0xcf0] sm:$0xff]
        %v1617 = vld [vmem:[%s1171 + $0xcf8] sm:$0xff]
        %v1618 = vld [vmem:[%s1171 + $0xd00] sm:$0xff]
        %v1619 = vld [vmem:[%s1171 + $0xd08] sm:$0xff]
        %v1620 = vld [vmem:[%s1171 + $0xd10] sm:$0xff]
        %v1621 = vld [vmem:[%s1171 + $0xd18] sm:$0xff]
        %v1622 = vld [vmem:[%s1171 + $0xd20] sm:$0xff]
        %v1623 = vld [vmem:[%s1171 + $0xd28] sm:$0xff]
        %v1624 = vld [vmem:[%s1171 + $0xd30] sm:$0xff]
        %v1625 = vld [vmem:[%s1171 + $0xd38] sm:$0xff]
        %v1626 = vld [vmem:[%s1171 + $0xd40] sm:$0xff]
        %v1627 = vld [vmem:[%s1171 + $0xd48] sm:$0xff]
        %v1628 = vld [vmem:[%s1171 + $0xd50] sm:$0xff]
        %v1629 = vld [vmem:[%s1171 + $0xd58] sm:$0xff]
        %v1630 = vld [vmem:[%s1171 + $0xd60] sm:$0xff]
        %v1631 = vld [vmem:[%s1171 + $0xd68] sm:$0xff]
        %v1632 = vld [vmem:[%s1171 + $0xd70] sm:$0xff]
        %v1633 = vld [vmem:[%s1171 + $0xd78] sm:$0xff]
        %v1634 = vld [vmem:[%s1171 + $0xd80] sm:$0xff]
        %v1635 = vld [vmem:[%s1171 + $0xd88] sm:$0xff]
        %v1636 = vld [vmem:[%s1171 + $0xd90] sm:$0xff]
        %v1637 = vld [vmem:[%s1171 + $0xd98] sm:$0xff]
        %v1638 = vld [vmem:[%s1171 + $0xda0] sm:$0xff]
        %v1639 = vld [vmem:[%s1171 + $0xda8] sm:$0xff]
        %v1640 = vld [vmem:[%s1171 + $0xdb0] sm:$0xff]
        %v1641 = vld [vmem:[%s1171 + $0xdb8] sm:$0xff]
        %v1642 = vld [vmem:[%s1171 + $0xdc0] sm:$0xff]
        %v1643 = vld [vmem:[%s1171 + $0xdc8] sm:$0xff]
        %v1644 = vld [vmem:[%s1171 + $0xdd0] sm:$0xff]
        %v1645 = vld [vmem:[%s1171 + $0xdd8] sm:$0xff]
        %v1646 = vld [vmem:[%s1171 + $0xde0] sm:$0xff]
        %v1647 = vld [vmem:[%s1171 + $0xde8] sm:$0xff]
        %v1648 = vld [vmem:[%s1171 + $0xdf0] sm:$0xff]
        %v1649 = vld [vmem:[%s1171 + $0xdf8] sm:$0xff]
        %v1650 = vld [vmem:[%s1171 + $0xe00] sm:$0xff]
        %v1651 = vld [vmem:[%s1171 + $0xe08] sm:$0xff]
        %v1652 = vld [vmem:[%s1171 + $0xe10] sm:$0xff]
        %v1653 = vld [vmem:[%s1171 + $0xe18] sm:$0xff]
        %v1654 = vld [vmem:[%s1171 + $0xe20] sm:$0xff]
        %v1655 = vld [vmem:[%s1171 + $0xe28] sm:$0xff]
        %v1656 = vld [vmem:[%s1171 + $0xe30] sm:$0xff]
        %v1657 = vld [vmem:[%s1171 + $0xe38] sm:$0xff]
        %v1658 = vld [vmem:[%s1171 + $0xe40] sm:$0xff]
        %v1659 = vld [vmem:[%s1171 + $0xe48] sm:$0xff]
        %v1660 = vld [vmem:[%s1171 + $0xe50] sm:$0xff]
        %v1661 = vld [vmem:[%s1171 + $0xe58] sm:$0xff]
        %v1662 = vld [vmem:[%s1171 + $0xe60] sm:$0xff]
        %v1663 = vld [vmem:[%s1171 + $0xe68] sm:$0xff]
        %v1664 = vld [vmem:[%s1171 + $0xe70] sm:$0xff]
        %v1665 = vld [vmem:[%s1171 + $0xe78] sm:$0xff]
        %v1666 = vld [vmem:[%s1171 + $0xe80] sm:$0xff]
        %v1667 = vld [vmem:[%s1171 + $0xe88] sm:$0xff]
        %v1668 = vld [vmem:[%s1171 + $0xe90] sm:$0xff]
        %v1669 = vld [vmem:[%s1171 + $0xe98] sm:$0xff]
        %v1670 = vld [vmem:[%s1171 + $0xea0] sm:$0xff]
        %v1671 = vld [vmem:[%s1171 + $0xea8] sm:$0xff]
        %v1672 = vld [vmem:[%s1171 + $0xeb0] sm:$0xff]
        %v1673 = vld [vmem:[%s1171 + $0xeb8] sm:$0xff]
        %v1674 = vld [vmem:[%s1171 + $0xec0] sm:$0xff]
        %v1675 = vld [vmem:[%s1171 + $0xec8] sm:$0xff]
        %v1676 = vld [vmem:[%s1171 + $0xed0] sm:$0xff]
        %v1677 = vld [vmem:[%s1171 + $0xed8] sm:$0xff]
        %v1678 = vld [vmem:[%s1171 + $0xee0] sm:$0xff]
        %v1679 = vld [vmem:[%s1171 + $0xee8] sm:$0xff]
        %v1680 = vld [vmem:[%s1171 + $0xef0] sm:$0xff]
        %v1681 = vld [vmem:[%s1171 + $0xef8] sm:$0xff]
        %v1682 = vld [vmem:[%s1171 + $0xf00] sm:$0xff]
        %v1683 = vld [vmem:[%s1171 + $0xf08] sm:$0xff]
        %v1684 = vld [vmem:[%s1171 + $0xf10] sm:$0xff]
        %v1685 = vld [vmem:[%s1171 + $0xf18] sm:$0xff]
        %v1686 = vld [vmem:[%s1171 + $0xf20] sm:$0xff]
        %v1687 = vld [vmem:[%s1171 + $0xf28] sm:$0xff]
        %v1688 = vld [vmem:[%s1171 + $0xf30] sm:$0xff]
        %v1689 = vld [vmem:[%s1171 + $0xf38] sm:$0xff]
        %v1690 = vld [vmem:[%s1171 + $0xf40] sm:$0xff]
        %v1691 = vld [vmem:[%s1171 + $0xf48] sm:$0xff]
        %v1692 = vld [vmem:[%s1171 + $0xf50] sm:$0xff]
        %v1693 = vld [vmem:[%s1171 + $0xf58] sm:$0xff]
        %v1694 = vld [vmem:[%s1171 + $0xf60] sm:$0xff]
        %v1695 = vld [vmem:[%s1171 + $0xf68] sm:$0xff]
        %v1696 = vld [vmem:[%s1171 + $0xf70] sm:$0xff]
        %v1697 = vld [vmem:[%s1171 + $0xf78] sm:$0xff]
        %v1698 = vld [vmem:[%s1171 + $0xf80] sm:$0xff]
        %v1699 = vld [vmem:[%s1171 + $0xf88] sm:$0xff]
        %v1700 = vld [vmem:[%s1171 + $0xf90] sm:$0xff]
        %v1701 = vld [vmem:[%s1171 + $0xf98] sm:$0xff]
        %v1702 = vld [vmem:[%s1171 + $0xfa0] sm:$0xff]
        %v1703 = vld [vmem:[%s1171 + $0xfa8] sm:$0xff]
        %v1704 = vld [vmem:[%s1171 + $0xfb0] sm:$0xff]
        %v1705 = vld [vmem:[%s1171 + $0xfb8] sm:$0xff]
        %v1706 = vld [vmem:[%s2] sm:$0xf]
        %1708 = vset.pattern.permute.xlu0 0
        %1709 = vperm.xlu0 %1708, %v1706
        %v1710 = vpop.permute.xlu0 %1709
        %1715 = vst [vmem:[#allocation1] ss:$2 sm:$0xff] %v1199
        %s1716 = scalar_lea.vmem [#allocation1], 16
        %1717 = vst [vmem:[%s1716] ss:$2 sm:$0xff] %v1200
        %s1718 = scalar_lea.vmem [#allocation1], 32
        %1719 = vst [vmem:[%s1718] ss:$2 sm:$0xff] %v1201
        %v1720 = vld.sshfl [vmem:[#allocation1] sm:$0xff pattern:$0x75316420]
        %v1721 = vld.sshfl [vmem:[#allocation1 + $0x8] sm:$0xff pattern:$0x75316420]
        %v1722 = vld.sshfl [vmem:[#allocation1 + $0x10] sm:$0xff pattern:$0x75316420]
        %v1723 = vld.sshfl [vmem:[#allocation1 + $0x18] sm:$0xff pattern:$0x75316420]
        %v1724 = vld.sshfl [vmem:[#allocation1 + $0x20] sm:$0xff pattern:$0x75316420]
        %vm1729 = vcmask 523264
        %v1730 = vsel %vm1729, %v1724, 0
        %1732 = vmatpush.msra.mxu0 %v1307
        %1733 = vmatpush.msra.mxu0 %v1300
        %1734 = vmatpush.msra.mxu0 %v1293
        %1735 = vmatpush.msra.mxu0 %v1286
        %1736 = vmatpush.msra.mxu0 %v1279
        %1737 = vmatpush.msra.mxu0 %v1272
        %1738 = vmatpush.msra.mxu0 %v1265
        %1739 = vmatpush.msra.mxu0 %v1258
        %1740 = vmatpush.msra.mxu0 %v1251
        %1741 = vmatpush.msra.mxu0 %v1244
        %1742 = vmatpush.msra.mxu0 %v1237
        %1743 = vmatpush.msra.mxu0 %v1230
        %1744 = vmatpush.msra.mxu0 %v1223
        %1745 = vmatpush.msra.mxu0 %v1216
        %1746 = vmatpush.msra.mxu0 %v1209
        %1747 = vmatpush.msra.mxu0 %v1202
        %1748 = vmatmul.f32.gmra.mxu0 %v1720
        %v1749 = vpop.f32.mrf.mxu0
        %v1750 = vadd.f32 %v1710, %v1749
        %1751 = vdwg.mxu0
        %1752 = vmatpush.msra.mxu0 %v1419
        %1753 = vmatpush.msra.mxu0 %v1412
        %1754 = vmatpush.msra.mxu0 %v1405
        %1755 = vmatpush.msra.mxu0 %v1398
        %1756 = vmatpush.msra.mxu0 %v1391
        %1757 = vmatpush.msra.mxu0 %v1384
        %1758 = vmatpush.msra.mxu0 %v1377
        %1759 = vmatpush.msra.mxu0 %v1370
        %1760 = vmatpush.msra.mxu0 %v1363
        %1761 = vmatpush.msra.mxu0 %v1356
        %1762 = vmatpush.msra.mxu0 %v1349
        %1763 = vmatpush.msra.mxu0 %v1342
        %1764 = vmatpush.msra.mxu0 %v1335
        %1765 = vmatpush.msra.mxu0 %v1328
        %1766 = vmatpush.msra.mxu0 %v1321
        %1767 = vmatpush.msra.mxu0 %v1314
        %1768 = vmatmul.f32.gmra.mxu0 %v1721
        %v1769 = vpop.f32.mrf.mxu0
        %v1770 = vadd.f32 %v1750, %v1769
        %1771 = vdwg.mxu0
        %1772 = vmatpush.msra.mxu0 %v1531
        %1773 = vmatpush.msra.mxu0 %v1524
        %1774 = vmatpush.msra.mxu0 %v1517
        %1775 = vmatpush.msra.mxu0 %v1510
        %1776 = vmatpush.msra.mxu0 %v1503
        %1777 = vmatpush.msra.mxu0 %v1496
        %1778 = vmatpush.msra.mxu0 %v1489
        %1779 = vmatpush.msra.mxu0 %v1482
        %1780 = vmatpush.msra.mxu0 %v1475
        %1781 = vmatpush.msra.mxu0 %v1468
        %1782 = vmatpush.msra.mxu0 %v1461
        %1783 = vmatpush.msra.mxu0 %v1454
        %1784 = vmatpush.msra.mxu0 %v1447
        %1785 = vmatpush.msra.mxu0 %v1440
        %1786 = vmatpush.msra.mxu0 %v1433
        %1787 = vmatpush.msra.mxu0 %v1426
        %1788 = vmatmul.f32.gmra.mxu0 %v1722
        %v1789 = vpop.f32.mrf.mxu0
        %v1790 = vadd.f32 %v1770, %v1789
        %1791 = vdwg.mxu0
        %1792 = vmatpush.msra.mxu0 %v1643
        %1793 = vmatpush.msra.mxu0 %v1636
        %1794 = vmatpush.msra.mxu0 %v1629
        %1795 = vmatpush.msra.mxu0 %v1622
        %1796 = vmatpush.msra.mxu0 %v1615
        %1797 = vmatpush.msra.mxu0 %v1608
        %1798 = vmatpush.msra.mxu0 %v1601
        %1799 = vmatpush.msra.mxu0 %v1594
        %1800 = vmatpush.msra.mxu0 %v1587
        %1801 = vmatpush.msra.mxu0 %v1580
        %1802 = vmatpush.msra.mxu0 %v1573
        %1803 = vmatpush.msra.mxu0 %v1566
        %1804 = vmatpush.msra.mxu0 %v1559
        %1805 = vmatpush.msra.mxu0 %v1552
        %1806 = vmatpush.msra.mxu0 %v1545
        %1807 = vmatpush.msra.mxu0 %v1538
        %1808 = vmatmul.f32.gmra.mxu0 %v1723
        %v1809 = vpop.f32.mrf.mxu0
        %v1810 = vadd.f32 %v1790, %v1809
        %1811 = vdwg.mxu0
        %1812 = vmatpush.msra.mxu0 0.0
        %1813 = vmatpush.msra.mxu0 0.0
        %1814 = vmatpush.msra.mxu0 0.0
        %1815 = vmatpush.msra.mxu0 0.0
        %1816 = vmatpush.msra.mxu0 0.0
        %1817 = vmatpush.msra.mxu0 0.0
        %1818 = vmatpush.msra.mxu0 0.0
        %1819 = vmatpush.msra.mxu0 0.0
        %1820 = vmatpush.msra.mxu0 %v1699
        %1821 = vmatpush.msra.mxu0 %v1692
        %1822 = vmatpush.msra.mxu0 %v1685
        %1823 = vmatpush.msra.mxu0 %v1678
        %1824 = vmatpush.msra.mxu0 %v1671
        %1825 = vmatpush.msra.mxu0 %v1664
        %1826 = vmatpush.msra.mxu0 %v1657
        %1827 = vmatpush.msra.mxu0 %v1650
        %1828 = vmatmul.f32.gmra.mxu0 %v1730
        %v1829 = vpop.f32.mrf.mxu0
        %v1830 = vadd.f32 %v1810, %v1829
        %1831 = vdwg.mxu0
        %1832 = vmatpush.msra.mxu0 %v1308
        %1833 = vmatpush.msra.mxu0 %v1301
        %1834 = vmatpush.msra.mxu0 %v1294
        %1835 = vmatpush.msra.mxu0 %v1287
        %1836 = vmatpush.msra.mxu0 %v1280
        %1837 = vmatpush.msra.mxu0 %v1273
        %1838 = vmatpush.msra.mxu0 %v1266
        %1839 = vmatpush.msra.mxu0 %v1259
        %1840 = vmatpush.msra.mxu0 %v1252
        %1841 = vmatpush.msra.mxu0 %v1245
        %1842 = vmatpush.msra.mxu0 %v1238
        %1843 = vmatpush.msra.mxu0 %v1231
        %1844 = vmatpush.msra.mxu0 %v1224
        %1845 = vmatpush.msra.mxu0 %v1217
        %1846 = vmatpush.msra.mxu0 %v1210
        %1847 = vmatpush.msra.mxu0 %v1203
        %1848 = vmatmul.f32.gmra.mxu0 %v1720
        %v1849 = vpop.f32.mrf.mxu0
        %v1850 = vadd.f32 %v1710, %v1849
        %1851 = vdwg.mxu0
        %1852 = vmatpush.msra.mxu0 %v1420
        %1853 = vmatpush.msra.mxu0 %v1413
        %1854 = vmatpush.msra.mxu0 %v1406
        %1855 = vmatpush.msra.mxu0 %v1399
        %1856 = vmatpush.msra.mxu0 %v1392
        %1857 = vmatpush.msra.mxu0 %v1385
        %1858 = vmatpush.msra.mxu0 %v1378
        %1859 = vmatpush.msra.mxu0 %v1371
        %1860 = vmatpush.msra.mxu0 %v1364
        %1861 = vmatpush.msra.mxu0 %v1357
        %1862 = vmatpush.msra.mxu0 %v1350
        %1863 = vmatpush.msra.mxu0 %v1343
        %1864 = vmatpush.msra.mxu0 %v1336
        %1865 = vmatpush.msra.mxu0 %v1329
        %1866 = vmatpush.msra.mxu0 %v1322
        %1867 = vmatpush.msra.mxu0 %v1315
        %1868 = vmatmul.f32.gmra.mxu0 %v1721
        %v1869 = vpop.f32.mrf.mxu0
        %v1870 = vadd.f32 %v1850, %v1869
        %1871 = vdwg.mxu0
        %1872 = vmatpush.msra.mxu0 %v1532
        %1873 = vmatpush.msra.mxu0 %v1525
        %1874 = vmatpush.msra.mxu0 %v1518
        %1875 = vmatpush.msra.mxu0 %v1511
        %1876 = vmatpush.msra.mxu0 %v1504
        %1877 = vmatpush.msra.mxu0 %v1497
        %1878 = vmatpush.msra.mxu0 %v1490
        %1879 = vmatpush.msra.mxu0 %v1483
        %1880 = vmatpush.msra.mxu0 %v1476
        %1881 = vmatpush.msra.mxu0 %v1469
        %1882 = vmatpush.msra.mxu0 %v1462
        %1883 = vmatpush.msra.mxu0 %v1455
        %1884 = vmatpush.msra.mxu0 %v1448
        %1885 = vmatpush.msra.mxu0 %v1441
        %1886 = vmatpush.msra.mxu0 %v1434
        %1887 = vmatpush.msra.mxu0 %v1427
        %1888 = vmatmul.f32.gmra.mxu0 %v1722
        %v1889 = vpop.f32.mrf.mxu0
        %v1890 = vadd.f32 %v1870, %v1889
        %1891 = vdwg.mxu0
        %1892 = vmatpush.msra.mxu0 %v1644
        %1893 = vmatpush.msra.mxu0 %v1637
        %1894 = vmatpush.msra.mxu0 %v1630
        %1895 = vmatpush.msra.mxu0 %v1623
        %1896 = vmatpush.msra.mxu0 %v1616
        %1897 = vmatpush.msra.mxu0 %v1609
        %1898 = vmatpush.msra.mxu0 %v1602
        %1899 = vmatpush.msra.mxu0 %v1595
        %1900 = vmatpush.msra.mxu0 %v1588
        %1901 = vmatpush.msra.mxu0 %v1581
        %1902 = vmatpush.msra.mxu0 %v1574
        %1903 = vmatpush.msra.mxu0 %v1567
        %1904 = vmatpush.msra.mxu0 %v1560
        %1905 = vmatpush.msra.mxu0 %v1553
        %1906 = vmatpush.msra.mxu0 %v1546
        %1907 = vmatpush.msra.mxu0 %v1539
        %1908 = vmatmul.f32.gmra.mxu0 %v1723
        %v1909 = vpop.f32.mrf.mxu0
        %v1910 = vadd.f32 %v1890, %v1909
        %1911 = vdwg.mxu0
        %1912 = vmatpush.msra.mxu0 0.0
        %1913 = vmatpush.msra.mxu0 0.0
        %1914 = vmatpush.msra.mxu0 0.0
        %1915 = vmatpush.msra.mxu0 0.0
        %1916 = vmatpush.msra.mxu0 0.0
        %1917 = vmatpush.msra.mxu0 0.0
        %1918 = vmatpush.msra.mxu0 0.0
        %1919 = vmatpush.msra.mxu0 0.0
        %1920 = vmatpush.msra.mxu0 %v1700
        %1921 = vmatpush.msra.mxu0 %v1693
        %1922 = vmatpush.msra.mxu0 %v1686
        %1923 = vmatpush.msra.mxu0 %v1679
        %1924 = vmatpush.msra.mxu0 %v1672
        %1925 = vmatpush.msra.mxu0 %v1665
        %1926 = vmatpush.msra.mxu0 %v1658
        %1927 = vmatpush.msra.mxu0 %v1651
        %1928 = vmatmul.f32.gmra.mxu0 %v1730
        %v1929 = vpop.f32.mrf.mxu0
        %v1930 = vadd.f32 %v1910, %v1929
        %1931 = vdwg.mxu0
        %1932 = vmatpush.msra.mxu0 %v1309
        %1933 = vmatpush.msra.mxu0 %v1302
        %1934 = vmatpush.msra.mxu0 %v1295
        %1935 = vmatpush.msra.mxu0 %v1288
        %1936 = vmatpush.msra.mxu0 %v1281
        %1937 = vmatpush.msra.mxu0 %v1274
        %1938 = vmatpush.msra.mxu0 %v1267
        %1939 = vmatpush.msra.mxu0 %v1260
        %1940 = vmatpush.msra.mxu0 %v1253
        %1941 = vmatpush.msra.mxu0 %v1246
        %1942 = vmatpush.msra.mxu0 %v1239
        %1943 = vmatpush.msra.mxu0 %v1232
        %1944 = vmatpush.msra.mxu0 %v1225
        %1945 = vmatpush.msra.mxu0 %v1218
        %1946 = vmatpush.msra.mxu0 %v1211
        %1947 = vmatpush.msra.mxu0 %v1204
        %1948 = vmatmul.f32.gmra.mxu0 %v1720
        %v1949 = vpop.f32.mrf.mxu0
        %v1950 = vadd.f32 %v1710, %v1949
        %1951 = vdwg.mxu0
        %1952 = vmatpush.msra.mxu0 %v1421
        %1953 = vmatpush.msra.mxu0 %v1414
        %1954 = vmatpush.msra.mxu0 %v1407
        %1955 = vmatpush.msra.mxu0 %v1400
        %1956 = vmatpush.msra.mxu0 %v1393
        %1957 = vmatpush.msra.mxu0 %v1386
        %1958 = vmatpush.msra.mxu0 %v1379
        %1959 = vmatpush.msra.mxu0 %v1372
        %1960 = vmatpush.msra.mxu0 %v1365
        %1961 = vmatpush.msra.mxu0 %v1358
        %1962 = vmatpush.msra.mxu0 %v1351
        %1963 = vmatpush.msra.mxu0 %v1344
        %1964 = vmatpush.msra.mxu0 %v1337
        %1965 = vmatpush.msra.mxu0 %v1330
        %1966 = vmatpush.msra.mxu0 %v1323
        %1967 = vmatpush.msra.mxu0 %v1316
        %1968 = vmatmul.f32.gmra.mxu0 %v1721
        %v1969 = vpop.f32.mrf.mxu0
        %v1970 = vadd.f32 %v1950, %v1969
        %1971 = vdwg.mxu0
        %1972 = vmatpush.msra.mxu0 %v1533
        %1973 = vmatpush.msra.mxu0 %v1526
        %1974 = vmatpush.msra.mxu0 %v1519
        %1975 = vmatpush.msra.mxu0 %v1512
        %1976 = vmatpush.msra.mxu0 %v1505
        %1977 = vmatpush.msra.mxu0 %v1498
        %1978 = vmatpush.msra.mxu0 %v1491
        %1979 = vmatpush.msra.mxu0 %v1484
        %1980 = vmatpush.msra.mxu0 %v1477
        %1981 = vmatpush.msra.mxu0 %v1470
        %1982 = vmatpush.msra.mxu0 %v1463
        %1983 = vmatpush.msra.mxu0 %v1456
        %1984 = vmatpush.msra.mxu0 %v1449
        %1985 = vmatpush.msra.mxu0 %v1442
        %1986 = vmatpush.msra.mxu0 %v1435
        %1987 = vmatpush.msra.mxu0 %v1428
        %1988 = vmatmul.f32.gmra.mxu0 %v1722
        %v1989 = vpop.f32.mrf.mxu0
        %v1990 = vadd.f32 %v1970, %v1989
        %1991 = vdwg.mxu0
        %1992 = vmatpush.msra.mxu0 %v1645
        %1993 = vmatpush.msra.mxu0 %v1638
        %1994 = vmatpush.msra.mxu0 %v1631
        %1995 = vmatpush.msra.mxu0 %v1624
        %1996 = vmatpush.msra.mxu0 %v1617
        %1997 = vmatpush.msra.mxu0 %v1610
        %1998 = vmatpush.msra.mxu0 %v1603
        %1999 = vmatpush.msra.mxu0 %v1596
        %2000 = vmatpush.msra.mxu0 %v1589
        %2001 = vmatpush.msra.mxu0 %v1582
        %2002 = vmatpush.msra.mxu0 %v1575
        %2003 = vmatpush.msra.mxu0 %v1568
        %2004 = vmatpush.msra.mxu0 %v1561
        %2005 = vmatpush.msra.mxu0 %v1554
        %2006 = vmatpush.msra.mxu0 %v1547
        %2007 = vmatpush.msra.mxu0 %v1540
        %2008 = vmatmul.f32.gmra.mxu0 %v1723
        %v2009 = vpop.f32.mrf.mxu0
        %v2010 = vadd.f32 %v1990, %v2009
        %2011 = vdwg.mxu0
        %2012 = vmatpush.msra.mxu0 0.0
        %2013 = vmatpush.msra.mxu0 0.0
        %2014 = vmatpush.msra.mxu0 0.0
        %2015 = vmatpush.msra.mxu0 0.0
        %2016 = vmatpush.msra.mxu0 0.0
        %2017 = vmatpush.msra.mxu0 0.0
        %2018 = vmatpush.msra.mxu0 0.0
        %2019 = vmatpush.msra.mxu0 0.0
        %2020 = vmatpush.msra.mxu0 %v1701
        %2021 = vmatpush.msra.mxu0 %v1694
        %2022 = vmatpush.msra.mxu0 %v1687
        %2023 = vmatpush.msra.mxu0 %v1680
        %2024 = vmatpush.msra.mxu0 %v1673
        %2025 = vmatpush.msra.mxu0 %v1666
        %2026 = vmatpush.msra.mxu0 %v1659
        %2027 = vmatpush.msra.mxu0 %v1652
        %2028 = vmatmul.f32.gmra.mxu0 %v1730
        %v2029 = vpop.f32.mrf.mxu0
        %v2030 = vadd.f32 %v2010, %v2029
        %2031 = vdwg.mxu0
        %2032 = vmatpush.msra.mxu0 %v1310
        %2033 = vmatpush.msra.mxu0 %v1303
        %2034 = vmatpush.msra.mxu0 %v1296
        %2035 = vmatpush.msra.mxu0 %v1289
        %2036 = vmatpush.msra.mxu0 %v1282
        %2037 = vmatpush.msra.mxu0 %v1275
        %2038 = vmatpush.msra.mxu0 %v1268
        %2039 = vmatpush.msra.mxu0 %v1261
        %2040 = vmatpush.msra.mxu0 %v1254
        %2041 = vmatpush.msra.mxu0 %v1247
        %2042 = vmatpush.msra.mxu0 %v1240
        %2043 = vmatpush.msra.mxu0 %v1233
        %2044 = vmatpush.msra.mxu0 %v1226
        %2045 = vmatpush.msra.mxu0 %v1219
        %2046 = vmatpush.msra.mxu0 %v1212
        %2047 = vmatpush.msra.mxu0 %v1205
        %2048 = vmatmul.f32.gmra.mxu0 %v1720
        %v2049 = vpop.f32.mrf.mxu0
        %v2050 = vadd.f32 %v1710, %v2049
        %2051 = vdwg.mxu0
        %2052 = vmatpush.msra.mxu0 %v1422
        %2053 = vmatpush.msra.mxu0 %v1415
        %2054 = vmatpush.msra.mxu0 %v1408
        %2055 = vmatpush.msra.mxu0 %v1401
        %2056 = vmatpush.msra.mxu0 %v1394
        %2057 = vmatpush.msra.mxu0 %v1387
        %2058 = vmatpush.msra.mxu0 %v1380
        %2059 = vmatpush.msra.mxu0 %v1373
        %2060 = vmatpush.msra.mxu0 %v1366
        %2061 = vmatpush.msra.mxu0 %v1359
        %2062 = vmatpush.msra.mxu0 %v1352
        %2063 = vmatpush.msra.mxu0 %v1345
        %2064 = vmatpush.msra.mxu0 %v1338
        %2065 = vmatpush.msra.mxu0 %v1331
        %2066 = vmatpush.msra.mxu0 %v1324
        %2067 = vmatpush.msra.mxu0 %v1317
        %2068 = vmatmul.f32.gmra.mxu0 %v1721
        %v2069 = vpop.f32.mrf.mxu0
        %v2070 = vadd.f32 %v2050, %v2069
        %2071 = vdwg.mxu0
        %2072 = vmatpush.msra.mxu0 %v1534
        %2073 = vmatpush.msra.mxu0 %v1527
        %2074 = vmatpush.msra.mxu0 %v1520
        %2075 = vmatpush.msra.mxu0 %v1513
        %2076 = vmatpush.msra.mxu0 %v1506
        %2077 = vmatpush.msra.mxu0 %v1499
        %2078 = vmatpush.msra.mxu0 %v1492
        %2079 = vmatpush.msra.mxu0 %v1485
        %2080 = vmatpush.msra.mxu0 %v1478
        %2081 = vmatpush.msra.mxu0 %v1471
        %2082 = vmatpush.msra.mxu0 %v1464
        %2083 = vmatpush.msra.mxu0 %v1457
        %2084 = vmatpush.msra.mxu0 %v1450
        %2085 = vmatpush.msra.mxu0 %v1443
        %2086 = vmatpush.msra.mxu0 %v1436
        %2087 = vmatpush.msra.mxu0 %v1429
        %2088 = vmatmul.f32.gmra.mxu0 %v1722
        %v2089 = vpop.f32.mrf.mxu0
        %v2090 = vadd.f32 %v2070, %v2089
        %2091 = vdwg.mxu0
        %2092 = vmatpush.msra.mxu0 %v1646
        %2093 = vmatpush.msra.mxu0 %v1639
        %2094 = vmatpush.msra.mxu0 %v1632
        %2095 = vmatpush.msra.mxu0 %v1625
        %2096 = vmatpush.msra.mxu0 %v1618
        %2097 = vmatpush.msra.mxu0 %v1611
        %2098 = vmatpush.msra.mxu0 %v1604
        %2099 = vmatpush.msra.mxu0 %v1597
        %2100 = vmatpush.msra.mxu0 %v1590
        %2101 = vmatpush.msra.mxu0 %v1583
        %2102 = vmatpush.msra.mxu0 %v1576
        %2103 = vmatpush.msra.mxu0 %v1569
        %2104 = vmatpush.msra.mxu0 %v1562
        %2105 = vmatpush.msra.mxu0 %v1555
        %2106 = vmatpush.msra.mxu0 %v1548
        %2107 = vmatpush.msra.mxu0 %v1541
        %2108 = vmatmul.f32.gmra.mxu0 %v1723
        %v2109 = vpop.f32.mrf.mxu0
        %v2110 = vadd.f32 %v2090, %v2109
        %2111 = vdwg.mxu0
        %2112 = vmatpush.msra.mxu0 0.0
        %2113 = vmatpush.msra.mxu0 0.0
        %2114 = vmatpush.msra.mxu0 0.0
        %2115 = vmatpush.msra.mxu0 0.0
        %2116 = vmatpush.msra.mxu0 0.0
        %2117 = vmatpush.msra.mxu0 0.0
        %2118 = vmatpush.msra.mxu0 0.0
        %2119 = vmatpush.msra.mxu0 0.0
        %2120 = vmatpush.msra.mxu0 %v1702
        %2121 = vmatpush.msra.mxu0 %v1695
        %2122 = vmatpush.msra.mxu0 %v1688
        %2123 = vmatpush.msra.mxu0 %v1681
        %2124 = vmatpush.msra.mxu0 %v1674
        %2125 = vmatpush.msra.mxu0 %v1667
        %2126 = vmatpush.msra.mxu0 %v1660
        %2127 = vmatpush.msra.mxu0 %v1653
        %2128 = vmatmul.f32.gmra.mxu0 %v1730
        %v2129 = vpop.f32.mrf.mxu0
        %v2130 = vadd.f32 %v2110, %v2129
        %2131 = vdwg.mxu0
        %2132 = vmatpush.msra.mxu0 %v1311
        %2133 = vmatpush.msra.mxu0 %v1304
        %2134 = vmatpush.msra.mxu0 %v1297
        %2135 = vmatpush.msra.mxu0 %v1290
        %2136 = vmatpush.msra.mxu0 %v1283
        %2137 = vmatpush.msra.mxu0 %v1276
        %2138 = vmatpush.msra.mxu0 %v1269
        %2139 = vmatpush.msra.mxu0 %v1262
        %2140 = vmatpush.msra.mxu0 %v1255
        %2141 = vmatpush.msra.mxu0 %v1248
        %2142 = vmatpush.msra.mxu0 %v1241
        %2143 = vmatpush.msra.mxu0 %v1234
        %2144 = vmatpush.msra.mxu0 %v1227
        %2145 = vmatpush.msra.mxu0 %v1220
        %2146 = vmatpush.msra.mxu0 %v1213
        %2147 = vmatpush.msra.mxu0 %v1206
        %2148 = vmatmul.f32.gmra.mxu0 %v1720
        %v2149 = vpop.f32.mrf.mxu0
        %v2150 = vadd.f32 %v1710, %v2149
        %2151 = vdwg.mxu0
        %2152 = vmatpush.msra.mxu0 %v1423
        %2153 = vmatpush.msra.mxu0 %v1416
        %2154 = vmatpush.msra.mxu0 %v1409
        %2155 = vmatpush.msra.mxu0 %v1402
        %2156 = vmatpush.msra.mxu0 %v1395
        %2157 = vmatpush.msra.mxu0 %v1388
        %2158 = vmatpush.msra.mxu0 %v1381
        %2159 = vmatpush.msra.mxu0 %v1374
        %2160 = vmatpush.msra.mxu0 %v1367
        %2161 = vmatpush.msra.mxu0 %v1360
        %2162 = vmatpush.msra.mxu0 %v1353
        %2163 = vmatpush.msra.mxu0 %v1346
        %2164 = vmatpush.msra.mxu0 %v1339
        %2165 = vmatpush.msra.mxu0 %v1332
        %2166 = vmatpush.msra.mxu0 %v1325
        %2167 = vmatpush.msra.mxu0 %v1318
        %2168 = vmatmul.f32.gmra.mxu0 %v1721
        %v2169 = vpop.f32.mrf.mxu0
        %v2170 = vadd.f32 %v2150, %v2169
        %2171 = vdwg.mxu0
        %2172 = vmatpush.msra.mxu0 %v1535
        %2173 = vmatpush.msra.mxu0 %v1528
        %2174 = vmatpush.msra.mxu0 %v1521
        %2175 = vmatpush.msra.mxu0 %v1514
        %2176 = vmatpush.msra.mxu0 %v1507
        %2177 = vmatpush.msra.mxu0 %v1500
        %2178 = vmatpush.msra.mxu0 %v1493
        %2179 = vmatpush.msra.mxu0 %v1486
        %2180 = vmatpush.msra.mxu0 %v1479
        %2181 = vmatpush.msra.mxu0 %v1472
        %2182 = vmatpush.msra.mxu0 %v1465
        %2183 = vmatpush.msra.mxu0 %v1458
        %2184 = vmatpush.msra.mxu0 %v1451
        %2185 = vmatpush.msra.mxu0 %v1444
        %2186 = vmatpush.msra.mxu0 %v1437
        %2187 = vmatpush.msra.mxu0 %v1430
        %2188 = vmatmul.f32.gmra.mxu0 %v1722
        %v2189 = vpop.f32.mrf.mxu0
        %v2190 = vadd.f32 %v2170, %v2189
        %2191 = vdwg.mxu0
        %2192 = vmatpush.msra.mxu0 %v1647
        %2193 = vmatpush.msra.mxu0 %v1640
        %2194 = vmatpush.msra.mxu0 %v1633
        %2195 = vmatpush.msra.mxu0 %v1626
        %2196 = vmatpush.msra.mxu0 %v1619
        %2197 = vmatpush.msra.mxu0 %v1612
        %2198 = vmatpush.msra.mxu0 %v1605
        %2199 = vmatpush.msra.mxu0 %v1598
        %2200 = vmatpush.msra.mxu0 %v1591
        %2201 = vmatpush.msra.mxu0 %v1584
        %2202 = vmatpush.msra.mxu0 %v1577
        %2203 = vmatpush.msra.mxu0 %v1570
        %2204 = vmatpush.msra.mxu0 %v1563
        %2205 = vmatpush.msra.mxu0 %v1556
        %2206 = vmatpush.msra.mxu0 %v1549
        %2207 = vmatpush.msra.mxu0 %v1542
        %2208 = vmatmul.f32.gmra.mxu0 %v1723
        %v2209 = vpop.f32.mrf.mxu0
        %v2210 = vadd.f32 %v2190, %v2209
        %2211 = vdwg.mxu0
        %2212 = vmatpush.msra.mxu0 0.0
        %2213 = vmatpush.msra.mxu0 0.0
        %2214 = vmatpush.msra.mxu0 0.0
        %2215 = vmatpush.msra.mxu0 0.0
        %2216 = vmatpush.msra.mxu0 0.0
        %2217 = vmatpush.msra.mxu0 0.0
        %2218 = vmatpush.msra.mxu0 0.0
        %2219 = vmatpush.msra.mxu0 0.0
        %2220 = vmatpush.msra.mxu0 %v1703
        %2221 = vmatpush.msra.mxu0 %v1696
        %2222 = vmatpush.msra.mxu0 %v1689
        %2223 = vmatpush.msra.mxu0 %v1682
        %2224 = vmatpush.msra.mxu0 %v1675
        %2225 = vmatpush.msra.mxu0 %v1668
        %2226 = vmatpush.msra.mxu0 %v1661
        %2227 = vmatpush.msra.mxu0 %v1654
        %2228 = vmatmul.f32.gmra.mxu0 %v1730
        %v2229 = vpop.f32.mrf.mxu0
        %v2230 = vadd.f32 %v2210, %v2229
        %2231 = vdwg.mxu0
        %2232 = vmatpush.msra.mxu0 %v1312
        %2233 = vmatpush.msra.mxu0 %v1305
        %2234 = vmatpush.msra.mxu0 %v1298
        %2235 = vmatpush.msra.mxu0 %v1291
        %2236 = vmatpush.msra.mxu0 %v1284
        %2237 = vmatpush.msra.mxu0 %v1277
        %2238 = vmatpush.msra.mxu0 %v1270
        %2239 = vmatpush.msra.mxu0 %v1263
        %2240 = vmatpush.msra.mxu0 %v1256
        %2241 = vmatpush.msra.mxu0 %v1249
        %2242 = vmatpush.msra.mxu0 %v1242
        %2243 = vmatpush.msra.mxu0 %v1235
        %2244 = vmatpush.msra.mxu0 %v1228
        %2245 = vmatpush.msra.mxu0 %v1221
        %2246 = vmatpush.msra.mxu0 %v1214
        %2247 = vmatpush.msra.mxu0 %v1207
        %2248 = vmatmul.f32.gmra.mxu0 %v1720
        %v2249 = vpop.f32.mrf.mxu0
        %v2250 = vadd.f32 %v1710, %v2249
        %2251 = vdwg.mxu0
        %2252 = vmatpush.msra.mxu0 %v1424
        %2253 = vmatpush.msra.mxu0 %v1417
        %2254 = vmatpush.msra.mxu0 %v1410
        %2255 = vmatpush.msra.mxu0 %v1403
        %2256 = vmatpush.msra.mxu0 %v1396
        %2257 = vmatpush.msra.mxu0 %v1389
        %2258 = vmatpush.msra.mxu0 %v1382
        %2259 = vmatpush.msra.mxu0 %v1375
        %2260 = vmatpush.msra.mxu0 %v1368
        %2261 = vmatpush.msra.mxu0 %v1361
        %2262 = vmatpush.msra.mxu0 %v1354
        %2263 = vmatpush.msra.mxu0 %v1347
        %2264 = vmatpush.msra.mxu0 %v1340
        %2265 = vmatpush.msra.mxu0 %v1333
        %2266 = vmatpush.msra.mxu0 %v1326
        %2267 = vmatpush.msra.mxu0 %v1319
        %2268 = vmatmul.f32.gmra.mxu0 %v1721
        %v2269 = vpop.f32.mrf.mxu0
        %v2270 = vadd.f32 %v2250, %v2269
        %2271 = vdwg.mxu0
        %2272 = vmatpush.msra.mxu0 %v1536
        %2273 = vmatpush.msra.mxu0 %v1529
        %2274 = vmatpush.msra.mxu0 %v1522
        %2275 = vmatpush.msra.mxu0 %v1515
        %2276 = vmatpush.msra.mxu0 %v1508
        %2277 = vmatpush.msra.mxu0 %v1501
        %2278 = vmatpush.msra.mxu0 %v1494
        %2279 = vmatpush.msra.mxu0 %v1487
        %2280 = vmatpush.msra.mxu0 %v1480
        %2281 = vmatpush.msra.mxu0 %v1473
        %2282 = vmatpush.msra.mxu0 %v1466
        %2283 = vmatpush.msra.mxu0 %v1459
        %2284 = vmatpush.msra.mxu0 %v1452
        %2285 = vmatpush.msra.mxu0 %v1445
        %2286 = vmatpush.msra.mxu0 %v1438
        %2287 = vmatpush.msra.mxu0 %v1431
        %2288 = vmatmul.f32.gmra.mxu0 %v1722
        %v2289 = vpop.f32.mrf.mxu0
        %v2290 = vadd.f32 %v2270, %v2289
        %2291 = vdwg.mxu0
        %2292 = vmatpush.msra.mxu0 %v1648
        %2293 = vmatpush.msra.mxu0 %v1641
        %2294 = vmatpush.msra.mxu0 %v1634
        %2295 = vmatpush.msra.mxu0 %v1627
        %2296 = vmatpush.msra.mxu0 %v1620
        %2297 = vmatpush.msra.mxu0 %v1613
        %2298 = vmatpush.msra.mxu0 %v1606
        %2299 = vmatpush.msra.mxu0 %v1599
        %2300 = vmatpush.msra.mxu0 %v1592
        %2301 = vmatpush.msra.mxu0 %v1585
        %2302 = vmatpush.msra.mxu0 %v1578
        %2303 = vmatpush.msra.mxu0 %v1571
        %2304 = vmatpush.msra.mxu0 %v1564
        %2305 = vmatpush.msra.mxu0 %v1557
        %2306 = vmatpush.msra.mxu0 %v1550
        %2307 = vmatpush.msra.mxu0 %v1543
        %2308 = vmatmul.f32.gmra.mxu0 %v1723
        %v2309 = vpop.f32.mrf.mxu0
        %v2310 = vadd.f32 %v2290, %v2309
        %2311 = vdwg.mxu0
        %2312 = vmatpush.msra.mxu0 0.0
        %2313 = vmatpush.msra.mxu0 0.0
        %2314 = vmatpush.msra.mxu0 0.0
        %2315 = vmatpush.msra.mxu0 0.0
        %2316 = vmatpush.msra.mxu0 0.0
        %2317 = vmatpush.msra.mxu0 0.0
        %2318 = vmatpush.msra.mxu0 0.0
        %2319 = vmatpush.msra.mxu0 0.0
        %2320 = vmatpush.msra.mxu0 %v1704
        %2321 = vmatpush.msra.mxu0 %v1697
        %2322 = vmatpush.msra.mxu0 %v1690
        %2323 = vmatpush.msra.mxu0 %v1683
        %2324 = vmatpush.msra.mxu0 %v1676
        %2325 = vmatpush.msra.mxu0 %v1669
        %2326 = vmatpush.msra.mxu0 %v1662
        %2327 = vmatpush.msra.mxu0 %v1655
        %2328 = vmatmul.f32.gmra.mxu0 %v1730
        %v2329 = vpop.f32.mrf.mxu0
        %v2330 = vadd.f32 %v2310, %v2329
        %2331 = vdwg.mxu0
        %2332 = vmatpush.msra.mxu0 %v1313
        %2333 = vmatpush.msra.mxu0 %v1306
        %2334 = vmatpush.msra.mxu0 %v1299
        %2335 = vmatpush.msra.mxu0 %v1292
        %2336 = vmatpush.msra.mxu0 %v1285
        %2337 = vmatpush.msra.mxu0 %v1278
        %2338 = vmatpush.msra.mxu0 %v1271
        %2339 = vmatpush.msra.mxu0 %v1264
        %2340 = vmatpush.msra.mxu0 %v1257
        %2341 = vmatpush.msra.mxu0 %v1250
        %2342 = vmatpush.msra.mxu0 %v1243
        %2343 = vmatpush.msra.mxu0 %v1236
        %2344 = vmatpush.msra.mxu0 %v1229
        %2345 = vmatpush.msra.mxu0 %v1222
        %2346 = vmatpush.msra.mxu0 %v1215
        %2347 = vmatpush.msra.mxu0 %v1208
        %2348 = vmatmul.f32.gmra.mxu0 %v1720
        %v2349 = vpop.f32.mrf.mxu0
        %v2350 = vadd.f32 %v1710, %v2349
        %2351 = vdwg.mxu0
        %2352 = vmatpush.msra.mxu0 %v1425
        %2353 = vmatpush.msra.mxu0 %v1418
        %2354 = vmatpush.msra.mxu0 %v1411
        %2355 = vmatpush.msra.mxu0 %v1404
        %2356 = vmatpush.msra.mxu0 %v1397
        %2357 = vmatpush.msra.mxu0 %v1390
        %2358 = vmatpush.msra.mxu0 %v1383
        %2359 = vmatpush.msra.mxu0 %v1376
        %2360 = vmatpush.msra.mxu0 %v1369
        %2361 = vmatpush.msra.mxu0 %v1362
        %2362 = vmatpush.msra.mxu0 %v1355
        %2363 = vmatpush.msra.mxu0 %v1348
        %2364 = vmatpush.msra.mxu0 %v1341
        %2365 = vmatpush.msra.mxu0 %v1334
        %2366 = vmatpush.msra.mxu0 %v1327
        %2367 = vmatpush.msra.mxu0 %v1320
        %2368 = vmatmul.f32.gmra.mxu0 %v1721
        %v2369 = vpop.f32.mrf.mxu0
        %v2370 = vadd.f32 %v2350, %v2369
        %2371 = vdwg.mxu0
        %2372 = vmatpush.msra.mxu0 %v1537
        %2373 = vmatpush.msra.mxu0 %v1530
        %2374 = vmatpush.msra.mxu0 %v1523
        %2375 = vmatpush.msra.mxu0 %v1516
        %2376 = vmatpush.msra.mxu0 %v1509
        %2377 = vmatpush.msra.mxu0 %v1502
        %2378 = vmatpush.msra.mxu0 %v1495
        %2379 = vmatpush.msra.mxu0 %v1488
        %2380 = vmatpush.msra.mxu0 %v1481
        %2381 = vmatpush.msra.mxu0 %v1474
        %2382 = vmatpush.msra.mxu0 %v1467
        %2383 = vmatpush.msra.mxu0 %v1460
        %2384 = vmatpush.msra.mxu0 %v1453
        %2385 = vmatpush.msra.mxu0 %v1446
        %2386 = vmatpush.msra.mxu0 %v1439
        %2387 = vmatpush.msra.mxu0 %v1432
        %2388 = vmatmul.f32.gmra.mxu0 %v1722
        %v2389 = vpop.f32.mrf.mxu0
        %v2390 = vadd.f32 %v2370, %v2389
        %2391 = vdwg.mxu0
        %2392 = vmatpush.msra.mxu0 %v1649
        %2393 = vmatpush.msra.mxu0 %v1642
        %2394 = vmatpush.msra.mxu0 %v1635
        %2395 = vmatpush.msra.mxu0 %v1628
        %2396 = vmatpush.msra.mxu0 %v1621
        %2397 = vmatpush.msra.mxu0 %v1614
        %2398 = vmatpush.msra.mxu0 %v1607
        %2399 = vmatpush.msra.mxu0 %v1600
        %2400 = vmatpush.msra.mxu0 %v1593
        %2401 = vmatpush.msra.mxu0 %v1586
        %2402 = vmatpush.msra.mxu0 %v1579
        %2403 = vmatpush.msra.mxu0 %v1572
        %2404 = vmatpush.msra.mxu0 %v1565
        %2405 = vmatpush.msra.mxu0 %v1558
        %2406 = vmatpush.msra.mxu0 %v1551
        %2407 = vmatpush.msra.mxu0 %v1544
        %2408 = vmatmul.f32.gmra.mxu0 %v1723
        %v2409 = vpop.f32.mrf.mxu0
        %v2410 = vadd.f32 %v2390, %v2409
        %2411 = vdwg.mxu0
        %2412 = vmatpush.msra.mxu0 0.0
        %2413 = vmatpush.msra.mxu0 0.0
        %2414 = vmatpush.msra.mxu0 0.0
        %2415 = vmatpush.msra.mxu0 0.0
        %2416 = vmatpush.msra.mxu0 0.0
        %2417 = vmatpush.msra.mxu0 0.0
        %2418 = vmatpush.msra.mxu0 0.0
        %2419 = vmatpush.msra.mxu0 0.0
        %2420 = vmatpush.msra.mxu0 %v1705
        %2421 = vmatpush.msra.mxu0 %v1698
        %2422 = vmatpush.msra.mxu0 %v1691
        %2423 = vmatpush.msra.mxu0 %v1684
        %2424 = vmatpush.msra.mxu0 %v1677
        %2425 = vmatpush.msra.mxu0 %v1670
        %2426 = vmatpush.msra.mxu0 %v1663
        %2427 = vmatpush.msra.mxu0 %v1656
        %2428 = vmatmul.f32.gmra.mxu0 %v1730
        %v2429 = vpop.f32.mrf.mxu0
        %v2430 = vadd.f32 %v2410, %v2429
        %2431 = vdwg.mxu0
        %vm2432 = vcmp.ge.f32.partialorder %v1830, 0.0
        %vm2433 = vcmp.ge.f32.partialorder %v1930, 0.0
        %vm2434 = vcmp.ge.f32.partialorder %v2030, 0.0
        %vm2435 = vcmp.ge.f32.partialorder %v2130, 0.0
        %vm2436 = vcmp.ge.f32.partialorder %v2230, 0.0
        %vm2437 = vcmp.ge.f32.partialorder %v2330, 0.0
        %vm2438 = vcmp.ge.f32.partialorder %v2430, 0.0
        %v2439 = vmul.f32 %v1830, 0.2
        %v2440 = vmul.f32 %v1930, 0.2
        %v2441 = vmul.f32 %v2030, 0.2
        %v2442 = vmul.f32 %v2130, 0.2
        %v2443 = vmul.f32 %v2230, 0.2
        %v2444 = vmul.f32 %v2330, 0.2
        %v2445 = vmul.f32 %v2430, 0.2
        %v2446 = vsel %vm2432, %v1830, %v2439
        %v2447 = vsel %vm2433, %v1930, %v2440
        %v2448 = vsel %vm2434, %v2030, %v2441
        %v2449 = vsel %vm2435, %v2130, %v2442
        %v2450 = vsel %vm2436, %v2230, %v2443
        %v2451 = vsel %vm2437, %v2330, %v2444
        %v2452 = vsel %vm2438, %v2430, %v2445
        %v2453 = vmul.f32 %v2446, %v2446
        %v2454 = vmul.f32 %v2447, %v2447
        %v2455 = vmul.f32 %v2448, %v2448
        %v2456 = vmul.f32 %v2449, %v2449
        %v2457 = vmul.f32 %v2450, %v2450
        %v2458 = vmul.f32 %v2451, %v2451
        %v2459 = vmul.f32 %v2452, %v2452
        %vm2460 = vcmask 1043456
        %v2461 = vsel %vm2460, %v2453, 0.0
        %v2462 = vrot.slane %v2461, 4
        %v2463 = vadd.f32 %v2461, %v2462
        %v2464 = vrot.slane %v2463, 2
        %v2465 = vadd.f32 %v2463, %v2464
        %v2466 = vrot.slane %v2465, 1
        %v2467 = vadd.f32 %v2465, %v2466
        %v2468 = vsel %vm2460, %v2454, 0.0
        %v2469 = vrot.slane %v2468, 4
        %v2470 = vadd.f32 %v2468, %v2469
        %v2471 = vrot.slane %v2470, 2
        %v2472 = vadd.f32 %v2470, %v2471
        %v2473 = vrot.slane %v2472, 1
        %v2474 = vadd.f32 %v2472, %v2473
        %v2475 = vsel %vm2460, %v2455, 0.0
        %v2476 = vrot.slane %v2475, 4
        %v2477 = vadd.f32 %v2475, %v2476
        %v2478 = vrot.slane %v2477, 2
        %v2479 = vadd.f32 %v2477, %v2478
        %v2480 = vrot.slane %v2479, 1
        %v2481 = vadd.f32 %v2479, %v2480
        %v2482 = vsel %vm2460, %v2456, 0.0
        %v2483 = vrot.slane %v2482, 4
        %v2484 = vadd.f32 %v2482, %v2483
        %v2485 = vrot.slane %v2484, 2
        %v2486 = vadd.f32 %v2484, %v2485
        %v2487 = vrot.slane %v2486, 1
        %v2488 = vadd.f32 %v2486, %v2487
        %v2489 = vsel %vm2460, %v2457, 0.0
        %v2490 = vrot.slane %v2489, 4
        %v2491 = vadd.f32 %v2489, %v2490
        %v2492 = vrot.slane %v2491, 2
        %v2493 = vadd.f32 %v2491, %v2492
        %v2494 = vrot.slane %v2493, 1
        %v2495 = vadd.f32 %v2493, %v2494
        %v2496 = vsel %vm2460, %v2458, 0.0
        %v2497 = vrot.slane %v2496, 4
        %v2498 = vadd.f32 %v2496, %v2497
        %v2499 = vrot.slane %v2498, 2
        %v2500 = vadd.f32 %v2498, %v2499
        %v2501 = vrot.slane %v2500, 1
        %v2502 = vadd.f32 %v2500, %v2501
        %v2503 = vsel %vm2460, %v2459, 0.0
        %v2504 = vrot.slane %v2503, 4
        %v2505 = vadd.f32 %v2503, %v2504
        %v2506 = vrot.slane %v2505, 2
        %v2507 = vadd.f32 %v2505, %v2506
        %v2508 = vrot.slane %v2507, 1
        %v2509 = vadd.f32 %v2507, %v2508
        %v2510 = vmul.f32 %v2467, 0.25
        %v2511 = vmul.f32 %v2474, 0.25
        %v2512 = vmul.f32 %v2481, 0.25
        %v2513 = vmul.f32 %v2488, 0.25
        %v2514 = vmul.f32 %v2495, 0.25
        %v2515 = vmul.f32 %v2502, 0.25
        %v2516 = vmul.f32 %v2509, 0.25
        %v2517 = vadd.f32 %v2510, 1e-08
        %v2518 = vadd.f32 %v2511, 1e-08
        %v2519 = vadd.f32 %v2512, 1e-08
        %v2520 = vadd.f32 %v2513, 1e-08
        %v2521 = vadd.f32 %v2514, 1e-08
        %v2522 = vadd.f32 %v2515, 1e-08
        %v2523 = vadd.f32 %v2516, 1e-08
        %v2524 = vrsqrt.pop %v2517
        %v2525 = vmul.f32 %v2524, %v2517
        %v2526 = vmul.f32 %v2525, %v2524
        %v2527 = vmul.f32 0.5, %v2526
        %v2528 = vsub.f32 1.5, %v2527
        %v2529 = vmul.f32 %v2524, %v2528
        %vm2530 = vweird.f32 %v2517
        %vm2531 = vweird.f32 %v2524
        %vm2532 = vmor %vm2530, %vm2531
        %v2533 = vsel %vm2532, %v2524, %v2529
        %v2534 = vrsqrt.pop %v2518
        %v2535 = vmul.f32 %v2534, %v2518
        %v2536 = vmul.f32 %v2535, %v2534
        %v2537 = vmul.f32 0.5, %v2536
        %v2538 = vsub.f32 1.5, %v2537
        %v2539 = vmul.f32 %v2534, %v2538
        %vm2540 = vweird.f32 %v2518
        %vm2541 = vweird.f32 %v2534
        %vm2542 = vmor %vm2540, %vm2541
        %v2543 = vsel %vm2542, %v2534, %v2539
        %v2544 = vrsqrt.pop %v2519
        %v2545 = vmul.f32 %v2544, %v2519
        %v2546 = vmul.f32 %v2545, %v2544
        %v2547 = vmul.f32 0.5, %v2546
        %v2548 = vsub.f32 1.5, %v2547
        %v2549 = vmul.f32 %v2544, %v2548
        %vm2550 = vweird.f32 %v2519
        %vm2551 = vweird.f32 %v2544
        %vm2552 = vmor %vm2550, %vm2551
        %v2553 = vsel %vm2552, %v2544, %v2549
        %v2554 = vrsqrt.pop %v2520
        %v2555 = vmul.f32 %v2554, %v2520
        %v2556 = vmul.f32 %v2555, %v2554
        %v2557 = vmul.f32 0.5, %v2556
        %v2558 = vsub.f32 1.5, %v2557
        %v2559 = vmul.f32 %v2554, %v2558
        %vm2560 = vweird.f32 %v2520
        %vm2561 = vweird.f32 %v2554
        %vm2562 = vmor %vm2560, %vm2561
        %v2563 = vsel %vm2562, %v2554, %v2559
        %v2564 = vrsqrt.pop %v2521
        %v2565 = vmul.f32 %v2564, %v2521
        %v2566 = vmul.f32 %v2565, %v2564
        %v2567 = vmul.f32 0.5, %v2566
        %v2568 = vsub.f32 1.5, %v2567
        %v2569 = vmul.f32 %v2564, %v2568
        %vm2570 = vweird.f32 %v2521
        %vm2571 = vweird.f32 %v2564
        %vm2572 = vmor %vm2570, %vm2571
        %v2573 = vsel %vm2572, %v2564, %v2569
        %v2574 = vrsqrt.pop %v2522
        %v2575 = vmul.f32 %v2574, %v2522
        %v2576 = vmul.f32 %v2575, %v2574
        %v2577 = vmul.f32 0.5, %v2576
        %v2578 = vsub.f32 1.5, %v2577
        %v2579 = vmul.f32 %v2574, %v2578
        %vm2580 = vweird.f32 %v2522
        %vm2581 = vweird.f32 %v2574
        %vm2582 = vmor %vm2580, %vm2581
        %v2583 = vsel %vm2582, %v2574, %v2579
        %v2584 = vrsqrt.pop %v2523
        %v2585 = vmul.f32 %v2584, %v2523
        %v2586 = vmul.f32 %v2585, %v2584
        %v2587 = vmul.f32 0.5, %v2586
        %v2588 = vsub.f32 1.5, %v2587
        %v2589 = vmul.f32 %v2584, %v2588
        %vm2590 = vweird.f32 %v2523
        %vm2591 = vweird.f32 %v2584
        %vm2592 = vmor %vm2590, %vm2591
        %v2593 = vsel %vm2592, %v2584, %v2589
        %v2594 = vmul.f32 %v2446, %v2533
        %v2595 = vmul.f32 %v2447, %v2543
        %v2596 = vmul.f32 %v2448, %v2553
        %v2597 = vmul.f32 %v2449, %v2563
        %v2598 = vmul.f32 %v2450, %v2573
        %v2599 = vmul.f32 %v2451, %v2583
        %v2600 = vmul.f32 %v2452, %v2593
        %v2607 = vrot.slane %v2595, 4
        %v2608 = vrot.slane %v2597, 4
        %v2609 = vrot.slane %v2599, 4
        %v2610 = vsel %vm2460, %v2594, %v2607
        %v2611 = vsel %vm2460, %v2596, %v2608
        %v2612 = vsel %vm2460, %v2598, %v2609
        %2616 = vst [vmem:[%s1197] sm:$0xff] %v2610
        %2617 = vst [vmem:[%s1197 + $0x8] sm:$0xff] %v2611
        %2618 = vst [vmem:[%s1197 + $0x10] sm:$0xff] %v2612
        %2619 = vst [vmem:[%s1197 + $0x18] sm:$0xf] %v2600
        %s2620 = smul.u32 7, %s14
        %p2621 = scmp.lt.s32.totalorder %s2620, 27
        %s2622 = scalar_select %p2621, %s2620, 27
        %s2623 = smul.addr %s2622, 4
        %s2624 = scalar_lea.vmem %s3, %s2623
        // Predicated region
        $region56: #{unet_block_forward.15} parent=50 // pred_check
          %p2625 = pneg %p100
        $region57: #{unet_block_forward.15} parent=50 // pred_check_branch
          %2627 = sbr.rel (%p2625) target = $region59
        $region58: #{unet_block_forward.15} parent=50 // pred_region
          %s2628 = smul.u32 7, %s14
        $region59: #{unet_block_forward.15} parent=50 // pred_fallthru
          _
      $region51: #{unet_block_forward.15} parent=5 // pred_fallthru
        _
      %p2629 = scmp.le.s32.totalorder 2, %s9
      // Predicated region
      $region60: #{unet_block_forward.15} parent=5 // pred_check
        %p2630 = pneg %p2629
      $region61: #{unet_block_forward.15} parent=5 // pred_check_branch
        %2632 = sbr.rel (%p2630) target = $region63
      $region62: #{unet_block_forward.15} parent=5 // pred_region
        %s2633 = ssub.s32 %s9, 2
        // Predicated region
        $region64: #{unet_block_forward.15} parent=62 // pred_check
          %p2634 = pneg %p106
        $region65: #{unet_block_forward.15} parent=62 // pred_check_branch
          %2636 = sbr.rel (%p2634) target = $region67
        $region66: #{unet_block_forward.15} parent=62 // pred_region
          %s2637 = smul.u32 7, %s15
          %p2638 = scmp.lt.s32.totalorder %s2637, 27
          %s2639 = scalar_select %p2638, %s2637, 27
          %s2640 = smul.addr %s2639, 4
          %s2641 = scalar_lea.vmem %s3, %s2640
        $region67: #{unet_block_forward.15} parent=62 // pred_fallthru
          _
      $region63: #{unet_block_forward.15} parent=5 // pred_fallthru
        _
    $region6: #{unet_block_forward.15} parent=1 // loop_footer
      %s13 = sadd.s32 1, %s9
    $region7: #{unet_block_forward.15} parent=1 // loop_footer_branch
      %8 = sbr.rel target = $region3
    $region8: #{unet_block_forward.15} parent=1 // loop_exit
      _

</llo_original>
